<compile_context>
chip_gen: v6e
topology: v6e:2x2x1
jax: 0.10.0
libtpu: 0.0.40
codegen_flags: <defaults>
</compile_context>

<pallas_src>
import jax
import jax.numpy as jnp
from jax.experimental import pallas as pl
from jax.experimental.pallas import tpu as pltpu


def _round_up(v, m):
    return ((v + m - 1) // m) * m


def _vae_kernel(x_ref,
                w1, b1, w2, b2, w3, b3, w4, b4, w5, b5, w6, b6,
                o_ref):
    """Fused encoder+decoder: 6 matmuls (bf16 MXU, f32 accum), ReLU on first 5."""

    def dense(h_bf16, w_ref, b_ref, relu=True):
        y = jnp.dot(h_bf16, w_ref[...], preferred_element_type=jnp.float32)
        y = y + b_ref[...]                  # (1, out) bias, broadcast over batch
        if relu:
            y = jnp.maximum(y, 0.0)
        return y

    # encoder (f32 input tile cast to bf16 in-kernel; no wrapper-side cast pass)
    h = dense(x_ref[...].astype(jnp.bfloat16), w1, b1)      # size -> 768 (pad of 678)
    h = dense(h.astype(jnp.bfloat16), w2, b2)                # 768  -> 256
    h = dense(h.astype(jnp.bfloat16), w3, b3)                # 256  -> code (padded)
    # decoder
    h = dense(h.astype(jnp.bfloat16), w4, b4)                # code -> 256
    h = dense(h.astype(jnp.bfloat16), w5, b5)                # 256  -> 768
    y = dense(h.astype(jnp.bfloat16), w6, b6, relu=False)    # 768  -> size
    o_ref[...] = y.astype(o_ref.dtype)


def _pad_and_cast_params(params):
    """Zero-pad hidden dims to multiples of 128 and cast weights to bf16.

    Padded output columns have zero weights + zero bias (ReLU(0)=0) and the
    corresponding rows of the next layer's weight are zero, so results are
    bit-for-bit unaffected by the padding."""
    dims = [params[0][0].shape[0]] + [w.shape[1] for w, _ in params]
    padded_dims = [dims[0]] + [_round_up(d, 128) for d in dims[1:-1]] + [dims[-1]]
    out = []
    for i, (w, b) in enumerate(params):
        in_d, out_d = padded_dims[i], padded_dims[i + 1]
        w_p = jnp.zeros((in_d, out_d), jnp.bfloat16)
        w_p = w_p.at[: w.shape[0], : w.shape[1]].set(w.astype(jnp.bfloat16))
        b_p = jnp.zeros((1, out_d), jnp.float32)
        b_p = b_p.at[0, : b.shape[0]].set(b.astype(jnp.float32))
        out.append((w_p, b_p))
    return out


def _choose_tiling(n, tile_target):
    """Pick (tile, padded_n) with tile a multiple of 16, tile <= tile_target,
    minimal padding, and >= 2 grid steps whenever the batch permits (so both
    v7x TensorCores get work under dimension_semantics=("parallel",))."""
    n16 = _round_up(max(n, 1), 16)
    tile_target = max(16, _round_up(tile_target, 16))
    num_tiles = -(-n16 // tile_target)          # cdiv
    if num_tiles == 1 and n16 >= 32:
        num_tiles = 2                           # keep both v7x TCs busy
    tile = _round_up(-(-n16 // num_tiles), 16)  # <= tile_target by construction
    return tile, tile * num_tiles


def vae_forward_pallas(x_nchw, params, tile_n=512, out_dtype=jnp.float32):
    """x_nchw: (N, C, H, W) float32.  params: list of 6 (W, b) with W (in, out).

    out_dtype=jnp.bfloat16 halves the output HBM writeback (recommended on
    v6e/v7x; numerics are already bf16-limited upstream)."""
    n = x_nchw.shape[0]
    size = x_nchw.shape[1] * x_nchw.shape[2] * x_nchw.shape[3]
    x = x_nchw.reshape(n, size).astype(jnp.float32)

    padded_params = _pad_and_cast_params(params)

    tile, padded_n = _choose_tiling(n, tile_n)
    if padded_n != n:
        x = jnp.pad(x, ((0, padded_n - n), (0, 0)))

    flat_args = [x]
    in_specs = [pl.BlockSpec((tile, size), lambda i: (i, 0))]
    for w, b in padded_params:
        flat_args.append(w)
        in_specs.append(pl.BlockSpec(w.shape, lambda i: (0, 0)))   # VMEM-resident
        flat_args.append(b)
        in_specs.append(pl.BlockSpec(b.shape, lambda i: (0, 0)))

    out_dtype = jnp.dtype(out_dtype)
    flops = 2 * padded_n * sum(w.shape[0] * w.shape[1] for w, _ in padded_params)
    bytes_accessed = (
        x.size * x.dtype.itemsize
        + sum(w.size * w.dtype.itemsize + b.size * b.dtype.itemsize
              for w, b in padded_params)
        + padded_n * size * out_dtype.itemsize)

    out = pl.pallas_call(
        _vae_kernel,
        out_shape=jax.ShapeDtypeStruct((padded_n, size), out_dtype),
        grid=(padded_n // tile,),
        in_specs=in_specs,
        out_specs=pl.BlockSpec((tile, size), lambda i: (i, 0)),
        compiler_params=pltpu.CompilerParams(
            dimension_semantics=("parallel",),
            vmem_limit_bytes=48 * 1024 * 1024,   # fits v7x 64 MiB/TC with margin
        ),
        cost_estimate=pl.CostEstimate(
            flops=flops, transcendentals=0, bytes_accessed=bytes_accessed),
    )(*flat_args)
    return out[:n]


def init_vae_params(key, size, code_dim):
    """PyTorch nn.Linear-style init; weights stored as (in_features, out_features)."""
    dims = [size, 678, 256, code_dim, 256, 678, size]
    params = []
    for i in range(6):
        fan_in, fan_out = dims[i], dims[i + 1]
        key, kw, kb = jax.random.split(key, 3)
        bound = 1.0 / jnp.sqrt(jnp.float32(fan_in))
        w = jax.random.uniform(kw, (fan_in, fan_out), jnp.float32, -bound, bound)
        b = jax.random.uniform(kb, (fan_out,), jnp.float32, -bound, bound)
        params.append((w, b))
    return params


def vae_forward_ref(x_nchw, params):
    """Reference with the same bf16-input / f32-accumulate numerics as the kernel."""
    n = x_nchw.shape[0]
    h = x_nchw.reshape(n, -1)
    for i, (w, b) in enumerate(params):
        h = jnp.dot(h.astype(jnp.bfloat16), w.astype(jnp.bfloat16),
                    preferred_element_type=jnp.float32) + b
        if i < 5:
            h = jnp.maximum(h, 0.0)
    return h


if __name__ == "__main__":
    # Small shapes consistent with the module: size=(C,H,W)=(4,16,16) -> 1024 features.
    C, H, W = 4, 16, 16
    CODE_DIM = 32
    N = 2

    key = jax.random.PRNGKey(0)
    key, kx = jax.random.split(key)
    x = jax.random.normal(kx, (N, C, H, W), jnp.float32)

    params = init_vae_params(key, C * H * W, CODE_DIM)

    ref = jax.block_until_ready(vae_forward_ref(x, params))

    # f32 output path (matches the PyTorch module's output dtype).
    out_f32 = jax.block_until_ready(vae_forward_pallas(x, params))
    assert out_f32.shape == (N, C * H * W), out_f32.shape
    err_f32 = float(jnp.max(jnp.abs(out_f32 - ref)))
    assert jnp.allclose(out_f32, ref, atol=2e-3, rtol=2e-3), err_f32

    # bf16 output path (memory-bound chips: ~25-30% faster on v6e).
    out_bf16 = jax.block_until_ready(
        vae_forward_pallas(x, params, out_dtype=jnp.bfloat16))
    assert out_bf16.dtype == jnp.bfloat16
    err_bf16 = float(jnp.max(jnp.abs(out_bf16.astype(jnp.float32) - ref)))
    assert jnp.allclose(out_bf16.astype(jnp.float32), ref,
                        atol=3e-2, rtol=3e-2), err_bf16

    print("KERNEL_OK")
</pallas_src>

<mosaic_0001>
module attributes {stable_mosaic.version = 11 : i64} {
  func.func @_vae_kernel(%arg0: i32, %arg1: memref<16x1024xf32, #tpu.memory_space<vmem>>, %arg2: memref<1024x768xbf16, #tpu.memory_space<vmem>>, %arg3: memref<1x768xf32, #tpu.memory_space<vmem>>, %arg4: memref<768x256xbf16, #tpu.memory_space<vmem>>, %arg5: memref<1x256xf32, #tpu.memory_space<vmem>>, %arg6: memref<256x128xbf16, #tpu.memory_space<vmem>>, %arg7: memref<1x128xf32, #tpu.memory_space<vmem>>, %arg8: memref<128x256xbf16, #tpu.memory_space<vmem>>, %arg9: memref<1x256xf32, #tpu.memory_space<vmem>>, %arg10: memref<256x768xbf16, #tpu.memory_space<vmem>>, %arg11: memref<1x768xf32, #tpu.memory_space<vmem>>, %arg12: memref<768x1024xbf16, #tpu.memory_space<vmem>>, %arg13: memref<1x1024xf32, #tpu.memory_space<vmem>>, %arg14: memref<16x1024xf32, #tpu.memory_space<vmem>>) attributes {dimension_semantics = [#tpu.dimension_semantics<parallel>], iteration_bounds = array<i64: 1>, scalar_prefetch = 0 : i64, scratch_operands = 0 : i64, tpu.core_type = #tpu.core_type<tc>, window_params = [{transform_indices = @transform_0, window_bounds = array<i64: 16, 1024>}, {pipeline_mode = #tpu.pipeline_mode<synchronous>, transform_indices = @transform_1, window_bounds = array<i64: 1024, 768>}, {pipeline_mode = #tpu.pipeline_mode<synchronous>, transform_indices = @transform_2, window_bounds = array<i64: 1, 768>}, {pipeline_mode = #tpu.pipeline_mode<synchronous>, transform_indices = @transform_3, window_bounds = array<i64: 768, 256>}, {pipeline_mode = #tpu.pipeline_mode<synchronous>, transform_indices = @transform_4, window_bounds = array<i64: 1, 256>}, {pipeline_mode = #tpu.pipeline_mode<synchronous>, transform_indices = @transform_5, window_bounds = array<i64: 256, 128>}, {pipeline_mode = #tpu.pipeline_mode<synchronous>, transform_indices = @transform_6, window_bounds = array<i64: 1, 128>}, {pipeline_mode = #tpu.pipeline_mode<synchronous>, transform_indices = @transform_7, window_bounds = array<i64: 128, 256>}, {pipeline_mode = #tpu.pipeline_mode<synchronous>, transform_indices = @transform_8, window_bounds = array<i64: 1, 256>}, {pipeline_mode = #tpu.pipeline_mode<synchronous>, transform_indices = @transform_9, window_bounds = array<i64: 256, 768>}, {pipeline_mode = #tpu.pipeline_mode<synchronous>, transform_indices = @transform_10, window_bounds = array<i64: 1, 768>}, {pipeline_mode = #tpu.pipeline_mode<synchronous>, transform_indices = @transform_11, window_bounds = array<i64: 768, 1024>}, {pipeline_mode = #tpu.pipeline_mode<synchronous>, transform_indices = @transform_12, window_bounds = array<i64: 1, 1024>}, {transform_indices = @transform_13, window_bounds = array<i64: 16, 1024>}]} {
    %c0 = arith.constant 0 : index
    %c0_0 = arith.constant 0 : index
    %0 = vector.load %arg1[%c0, %c0_0] : memref<16x1024xf32, #tpu.memory_space<vmem>>, vector<16x1024xf32>
    %1 = arith.truncf %0 : vector<16x1024xf32> to vector<16x1024xbf16>
    %c0_1 = arith.constant 0 : index
    %c0_2 = arith.constant 0 : index
    %2 = vector.load %arg2[%c0_1, %c0_2] : memref<1024x768xbf16, #tpu.memory_space<vmem>>, vector<1024x768xbf16>
    %cst = arith.constant dense<0.000000e+00> : vector<16x768xf32>
    %3 = tpu.matmul %1, %2, %cst {dimension_numbers = #tpu.dot_dimension_numbers<[1], [0], [0], [1], [0, 0, 1, 1], [], []>} : vector<16x1024xbf16>, vector<1024x768xbf16>, vector<16x768xf32> -> vector<16x768xf32>
    %c0_3 = arith.constant 0 : index
    %c0_4 = arith.constant 0 : index
    %4 = vector.load %arg3[%c0_3, %c0_4] : memref<1x768xf32, #tpu.memory_space<vmem>>, vector<1x768xf32>
    %5 = vector.broadcast %4 : vector<1x768xf32> to vector<16x768xf32>
    %6 = arith.addf %3, %5 : vector<16x768xf32>
    %cst_5 = arith.constant 0.000000e+00 : f32
    %7 = vector.broadcast %cst_5 : f32 to vector<16x768xf32>
    %8 = arith.maximumf %6, %7 : vector<16x768xf32>
    %9 = arith.truncf %8 : vector<16x768xf32> to vector<16x768xbf16>
    %c0_6 = arith.constant 0 : index
    %c0_7 = arith.constant 0 : index
    %10 = vector.load %arg4[%c0_6, %c0_7] : memref<768x256xbf16, #tpu.memory_space<vmem>>, vector<768x256xbf16>
    %cst_8 = arith.constant dense<0.000000e+00> : vector<16x256xf32>
    %11 = tpu.matmul %9, %10, %cst_8 {dimension_numbers = #tpu.dot_dimension_numbers<[1], [0], [0], [1], [0, 0, 1, 1], [], []>} : vector<16x768xbf16>, vector<768x256xbf16>, vector<16x256xf32> -> vector<16x256xf32>
    %c0_9 = arith.constant 0 : index
    %c0_10 = arith.constant 0 : index
    %12 = vector.load %arg5[%c0_9, %c0_10] : memref<1x256xf32, #tpu.memory_space<vmem>>, vector<1x256xf32>
    %13 = vector.broadcast %12 : vector<1x256xf32> to vector<16x256xf32>
    %14 = arith.addf %11, %13 : vector<16x256xf32>
    %cst_11 = arith.constant 0.000000e+00 : f32
    %15 = vector.broadcast %cst_11 : f32 to vector<16x256xf32>
    %16 = arith.maximumf %14, %15 : vector<16x256xf32>
    %17 = arith.truncf %16 : vector<16x256xf32> to vector<16x256xbf16>
    %c0_12 = arith.constant 0 : index
    %c0_13 = arith.constant 0 : index
    %18 = vector.load %arg6[%c0_12, %c0_13] : memref<256x128xbf16, #tpu.memory_space<vmem>>, vector<256x128xbf16>
    %cst_14 = arith.constant dense<0.000000e+00> : vector<16x128xf32>
    %19 = tpu.matmul %17, %18, %cst_14 {dimension_numbers = #tpu.dot_dimension_numbers<[1], [0], [0], [1], [0, 0, 1, 1], [], []>} : vector<16x256xbf16>, vector<256x128xbf16>, vector<16x128xf32> -> vector<16x128xf32>
    %c0_15 = arith.constant 0 : index
    %c0_16 = arith.constant 0 : index
    %20 = vector.load %arg7[%c0_15, %c0_16] : memref<1x128xf32, #tpu.memory_space<vmem>>, vector<1x128xf32>
    %21 = vector.broadcast %20 : vector<1x128xf32> to vector<16x128xf32>
    %22 = arith.addf %19, %21 : vector<16x128xf32>
    %cst_17 = arith.constant 0.000000e+00 : f32
    %23 = vector.broadcast %cst_17 : f32 to vector<16x128xf32>
    %24 = arith.maximumf %22, %23 : vector<16x128xf32>
    %25 = arith.truncf %24 : vector<16x128xf32> to vector<16x128xbf16>
    %c0_18 = arith.constant 0 : index
    %c0_19 = arith.constant 0 : index
    %26 = vector.load %arg8[%c0_18, %c0_19] : memref<128x256xbf16, #tpu.memory_space<vmem>>, vector<128x256xbf16>
    %cst_20 = arith.constant dense<0.000000e+00> : vector<16x256xf32>
    %27 = tpu.matmul %25, %26, %cst_20 {dimension_numbers = #tpu.dot_dimension_numbers<[1], [0], [0], [1], [0, 0, 1, 1], [], []>} : vector<16x128xbf16>, vector<128x256xbf16>, vector<16x256xf32> -> vector<16x256xf32>
    %c0_21 = arith.constant 0 : index
    %c0_22 = arith.constant 0 : index
    %28 = vector.load %arg9[%c0_21, %c0_22] : memref<1x256xf32, #tpu.memory_space<vmem>>, vector<1x256xf32>
    %29 = vector.broadcast %28 : vector<1x256xf32> to vector<16x256xf32>
    %30 = arith.addf %27, %29 : vector<16x256xf32>
    %cst_23 = arith.constant 0.000000e+00 : f32
    %31 = vector.broadcast %cst_23 : f32 to vector<16x256xf32>
    %32 = arith.maximumf %30, %31 : vector<16x256xf32>
    %33 = arith.truncf %32 : vector<16x256xf32> to vector<16x256xbf16>
    %c0_24 = arith.constant 0 : index
    %c0_25 = arith.constant 0 : index
    %34 = vector.load %arg10[%c0_24, %c0_25] : memref<256x768xbf16, #tpu.memory_space<vmem>>, vector<256x768xbf16>
    %cst_26 = arith.constant dense<0.000000e+00> : vector<16x768xf32>
    %35 = tpu.matmul %33, %34, %cst_26 {dimension_numbers = #tpu.dot_dimension_numbers<[1], [0], [0], [1], [0, 0, 1, 1], [], []>} : vector<16x256xbf16>, vector<256x768xbf16>, vector<16x768xf32> -> vector<16x768xf32>
    %c0_27 = arith.constant 0 : index
    %c0_28 = arith.constant 0 : index
    %36 = vector.load %arg11[%c0_27, %c0_28] : memref<1x768xf32, #tpu.memory_space<vmem>>, vector<1x768xf32>
    %37 = vector.broadcast %36 : vector<1x768xf32> to vector<16x768xf32>
    %38 = arith.addf %35, %37 : vector<16x768xf32>
    %cst_29 = arith.constant 0.000000e+00 : f32
    %39 = vector.broadcast %cst_29 : f32 to vector<16x768xf32>
    %40 = arith.maximumf %38, %39 : vector<16x768xf32>
    %41 = arith.truncf %40 : vector<16x768xf32> to vector<16x768xbf16>
    %c0_30 = arith.constant 0 : index
    %c0_31 = arith.constant 0 : index
    %42 = vector.load %arg12[%c0_30, %c0_31] : memref<768x1024xbf16, #tpu.memory_space<vmem>>, vector<768x1024xbf16>
    %cst_32 = arith.constant dense<0.000000e+00> : vector<16x1024xf32>
    %43 = tpu.matmul %41, %42, %cst_32 {dimension_numbers = #tpu.dot_dimension_numbers<[1], [0], [0], [1], [0, 0, 1, 1], [], []>} : vector<16x768xbf16>, vector<768x1024xbf16>, vector<16x1024xf32> -> vector<16x1024xf32>
    %c0_33 = arith.constant 0 : index
    %c0_34 = arith.constant 0 : index
    %44 = vector.load %arg13[%c0_33, %c0_34] : memref<1x1024xf32, #tpu.memory_space<vmem>>, vector<1x1024xf32>
    %45 = vector.broadcast %44 : vector<1x1024xf32> to vector<16x1024xf32>
    %46 = arith.addf %43, %45 : vector<16x1024xf32>
    %c0_35 = arith.constant 0 : index
    %c0_36 = arith.constant 0 : index
    %47 = vector.load %arg14[%c0_35, %c0_36] : memref<16x1024xf32, #tpu.memory_space<vmem>>, vector<16x1024xf32>
    tpu.vector_store %arg14[%c0_35, %c0_36], %46 {strides = array<i32>} : memref<16x1024xf32, #tpu.memory_space<vmem>>, vector<16x1024xf32>,
    return
  }
  func.func @transform_0(%arg0: i32) -> (i32, i32) {
    %c0_i32 = arith.constant 0 : i32
    %c0_i32_0 = arith.constant 0 : i32
    return %arg0, %c0_i32 : i32, i32
  }
  func.func @transform_1(%arg0: i32) -> (i32, i32) {
    %c0_i32 = arith.constant 0 : i32
    %c0_i32_0 = arith.constant 0 : i32
    %c0_i32_1 = arith.constant 0 : i32
    return %c0_i32, %c0_i32_0 : i32, i32
  }
  func.func @transform_2(%arg0: i32) -> (i32, i32) {
    %c0_i32 = arith.constant 0 : i32
    %c0_i32_0 = arith.constant 0 : i32
    %c0_i32_1 = arith.constant 0 : i32
    return %c0_i32, %c0_i32_0 : i32, i32
  }
  func.func @transform_3(%arg0: i32) -> (i32, i32) {
    %c0_i32 = arith.constant 0 : i32
    %c0_i32_0 = arith.constant 0 : i32
    %c0_i32_1 = arith.constant 0 : i32
    return %c0_i32, %c0_i32_0 : i32, i32
  }
  func.func @transform_4(%arg0: i32) -> (i32, i32) {
    %c0_i32 = arith.constant 0 : i32
    %c0_i32_0 = arith.constant 0 : i32
    %c0_i32_1 = arith.constant 0 : i32
    return %c0_i32, %c0_i32_0 : i32, i32
  }
  func.func @transform_5(%arg0: i32) -> (i32, i32) {
    %c0_i32 = arith.constant 0 : i32
    %c0_i32_0 = arith.constant 0 : i32
    %c0_i32_1 = arith.constant 0 : i32
    return %c0_i32, %c0_i32_0 : i32, i32
  }
  func.func @transform_6(%arg0: i32) -> (i32, i32) {
    %c0_i32 = arith.constant 0 : i32
    %c0_i32_0 = arith.constant 0 : i32
    %c0_i32_1 = arith.constant 0 : i32
    return %c0_i32, %c0_i32_0 : i32, i32
  }
  func.func @transform_7(%arg0: i32) -> (i32, i32) {
    %c0_i32 = arith.constant 0 : i32
    %c0_i32_0 = arith.constant 0 : i32
    %c0_i32_1 = arith.constant 0 : i32
    return %c0_i32, %c0_i32_0 : i32, i32
  }
  func.func @transform_8(%arg0: i32) -> (i32, i32) {
    %c0_i32 = arith.constant 0 : i32
    %c0_i32_0 = arith.constant 0 : i32
    %c0_i32_1 = arith.constant 0 : i32
    return %c0_i32, %c0_i32_0 : i32, i32
  }
  func.func @transform_9(%arg0: i32) -> (i32, i32) {
    %c0_i32 = arith.constant 0 : i32
    %c0_i32_0 = arith.constant 0 : i32
    %c0_i32_1 = arith.constant 0 : i32
    return %c0_i32, %c0_i32_0 : i32, i32
  }
  func.func @transform_10(%arg0: i32) -> (i32, i32) {
    %c0_i32 = arith.constant 0 : i32
    %c0_i32_0 = arith.constant 0 : i32
    %c0_i32_1 = arith.constant 0 : i32
    return %c0_i32, %c0_i32_0 : i32, i32
  }
  func.func @transform_11(%arg0: i32) -> (i32, i32) {
    %c0_i32 = arith.constant 0 : i32
    %c0_i32_0 = arith.constant 0 : i32
    %c0_i32_1 = arith.constant 0 : i32
    return %c0_i32, %c0_i32_0 : i32, i32
  }
  func.func @transform_12(%arg0: i32) -> (i32, i32) {
    %c0_i32 = arith.constant 0 : i32
    %c0_i32_0 = arith.constant 0 : i32
    %c0_i32_1 = arith.constant 0 : i32
    return %c0_i32, %c0_i32_0 : i32, i32
  }
  func.func @transform_13(%arg0: i32) -> (i32, i32) {
    %c0_i32 = arith.constant 0 : i32
    %c0_i32_0 = arith.constant 0 : i32
    return %arg0, %c0_i32 : i32, i32
  }
}

</mosaic_0001>

<llo_original>
// kernel: tpu_custom_call.1
$region0: #{tpu_custom_call.1}
  #allocation0 [shape = 'u32[]', space=smem, size = 0x4, offset = 0x4, fixed_abs, tag = 'smem constant byte address 0x4 - core index']
  #allocation1 [shape = 'u32[144,128]{1,0:T(1,128)}', space=vmem, size = 0x12000, scoped, tag = 'internal scratch']
  %s0 = inlined_call_operand.hbm [shape: f32[16,1024], index: 0, kind: input, shape index: {}]
  %s1 = inlined_call_operand.hbm [shape: bf16[1024,768], index: 1, kind: input, shape index: {}]
  %s2 = inlined_call_operand.hbm [shape: f32[1,768], index: 2, kind: input, shape index: {}]
  %s3 = inlined_call_operand.hbm [shape: bf16[768,256], index: 3, kind: input, shape index: {}]
  %s4 = inlined_call_operand.hbm [shape: f32[1,256], index: 4, kind: input, shape index: {}]
  %s5 = inlined_call_operand.hbm [shape: bf16[256,128], index: 5, kind: input, shape index: {}]
  %s6 = inlined_call_operand.hbm [shape: f32[1,128], index: 6, kind: input, shape index: {}]
  %s7 = inlined_call_operand.hbm [shape: bf16[128,256], index: 7, kind: input, shape index: {}]
  %s8 = inlined_call_operand.hbm [shape: f32[1,256], index: 8, kind: input, shape index: {}]
  %s9 = inlined_call_operand.hbm [shape: bf16[256,768], index: 9, kind: input, shape index: {}]
  %s10 = inlined_call_operand.hbm [shape: f32[1,768], index: 10, kind: input, shape index: {}]
  %s11 = inlined_call_operand.hbm [shape: bf16[768,1024], index: 11, kind: input, shape index: {}]
  %s12 = inlined_call_operand.hbm [shape: f32[1,1024], index: 12, kind: input, shape index: {}]
  %s13 = inlined_call_operand.hbm [shape: f32[16,1024], index: 13, kind: output, shape index: {}]
  %s14 = sld [smem:[#allocation0]]
  $region114: #{tpu_custom_call.1} parent=0
    _
  %s16 = ssub.s32 1, %s14
  %s17 = scalar_select 0, %s16, %s14
  $region1: #{tpu_custom_call.1} parent=0
    #allocation2 [shape = 'u8[65536]{0}', space=vmem, size = 0x10000, scoped, tag = 'input window, operand 0, single buffered']
    #allocation3 [shape = 's32[1]{0}', space=sflag, size = 0x4, scoped, tag = 'scoped memory for tpu_custom_call.1']
    #allocation4 [shape = 's32[1]{0}', space=sflag, size = 0x4, scoped, tag = 'scoped memory for tpu_custom_call.1']
    #allocation5 [shape = 'u8[1572864]{0}', space=vmem, size = 0x180000, scoped, tag = 'input window, operand 1, single buffered']
    #allocation6 [shape = 's32[1]{0}', space=sflag, size = 0x4, scoped, tag = 'scoped memory for tpu_custom_call.1']
    #allocation7 [shape = 'u8[3072]{0}', space=vmem, size = 0xc00, scoped, tag = 'input window, operand 2, single buffered']
    #allocation8 [shape = 'u8[393216]{0}', space=vmem, size = 0x60000, scoped, tag = 'input window, operand 3, single buffered']
    #allocation9 [shape = 's32[1]{0}', space=sflag, size = 0x4, scoped, tag = 'scoped memory for tpu_custom_call.1']
    #allocation10 [shape = 'u8[1024]{0}', space=vmem, size = 0x400, scoped, tag = 'input window, operand 4, single buffered']
    #allocation11 [shape = 'u8[65536]{0}', space=vmem, size = 0x10000, scoped, tag = 'input window, operand 5, single buffered']
    #allocation12 [shape = 's32[1]{0}', space=sflag, size = 0x4, scoped, tag = 'scoped memory for tpu_custom_call.1']
    #allocation13 [shape = 'u8[512]{0}', space=vmem, size = 0x400, scoped, tag = 'input window, operand 6, single buffered']
    #allocation14 [shape = 'u8[65536]{0}', space=vmem, size = 0x10000, scoped, tag = 'input window, operand 7, single buffered']
    #allocation15 [shape = 's32[1]{0}', space=sflag, size = 0x4, scoped, tag = 'scoped memory for tpu_custom_call.1']
    #allocation16 [shape = 'u8[1024]{0}', space=vmem, size = 0x400, scoped, tag = 'input window, operand 8, single buffered']
    #allocation17 [shape = 'u8[393216]{0}', space=vmem, size = 0x60000, scoped, tag = 'input window, operand 9, single buffered']
    #allocation18 [shape = 's32[1]{0}', space=sflag, size = 0x4, scoped, tag = 'scoped memory for tpu_custom_call.1']
    #allocation19 [shape = 'u8[3072]{0}', space=vmem, size = 0xc00, scoped, tag = 'input window, operand 10, single buffered']
    #allocation20 [shape = 'u8[1572864]{0}', space=vmem, size = 0x180000, scoped, tag = 'input window, operand 11, single buffered']
    #allocation21 [shape = 's32[1]{0}', space=sflag, size = 0x4, scoped, tag = 'scoped memory for tpu_custom_call.1']
    #allocation22 [shape = 'u8[4096]{0}', space=vmem, size = 0x1000, scoped, tag = 'input window, operand 12, single buffered']
    #allocation23 [shape = 'u8[65536]{0}', space=vmem, size = 0x10000, scoped, tag = 'output window, operand 0, single buffered']
    %18 = vsyncpa [#allocation3], 0
    %19 = vsyncpa [#allocation6], 0
    %20 = vsyncpa [#allocation9], 0
    %21 = vsyncpa [#allocation12], 0
    %22 = vsyncpa [#allocation15], 0
    %23 = vsyncpa [#allocation18], 0
    %24 = vsyncpa [#allocation21], 0
    %25 = vsyncpa [#allocation4], 0
    // Predicated region
    $region2: #{tpu_custom_call.1} parent=1 // pred_check
      _
    $region3: #{tpu_custom_call.1} parent=1 // pred_check_branch
      %27 = sbr.rel (0) target = $region5
    $region4: #{tpu_custom_call.1} parent=1 // pred_region
      %s29 = ssub.s32 2048, 2048
      %30 = vsyncadd [#allocation3], %s29
      %s31 = sshll.u32 [#allocation2], 4
      %s32 = int_to_ptr.vmem [resolvable:$true] %s31
      %37 = dma.hbm_to_vmem [thread:$0]  %s0, 2048, %s32, [#allocation3], 1024, 1024, 64
    $region5: #{tpu_custom_call.1} parent=1 // pred_fallthru
      _
    // Predicated region
    $region6: #{tpu_custom_call.1} parent=1 // pred_check
      _
    $region7: #{tpu_custom_call.1} parent=1 // pred_check_branch
      %39 = sbr.rel (0) target = $region9
    $region8: #{tpu_custom_call.1} parent=1 // pred_region
      %s41 = ssub.s32 49152, 49152
      %42 = vsyncadd [#allocation6], %s41
      %s43 = sshll.u32 [#allocation5], 4
      %s44 = int_to_ptr.vmem [resolvable:$true] %s43
      %49 = dma.hbm_to_vmem [thread:$0]  %s1, 49152, %s44, [#allocation6], 384, 384, 24
    $region9: #{tpu_custom_call.1} parent=1 // pred_fallthru
      _
    // Predicated region
    $region10: #{tpu_custom_call.1} parent=1 // pred_check
      _
    $region11: #{tpu_custom_call.1} parent=1 // pred_check_branch
      %51 = sbr.rel (0) target = $region13
    $region12: #{tpu_custom_call.1} parent=1 // pred_region
      %s53 = ssub.s32 96, 96
      %54 = vsyncadd [#allocation6], %s53
      %s56 = sshll.u32 [#allocation7], 4
      %s57 = int_to_ptr.vmem [resolvable:$true] %s56
      %59 = dma.hbm_to_vmem [thread:$0]  %s2, 96, %s57, [#allocation6]
    $region13: #{tpu_custom_call.1} parent=1 // pred_fallthru
      _
    // Predicated region
    $region14: #{tpu_custom_call.1} parent=1 // pred_check
      _
    $region15: #{tpu_custom_call.1} parent=1 // pred_check_branch
      %61 = sbr.rel (0) target = $region17
    $region16: #{tpu_custom_call.1} parent=1 // pred_region
      %s63 = ssub.s32 12288, 12288
      %64 = vsyncadd [#allocation9], %s63
      %s65 = sshll.u32 [#allocation8], 4
      %s66 = int_to_ptr.vmem [resolvable:$true] %s65
      %71 = dma.hbm_to_vmem [thread:$0]  %s3, 12288, %s66, [#allocation9], 128, 128, 8
    $region17: #{tpu_custom_call.1} parent=1 // pred_fallthru
      _
    // Predicated region
    $region18: #{tpu_custom_call.1} parent=1 // pred_check
      _
    $region19: #{tpu_custom_call.1} parent=1 // pred_check_branch
      %73 = sbr.rel (0) target = $region21
    $region20: #{tpu_custom_call.1} parent=1 // pred_region
      %s75 = ssub.s32 32, 32
      %76 = vsyncadd [#allocation9], %s75
      %s78 = sshll.u32 [#allocation10], 4
      %s79 = int_to_ptr.vmem [resolvable:$true] %s78
      %81 = dma.hbm_to_vmem [thread:$0]  %s4, 32, %s79, [#allocation9]
    $region21: #{tpu_custom_call.1} parent=1 // pred_fallthru
      _
    // Predicated region
    $region22: #{tpu_custom_call.1} parent=1 // pred_check
      _
    $region23: #{tpu_custom_call.1} parent=1 // pred_check_branch
      %83 = sbr.rel (0) target = $region25
    $region24: #{tpu_custom_call.1} parent=1 // pred_region
      %s85 = ssub.s32 2048, 2048
      %86 = vsyncadd [#allocation12], %s85
      %s87 = sshll.u32 [#allocation11], 4
      %s88 = int_to_ptr.vmem [resolvable:$true] %s87
      %93 = dma.hbm_to_vmem [thread:$0]  %s5, 2048, %s88, [#allocation12], 64, 64, 4
    $region25: #{tpu_custom_call.1} parent=1 // pred_fallthru
      _
    // Predicated region
    $region26: #{tpu_custom_call.1} parent=1 // pred_check
      _
    $region27: #{tpu_custom_call.1} parent=1 // pred_check_branch
      %95 = sbr.rel (0) target = $region29
    $region28: #{tpu_custom_call.1} parent=1 // pred_region
      %s97 = ssub.s32 16, 16
      %98 = vsyncadd [#allocation12], %s97
      %s100 = sshll.u32 [#allocation13], 4
      %s101 = int_to_ptr.vmem [resolvable:$true] %s100
      %103 = dma.hbm_to_vmem [thread:$0]  %s6, 16, %s101, [#allocation12]
    $region29: #{tpu_custom_call.1} parent=1 // pred_fallthru
      _
    // Predicated region
    $region30: #{tpu_custom_call.1} parent=1 // pred_check
      _
    $region31: #{tpu_custom_call.1} parent=1 // pred_check_branch
      %105 = sbr.rel (0) target = $region33
    $region32: #{tpu_custom_call.1} parent=1 // pred_region
      %s107 = ssub.s32 2048, 2048
      %108 = vsyncadd [#allocation15], %s107
      %s109 = sshll.u32 [#allocation14], 4
      %s110 = int_to_ptr.vmem [resolvable:$true] %s109
      %115 = dma.hbm_to_vmem [thread:$0]  %s7, 2048, %s110, [#allocation15], 128, 128, 8
    $region33: #{tpu_custom_call.1} parent=1 // pred_fallthru
      _
    // Predicated region
    $region34: #{tpu_custom_call.1} parent=1 // pred_check
      _
    $region35: #{tpu_custom_call.1} parent=1 // pred_check_branch
      %117 = sbr.rel (0) target = $region37
    $region36: #{tpu_custom_call.1} parent=1 // pred_region
      %s119 = ssub.s32 32, 32
      %120 = vsyncadd [#allocation15], %s119
      %s122 = sshll.u32 [#allocation16], 4
      %s123 = int_to_ptr.vmem [resolvable:$true] %s122
      %125 = dma.hbm_to_vmem [thread:$0]  %s8, 32, %s123, [#allocation15]
    $region37: #{tpu_custom_call.1} parent=1 // pred_fallthru
      _
    // Predicated region
    $region38: #{tpu_custom_call.1} parent=1 // pred_check
      _
    $region39: #{tpu_custom_call.1} parent=1 // pred_check_branch
      %127 = sbr.rel (0) target = $region41
    $region40: #{tpu_custom_call.1} parent=1 // pred_region
      %s129 = ssub.s32 12288, 12288
      %130 = vsyncadd [#allocation18], %s129
      %s131 = sshll.u32 [#allocation17], 4
      %s132 = int_to_ptr.vmem [resolvable:$true] %s131
      %137 = dma.hbm_to_vmem [thread:$0]  %s9, 12288, %s132, [#allocation18], 384, 384, 24
    $region41: #{tpu_custom_call.1} parent=1 // pred_fallthru
      _
    // Predicated region
    $region42: #{tpu_custom_call.1} parent=1 // pred_check
      _
    $region43: #{tpu_custom_call.1} parent=1 // pred_check_branch
      %139 = sbr.rel (0) target = $region45
    $region44: #{tpu_custom_call.1} parent=1 // pred_region
      %s141 = ssub.s32 96, 96
      %142 = vsyncadd [#allocation18], %s141
      %s144 = sshll.u32 [#allocation19], 4
      %s145 = int_to_ptr.vmem [resolvable:$true] %s144
      %147 = dma.hbm_to_vmem [thread:$0]  %s10, 96, %s145, [#allocation18]
    $region45: #{tpu_custom_call.1} parent=1 // pred_fallthru
      _
    // Predicated region
    $region46: #{tpu_custom_call.1} parent=1 // pred_check
      _
    $region47: #{tpu_custom_call.1} parent=1 // pred_check_branch
      %149 = sbr.rel (0) target = $region49
    $region48: #{tpu_custom_call.1} parent=1 // pred_region
      %s151 = ssub.s32 49152, 49152
      %152 = vsyncadd [#allocation21], %s151
      %s153 = sshll.u32 [#allocation20], 4
      %s154 = int_to_ptr.vmem [resolvable:$true] %s153
      %159 = dma.hbm_to_vmem [thread:$0]  %s11, 49152, %s154, [#allocation21], 512, 512, 32
    $region49: #{tpu_custom_call.1} parent=1 // pred_fallthru
      _
    // Predicated region
    $region50: #{tpu_custom_call.1} parent=1 // pred_check
      _
    $region51: #{tpu_custom_call.1} parent=1 // pred_check_branch
      %161 = sbr.rel (0) target = $region53
    $region52: #{tpu_custom_call.1} parent=1 // pred_region
      %s163 = ssub.s32 128, 128
      %164 = vsyncadd [#allocation21], %s163
      %s166 = sshll.u32 [#allocation22], 4
      %s167 = int_to_ptr.vmem [resolvable:$true] %s166
      %169 = dma.hbm_to_vmem [thread:$0]  %s12, 128, %s167, [#allocation21]
    $region53: #{tpu_custom_call.1} parent=1 // pred_fallthru
      _
    // Predicated region
    $region54: #{tpu_custom_call.1} parent=1 // pred_check
      _
    $region55: #{tpu_custom_call.1} parent=1 // pred_check_branch
      %171 = sbr.rel (0) target = $region57
    $region56: #{tpu_custom_call.1} parent=1 // pred_region
      %172 = dma.done [#allocation3], 2048
    $region57: #{tpu_custom_call.1} parent=1 // pred_fallthru
      _
    // Predicated region
    $region58: #{tpu_custom_call.1} parent=1 // pred_check
      _
    $region59: #{tpu_custom_call.1} parent=1 // pred_check_branch
      %174 = sbr.rel (0) target = $region61
    $region60: #{tpu_custom_call.1} parent=1 // pred_region
      %175 = dma.done [#allocation6], 49152
    $region61: #{tpu_custom_call.1} parent=1 // pred_fallthru
      _
    // Predicated region
    $region62: #{tpu_custom_call.1} parent=1 // pred_check
      _
    $region63: #{tpu_custom_call.1} parent=1 // pred_check_branch
      %177 = sbr.rel (0) target = $region65
    $region64: #{tpu_custom_call.1} parent=1 // pred_region
      %178 = dma.done [#allocation6], 96
    $region65: #{tpu_custom_call.1} parent=1 // pred_fallthru
      _
    // Predicated region
    $region66: #{tpu_custom_call.1} parent=1 // pred_check
      _
    $region67: #{tpu_custom_call.1} parent=1 // pred_check_branch
      %180 = sbr.rel (0) target = $region69
    $region68: #{tpu_custom_call.1} parent=1 // pred_region
      %181 = dma.done [#allocation9], 12288
    $region69: #{tpu_custom_call.1} parent=1 // pred_fallthru
      _
    // Predicated region
    $region70: #{tpu_custom_call.1} parent=1 // pred_check
      _
    $region71: #{tpu_custom_call.1} parent=1 // pred_check_branch
      %183 = sbr.rel (0) target = $region73
    $region72: #{tpu_custom_call.1} parent=1 // pred_region
      %184 = dma.done [#allocation9], 32
    $region73: #{tpu_custom_call.1} parent=1 // pred_fallthru
      _
    // Predicated region
    $region74: #{tpu_custom_call.1} parent=1 // pred_check
      _
    $region75: #{tpu_custom_call.1} parent=1 // pred_check_branch
      %186 = sbr.rel (0) target = $region77
    $region76: #{tpu_custom_call.1} parent=1 // pred_region
      %187 = dma.done [#allocation12], 2048
    $region77: #{tpu_custom_call.1} parent=1 // pred_fallthru
      _
    // Predicated region
    $region78: #{tpu_custom_call.1} parent=1 // pred_check
      _
    $region79: #{tpu_custom_call.1} parent=1 // pred_check_branch
      %189 = sbr.rel (0) target = $region81
    $region80: #{tpu_custom_call.1} parent=1 // pred_region
      %190 = dma.done [#allocation12], 16
    $region81: #{tpu_custom_call.1} parent=1 // pred_fallthru
      _
    // Predicated region
    $region82: #{tpu_custom_call.1} parent=1 // pred_check
      _
    $region83: #{tpu_custom_call.1} parent=1 // pred_check_branch
      %192 = sbr.rel (0) target = $region85
    $region84: #{tpu_custom_call.1} parent=1 // pred_region
      %193 = dma.done [#allocation15], 2048
    $region85: #{tpu_custom_call.1} parent=1 // pred_fallthru
      _
    // Predicated region
    $region86: #{tpu_custom_call.1} parent=1 // pred_check
      _
    $region87: #{tpu_custom_call.1} parent=1 // pred_check_branch
      %195 = sbr.rel (0) target = $region89
    $region88: #{tpu_custom_call.1} parent=1 // pred_region
      %196 = dma.done [#allocation15], 32
    $region89: #{tpu_custom_call.1} parent=1 // pred_fallthru
      _
    // Predicated region
    $region90: #{tpu_custom_call.1} parent=1 // pred_check
      _
    $region91: #{tpu_custom_call.1} parent=1 // pred_check_branch
      %198 = sbr.rel (0) target = $region93
    $region92: #{tpu_custom_call.1} parent=1 // pred_region
      %199 = dma.done [#allocation18], 12288
    $region93: #{tpu_custom_call.1} parent=1 // pred_fallthru
      _
    // Predicated region
    $region94: #{tpu_custom_call.1} parent=1 // pred_check
      _
    $region95: #{tpu_custom_call.1} parent=1 // pred_check_branch
      %201 = sbr.rel (0) target = $region97
    $region96: #{tpu_custom_call.1} parent=1 // pred_region
      %202 = dma.done [#allocation18], 96
    $region97: #{tpu_custom_call.1} parent=1 // pred_fallthru
      _
    // Predicated region
    $region98: #{tpu_custom_call.1} parent=1 // pred_check
      _
    $region99: #{tpu_custom_call.1} parent=1 // pred_check_branch
      %204 = sbr.rel (0) target = $region101
    $region100: #{tpu_custom_call.1} parent=1 // pred_region
      %205 = dma.done [#allocation21], 49152
    $region101: #{tpu_custom_call.1} parent=1 // pred_fallthru
      _
    // Predicated region
    $region102: #{tpu_custom_call.1} parent=1 // pred_check
      _
    $region103: #{tpu_custom_call.1} parent=1 // pred_check_branch
      %207 = sbr.rel (0) target = $region105
    $region104: #{tpu_custom_call.1} parent=1 // pred_region
      %208 = dma.done [#allocation21], 128
    $region105: #{tpu_custom_call.1} parent=1 // pred_fallthru
      _
    %v210 = vld [vmem:[#allocation2] sm:$0xff]
    %v211 = vld [vmem:[#allocation2 + $0x8] sm:$0xff]
    %v212 = vld [vmem:[#allocation2 + $0x10] sm:$0xff]
    %v213 = vld [vmem:[#allocation2 + $0x18] sm:$0xff]
    %v214 = vld [vmem:[#allocation2 + $0x20] sm:$0xff]
    %v215 = vld [vmem:[#allocation2 + $0x28] sm:$0xff]
    %v216 = vld [vmem:[#allocation2 + $0x30] sm:$0xff]
    %v217 = vld [vmem:[#allocation2 + $0x38] sm:$0xff]
    %v218 = vld [vmem:[#allocation2 + $0x40] sm:$0xff]
    %v219 = vld [vmem:[#allocation2 + $0x48] sm:$0xff]
    %v220 = vld [vmem:[#allocation2 + $0x50] sm:$0xff]
    %v221 = vld [vmem:[#allocation2 + $0x58] sm:$0xff]
    %v222 = vld [vmem:[#allocation2 + $0x60] sm:$0xff]
    %v223 = vld [vmem:[#allocation2 + $0x68] sm:$0xff]
    %v224 = vld [vmem:[#allocation2 + $0x70] sm:$0xff]
    %v225 = vld [vmem:[#allocation2 + $0x78] sm:$0xff]
    %v226 = vpack.c.bf16 %v218, %v210
    %v227 = vpack.c.bf16 %v219, %v211
    %v228 = vpack.c.bf16 %v220, %v212
    %v229 = vpack.c.bf16 %v221, %v213
    %v230 = vpack.c.bf16 %v222, %v214
    %v231 = vpack.c.bf16 %v223, %v215
    %v232 = vpack.c.bf16 %v224, %v216
    %v233 = vpack.c.bf16 %v225, %v217
    %v234 = vld [vmem:[#allocation5] sm:$0xff]
    %v235 = vld [vmem:[#allocation5 + $0x8] sm:$0xff]
    %v236 = vld [vmem:[#allocation5 + $0x10] sm:$0xff]
    %v237 = vld [vmem:[#allocation5 + $0x18] sm:$0xff]
    %v238 = vld [vmem:[#allocation5 + $0x20] sm:$0xff]
    %v239 = vld [vmem:[#allocation5 + $0x28] sm:$0xff]
    %v240 = vld [vmem:[#allocation5 + $0x30] sm:$0xff]
    %v241 = vld [vmem:[#allocation5 + $0x38] sm:$0xff]
    %v242 = vld [vmem:[#allocation5 + $0x40] sm:$0xff]
    %v243 = vld [vmem:[#allocation5 + $0x48] sm:$0xff]
    %v244 = vld [vmem:[#allocation5 + $0x50] sm:$0xff]
    %v245 = vld [vmem:[#allocation5 + $0x58] sm:$0xff]
    %v246 = vld [vmem:[#allocation5 + $0x60] sm:$0xff]
    %v247 = vld [vmem:[#allocation5 + $0x68] sm:$0xff]
    %v248 = vld [vmem:[#allocation5 + $0x70] sm:$0xff]
    %v249 = vld [vmem:[#allocation5 + $0x78] sm:$0xff]
    %v250 = vld [vmem:[#allocation5 + $0x80] sm:$0xff]
    %v251 = vld [vmem:[#allocation5 + $0x88] sm:$0xff]
    %v252 = vld [vmem:[#allocation5 + $0x90] sm:$0xff]
    %v253 = vld [vmem:[#allocation5 + $0x98] sm:$0xff]
    %v254 = vld [vmem:[#allocation5 + $0xa0] sm:$0xff]
    %v255 = vld [vmem:[#allocation5 + $0xa8] sm:$0xff]
    %v256 = vld [vmem:[#allocation5 + $0xb0] sm:$0xff]
    %v257 = vld [vmem:[#allocation5 + $0xb8] sm:$0xff]
    %v258 = vld [vmem:[#allocation5 + $0xc0] sm:$0xff]
    %v259 = vld [vmem:[#allocation5 + $0xc8] sm:$0xff]
    %v260 = vld [vmem:[#allocation5 + $0xd0] sm:$0xff]
    %v261 = vld [vmem:[#allocation5 + $0xd8] sm:$0xff]
    %v262 = vld [vmem:[#allocation5 + $0xe0] sm:$0xff]
    %v263 = vld [vmem:[#allocation5 + $0xe8] sm:$0xff]
    %v264 = vld [vmem:[#allocation5 + $0xf0] sm:$0xff]
    %v265 = vld [vmem:[#allocation5 + $0xf8] sm:$0xff]
    %v266 = vld [vmem:[#allocation5 + $0x100] sm:$0xff]
    %v267 = vld [vmem:[#allocation5 + $0x108] sm:$0xff]
    %v268 = vld [vmem:[#allocation5 + $0x110] sm:$0xff]
    %v269 = vld [vmem:[#allocation5 + $0x118] sm:$0xff]
    %v270 = vld [vmem:[#allocation5 + $0x120] sm:$0xff]
    %v271 = vld [vmem:[#allocation5 + $0x128] sm:$0xff]
    %v272 = vld [vmem:[#allocation5 + $0x130] sm:$0xff]
    %v273 = vld [vmem:[#allocation5 + $0x138] sm:$0xff]
    %v274 = vld [vmem:[#allocation5 + $0x140] sm:$0xff]
    %v275 = vld [vmem:[#allocation5 + $0x148] sm:$0xff]
    %v276 = vld [vmem:[#allocation5 + $0x150] sm:$0xff]
    %v277 = vld [vmem:[#allocation5 + $0x158] sm:$0xff]
    %v278 = vld [vmem:[#allocation5 + $0x160] sm:$0xff]
    %v279 = vld [vmem:[#allocation5 + $0x168] sm:$0xff]
    %v280 = vld [vmem:[#allocation5 + $0x170] sm:$0xff]
    %v281 = vld [vmem:[#allocation5 + $0x178] sm:$0xff]
    %v282 = vld [vmem:[#allocation5 + $0x180] sm:$0xff]
    %v283 = vld [vmem:[#allocation5 + $0x188] sm:$0xff]
    %v284 = vld [vmem:[#allocation5 + $0x190] sm:$0xff]
    %v285 = vld [vmem:[#allocation5 + $0x198] sm:$0xff]
    %v286 = vld [vmem:[#allocation5 + $0x1a0] sm:$0xff]
    %v287 = vld [vmem:[#allocation5 + $0x1a8] sm:$0xff]
    %v288 = vld [vmem:[#allocation5 + $0x1b0] sm:$0xff]
    %v289 = vld [vmem:[#allocation5 + $0x1b8] sm:$0xff]
    %v290 = vld [vmem:[#allocation5 + $0x1c0] sm:$0xff]
    %v291 = vld [vmem:[#allocation5 + $0x1c8] sm:$0xff]
    %v292 = vld [vmem:[#allocation5 + $0x1d0] sm:$0xff]
    %v293 = vld [vmem:[#allocation5 + $0x1d8] sm:$0xff]
    %v294 = vld [vmem:[#allocation5 + $0x1e0] sm:$0xff]
    %v295 = vld [vmem:[#allocation5 + $0x1e8] sm:$0xff]
    %v296 = vld [vmem:[#allocation5 + $0x1f0] sm:$0xff]
    %v297 = vld [vmem:[#allocation5 + $0x1f8] sm:$0xff]
    %v298 = vld [vmem:[#allocation5 + $0x200] sm:$0xff]
    %v299 = vld [vmem:[#allocation5 + $0x208] sm:$0xff]
    %v300 = vld [vmem:[#allocation5 + $0x210] sm:$0xff]
    %v301 = vld [vmem:[#allocation5 + $0x218] sm:$0xff]
    %v302 = vld [vmem:[#allocation5 + $0x220] sm:$0xff]
    %v303 = vld [vmem:[#allocation5 + $0x228] sm:$0xff]
    %v304 = vld [vmem:[#allocation5 + $0x230] sm:$0xff]
    %v305 = vld [vmem:[#allocation5 + $0x238] sm:$0xff]
    %v306 = vld [vmem:[#allocation5 + $0x240] sm:$0xff]
    %v307 = vld [vmem:[#allocation5 + $0x248] sm:$0xff]
    %v308 = vld [vmem:[#allocation5 + $0x250] sm:$0xff]
    %v309 = vld [vmem:[#allocation5 + $0x258] sm:$0xff]
    %v310 = vld [vmem:[#allocation5 + $0x260] sm:$0xff]
    %v311 = vld [vmem:[#allocation5 + $0x268] sm:$0xff]
    %v312 = vld [vmem:[#allocation5 + $0x270] sm:$0xff]
    %v313 = vld [vmem:[#allocation5 + $0x278] sm:$0xff]
    %v314 = vld [vmem:[#allocation5 + $0x280] sm:$0xff]
    %v315 = vld [vmem:[#allocation5 + $0x288] sm:$0xff]
    %v316 = vld [vmem:[#allocation5 + $0x290] sm:$0xff]
    %v317 = vld [vmem:[#allocation5 + $0x298] sm:$0xff]
    %v318 = vld [vmem:[#allocation5 + $0x2a0] sm:$0xff]
    %v319 = vld [vmem:[#allocation5 + $0x2a8] sm:$0xff]
    %v320 = vld [vmem:[#allocation5 + $0x2b0] sm:$0xff]
    %v321 = vld [vmem:[#allocation5 + $0x2b8] sm:$0xff]
    %v322 = vld [vmem:[#allocation5 + $0x2c0] sm:$0xff]
    %v323 = vld [vmem:[#allocation5 + $0x2c8] sm:$0xff]
    %v324 = vld [vmem:[#allocation5 + $0x2d0] sm:$0xff]
    %v325 = vld [vmem:[#allocation5 + $0x2d8] sm:$0xff]
    %v326 = vld [vmem:[#allocation5 + $0x2e0] sm:$0xff]
    %v327 = vld [vmem:[#allocation5 + $0x2e8] sm:$0xff]
    %v328 = vld [vmem:[#allocation5 + $0x2f0] sm:$0xff]
    %v329 = vld [vmem:[#allocation5 + $0x2f8] sm:$0xff]
    %v330 = vld [vmem:[#allocation5 + $0x300] sm:$0xff]
    %v331 = vld [vmem:[#allocation5 + $0x308] sm:$0xff]
    %v332 = vld [vmem:[#allocation5 + $0x310] sm:$0xff]
    %v333 = vld [vmem:[#allocation5 + $0x318] sm:$0xff]
    %v334 = vld [vmem:[#allocation5 + $0x320] sm:$0xff]
    %v335 = vld [vmem:[#allocation5 + $0x328] sm:$0xff]
    %v336 = vld [vmem:[#allocation5 + $0x330] sm:$0xff]
    %v337 = vld [vmem:[#allocation5 + $0x338] sm:$0xff]
    %v338 = vld [vmem:[#allocation5 + $0x340] sm:$0xff]
    %v339 = vld [vmem:[#allocation5 + $0x348] sm:$0xff]
    %v340 = vld [vmem:[#allocation5 + $0x350] sm:$0xff]
    %v341 = vld [vmem:[#allocation5 + $0x358] sm:$0xff]
    %v342 = vld [vmem:[#allocation5 + $0x360] sm:$0xff]
    %v343 = vld [vmem:[#allocation5 + $0x368] sm:$0xff]
    %v344 = vld [vmem:[#allocation5 + $0x370] sm:$0xff]
    %v345 = vld [vmem:[#allocation5 + $0x378] sm:$0xff]
    %v346 = vld [vmem:[#allocation5 + $0x380] sm:$0xff]
    %v347 = vld [vmem:[#allocation5 + $0x388] sm:$0xff]
    %v348 = vld [vmem:[#allocation5 + $0x390] sm:$0xff]
    %v349 = vld [vmem:[#allocation5 + $0x398] sm:$0xff]
    %v350 = vld [vmem:[#allocation5 + $0x3a0] sm:$0xff]
    %v351 = vld [vmem:[#allocation5 + $0x3a8] sm:$0xff]
    %v352 = vld [vmem:[#allocation5 + $0x3b0] sm:$0xff]
    %v353 = vld [vmem:[#allocation5 + $0x3b8] sm:$0xff]
    %v354 = vld [vmem:[#allocation5 + $0x3c0] sm:$0xff]
    %v355 = vld [vmem:[#allocation5 + $0x3c8] sm:$0xff]
    %v356 = vld [vmem:[#allocation5 + $0x3d0] sm:$0xff]
    %v357 = vld [vmem:[#allocation5 + $0x3d8] sm:$0xff]
    %v358 = vld [vmem:[#allocation5 + $0x3e0] sm:$0xff]
    %v359 = vld [vmem:[#allocation5 + $0x3e8] sm:$0xff]
    %v360 = vld [vmem:[#allocation5 + $0x3f0] sm:$0xff]
    %v361 = vld [vmem:[#allocation5 + $0x3f8] sm:$0xff]
    %v362 = vld [vmem:[#allocation5 + $0x400] sm:$0xff]
    %v363 = vld [vmem:[#allocation5 + $0x408] sm:$0xff]
    %v364 = vld [vmem:[#allocation5 + $0x410] sm:$0xff]
    %v365 = vld [vmem:[#allocation5 + $0x418] sm:$0xff]
    %v366 = vld [vmem:[#allocation5 + $0x420] sm:$0xff]
    %v367 = vld [vmem:[#allocation5 + $0x428] sm:$0xff]
    %v368 = vld [vmem:[#allocation5 + $0x430] sm:$0xff]
    %v369 = vld [vmem:[#allocation5 + $0x438] sm:$0xff]
    %v370 = vld [vmem:[#allocation5 + $0x440] sm:$0xff]
    %v371 = vld [vmem:[#allocation5 + $0x448] sm:$0xff]
    %v372 = vld [vmem:[#allocation5 + $0x450] sm:$0xff]
    %v373 = vld [vmem:[#allocation5 + $0x458] sm:$0xff]
    %v374 = vld [vmem:[#allocation5 + $0x460] sm:$0xff]
    %v375 = vld [vmem:[#allocation5 + $0x468] sm:$0xff]
    %v376 = vld [vmem:[#allocation5 + $0x470] sm:$0xff]
    %v377 = vld [vmem:[#allocation5 + $0x478] sm:$0xff]
    %v378 = vld [vmem:[#allocation5 + $0x480] sm:$0xff]
    %v379 = vld [vmem:[#allocation5 + $0x488] sm:$0xff]
    %v380 = vld [vmem:[#allocation5 + $0x490] sm:$0xff]
    %v381 = vld [vmem:[#allocation5 + $0x498] sm:$0xff]
    %v382 = vld [vmem:[#allocation5 + $0x4a0] sm:$0xff]
    %v383 = vld [vmem:[#allocation5 + $0x4a8] sm:$0xff]
    %v384 = vld [vmem:[#allocation5 + $0x4b0] sm:$0xff]
    %v385 = vld [vmem:[#allocation5 + $0x4b8] sm:$0xff]
    %v386 = vld [vmem:[#allocation5 + $0x4c0] sm:$0xff]
    %v387 = vld [vmem:[#allocation5 + $0x4c8] sm:$0xff]
    %v388 = vld [vmem:[#allocation5 + $0x4d0] sm:$0xff]
    %v389 = vld [vmem:[#allocation5 + $0x4d8] sm:$0xff]
    %v390 = vld [vmem:[#allocation5 + $0x4e0] sm:$0xff]
    %v391 = vld [vmem:[#allocation5 + $0x4e8] sm:$0xff]
    %v392 = vld [vmem:[#allocation5 + $0x4f0] sm:$0xff]
    %v393 = vld [vmem:[#allocation5 + $0x4f8] sm:$0xff]
    %v394 = vld [vmem:[#allocation5 + $0x500] sm:$0xff]
    %v395 = vld [vmem:[#allocation5 + $0x508] sm:$0xff]
    %v396 = vld [vmem:[#allocation5 + $0x510] sm:$0xff]
    %v397 = vld [vmem:[#allocation5 + $0x518] sm:$0xff]
    %v398 = vld [vmem:[#allocation5 + $0x520] sm:$0xff]
    %v399 = vld [vmem:[#allocation5 + $0x528] sm:$0xff]
    %v400 = vld [vmem:[#allocation5 + $0x530] sm:$0xff]
    %v401 = vld [vmem:[#allocation5 + $0x538] sm:$0xff]
    %v402 = vld [vmem:[#allocation5 + $0x540] sm:$0xff]
    %v403 = vld [vmem:[#allocation5 + $0x548] sm:$0xff]
    %v404 = vld [vmem:[#allocation5 + $0x550] sm:$0xff]
    %v405 = vld [vmem:[#allocation5 + $0x558] sm:$0xff]
    %v406 = vld [vmem:[#allocation5 + $0x560] sm:$0xff]
    %v407 = vld [vmem:[#allocation5 + $0x568] sm:$0xff]
    %v408 = vld [vmem:[#allocation5 + $0x570] sm:$0xff]
    %v409 = vld [vmem:[#allocation5 + $0x578] sm:$0xff]
    %v410 = vld [vmem:[#allocation5 + $0x580] sm:$0xff]
    %v411 = vld [vmem:[#allocation5 + $0x588] sm:$0xff]
    %v412 = vld [vmem:[#allocation5 + $0x590] sm:$0xff]
    %v413 = vld [vmem:[#allocation5 + $0x598] sm:$0xff]
    %v414 = vld [vmem:[#allocation5 + $0x5a0] sm:$0xff]
    %v415 = vld [vmem:[#allocation5 + $0x5a8] sm:$0xff]
    %v416 = vld [vmem:[#allocation5 + $0x5b0] sm:$0xff]
    %v417 = vld [vmem:[#allocation5 + $0x5b8] sm:$0xff]
    %v418 = vld [vmem:[#allocation5 + $0x5c0] sm:$0xff]
    %v419 = vld [vmem:[#allocation5 + $0x5c8] sm:$0xff]
    %v420 = vld [vmem:[#allocation5 + $0x5d0] sm:$0xff]
    %v421 = vld [vmem:[#allocation5 + $0x5d8] sm:$0xff]
    %v422 = vld [vmem:[#allocation5 + $0x5e0] sm:$0xff]
    %v423 = vld [vmem:[#allocation5 + $0x5e8] sm:$0xff]
    %v424 = vld [vmem:[#allocation5 + $0x5f0] sm:$0xff]
    %v425 = vld [vmem:[#allocation5 + $0x5f8] sm:$0xff]
    %v426 = vld [vmem:[#allocation5 + $0x600] sm:$0xff]
    %v427 = vld [vmem:[#allocation5 + $0x608] sm:$0xff]
    %v428 = vld [vmem:[#allocation5 + $0x610] sm:$0xff]
    %v429 = vld [vmem:[#allocation5 + $0x618] sm:$0xff]
    %v430 = vld [vmem:[#allocation5 + $0x620] sm:$0xff]
    %v431 = vld [vmem:[#allocation5 + $0x628] sm:$0xff]
    %v432 = vld [vmem:[#allocation5 + $0x630] sm:$0xff]
    %v433 = vld [vmem:[#allocation5 + $0x638] sm:$0xff]
    %v434 = vld [vmem:[#allocation5 + $0x640] sm:$0xff]
    %v435 = vld [vmem:[#allocation5 + $0x648] sm:$0xff]
    %v436 = vld [vmem:[#allocation5 + $0x650] sm:$0xff]
    %v437 = vld [vmem:[#allocation5 + $0x658] sm:$0xff]
    %v438 = vld [vmem:[#allocation5 + $0x660] sm:$0xff]
    %v439 = vld [vmem:[#allocation5 + $0x668] sm:$0xff]
    %v440 = vld [vmem:[#allocation5 + $0x670] sm:$0xff]
    %v441 = vld [vmem:[#allocation5 + $0x678] sm:$0xff]
    %v442 = vld [vmem:[#allocation5 + $0x680] sm:$0xff]
    %v443 = vld [vmem:[#allocation5 + $0x688] sm:$0xff]
    %v444 = vld [vmem:[#allocation5 + $0x690] sm:$0xff]
    %v445 = vld [vmem:[#allocation5 + $0x698] sm:$0xff]
    %v446 = vld [vmem:[#allocation5 + $0x6a0] sm:$0xff]
    %v447 = vld [vmem:[#allocation5 + $0x6a8] sm:$0xff]
    %v448 = vld [vmem:[#allocation5 + $0x6b0] sm:$0xff]
    %v449 = vld [vmem:[#allocation5 + $0x6b8] sm:$0xff]
    %v450 = vld [vmem:[#allocation5 + $0x6c0] sm:$0xff]
    %v451 = vld [vmem:[#allocation5 + $0x6c8] sm:$0xff]
    %v452 = vld [vmem:[#allocation5 + $0x6d0] sm:$0xff]
    %v453 = vld [vmem:[#allocation5 + $0x6d8] sm:$0xff]
    %v454 = vld [vmem:[#allocation5 + $0x6e0] sm:$0xff]
    %v455 = vld [vmem:[#allocation5 + $0x6e8] sm:$0xff]
    %v456 = vld [vmem:[#allocation5 + $0x6f0] sm:$0xff]
    %v457 = vld [vmem:[#allocation5 + $0x6f8] sm:$0xff]
    %v458 = vld [vmem:[#allocation5 + $0x700] sm:$0xff]
    %v459 = vld [vmem:[#allocation5 + $0x708] sm:$0xff]
    %v460 = vld [vmem:[#allocation5 + $0x710] sm:$0xff]
    %v461 = vld [vmem:[#allocation5 + $0x718] sm:$0xff]
    %v462 = vld [vmem:[#allocation5 + $0x720] sm:$0xff]
    %v463 = vld [vmem:[#allocation5 + $0x728] sm:$0xff]
    %v464 = vld [vmem:[#allocation5 + $0x730] sm:$0xff]
    %v465 = vld [vmem:[#allocation5 + $0x738] sm:$0xff]
    %v466 = vld [vmem:[#allocation5 + $0x740] sm:$0xff]
    %v467 = vld [vmem:[#allocation5 + $0x748] sm:$0xff]
    %v468 = vld [vmem:[#allocation5 + $0x750] sm:$0xff]
    %v469 = vld [vmem:[#allocation5 + $0x758] sm:$0xff]
    %v470 = vld [vmem:[#allocation5 + $0x760] sm:$0xff]
    %v471 = vld [vmem:[#allocation5 + $0x768] sm:$0xff]
    %v472 = vld [vmem:[#allocation5 + $0x770] sm:$0xff]
    %v473 = vld [vmem:[#allocation5 + $0x778] sm:$0xff]
    %v474 = vld [vmem:[#allocation5 + $0x780] sm:$0xff]
    %v475 = vld [vmem:[#allocation5 + $0x788] sm:$0xff]
    %v476 = vld [vmem:[#allocation5 + $0x790] sm:$0xff]
    %v477 = vld [vmem:[#allocation5 + $0x798] sm:$0xff]
    %v478 = vld [vmem:[#allocation5 + $0x7a0] sm:$0xff]
    %v479 = vld [vmem:[#allocation5 + $0x7a8] sm:$0xff]
    %v480 = vld [vmem:[#allocation5 + $0x7b0] sm:$0xff]
    %v481 = vld [vmem:[#allocation5 + $0x7b8] sm:$0xff]
    %v482 = vld [vmem:[#allocation5 + $0x7c0] sm:$0xff]
    %v483 = vld [vmem:[#allocation5 + $0x7c8] sm:$0xff]
    %v484 = vld [vmem:[#allocation5 + $0x7d0] sm:$0xff]
    %v485 = vld [vmem:[#allocation5 + $0x7d8] sm:$0xff]
    %v486 = vld [vmem:[#allocation5 + $0x7e0] sm:$0xff]
    %v487 = vld [vmem:[#allocation5 + $0x7e8] sm:$0xff]
    %v488 = vld [vmem:[#allocation5 + $0x7f0] sm:$0xff]
    %v489 = vld [vmem:[#allocation5 + $0x7f8] sm:$0xff]
    %v490 = vld [vmem:[#allocation5 + $0x800] sm:$0xff]
    %v491 = vld [vmem:[#allocation5 + $0x808] sm:$0xff]
    %v492 = vld [vmem:[#allocation5 + $0x810] sm:$0xff]
    %v493 = vld [vmem:[#allocation5 + $0x818] sm:$0xff]
    %v494 = vld [vmem:[#allocation5 + $0x820] sm:$0xff]
    %v495 = vld [vmem:[#allocation5 + $0x828] sm:$0xff]
    %v496 = vld [vmem:[#allocation5 + $0x830] sm:$0xff]
    %v497 = vld [vmem:[#allocation5 + $0x838] sm:$0xff]
    %v498 = vld [vmem:[#allocation5 + $0x840] sm:$0xff]
    %v499 = vld [vmem:[#allocation5 + $0x848] sm:$0xff]
    %v500 = vld [vmem:[#allocation5 + $0x850] sm:$0xff]
    %v501 = vld [vmem:[#allocation5 + $0x858] sm:$0xff]
    %v502 = vld [vmem:[#allocation5 + $0x860] sm:$0xff]
    %v503 = vld [vmem:[#allocation5 + $0x868] sm:$0xff]
    %v504 = vld [vmem:[#allocation5 + $0x870] sm:$0xff]
    %v505 = vld [vmem:[#allocation5 + $0x878] sm:$0xff]
    %v506 = vld [vmem:[#allocation5 + $0x880] sm:$0xff]
    %v507 = vld [vmem:[#allocation5 + $0x888] sm:$0xff]
    %v508 = vld [vmem:[#allocation5 + $0x890] sm:$0xff]
    %v509 = vld [vmem:[#allocation5 + $0x898] sm:$0xff]
    %v510 = vld [vmem:[#allocation5 + $0x8a0] sm:$0xff]
    %v511 = vld [vmem:[#allocation5 + $0x8a8] sm:$0xff]
    %v512 = vld [vmem:[#allocation5 + $0x8b0] sm:$0xff]
    %v513 = vld [vmem:[#allocation5 + $0x8b8] sm:$0xff]
    %v514 = vld [vmem:[#allocation5 + $0x8c0] sm:$0xff]
    %v515 = vld [vmem:[#allocation5 + $0x8c8] sm:$0xff]
    %v516 = vld [vmem:[#allocation5 + $0x8d0] sm:$0xff]
    %v517 = vld [vmem:[#allocation5 + $0x8d8] sm:$0xff]
    %v518 = vld [vmem:[#allocation5 + $0x8e0] sm:$0xff]
    %v519 = vld [vmem:[#allocation5 + $0x8e8] sm:$0xff]
    %v520 = vld [vmem:[#allocation5 + $0x8f0] sm:$0xff]
    %v521 = vld [vmem:[#allocation5 + $0x8f8] sm:$0xff]
    %v522 = vld [vmem:[#allocation5 + $0x900] sm:$0xff]
    %v523 = vld [vmem:[#allocation5 + $0x908] sm:$0xff]
    %v524 = vld [vmem:[#allocation5 + $0x910] sm:$0xff]
    %v525 = vld [vmem:[#allocation5 + $0x918] sm:$0xff]
    %v526 = vld [vmem:[#allocation5 + $0x920] sm:$0xff]
    %v527 = vld [vmem:[#allocation5 + $0x928] sm:$0xff]
    %v528 = vld [vmem:[#allocation5 + $0x930] sm:$0xff]
    %v529 = vld [vmem:[#allocation5 + $0x938] sm:$0xff]
    %v530 = vld [vmem:[#allocation5 + $0x940] sm:$0xff]
    %v531 = vld [vmem:[#allocation5 + $0x948] sm:$0xff]
    %v532 = vld [vmem:[#allocation5 + $0x950] sm:$0xff]
    %v533 = vld [vmem:[#allocation5 + $0x958] sm:$0xff]
    %v534 = vld [vmem:[#allocation5 + $0x960] sm:$0xff]
    %v535 = vld [vmem:[#allocation5 + $0x968] sm:$0xff]
    %v536 = vld [vmem:[#allocation5 + $0x970] sm:$0xff]
    %v537 = vld [vmem:[#allocation5 + $0x978] sm:$0xff]
    %v538 = vld [vmem:[#allocation5 + $0x980] sm:$0xff]
    %v539 = vld [vmem:[#allocation5 + $0x988] sm:$0xff]
    %v540 = vld [vmem:[#allocation5 + $0x990] sm:$0xff]
    %v541 = vld [vmem:[#allocation5 + $0x998] sm:$0xff]
    %v542 = vld [vmem:[#allocation5 + $0x9a0] sm:$0xff]
    %v543 = vld [vmem:[#allocation5 + $0x9a8] sm:$0xff]
    %v544 = vld [vmem:[#allocation5 + $0x9b0] sm:$0xff]
    %v545 = vld [vmem:[#allocation5 + $0x9b8] sm:$0xff]
    %v546 = vld [vmem:[#allocation5 + $0x9c0] sm:$0xff]
    %v547 = vld [vmem:[#allocation5 + $0x9c8] sm:$0xff]
    %v548 = vld [vmem:[#allocation5 + $0x9d0] sm:$0xff]
    %v549 = vld [vmem:[#allocation5 + $0x9d8] sm:$0xff]
    %v550 = vld [vmem:[#allocation5 + $0x9e0] sm:$0xff]
    %v551 = vld [vmem:[#allocation5 + $0x9e8] sm:$0xff]
    %v552 = vld [vmem:[#allocation5 + $0x9f0] sm:$0xff]
    %v553 = vld [vmem:[#allocation5 + $0x9f8] sm:$0xff]
    %v554 = vld [vmem:[#allocation5 + $0xa00] sm:$0xff]
    %v555 = vld [vmem:[#allocation5 + $0xa08] sm:$0xff]
    %v556 = vld [vmem:[#allocation5 + $0xa10] sm:$0xff]
    %v557 = vld [vmem:[#allocation5 + $0xa18] sm:$0xff]
    %v558 = vld [vmem:[#allocation5 + $0xa20] sm:$0xff]
    %v559 = vld [vmem:[#allocation5 + $0xa28] sm:$0xff]
    %v560 = vld [vmem:[#allocation5 + $0xa30] sm:$0xff]
    %v561 = vld [vmem:[#allocation5 + $0xa38] sm:$0xff]
    %v562 = vld [vmem:[#allocation5 + $0xa40] sm:$0xff]
    %v563 = vld [vmem:[#allocation5 + $0xa48] sm:$0xff]
    %v564 = vld [vmem:[#allocation5 + $0xa50] sm:$0xff]
    %v565 = vld [vmem:[#allocation5 + $0xa58] sm:$0xff]
    %v566 = vld [vmem:[#allocation5 + $0xa60] sm:$0xff]
    %v567 = vld [vmem:[#allocation5 + $0xa68] sm:$0xff]
    %v568 = vld [vmem:[#allocation5 + $0xa70] sm:$0xff]
    %v569 = vld [vmem:[#allocation5 + $0xa78] sm:$0xff]
    %v570 = vld [vmem:[#allocation5 + $0xa80] sm:$0xff]
    %v571 = vld [vmem:[#allocation5 + $0xa88] sm:$0xff]
    %v572 = vld [vmem:[#allocation5 + $0xa90] sm:$0xff]
    %v573 = vld [vmem:[#allocation5 + $0xa98] sm:$0xff]
    %v574 = vld [vmem:[#allocation5 + $0xaa0] sm:$0xff]
    %v575 = vld [vmem:[#allocation5 + $0xaa8] sm:$0xff]
    %v576 = vld [vmem:[#allocation5 + $0xab0] sm:$0xff]
    %v577 = vld [vmem:[#allocation5 + $0xab8] sm:$0xff]
    %v578 = vld [vmem:[#allocation5 + $0xac0] sm:$0xff]
    %v579 = vld [vmem:[#allocation5 + $0xac8] sm:$0xff]
    %v580 = vld [vmem:[#allocation5 + $0xad0] sm:$0xff]
    %v581 = vld [vmem:[#allocation5 + $0xad8] sm:$0xff]
    %v582 = vld [vmem:[#allocation5 + $0xae0] sm:$0xff]
    %v583 = vld [vmem:[#allocation5 + $0xae8] sm:$0xff]
    %v584 = vld [vmem:[#allocation5 + $0xaf0] sm:$0xff]
    %v585 = vld [vmem:[#allocation5 + $0xaf8] sm:$0xff]
    %v586 = vld [vmem:[#allocation5 + $0xb00] sm:$0xff]
    %v587 = vld [vmem:[#allocation5 + $0xb08] sm:$0xff]
    %v588 = vld [vmem:[#allocation5 + $0xb10] sm:$0xff]
    %v589 = vld [vmem:[#allocation5 + $0xb18] sm:$0xff]
    %v590 = vld [vmem:[#allocation5 + $0xb20] sm:$0xff]
    %v591 = vld [vmem:[#allocation5 + $0xb28] sm:$0xff]
    %v592 = vld [vmem:[#allocation5 + $0xb30] sm:$0xff]
    %v593 = vld [vmem:[#allocation5 + $0xb38] sm:$0xff]
    %v594 = vld [vmem:[#allocation5 + $0xb40] sm:$0xff]
    %v595 = vld [vmem:[#allocation5 + $0xb48] sm:$0xff]
    %v596 = vld [vmem:[#allocation5 + $0xb50] sm:$0xff]
    %v597 = vld [vmem:[#allocation5 + $0xb58] sm:$0xff]
    %v598 = vld [vmem:[#allocation5 + $0xb60] sm:$0xff]
    %v599 = vld [vmem:[#allocation5 + $0xb68] sm:$0xff]
    %v600 = vld [vmem:[#allocation5 + $0xb70] sm:$0xff]
    %v601 = vld [vmem:[#allocation5 + $0xb78] sm:$0xff]
    %v602 = vld [vmem:[#allocation5 + $0xb80] sm:$0xff]
    %v603 = vld [vmem:[#allocation5 + $0xb88] sm:$0xff]
    %v604 = vld [vmem:[#allocation5 + $0xb90] sm:$0xff]
    %v605 = vld [vmem:[#allocation5 + $0xb98] sm:$0xff]
    %v606 = vld [vmem:[#allocation5 + $0xba0] sm:$0xff]
    %v607 = vld [vmem:[#allocation5 + $0xba8] sm:$0xff]
    %v608 = vld [vmem:[#allocation5 + $0xbb0] sm:$0xff]
    %v609 = vld [vmem:[#allocation5 + $0xbb8] sm:$0xff]
    %v610 = vld [vmem:[#allocation5 + $0xbc0] sm:$0xff]
    %v611 = vld [vmem:[#allocation5 + $0xbc8] sm:$0xff]
    %v612 = vld [vmem:[#allocation5 + $0xbd0] sm:$0xff]
    %v613 = vld [vmem:[#allocation5 + $0xbd8] sm:$0xff]
    %v614 = vld [vmem:[#allocation5 + $0xbe0] sm:$0xff]
    %v615 = vld [vmem:[#allocation5 + $0xbe8] sm:$0xff]
    %v616 = vld [vmem:[#allocation5 + $0xbf0] sm:$0xff]
    %v617 = vld [vmem:[#allocation5 + $0xbf8] sm:$0xff]
    %v618 = vld [vmem:[#allocation7] sm:$0x3f]
    %v620 = vlaneseq
    %v621 = vshrl.u32 %v620, 7
    %v622 = vsub.s32 0, %v621
    %v623 = vrot.slane %v618, %v622
    %v624 = vlaneseq
    %v625 = vshrl.u32 %v624, 7
    %v626 = vsub.s32 1, %v625
    %v627 = vrot.slane %v618, %v626
    %v628 = vlaneseq
    %v629 = vshrl.u32 %v628, 7
    %v630 = vsub.s32 2, %v629
    %v631 = vrot.slane %v618, %v630
    %v632 = vlaneseq
    %v633 = vshrl.u32 %v632, 7
    %v634 = vsub.s32 3, %v633
    %v635 = vrot.slane %v618, %v634
    %v636 = vlaneseq
    %v637 = vshrl.u32 %v636, 7
    %v638 = vsub.s32 4, %v637
    %v639 = vrot.slane %v618, %v638
    %v640 = vlaneseq
    %v641 = vshrl.u32 %v640, 7
    %v642 = vsub.s32 5, %v641
    %v643 = vrot.slane %v618, %v642
    %v1034 = vunpack.c.l.b16 %v234
    %v1035 = vunpack.c.h.b16 %v234
    %v1036 = vunpack.c.l.b16 %v235
    %v1037 = vunpack.c.h.b16 %v235
    %v1038 = vunpack.c.l.b16 %v236
    %v1039 = vunpack.c.h.b16 %v236
    %v1040 = vunpack.c.l.b16 %v237
    %v1041 = vunpack.c.h.b16 %v237
    %v1042 = vunpack.c.l.b16 %v238
    %v1043 = vunpack.c.h.b16 %v238
    %v1044 = vunpack.c.l.b16 %v239
    %v1045 = vunpack.c.h.b16 %v239
    %v1046 = vunpack.c.l.b16 %v240
    %v1047 = vunpack.c.h.b16 %v240
    %v1048 = vunpack.c.l.b16 %v241
    %v1049 = vunpack.c.h.b16 %v241
    %v1050 = vunpack.c.l.b16 %v242
    %v1051 = vunpack.c.h.b16 %v242
    %v1052 = vunpack.c.l.b16 %v243
    %v1053 = vunpack.c.h.b16 %v243
    %v1054 = vunpack.c.l.b16 %v244
    %v1055 = vunpack.c.h.b16 %v244
    %v1056 = vunpack.c.l.b16 %v245
    %v1057 = vunpack.c.h.b16 %v245
    %v1058 = vunpack.c.l.b16 %v246
    %v1059 = vunpack.c.h.b16 %v246
    %v1060 = vunpack.c.l.b16 %v247
    %v1061 = vunpack.c.h.b16 %v247
    %v1062 = vunpack.c.l.b16 %v248
    %v1063 = vunpack.c.h.b16 %v248
    %v1064 = vunpack.c.l.b16 %v249
    %v1065 = vunpack.c.h.b16 %v249
    %v1066 = vunpack.c.l.b16 %v250
    %v1067 = vunpack.c.h.b16 %v250
    %v1068 = vunpack.c.l.b16 %v251
    %v1069 = vunpack.c.h.b16 %v251
    %v1070 = vunpack.c.l.b16 %v252
    %v1071 = vunpack.c.h.b16 %v252
    %v1072 = vunpack.c.l.b16 %v253
    %v1073 = vunpack.c.h.b16 %v253
    %v1074 = vunpack.c.l.b16 %v254
    %v1075 = vunpack.c.h.b16 %v254
    %v1076 = vunpack.c.l.b16 %v255
    %v1077 = vunpack.c.h.b16 %v255
    %v1078 = vunpack.c.l.b16 %v256
    %v1079 = vunpack.c.h.b16 %v256
    %v1080 = vunpack.c.l.b16 %v257
    %v1081 = vunpack.c.h.b16 %v257
    %v1082 = vunpack.c.l.b16 %v258
    %v1083 = vunpack.c.h.b16 %v258
    %v1084 = vunpack.c.l.b16 %v259
    %v1085 = vunpack.c.h.b16 %v259
    %v1086 = vunpack.c.l.b16 %v260
    %v1087 = vunpack.c.h.b16 %v260
    %v1088 = vunpack.c.l.b16 %v261
    %v1089 = vunpack.c.h.b16 %v261
    %v1090 = vunpack.c.l.b16 %v262
    %v1091 = vunpack.c.h.b16 %v262
    %v1092 = vunpack.c.l.b16 %v263
    %v1093 = vunpack.c.h.b16 %v263
    %v1094 = vunpack.c.l.b16 %v264
    %v1095 = vunpack.c.h.b16 %v264
    %v1096 = vunpack.c.l.b16 %v265
    %v1097 = vunpack.c.h.b16 %v265
    %v1098 = vunpack.c.l.b16 %v266
    %v1099 = vunpack.c.h.b16 %v266
    %v1100 = vunpack.c.l.b16 %v267
    %v1101 = vunpack.c.h.b16 %v267
    %v1102 = vunpack.c.l.b16 %v268
    %v1103 = vunpack.c.h.b16 %v268
    %v1104 = vunpack.c.l.b16 %v269
    %v1105 = vunpack.c.h.b16 %v269
    %v1106 = vunpack.c.l.b16 %v270
    %v1107 = vunpack.c.h.b16 %v270
    %v1108 = vunpack.c.l.b16 %v271
    %v1109 = vunpack.c.h.b16 %v271
    %v1110 = vunpack.c.l.b16 %v272
    %v1111 = vunpack.c.h.b16 %v272
    %v1112 = vunpack.c.l.b16 %v273
    %v1113 = vunpack.c.h.b16 %v273
    %v1114 = vunpack.c.l.b16 %v274
    %v1115 = vunpack.c.h.b16 %v274
    %v1116 = vunpack.c.l.b16 %v275
    %v1117 = vunpack.c.h.b16 %v275
    %v1118 = vunpack.c.l.b16 %v276
    %v1119 = vunpack.c.h.b16 %v276
    %v1120 = vunpack.c.l.b16 %v277
    %v1121 = vunpack.c.h.b16 %v277
    %v1122 = vunpack.c.l.b16 %v278
    %v1123 = vunpack.c.h.b16 %v278
    %v1124 = vunpack.c.l.b16 %v279
    %v1125 = vunpack.c.h.b16 %v279
    %v1126 = vunpack.c.l.b16 %v280
    %v1127 = vunpack.c.h.b16 %v280
    %v1128 = vunpack.c.l.b16 %v281
    %v1129 = vunpack.c.h.b16 %v281
    %v1130 = vunpack.c.l.b16 %v282
    %v1131 = vunpack.c.h.b16 %v282
    %v1132 = vunpack.c.l.b16 %v283
    %v1133 = vunpack.c.h.b16 %v283
    %v1134 = vunpack.c.l.b16 %v284
    %v1135 = vunpack.c.h.b16 %v284
    %v1136 = vunpack.c.l.b16 %v285
    %v1137 = vunpack.c.h.b16 %v285
    %v1138 = vunpack.c.l.b16 %v286
    %v1139 = vunpack.c.h.b16 %v286
    %v1140 = vunpack.c.l.b16 %v287
    %v1141 = vunpack.c.h.b16 %v287
    %v1142 = vunpack.c.l.b16 %v288
    %v1143 = vunpack.c.h.b16 %v288
    %v1144 = vunpack.c.l.b16 %v289
    %v1145 = vunpack.c.h.b16 %v289
    %v1146 = vunpack.c.l.b16 %v290
    %v1147 = vunpack.c.h.b16 %v290
    %v1148 = vunpack.c.l.b16 %v291
    %v1149 = vunpack.c.h.b16 %v291
    %v1150 = vunpack.c.l.b16 %v292
    %v1151 = vunpack.c.h.b16 %v292
    %v1152 = vunpack.c.l.b16 %v293
    %v1153 = vunpack.c.h.b16 %v293
    %v1154 = vunpack.c.l.b16 %v294
    %v1155 = vunpack.c.h.b16 %v294
    %v1156 = vunpack.c.l.b16 %v295
    %v1157 = vunpack.c.h.b16 %v295
    %v1158 = vunpack.c.l.b16 %v296
    %v1159 = vunpack.c.h.b16 %v296
    %v1160 = vunpack.c.l.b16 %v297
    %v1161 = vunpack.c.h.b16 %v297
    %v1162 = vunpack.c.l.b16 %v298
    %v1163 = vunpack.c.h.b16 %v298
    %v1164 = vunpack.c.l.b16 %v299
    %v1165 = vunpack.c.h.b16 %v299
    %v1166 = vunpack.c.l.b16 %v300
    %v1167 = vunpack.c.h.b16 %v300
    %v1168 = vunpack.c.l.b16 %v301
    %v1169 = vunpack.c.h.b16 %v301
    %v1170 = vunpack.c.l.b16 %v302
    %v1171 = vunpack.c.h.b16 %v302
    %v1172 = vunpack.c.l.b16 %v303
    %v1173 = vunpack.c.h.b16 %v303
    %v1174 = vunpack.c.l.b16 %v304
    %v1175 = vunpack.c.h.b16 %v304
    %v1176 = vunpack.c.l.b16 %v305
    %v1177 = vunpack.c.h.b16 %v305
    %v1178 = vunpack.c.l.b16 %v306
    %v1179 = vunpack.c.h.b16 %v306
    %v1180 = vunpack.c.l.b16 %v307
    %v1181 = vunpack.c.h.b16 %v307
    %v1182 = vunpack.c.l.b16 %v308
    %v1183 = vunpack.c.h.b16 %v308
    %v1184 = vunpack.c.l.b16 %v309
    %v1185 = vunpack.c.h.b16 %v309
    %v1186 = vunpack.c.l.b16 %v310
    %v1187 = vunpack.c.h.b16 %v310
    %v1188 = vunpack.c.l.b16 %v311
    %v1189 = vunpack.c.h.b16 %v311
    %v1190 = vunpack.c.l.b16 %v312
    %v1191 = vunpack.c.h.b16 %v312
    %v1192 = vunpack.c.l.b16 %v313
    %v1193 = vunpack.c.h.b16 %v313
    %v1194 = vunpack.c.l.b16 %v314
    %v1195 = vunpack.c.h.b16 %v314
    %v1196 = vunpack.c.l.b16 %v315
    %v1197 = vunpack.c.h.b16 %v315
    %v1198 = vunpack.c.l.b16 %v316
    %v1199 = vunpack.c.h.b16 %v316
    %v1200 = vunpack.c.l.b16 %v317
    %v1201 = vunpack.c.h.b16 %v317
    %v1202 = vunpack.c.l.b16 %v318
    %v1203 = vunpack.c.h.b16 %v318
    %v1204 = vunpack.c.l.b16 %v319
    %v1205 = vunpack.c.h.b16 %v319
    %v1206 = vunpack.c.l.b16 %v320
    %v1207 = vunpack.c.h.b16 %v320
    %v1208 = vunpack.c.l.b16 %v321
    %v1209 = vunpack.c.h.b16 %v321
    %v1210 = vunpack.c.l.b16 %v322
    %v1211 = vunpack.c.h.b16 %v322
    %v1212 = vunpack.c.l.b16 %v323
    %v1213 = vunpack.c.h.b16 %v323
    %v1214 = vunpack.c.l.b16 %v324
    %v1215 = vunpack.c.h.b16 %v324
    %v1216 = vunpack.c.l.b16 %v325
    %v1217 = vunpack.c.h.b16 %v325
    %v1218 = vunpack.c.l.b16 %v326
    %v1219 = vunpack.c.h.b16 %v326
    %v1220 = vunpack.c.l.b16 %v327
    %v1221 = vunpack.c.h.b16 %v327
    %v1222 = vunpack.c.l.b16 %v328
    %v1223 = vunpack.c.h.b16 %v328
    %v1224 = vunpack.c.l.b16 %v329
    %v1225 = vunpack.c.h.b16 %v329
    %v1226 = vunpack.c.l.b16 %v330
    %v1227 = vunpack.c.h.b16 %v330
    %v1228 = vunpack.c.l.b16 %v331
    %v1229 = vunpack.c.h.b16 %v331
    %v1230 = vunpack.c.l.b16 %v332
    %v1231 = vunpack.c.h.b16 %v332
    %v1232 = vunpack.c.l.b16 %v333
    %v1233 = vunpack.c.h.b16 %v333
    %v1234 = vunpack.c.l.b16 %v334
    %v1235 = vunpack.c.h.b16 %v334
    %v1236 = vunpack.c.l.b16 %v335
    %v1237 = vunpack.c.h.b16 %v335
    %v1238 = vunpack.c.l.b16 %v336
    %v1239 = vunpack.c.h.b16 %v336
    %v1240 = vunpack.c.l.b16 %v337
    %v1241 = vunpack.c.h.b16 %v337
    %v1242 = vunpack.c.l.b16 %v338
    %v1243 = vunpack.c.h.b16 %v338
    %v1244 = vunpack.c.l.b16 %v339
    %v1245 = vunpack.c.h.b16 %v339
    %v1246 = vunpack.c.l.b16 %v340
    %v1247 = vunpack.c.h.b16 %v340
    %v1248 = vunpack.c.l.b16 %v341
    %v1249 = vunpack.c.h.b16 %v341
    %v1250 = vunpack.c.l.b16 %v342
    %v1251 = vunpack.c.h.b16 %v342
    %v1252 = vunpack.c.l.b16 %v343
    %v1253 = vunpack.c.h.b16 %v343
    %v1254 = vunpack.c.l.b16 %v344
    %v1255 = vunpack.c.h.b16 %v344
    %v1256 = vunpack.c.l.b16 %v345
    %v1257 = vunpack.c.h.b16 %v345
    %v1258 = vunpack.c.l.b16 %v346
    %v1259 = vunpack.c.h.b16 %v346
    %v1260 = vunpack.c.l.b16 %v347
    %v1261 = vunpack.c.h.b16 %v347
    %v1262 = vunpack.c.l.b16 %v348
    %v1263 = vunpack.c.h.b16 %v348
    %v1264 = vunpack.c.l.b16 %v349
    %v1265 = vunpack.c.h.b16 %v349
    %v1266 = vunpack.c.l.b16 %v350
    %v1267 = vunpack.c.h.b16 %v350
    %v1268 = vunpack.c.l.b16 %v351
    %v1269 = vunpack.c.h.b16 %v351
    %v1270 = vunpack.c.l.b16 %v352
    %v1271 = vunpack.c.h.b16 %v352
    %v1272 = vunpack.c.l.b16 %v353
    %v1273 = vunpack.c.h.b16 %v353
    %v1274 = vunpack.c.l.b16 %v354
    %v1275 = vunpack.c.h.b16 %v354
    %v1276 = vunpack.c.l.b16 %v355
    %v1277 = vunpack.c.h.b16 %v355
    %v1278 = vunpack.c.l.b16 %v356
    %v1279 = vunpack.c.h.b16 %v356
    %v1280 = vunpack.c.l.b16 %v357
    %v1281 = vunpack.c.h.b16 %v357
    %v1282 = vunpack.c.l.b16 %v358
    %v1283 = vunpack.c.h.b16 %v358
    %v1284 = vunpack.c.l.b16 %v359
    %v1285 = vunpack.c.h.b16 %v359
    %v1286 = vunpack.c.l.b16 %v360
    %v1287 = vunpack.c.h.b16 %v360
    %v1288 = vunpack.c.l.b16 %v361
    %v1289 = vunpack.c.h.b16 %v361
    %v1290 = vunpack.c.l.b16 %v362
    %v1291 = vunpack.c.h.b16 %v362
    %v1292 = vunpack.c.l.b16 %v363
    %v1293 = vunpack.c.h.b16 %v363
    %v1294 = vunpack.c.l.b16 %v364
    %v1295 = vunpack.c.h.b16 %v364
    %v1296 = vunpack.c.l.b16 %v365
    %v1297 = vunpack.c.h.b16 %v365
    %v1298 = vunpack.c.l.b16 %v366
    %v1299 = vunpack.c.h.b16 %v366
    %v1300 = vunpack.c.l.b16 %v367
    %v1301 = vunpack.c.h.b16 %v367
    %v1302 = vunpack.c.l.b16 %v368
    %v1303 = vunpack.c.h.b16 %v368
    %v1304 = vunpack.c.l.b16 %v369
    %v1305 = vunpack.c.h.b16 %v369
    %v1306 = vunpack.c.l.b16 %v370
    %v1307 = vunpack.c.h.b16 %v370
    %v1308 = vunpack.c.l.b16 %v371
    %v1309 = vunpack.c.h.b16 %v371
    %v1310 = vunpack.c.l.b16 %v372
    %v1311 = vunpack.c.h.b16 %v372
    %v1312 = vunpack.c.l.b16 %v373
    %v1313 = vunpack.c.h.b16 %v373
    %v1314 = vunpack.c.l.b16 %v374
    %v1315 = vunpack.c.h.b16 %v374
    %v1316 = vunpack.c.l.b16 %v375
    %v1317 = vunpack.c.h.b16 %v375
    %v1318 = vunpack.c.l.b16 %v376
    %v1319 = vunpack.c.h.b16 %v376
    %v1320 = vunpack.c.l.b16 %v377
    %v1321 = vunpack.c.h.b16 %v377
    %v1322 = vunpack.c.l.b16 %v378
    %v1323 = vunpack.c.h.b16 %v378
    %v1324 = vunpack.c.l.b16 %v379
    %v1325 = vunpack.c.h.b16 %v379
    %v1326 = vunpack.c.l.b16 %v380
    %v1327 = vunpack.c.h.b16 %v380
    %v1328 = vunpack.c.l.b16 %v381
    %v1329 = vunpack.c.h.b16 %v381
    %v1330 = vunpack.c.l.b16 %v382
    %v1331 = vunpack.c.h.b16 %v382
    %v1332 = vunpack.c.l.b16 %v383
    %v1333 = vunpack.c.h.b16 %v383
    %v1334 = vunpack.c.l.b16 %v384
    %v1335 = vunpack.c.h.b16 %v384
    %v1336 = vunpack.c.l.b16 %v385
    %v1337 = vunpack.c.h.b16 %v385
    %v1338 = vunpack.c.l.b16 %v386
    %v1339 = vunpack.c.h.b16 %v386
    %v1340 = vunpack.c.l.b16 %v387
    %v1341 = vunpack.c.h.b16 %v387
    %v1342 = vunpack.c.l.b16 %v388
    %v1343 = vunpack.c.h.b16 %v388
    %v1344 = vunpack.c.l.b16 %v389
    %v1345 = vunpack.c.h.b16 %v389
    %v1346 = vunpack.c.l.b16 %v390
    %v1347 = vunpack.c.h.b16 %v390
    %v1348 = vunpack.c.l.b16 %v391
    %v1349 = vunpack.c.h.b16 %v391
    %v1350 = vunpack.c.l.b16 %v392
    %v1351 = vunpack.c.h.b16 %v392
    %v1352 = vunpack.c.l.b16 %v393
    %v1353 = vunpack.c.h.b16 %v393
    %v1354 = vunpack.c.l.b16 %v394
    %v1355 = vunpack.c.h.b16 %v394
    %v1356 = vunpack.c.l.b16 %v395
    %v1357 = vunpack.c.h.b16 %v395
    %v1358 = vunpack.c.l.b16 %v396
    %v1359 = vunpack.c.h.b16 %v396
    %v1360 = vunpack.c.l.b16 %v397
    %v1361 = vunpack.c.h.b16 %v397
    %v1362 = vunpack.c.l.b16 %v398
    %v1363 = vunpack.c.h.b16 %v398
    %v1364 = vunpack.c.l.b16 %v399
    %v1365 = vunpack.c.h.b16 %v399
    %v1366 = vunpack.c.l.b16 %v400
    %v1367 = vunpack.c.h.b16 %v400
    %v1368 = vunpack.c.l.b16 %v401
    %v1369 = vunpack.c.h.b16 %v401
    %v1370 = vunpack.c.l.b16 %v402
    %v1371 = vunpack.c.h.b16 %v402
    %v1372 = vunpack.c.l.b16 %v403
    %v1373 = vunpack.c.h.b16 %v403
    %v1374 = vunpack.c.l.b16 %v404
    %v1375 = vunpack.c.h.b16 %v404
    %v1376 = vunpack.c.l.b16 %v405
    %v1377 = vunpack.c.h.b16 %v405
    %v1378 = vunpack.c.l.b16 %v406
    %v1379 = vunpack.c.h.b16 %v406
    %v1380 = vunpack.c.l.b16 %v407
    %v1381 = vunpack.c.h.b16 %v407
    %v1382 = vunpack.c.l.b16 %v408
    %v1383 = vunpack.c.h.b16 %v408
    %v1384 = vunpack.c.l.b16 %v409
    %v1385 = vunpack.c.h.b16 %v409
    %v1386 = vunpack.c.l.b16 %v410
    %v1387 = vunpack.c.h.b16 %v410
    %v1388 = vunpack.c.l.b16 %v411
    %v1389 = vunpack.c.h.b16 %v411
    %v1390 = vunpack.c.l.b16 %v412
    %v1391 = vunpack.c.h.b16 %v412
    %v1392 = vunpack.c.l.b16 %v413
    %v1393 = vunpack.c.h.b16 %v413
    %v1394 = vunpack.c.l.b16 %v414
    %v1395 = vunpack.c.h.b16 %v414
    %v1396 = vunpack.c.l.b16 %v415
    %v1397 = vunpack.c.h.b16 %v415
    %v1398 = vunpack.c.l.b16 %v416
    %v1399 = vunpack.c.h.b16 %v416
    %v1400 = vunpack.c.l.b16 %v417
    %v1401 = vunpack.c.h.b16 %v417
    %v1402 = vunpack.c.l.b16 %v418
    %v1403 = vunpack.c.h.b16 %v418
    %v1404 = vunpack.c.l.b16 %v419
    %v1405 = vunpack.c.h.b16 %v419
    %v1406 = vunpack.c.l.b16 %v420
    %v1407 = vunpack.c.h.b16 %v420
    %v1408 = vunpack.c.l.b16 %v421
    %v1409 = vunpack.c.h.b16 %v421
    %v1410 = vunpack.c.l.b16 %v422
    %v1411 = vunpack.c.h.b16 %v422
    %v1412 = vunpack.c.l.b16 %v423
    %v1413 = vunpack.c.h.b16 %v423
    %v1414 = vunpack.c.l.b16 %v424
    %v1415 = vunpack.c.h.b16 %v424
    %v1416 = vunpack.c.l.b16 %v425
    %v1417 = vunpack.c.h.b16 %v425
    %v1418 = vunpack.c.l.b16 %v426
    %v1419 = vunpack.c.h.b16 %v426
    %v1420 = vunpack.c.l.b16 %v427
    %v1421 = vunpack.c.h.b16 %v427
    %v1422 = vunpack.c.l.b16 %v428
    %v1423 = vunpack.c.h.b16 %v428
    %v1424 = vunpack.c.l.b16 %v429
    %v1425 = vunpack.c.h.b16 %v429
    %v1426 = vunpack.c.l.b16 %v430
    %v1427 = vunpack.c.h.b16 %v430
    %v1428 = vunpack.c.l.b16 %v431
    %v1429 = vunpack.c.h.b16 %v431
    %v1430 = vunpack.c.l.b16 %v432
    %v1431 = vunpack.c.h.b16 %v432
    %v1432 = vunpack.c.l.b16 %v433
    %v1433 = vunpack.c.h.b16 %v433
    %v1434 = vunpack.c.l.b16 %v434
    %v1435 = vunpack.c.h.b16 %v434
    %v1436 = vunpack.c.l.b16 %v435
    %v1437 = vunpack.c.h.b16 %v435
    %v1438 = vunpack.c.l.b16 %v436
    %v1439 = vunpack.c.h.b16 %v436
    %v1440 = vunpack.c.l.b16 %v437
    %v1441 = vunpack.c.h.b16 %v437
    %v1442 = vunpack.c.l.b16 %v438
    %v1443 = vunpack.c.h.b16 %v438
    %v1444 = vunpack.c.l.b16 %v439
    %v1445 = vunpack.c.h.b16 %v439
    %v1446 = vunpack.c.l.b16 %v440
    %v1447 = vunpack.c.h.b16 %v440
    %v1448 = vunpack.c.l.b16 %v441
    %v1449 = vunpack.c.h.b16 %v441
    %v1450 = vunpack.c.l.b16 %v442
    %v1451 = vunpack.c.h.b16 %v442
    %v1452 = vunpack.c.l.b16 %v443
    %v1453 = vunpack.c.h.b16 %v443
    %v1454 = vunpack.c.l.b16 %v444
    %v1455 = vunpack.c.h.b16 %v444
    %v1456 = vunpack.c.l.b16 %v445
    %v1457 = vunpack.c.h.b16 %v445
    %v1458 = vunpack.c.l.b16 %v446
    %v1459 = vunpack.c.h.b16 %v446
    %v1460 = vunpack.c.l.b16 %v447
    %v1461 = vunpack.c.h.b16 %v447
    %v1462 = vunpack.c.l.b16 %v448
    %v1463 = vunpack.c.h.b16 %v448
    %v1464 = vunpack.c.l.b16 %v449
    %v1465 = vunpack.c.h.b16 %v449
    %v1466 = vunpack.c.l.b16 %v450
    %v1467 = vunpack.c.h.b16 %v450
    %v1468 = vunpack.c.l.b16 %v451
    %v1469 = vunpack.c.h.b16 %v451
    %v1470 = vunpack.c.l.b16 %v452
    %v1471 = vunpack.c.h.b16 %v452
    %v1472 = vunpack.c.l.b16 %v453
    %v1473 = vunpack.c.h.b16 %v453
    %v1474 = vunpack.c.l.b16 %v454
    %v1475 = vunpack.c.h.b16 %v454
    %v1476 = vunpack.c.l.b16 %v455
    %v1477 = vunpack.c.h.b16 %v455
    %v1478 = vunpack.c.l.b16 %v456
    %v1479 = vunpack.c.h.b16 %v456
    %v1480 = vunpack.c.l.b16 %v457
    %v1481 = vunpack.c.h.b16 %v457
    %v1482 = vunpack.c.l.b16 %v458
    %v1483 = vunpack.c.h.b16 %v458
    %v1484 = vunpack.c.l.b16 %v459
    %v1485 = vunpack.c.h.b16 %v459
    %v1486 = vunpack.c.l.b16 %v460
    %v1487 = vunpack.c.h.b16 %v460
    %v1488 = vunpack.c.l.b16 %v461
    %v1489 = vunpack.c.h.b16 %v461
    %v1490 = vunpack.c.l.b16 %v462
    %v1491 = vunpack.c.h.b16 %v462
    %v1492 = vunpack.c.l.b16 %v463
    %v1493 = vunpack.c.h.b16 %v463
    %v1494 = vunpack.c.l.b16 %v464
    %v1495 = vunpack.c.h.b16 %v464
    %v1496 = vunpack.c.l.b16 %v465
    %v1497 = vunpack.c.h.b16 %v465
    %v1498 = vunpack.c.l.b16 %v466
    %v1499 = vunpack.c.h.b16 %v466
    %v1500 = vunpack.c.l.b16 %v467
    %v1501 = vunpack.c.h.b16 %v467
    %v1502 = vunpack.c.l.b16 %v468
    %v1503 = vunpack.c.h.b16 %v468
    %v1504 = vunpack.c.l.b16 %v469
    %v1505 = vunpack.c.h.b16 %v469
    %v1506 = vunpack.c.l.b16 %v470
    %v1507 = vunpack.c.h.b16 %v470
    %v1508 = vunpack.c.l.b16 %v471
    %v1509 = vunpack.c.h.b16 %v471
    %v1510 = vunpack.c.l.b16 %v472
    %v1511 = vunpack.c.h.b16 %v472
    %v1512 = vunpack.c.l.b16 %v473
    %v1513 = vunpack.c.h.b16 %v473
    %v1514 = vunpack.c.l.b16 %v474
    %v1515 = vunpack.c.h.b16 %v474
    %v1516 = vunpack.c.l.b16 %v475
    %v1517 = vunpack.c.h.b16 %v475
    %v1518 = vunpack.c.l.b16 %v476
    %v1519 = vunpack.c.h.b16 %v476
    %v1520 = vunpack.c.l.b16 %v477
    %v1521 = vunpack.c.h.b16 %v477
    %v1522 = vunpack.c.l.b16 %v478
    %v1523 = vunpack.c.h.b16 %v478
    %v1524 = vunpack.c.l.b16 %v479
    %v1525 = vunpack.c.h.b16 %v479
    %v1526 = vunpack.c.l.b16 %v480
    %v1527 = vunpack.c.h.b16 %v480
    %v1528 = vunpack.c.l.b16 %v481
    %v1529 = vunpack.c.h.b16 %v481
    %v1530 = vunpack.c.l.b16 %v482
    %v1531 = vunpack.c.h.b16 %v482
    %v1532 = vunpack.c.l.b16 %v483
    %v1533 = vunpack.c.h.b16 %v483
    %v1534 = vunpack.c.l.b16 %v484
    %v1535 = vunpack.c.h.b16 %v484
    %v1536 = vunpack.c.l.b16 %v485
    %v1537 = vunpack.c.h.b16 %v485
    %v1538 = vunpack.c.l.b16 %v486
    %v1539 = vunpack.c.h.b16 %v486
    %v1540 = vunpack.c.l.b16 %v487
    %v1541 = vunpack.c.h.b16 %v487
    %v1542 = vunpack.c.l.b16 %v488
    %v1543 = vunpack.c.h.b16 %v488
    %v1544 = vunpack.c.l.b16 %v489
    %v1545 = vunpack.c.h.b16 %v489
    %v1546 = vunpack.c.l.b16 %v490
    %v1547 = vunpack.c.h.b16 %v490
    %v1548 = vunpack.c.l.b16 %v491
    %v1549 = vunpack.c.h.b16 %v491
    %v1550 = vunpack.c.l.b16 %v492
    %v1551 = vunpack.c.h.b16 %v492
    %v1552 = vunpack.c.l.b16 %v493
    %v1553 = vunpack.c.h.b16 %v493
    %v1554 = vunpack.c.l.b16 %v494
    %v1555 = vunpack.c.h.b16 %v494
    %v1556 = vunpack.c.l.b16 %v495
    %v1557 = vunpack.c.h.b16 %v495
    %v1558 = vunpack.c.l.b16 %v496
    %v1559 = vunpack.c.h.b16 %v496
    %v1560 = vunpack.c.l.b16 %v497
    %v1561 = vunpack.c.h.b16 %v497
    %v1562 = vunpack.c.l.b16 %v498
    %v1563 = vunpack.c.h.b16 %v498
    %v1564 = vunpack.c.l.b16 %v499
    %v1565 = vunpack.c.h.b16 %v499
    %v1566 = vunpack.c.l.b16 %v500
    %v1567 = vunpack.c.h.b16 %v500
    %v1568 = vunpack.c.l.b16 %v501
    %v1569 = vunpack.c.h.b16 %v501
    %v1570 = vunpack.c.l.b16 %v502
    %v1571 = vunpack.c.h.b16 %v502
    %v1572 = vunpack.c.l.b16 %v503
    %v1573 = vunpack.c.h.b16 %v503
    %v1574 = vunpack.c.l.b16 %v504
    %v1575 = vunpack.c.h.b16 %v504
    %v1576 = vunpack.c.l.b16 %v505
    %v1577 = vunpack.c.h.b16 %v505
    %v1578 = vunpack.c.l.b16 %v506
    %v1579 = vunpack.c.h.b16 %v506
    %v1580 = vunpack.c.l.b16 %v507
    %v1581 = vunpack.c.h.b16 %v507
    %v1582 = vunpack.c.l.b16 %v508
    %v1583 = vunpack.c.h.b16 %v508
    %v1584 = vunpack.c.l.b16 %v509
    %v1585 = vunpack.c.h.b16 %v509
    %v1586 = vunpack.c.l.b16 %v510
    %v1587 = vunpack.c.h.b16 %v510
    %v1588 = vunpack.c.l.b16 %v511
    %v1589 = vunpack.c.h.b16 %v511
    %v1590 = vunpack.c.l.b16 %v512
    %v1591 = vunpack.c.h.b16 %v512
    %v1592 = vunpack.c.l.b16 %v513
    %v1593 = vunpack.c.h.b16 %v513
    %v1594 = vunpack.c.l.b16 %v514
    %v1595 = vunpack.c.h.b16 %v514
    %v1596 = vunpack.c.l.b16 %v515
    %v1597 = vunpack.c.h.b16 %v515
    %v1598 = vunpack.c.l.b16 %v516
    %v1599 = vunpack.c.h.b16 %v516
    %v1600 = vunpack.c.l.b16 %v517
    %v1601 = vunpack.c.h.b16 %v517
    %v1602 = vunpack.c.l.b16 %v518
    %v1603 = vunpack.c.h.b16 %v518
    %v1604 = vunpack.c.l.b16 %v519
    %v1605 = vunpack.c.h.b16 %v519
    %v1606 = vunpack.c.l.b16 %v520
    %v1607 = vunpack.c.h.b16 %v520
    %v1608 = vunpack.c.l.b16 %v521
    %v1609 = vunpack.c.h.b16 %v521
    %v1610 = vunpack.c.l.b16 %v522
    %v1611 = vunpack.c.h.b16 %v522
    %v1612 = vunpack.c.l.b16 %v523
    %v1613 = vunpack.c.h.b16 %v523
    %v1614 = vunpack.c.l.b16 %v524
    %v1615 = vunpack.c.h.b16 %v524
    %v1616 = vunpack.c.l.b16 %v525
    %v1617 = vunpack.c.h.b16 %v525
    %v1618 = vunpack.c.l.b16 %v526
    %v1619 = vunpack.c.h.b16 %v526
    %v1620 = vunpack.c.l.b16 %v527
    %v1621 = vunpack.c.h.b16 %v527
    %v1622 = vunpack.c.l.b16 %v528
    %v1623 = vunpack.c.h.b16 %v528
    %v1624 = vunpack.c.l.b16 %v529
    %v1625 = vunpack.c.h.b16 %v529
    %v1626 = vunpack.c.l.b16 %v530
    %v1627 = vunpack.c.h.b16 %v530
    %v1628 = vunpack.c.l.b16 %v531
    %v1629 = vunpack.c.h.b16 %v531
    %v1630 = vunpack.c.l.b16 %v532
    %v1631 = vunpack.c.h.b16 %v532
    %v1632 = vunpack.c.l.b16 %v533
    %v1633 = vunpack.c.h.b16 %v533
    %v1634 = vunpack.c.l.b16 %v534
    %v1635 = vunpack.c.h.b16 %v534
    %v1636 = vunpack.c.l.b16 %v535
    %v1637 = vunpack.c.h.b16 %v535
    %v1638 = vunpack.c.l.b16 %v536
    %v1639 = vunpack.c.h.b16 %v536
    %v1640 = vunpack.c.l.b16 %v537
    %v1641 = vunpack.c.h.b16 %v537
    %v1642 = vunpack.c.l.b16 %v538
    %v1643 = vunpack.c.h.b16 %v538
    %v1644 = vunpack.c.l.b16 %v539
    %v1645 = vunpack.c.h.b16 %v539
    %v1646 = vunpack.c.l.b16 %v540
    %v1647 = vunpack.c.h.b16 %v540
    %v1648 = vunpack.c.l.b16 %v541
    %v1649 = vunpack.c.h.b16 %v541
    %v1650 = vunpack.c.l.b16 %v542
    %v1651 = vunpack.c.h.b16 %v542
    %v1652 = vunpack.c.l.b16 %v543
    %v1653 = vunpack.c.h.b16 %v543
    %v1654 = vunpack.c.l.b16 %v544
    %v1655 = vunpack.c.h.b16 %v544
    %v1656 = vunpack.c.l.b16 %v545
    %v1657 = vunpack.c.h.b16 %v545
    %v1658 = vunpack.c.l.b16 %v546
    %v1659 = vunpack.c.h.b16 %v546
    %v1660 = vunpack.c.l.b16 %v547
    %v1661 = vunpack.c.h.b16 %v547
    %v1662 = vunpack.c.l.b16 %v548
    %v1663 = vunpack.c.h.b16 %v548
    %v1664 = vunpack.c.l.b16 %v549
    %v1665 = vunpack.c.h.b16 %v549
    %v1666 = vunpack.c.l.b16 %v550
    %v1667 = vunpack.c.h.b16 %v550
    %v1668 = vunpack.c.l.b16 %v551
    %v1669 = vunpack.c.h.b16 %v551
    %v1670 = vunpack.c.l.b16 %v552
    %v1671 = vunpack.c.h.b16 %v552
    %v1672 = vunpack.c.l.b16 %v553
    %v1673 = vunpack.c.h.b16 %v553
    %v1674 = vunpack.c.l.b16 %v554
    %v1675 = vunpack.c.h.b16 %v554
    %v1676 = vunpack.c.l.b16 %v555
    %v1677 = vunpack.c.h.b16 %v555
    %v1678 = vunpack.c.l.b16 %v556
    %v1679 = vunpack.c.h.b16 %v556
    %v1680 = vunpack.c.l.b16 %v557
    %v1681 = vunpack.c.h.b16 %v557
    %v1682 = vunpack.c.l.b16 %v558
    %v1683 = vunpack.c.h.b16 %v558
    %v1684 = vunpack.c.l.b16 %v559
    %v1685 = vunpack.c.h.b16 %v559
    %v1686 = vunpack.c.l.b16 %v560
    %v1687 = vunpack.c.h.b16 %v560
    %v1688 = vunpack.c.l.b16 %v561
    %v1689 = vunpack.c.h.b16 %v561
    %v1690 = vunpack.c.l.b16 %v562
    %v1691 = vunpack.c.h.b16 %v562
    %v1692 = vunpack.c.l.b16 %v563
    %v1693 = vunpack.c.h.b16 %v563
    %v1694 = vunpack.c.l.b16 %v564
    %v1695 = vunpack.c.h.b16 %v564
    %v1696 = vunpack.c.l.b16 %v565
    %v1697 = vunpack.c.h.b16 %v565
    %v1698 = vunpack.c.l.b16 %v566
    %v1699 = vunpack.c.h.b16 %v566
    %v1700 = vunpack.c.l.b16 %v567
    %v1701 = vunpack.c.h.b16 %v567
    %v1702 = vunpack.c.l.b16 %v568
    %v1703 = vunpack.c.h.b16 %v568
    %v1704 = vunpack.c.l.b16 %v569
    %v1705 = vunpack.c.h.b16 %v569
    %v1706 = vunpack.c.l.b16 %v570
    %v1707 = vunpack.c.h.b16 %v570
    %v1708 = vunpack.c.l.b16 %v571
    %v1709 = vunpack.c.h.b16 %v571
    %v1710 = vunpack.c.l.b16 %v572
    %v1711 = vunpack.c.h.b16 %v572
    %v1712 = vunpack.c.l.b16 %v573
    %v1713 = vunpack.c.h.b16 %v573
    %v1714 = vunpack.c.l.b16 %v574
    %v1715 = vunpack.c.h.b16 %v574
    %v1716 = vunpack.c.l.b16 %v575
    %v1717 = vunpack.c.h.b16 %v575
    %v1718 = vunpack.c.l.b16 %v576
    %v1719 = vunpack.c.h.b16 %v576
    %v1720 = vunpack.c.l.b16 %v577
    %v1721 = vunpack.c.h.b16 %v577
    %v1722 = vunpack.c.l.b16 %v578
    %v1723 = vunpack.c.h.b16 %v578
    %v1724 = vunpack.c.l.b16 %v579
    %v1725 = vunpack.c.h.b16 %v579
    %v1726 = vunpack.c.l.b16 %v580
    %v1727 = vunpack.c.h.b16 %v580
    %v1728 = vunpack.c.l.b16 %v581
    %v1729 = vunpack.c.h.b16 %v581
    %v1730 = vunpack.c.l.b16 %v582
    %v1731 = vunpack.c.h.b16 %v582
    %v1732 = vunpack.c.l.b16 %v583
    %v1733 = vunpack.c.h.b16 %v583
    %v1734 = vunpack.c.l.b16 %v584
    %v1735 = vunpack.c.h.b16 %v584
    %v1736 = vunpack.c.l.b16 %v585
    %v1737 = vunpack.c.h.b16 %v585
    %v1738 = vunpack.c.l.b16 %v586
    %v1739 = vunpack.c.h.b16 %v586
    %v1740 = vunpack.c.l.b16 %v587
    %v1741 = vunpack.c.h.b16 %v587
    %v1742 = vunpack.c.l.b16 %v588
    %v1743 = vunpack.c.h.b16 %v588
    %v1744 = vunpack.c.l.b16 %v589
    %v1745 = vunpack.c.h.b16 %v589
    %v1746 = vunpack.c.l.b16 %v590
    %v1747 = vunpack.c.h.b16 %v590
    %v1748 = vunpack.c.l.b16 %v591
    %v1749 = vunpack.c.h.b16 %v591
    %v1750 = vunpack.c.l.b16 %v592
    %v1751 = vunpack.c.h.b16 %v592
    %v1752 = vunpack.c.l.b16 %v593
    %v1753 = vunpack.c.h.b16 %v593
    %v1754 = vunpack.c.l.b16 %v594
    %v1755 = vunpack.c.h.b16 %v594
    %v1756 = vunpack.c.l.b16 %v595
    %v1757 = vunpack.c.h.b16 %v595
    %v1758 = vunpack.c.l.b16 %v596
    %v1759 = vunpack.c.h.b16 %v596
    %v1760 = vunpack.c.l.b16 %v597
    %v1761 = vunpack.c.h.b16 %v597
    %v1762 = vunpack.c.l.b16 %v598
    %v1763 = vunpack.c.h.b16 %v598
    %v1764 = vunpack.c.l.b16 %v599
    %v1765 = vunpack.c.h.b16 %v599
    %v1766 = vunpack.c.l.b16 %v600
    %v1767 = vunpack.c.h.b16 %v600
    %v1768 = vunpack.c.l.b16 %v601
    %v1769 = vunpack.c.h.b16 %v601
    %v1770 = vunpack.c.l.b16 %v602
    %v1771 = vunpack.c.h.b16 %v602
    %v1772 = vunpack.c.l.b16 %v603
    %v1773 = vunpack.c.h.b16 %v603
    %v1774 = vunpack.c.l.b16 %v604
    %v1775 = vunpack.c.h.b16 %v604
    %v1776 = vunpack.c.l.b16 %v605
    %v1777 = vunpack.c.h.b16 %v605
    %v1778 = vunpack.c.l.b16 %v606
    %v1779 = vunpack.c.h.b16 %v606
    %v1780 = vunpack.c.l.b16 %v607
    %v1781 = vunpack.c.h.b16 %v607
    %v1782 = vunpack.c.l.b16 %v608
    %v1783 = vunpack.c.h.b16 %v608
    %v1784 = vunpack.c.l.b16 %v609
    %v1785 = vunpack.c.h.b16 %v609
    %v1786 = vunpack.c.l.b16 %v610
    %v1787 = vunpack.c.h.b16 %v610
    %v1788 = vunpack.c.l.b16 %v611
    %v1789 = vunpack.c.h.b16 %v611
    %v1790 = vunpack.c.l.b16 %v612
    %v1791 = vunpack.c.h.b16 %v612
    %v1792 = vunpack.c.l.b16 %v613
    %v1793 = vunpack.c.h.b16 %v613
    %v1794 = vunpack.c.l.b16 %v614
    %v1795 = vunpack.c.h.b16 %v614
    %v1796 = vunpack.c.l.b16 %v615
    %v1797 = vunpack.c.h.b16 %v615
    %v1798 = vunpack.c.l.b16 %v616
    %v1799 = vunpack.c.h.b16 %v616
    %v1800 = vunpack.c.l.b16 %v617
    %v1801 = vunpack.c.h.b16 %v617
    %v1802 = vpack.c.b16 %v1040, %v1034
    %v1803 = vpack.c.b16 %v1041, %v1035
    %v1804 = vpack.c.b16 %v1042, %v1036
    %v1805 = vpack.c.b16 %v1043, %v1037
    %v1806 = vpack.c.b16 %v1044, %v1038
    %v1807 = vpack.c.b16 %v1045, %v1039
    %v1808 = vpack.c.b16 %v1052, %v1046
    %v1809 = vpack.c.b16 %v1053, %v1047
    %v1810 = vpack.c.b16 %v1054, %v1048
    %v1811 = vpack.c.b16 %v1055, %v1049
    %v1812 = vpack.c.b16 %v1056, %v1050
    %v1813 = vpack.c.b16 %v1057, %v1051
    %v1814 = vpack.c.b16 %v1064, %v1058
    %v1815 = vpack.c.b16 %v1065, %v1059
    %v1816 = vpack.c.b16 %v1066, %v1060
    %v1817 = vpack.c.b16 %v1067, %v1061
    %v1818 = vpack.c.b16 %v1068, %v1062
    %v1819 = vpack.c.b16 %v1069, %v1063
    %v1820 = vpack.c.b16 %v1076, %v1070
    %v1821 = vpack.c.b16 %v1077, %v1071
    %v1822 = vpack.c.b16 %v1078, %v1072
    %v1823 = vpack.c.b16 %v1079, %v1073
    %v1824 = vpack.c.b16 %v1080, %v1074
    %v1825 = vpack.c.b16 %v1081, %v1075
    %v1826 = vpack.c.b16 %v1088, %v1082
    %v1827 = vpack.c.b16 %v1089, %v1083
    %v1828 = vpack.c.b16 %v1090, %v1084
    %v1829 = vpack.c.b16 %v1091, %v1085
    %v1830 = vpack.c.b16 %v1092, %v1086
    %v1831 = vpack.c.b16 %v1093, %v1087
    %v1832 = vpack.c.b16 %v1100, %v1094
    %v1833 = vpack.c.b16 %v1101, %v1095
    %v1834 = vpack.c.b16 %v1102, %v1096
    %v1835 = vpack.c.b16 %v1103, %v1097
    %v1836 = vpack.c.b16 %v1104, %v1098
    %v1837 = vpack.c.b16 %v1105, %v1099
    %v1838 = vpack.c.b16 %v1112, %v1106
    %v1839 = vpack.c.b16 %v1113, %v1107
    %v1840 = vpack.c.b16 %v1114, %v1108
    %v1841 = vpack.c.b16 %v1115, %v1109
    %v1842 = vpack.c.b16 %v1116, %v1110
    %v1843 = vpack.c.b16 %v1117, %v1111
    %v1844 = vpack.c.b16 %v1124, %v1118
    %v1845 = vpack.c.b16 %v1125, %v1119
    %v1846 = vpack.c.b16 %v1126, %v1120
    %v1847 = vpack.c.b16 %v1127, %v1121
    %v1848 = vpack.c.b16 %v1128, %v1122
    %v1849 = vpack.c.b16 %v1129, %v1123
    %v1850 = vpack.c.b16 %v1136, %v1130
    %v1851 = vpack.c.b16 %v1137, %v1131
    %v1852 = vpack.c.b16 %v1138, %v1132
    %v1853 = vpack.c.b16 %v1139, %v1133
    %v1854 = vpack.c.b16 %v1140, %v1134
    %v1855 = vpack.c.b16 %v1141, %v1135
    %v1856 = vpack.c.b16 %v1148, %v1142
    %v1857 = vpack.c.b16 %v1149, %v1143
    %v1858 = vpack.c.b16 %v1150, %v1144
    %v1859 = vpack.c.b16 %v1151, %v1145
    %v1860 = vpack.c.b16 %v1152, %v1146
    %v1861 = vpack.c.b16 %v1153, %v1147
    %v1862 = vpack.c.b16 %v1160, %v1154
    %v1863 = vpack.c.b16 %v1161, %v1155
    %v1864 = vpack.c.b16 %v1162, %v1156
    %v1865 = vpack.c.b16 %v1163, %v1157
    %v1866 = vpack.c.b16 %v1164, %v1158
    %v1867 = vpack.c.b16 %v1165, %v1159
    %v1868 = vpack.c.b16 %v1172, %v1166
    %v1869 = vpack.c.b16 %v1173, %v1167
    %v1870 = vpack.c.b16 %v1174, %v1168
    %v1871 = vpack.c.b16 %v1175, %v1169
    %v1872 = vpack.c.b16 %v1176, %v1170
    %v1873 = vpack.c.b16 %v1177, %v1171
    %v1874 = vpack.c.b16 %v1184, %v1178
    %v1875 = vpack.c.b16 %v1185, %v1179
    %v1876 = vpack.c.b16 %v1186, %v1180
    %v1877 = vpack.c.b16 %v1187, %v1181
    %v1878 = vpack.c.b16 %v1188, %v1182
    %v1879 = vpack.c.b16 %v1189, %v1183
    %v1880 = vpack.c.b16 %v1196, %v1190
    %v1881 = vpack.c.b16 %v1197, %v1191
    %v1882 = vpack.c.b16 %v1198, %v1192
    %v1883 = vpack.c.b16 %v1199, %v1193
    %v1884 = vpack.c.b16 %v1200, %v1194
    %v1885 = vpack.c.b16 %v1201, %v1195
    %v1886 = vpack.c.b16 %v1208, %v1202
    %v1887 = vpack.c.b16 %v1209, %v1203
    %v1888 = vpack.c.b16 %v1210, %v1204
    %v1889 = vpack.c.b16 %v1211, %v1205
    %v1890 = vpack.c.b16 %v1212, %v1206
    %v1891 = vpack.c.b16 %v1213, %v1207
    %v1892 = vpack.c.b16 %v1220, %v1214
    %v1893 = vpack.c.b16 %v1221, %v1215
    %v1894 = vpack.c.b16 %v1222, %v1216
    %v1895 = vpack.c.b16 %v1223, %v1217
    %v1896 = vpack.c.b16 %v1224, %v1218
    %v1897 = vpack.c.b16 %v1225, %v1219
    %v1898 = vpack.c.b16 %v1232, %v1226
    %v1899 = vpack.c.b16 %v1233, %v1227
    %v1900 = vpack.c.b16 %v1234, %v1228
    %v1901 = vpack.c.b16 %v1235, %v1229
    %v1902 = vpack.c.b16 %v1236, %v1230
    %v1903 = vpack.c.b16 %v1237, %v1231
    %v1904 = vpack.c.b16 %v1244, %v1238
    %v1905 = vpack.c.b16 %v1245, %v1239
    %v1906 = vpack.c.b16 %v1246, %v1240
    %v1907 = vpack.c.b16 %v1247, %v1241
    %v1908 = vpack.c.b16 %v1248, %v1242
    %v1909 = vpack.c.b16 %v1249, %v1243
    %v1910 = vpack.c.b16 %v1256, %v1250
    %v1911 = vpack.c.b16 %v1257, %v1251
    %v1912 = vpack.c.b16 %v1258, %v1252
    %v1913 = vpack.c.b16 %v1259, %v1253
    %v1914 = vpack.c.b16 %v1260, %v1254
    %v1915 = vpack.c.b16 %v1261, %v1255
    %v1916 = vpack.c.b16 %v1268, %v1262
    %v1917 = vpack.c.b16 %v1269, %v1263
    %v1918 = vpack.c.b16 %v1270, %v1264
    %v1919 = vpack.c.b16 %v1271, %v1265
    %v1920 = vpack.c.b16 %v1272, %v1266
    %v1921 = vpack.c.b16 %v1273, %v1267
    %v1922 = vpack.c.b16 %v1280, %v1274
    %v1923 = vpack.c.b16 %v1281, %v1275
    %v1924 = vpack.c.b16 %v1282, %v1276
    %v1925 = vpack.c.b16 %v1283, %v1277
    %v1926 = vpack.c.b16 %v1284, %v1278
    %v1927 = vpack.c.b16 %v1285, %v1279
    %v1928 = vpack.c.b16 %v1292, %v1286
    %v1929 = vpack.c.b16 %v1293, %v1287
    %v1930 = vpack.c.b16 %v1294, %v1288
    %v1931 = vpack.c.b16 %v1295, %v1289
    %v1932 = vpack.c.b16 %v1296, %v1290
    %v1933 = vpack.c.b16 %v1297, %v1291
    %v1934 = vpack.c.b16 %v1304, %v1298
    %v1935 = vpack.c.b16 %v1305, %v1299
    %v1936 = vpack.c.b16 %v1306, %v1300
    %v1937 = vpack.c.b16 %v1307, %v1301
    %v1938 = vpack.c.b16 %v1308, %v1302
    %v1939 = vpack.c.b16 %v1309, %v1303
    %v1940 = vpack.c.b16 %v1316, %v1310
    %v1941 = vpack.c.b16 %v1317, %v1311
    %v1942 = vpack.c.b16 %v1318, %v1312
    %v1943 = vpack.c.b16 %v1319, %v1313
    %v1944 = vpack.c.b16 %v1320, %v1314
    %v1945 = vpack.c.b16 %v1321, %v1315
    %v1946 = vpack.c.b16 %v1328, %v1322
    %v1947 = vpack.c.b16 %v1329, %v1323
    %v1948 = vpack.c.b16 %v1330, %v1324
    %v1949 = vpack.c.b16 %v1331, %v1325
    %v1950 = vpack.c.b16 %v1332, %v1326
    %v1951 = vpack.c.b16 %v1333, %v1327
    %v1952 = vpack.c.b16 %v1340, %v1334
    %v1953 = vpack.c.b16 %v1341, %v1335
    %v1954 = vpack.c.b16 %v1342, %v1336
    %v1955 = vpack.c.b16 %v1343, %v1337
    %v1956 = vpack.c.b16 %v1344, %v1338
    %v1957 = vpack.c.b16 %v1345, %v1339
    %v1958 = vpack.c.b16 %v1352, %v1346
    %v1959 = vpack.c.b16 %v1353, %v1347
    %v1960 = vpack.c.b16 %v1354, %v1348
    %v1961 = vpack.c.b16 %v1355, %v1349
    %v1962 = vpack.c.b16 %v1356, %v1350
    %v1963 = vpack.c.b16 %v1357, %v1351
    %v1964 = vpack.c.b16 %v1364, %v1358
    %v1965 = vpack.c.b16 %v1365, %v1359
    %v1966 = vpack.c.b16 %v1366, %v1360
    %v1967 = vpack.c.b16 %v1367, %v1361
    %v1968 = vpack.c.b16 %v1368, %v1362
    %v1969 = vpack.c.b16 %v1369, %v1363
    %v1970 = vpack.c.b16 %v1376, %v1370
    %v1971 = vpack.c.b16 %v1377, %v1371
    %v1972 = vpack.c.b16 %v1378, %v1372
    %v1973 = vpack.c.b16 %v1379, %v1373
    %v1974 = vpack.c.b16 %v1380, %v1374
    %v1975 = vpack.c.b16 %v1381, %v1375
    %v1976 = vpack.c.b16 %v1388, %v1382
    %v1977 = vpack.c.b16 %v1389, %v1383
    %v1978 = vpack.c.b16 %v1390, %v1384
    %v1979 = vpack.c.b16 %v1391, %v1385
    %v1980 = vpack.c.b16 %v1392, %v1386
    %v1981 = vpack.c.b16 %v1393, %v1387
    %v1982 = vpack.c.b16 %v1400, %v1394
    %v1983 = vpack.c.b16 %v1401, %v1395
    %v1984 = vpack.c.b16 %v1402, %v1396
    %v1985 = vpack.c.b16 %v1403, %v1397
    %v1986 = vpack.c.b16 %v1404, %v1398
    %v1987 = vpack.c.b16 %v1405, %v1399
    %v1988 = vpack.c.b16 %v1412, %v1406
    %v1989 = vpack.c.b16 %v1413, %v1407
    %v1990 = vpack.c.b16 %v1414, %v1408
    %v1991 = vpack.c.b16 %v1415, %v1409
    %v1992 = vpack.c.b16 %v1416, %v1410
    %v1993 = vpack.c.b16 %v1417, %v1411
    %v1994 = vpack.c.b16 %v1424, %v1418
    %v1995 = vpack.c.b16 %v1425, %v1419
    %v1996 = vpack.c.b16 %v1426, %v1420
    %v1997 = vpack.c.b16 %v1427, %v1421
    %v1998 = vpack.c.b16 %v1428, %v1422
    %v1999 = vpack.c.b16 %v1429, %v1423
    %v2000 = vpack.c.b16 %v1436, %v1430
    %v2001 = vpack.c.b16 %v1437, %v1431
    %v2002 = vpack.c.b16 %v1438, %v1432
    %v2003 = vpack.c.b16 %v1439, %v1433
    %v2004 = vpack.c.b16 %v1440, %v1434
    %v2005 = vpack.c.b16 %v1441, %v1435
    %v2006 = vpack.c.b16 %v1448, %v1442
    %v2007 = vpack.c.b16 %v1449, %v1443
    %v2008 = vpack.c.b16 %v1450, %v1444
    %v2009 = vpack.c.b16 %v1451, %v1445
    %v2010 = vpack.c.b16 %v1452, %v1446
    %v2011 = vpack.c.b16 %v1453, %v1447
    %v2012 = vpack.c.b16 %v1460, %v1454
    %v2013 = vpack.c.b16 %v1461, %v1455
    %v2014 = vpack.c.b16 %v1462, %v1456
    %v2015 = vpack.c.b16 %v1463, %v1457
    %v2016 = vpack.c.b16 %v1464, %v1458
    %v2017 = vpack.c.b16 %v1465, %v1459
    %v2018 = vpack.c.b16 %v1472, %v1466
    %v2019 = vpack.c.b16 %v1473, %v1467
    %v2020 = vpack.c.b16 %v1474, %v1468
    %v2021 = vpack.c.b16 %v1475, %v1469
    %v2022 = vpack.c.b16 %v1476, %v1470
    %v2023 = vpack.c.b16 %v1477, %v1471
    %v2024 = vpack.c.b16 %v1484, %v1478
    %v2025 = vpack.c.b16 %v1485, %v1479
    %v2026 = vpack.c.b16 %v1486, %v1480
    %v2027 = vpack.c.b16 %v1487, %v1481
    %v2028 = vpack.c.b16 %v1488, %v1482
    %v2029 = vpack.c.b16 %v1489, %v1483
    %v2030 = vpack.c.b16 %v1496, %v1490
    %v2031 = vpack.c.b16 %v1497, %v1491
    %v2032 = vpack.c.b16 %v1498, %v1492
    %v2033 = vpack.c.b16 %v1499, %v1493
    %v2034 = vpack.c.b16 %v1500, %v1494
    %v2035 = vpack.c.b16 %v1501, %v1495
    %v2036 = vpack.c.b16 %v1508, %v1502
    %v2037 = vpack.c.b16 %v1509, %v1503
    %v2038 = vpack.c.b16 %v1510, %v1504
    %v2039 = vpack.c.b16 %v1511, %v1505
    %v2040 = vpack.c.b16 %v1512, %v1506
    %v2041 = vpack.c.b16 %v1513, %v1507
    %v2042 = vpack.c.b16 %v1520, %v1514
    %v2043 = vpack.c.b16 %v1521, %v1515
    %v2044 = vpack.c.b16 %v1522, %v1516
    %v2045 = vpack.c.b16 %v1523, %v1517
    %v2046 = vpack.c.b16 %v1524, %v1518
    %v2047 = vpack.c.b16 %v1525, %v1519
    %v2048 = vpack.c.b16 %v1532, %v1526
    %v2049 = vpack.c.b16 %v1533, %v1527
    %v2050 = vpack.c.b16 %v1534, %v1528
    %v2051 = vpack.c.b16 %v1535, %v1529
    %v2052 = vpack.c.b16 %v1536, %v1530
    %v2053 = vpack.c.b16 %v1537, %v1531
    %v2054 = vpack.c.b16 %v1544, %v1538
    %v2055 = vpack.c.b16 %v1545, %v1539
    %v2056 = vpack.c.b16 %v1546, %v1540
    %v2057 = vpack.c.b16 %v1547, %v1541
    %v2058 = vpack.c.b16 %v1548, %v1542
    %v2059 = vpack.c.b16 %v1549, %v1543
    %v2060 = vpack.c.b16 %v1556, %v1550
    %v2061 = vpack.c.b16 %v1557, %v1551
    %v2062 = vpack.c.b16 %v1558, %v1552
    %v2063 = vpack.c.b16 %v1559, %v1553
    %v2064 = vpack.c.b16 %v1560, %v1554
    %v2065 = vpack.c.b16 %v1561, %v1555
    %v2066 = vpack.c.b16 %v1568, %v1562
    %v2067 = vpack.c.b16 %v1569, %v1563
    %v2068 = vpack.c.b16 %v1570, %v1564
    %v2069 = vpack.c.b16 %v1571, %v1565
    %v2070 = vpack.c.b16 %v1572, %v1566
    %v2071 = vpack.c.b16 %v1573, %v1567
    %v2072 = vpack.c.b16 %v1580, %v1574
    %v2073 = vpack.c.b16 %v1581, %v1575
    %v2074 = vpack.c.b16 %v1582, %v1576
    %v2075 = vpack.c.b16 %v1583, %v1577
    %v2076 = vpack.c.b16 %v1584, %v1578
    %v2077 = vpack.c.b16 %v1585, %v1579
    %v2078 = vpack.c.b16 %v1592, %v1586
    %v2079 = vpack.c.b16 %v1593, %v1587
    %v2080 = vpack.c.b16 %v1594, %v1588
    %v2081 = vpack.c.b16 %v1595, %v1589
    %v2082 = vpack.c.b16 %v1596, %v1590
    %v2083 = vpack.c.b16 %v1597, %v1591
    %v2084 = vpack.c.b16 %v1604, %v1598
    %v2085 = vpack.c.b16 %v1605, %v1599
    %v2086 = vpack.c.b16 %v1606, %v1600
    %v2087 = vpack.c.b16 %v1607, %v1601
    %v2088 = vpack.c.b16 %v1608, %v1602
    %v2089 = vpack.c.b16 %v1609, %v1603
    %v2090 = vpack.c.b16 %v1616, %v1610
    %v2091 = vpack.c.b16 %v1617, %v1611
    %v2092 = vpack.c.b16 %v1618, %v1612
    %v2093 = vpack.c.b16 %v1619, %v1613
    %v2094 = vpack.c.b16 %v1620, %v1614
    %v2095 = vpack.c.b16 %v1621, %v1615
    %v2096 = vpack.c.b16 %v1628, %v1622
    %v2097 = vpack.c.b16 %v1629, %v1623
    %v2098 = vpack.c.b16 %v1630, %v1624
    %v2099 = vpack.c.b16 %v1631, %v1625
    %v2100 = vpack.c.b16 %v1632, %v1626
    %v2101 = vpack.c.b16 %v1633, %v1627
    %v2102 = vpack.c.b16 %v1640, %v1634
    %v2103 = vpack.c.b16 %v1641, %v1635
    %v2104 = vpack.c.b16 %v1642, %v1636
    %v2105 = vpack.c.b16 %v1643, %v1637
    %v2106 = vpack.c.b16 %v1644, %v1638
    %v2107 = vpack.c.b16 %v1645, %v1639
    %v2108 = vpack.c.b16 %v1652, %v1646
    %v2109 = vpack.c.b16 %v1653, %v1647
    %v2110 = vpack.c.b16 %v1654, %v1648
    %v2111 = vpack.c.b16 %v1655, %v1649
    %v2112 = vpack.c.b16 %v1656, %v1650
    %v2113 = vpack.c.b16 %v1657, %v1651
    %v2114 = vpack.c.b16 %v1664, %v1658
    %v2115 = vpack.c.b16 %v1665, %v1659
    %v2116 = vpack.c.b16 %v1666, %v1660
    %v2117 = vpack.c.b16 %v1667, %v1661
    %v2118 = vpack.c.b16 %v1668, %v1662
    %v2119 = vpack.c.b16 %v1669, %v1663
    %v2120 = vpack.c.b16 %v1676, %v1670
    %v2121 = vpack.c.b16 %v1677, %v1671
    %v2122 = vpack.c.b16 %v1678, %v1672
    %v2123 = vpack.c.b16 %v1679, %v1673
    %v2124 = vpack.c.b16 %v1680, %v1674
    %v2125 = vpack.c.b16 %v1681, %v1675
    %v2126 = vpack.c.b16 %v1688, %v1682
    %v2127 = vpack.c.b16 %v1689, %v1683
    %v2128 = vpack.c.b16 %v1690, %v1684
    %v2129 = vpack.c.b16 %v1691, %v1685
    %v2130 = vpack.c.b16 %v1692, %v1686
    %v2131 = vpack.c.b16 %v1693, %v1687
    %v2132 = vpack.c.b16 %v1700, %v1694
    %v2133 = vpack.c.b16 %v1701, %v1695
    %v2134 = vpack.c.b16 %v1702, %v1696
    %v2135 = vpack.c.b16 %v1703, %v1697
    %v2136 = vpack.c.b16 %v1704, %v1698
    %v2137 = vpack.c.b16 %v1705, %v1699
    %v2138 = vpack.c.b16 %v1712, %v1706
    %v2139 = vpack.c.b16 %v1713, %v1707
    %v2140 = vpack.c.b16 %v1714, %v1708
    %v2141 = vpack.c.b16 %v1715, %v1709
    %v2142 = vpack.c.b16 %v1716, %v1710
    %v2143 = vpack.c.b16 %v1717, %v1711
    %v2144 = vpack.c.b16 %v1724, %v1718
    %v2145 = vpack.c.b16 %v1725, %v1719
    %v2146 = vpack.c.b16 %v1726, %v1720
    %v2147 = vpack.c.b16 %v1727, %v1721
    %v2148 = vpack.c.b16 %v1728, %v1722
    %v2149 = vpack.c.b16 %v1729, %v1723
    %v2150 = vpack.c.b16 %v1736, %v1730
    %v2151 = vpack.c.b16 %v1737, %v1731
    %v2152 = vpack.c.b16 %v1738, %v1732
    %v2153 = vpack.c.b16 %v1739, %v1733
    %v2154 = vpack.c.b16 %v1740, %v1734
    %v2155 = vpack.c.b16 %v1741, %v1735
    %v2156 = vpack.c.b16 %v1748, %v1742
    %v2157 = vpack.c.b16 %v1749, %v1743
    %v2158 = vpack.c.b16 %v1750, %v1744
    %v2159 = vpack.c.b16 %v1751, %v1745
    %v2160 = vpack.c.b16 %v1752, %v1746
    %v2161 = vpack.c.b16 %v1753, %v1747
    %v2162 = vpack.c.b16 %v1760, %v1754
    %v2163 = vpack.c.b16 %v1761, %v1755
    %v2164 = vpack.c.b16 %v1762, %v1756
    %v2165 = vpack.c.b16 %v1763, %v1757
    %v2166 = vpack.c.b16 %v1764, %v1758
    %v2167 = vpack.c.b16 %v1765, %v1759
    %v2168 = vpack.c.b16 %v1772, %v1766
    %v2169 = vpack.c.b16 %v1773, %v1767
    %v2170 = vpack.c.b16 %v1774, %v1768
    %v2171 = vpack.c.b16 %v1775, %v1769
    %v2172 = vpack.c.b16 %v1776, %v1770
    %v2173 = vpack.c.b16 %v1777, %v1771
    %v2174 = vpack.c.b16 %v1784, %v1778
    %v2175 = vpack.c.b16 %v1785, %v1779
    %v2176 = vpack.c.b16 %v1786, %v1780
    %v2177 = vpack.c.b16 %v1787, %v1781
    %v2178 = vpack.c.b16 %v1788, %v1782
    %v2179 = vpack.c.b16 %v1789, %v1783
    %v2180 = vpack.c.b16 %v1796, %v1790
    %v2181 = vpack.c.b16 %v1797, %v1791
    %v2182 = vpack.c.b16 %v1798, %v1792
    %v2183 = vpack.c.b16 %v1799, %v1793
    %v2184 = vpack.c.b16 %v1800, %v1794
    %v2185 = vpack.c.b16 %v1801, %v1795
    %2570 = vmatprep.subr.bf16.mxu0 %v1845
    %2571 = vmatpush1.bf16.msra.mxu0 %v1844
    %2572 = vmatprep.subr.bf16.mxu0 %v1839
    %2573 = vmatpush1.bf16.msra.mxu0 %v1838
    %2574 = vmatprep.subr.bf16.mxu0 %v1833
    %2575 = vmatpush1.bf16.msra.mxu0 %v1832
    %2576 = vmatprep.subr.bf16.mxu0 %v1827
    %2577 = vmatpush1.bf16.msra.mxu0 %v1826
    %2578 = vmatprep.subr.bf16.mxu0 %v1821
    %2579 = vmatpush1.bf16.msra.mxu0 %v1820
    %2580 = vmatprep.subr.bf16.mxu0 %v1815
    %2581 = vmatpush1.bf16.msra.mxu0 %v1814
    %2582 = vmatprep.subr.bf16.mxu0 %v1809
    %2583 = vmatpush1.bf16.msra.mxu0 %v1808
    %2584 = vmatprep.subr.bf16.mxu0 %v1803
    %2585 = vmatpush1.bf16.msra.mxu0 %v1802
    %2586 = vmatprep.subr.bf16.mxu0 %v1893
    %2587 = vmatpush2.bf16.msra.mxu0 %v1892
    %2588 = vmatprep.subr.bf16.mxu0 %v1887
    %2589 = vmatpush2.bf16.msra.mxu0 %v1886
    %2590 = vmatprep.subr.bf16.mxu0 %v1881
    %2591 = vmatpush2.bf16.msra.mxu0 %v1880
    %2592 = vmatprep.subr.bf16.mxu0 %v1875
    %2593 = vmatpush2.bf16.msra.mxu0 %v1874
    %2594 = vmatprep.subr.bf16.mxu0 %v1869
    %2595 = vmatpush2.bf16.msra.mxu0 %v1868
    %2596 = vmatprep.subr.bf16.mxu0 %v1863
    %2597 = vmatpush2.bf16.msra.mxu0 %v1862
    %2598 = vmatprep.subr.bf16.mxu0 %v1857
    %2599 = vmatpush2.bf16.msra.mxu0 %v1856
    %2600 = vmatprep.subr.bf16.mxu0 %v1851
    %2601 = vmatpush2.bf16.msra.mxu0 %v1850
    %2602 = vmatprep.mubr.bf16.mxu0 %v227
    %2603 = vmatmul.mubr.bf16.gmra.mxu0 %v226
    %v2604 = vpop.f32.mrf.mxu0
    %v2605 = vadd.f32 %v623, %v2604
    %v2606 = vpop.f32.mrf.mxu0
    %v2607 = vadd.f32 %v627, %v2606
    %v2608 = vpop.f32.mrf.mxu0
    %v2609 = vadd.f32 %v623, %v2608
    %v2610 = vpop.f32.mrf.mxu0
    %v2611 = vadd.f32 %v627, %v2610
    %2612 = vdwg.mxu0
    %2613 = vmatprep.subr.bf16.mxu0 %v1941
    %2614 = vmatpush1.bf16.msra.mxu0 %v1940
    %2615 = vmatprep.subr.bf16.mxu0 %v1935
    %2616 = vmatpush1.bf16.msra.mxu0 %v1934
    %2617 = vmatprep.subr.bf16.mxu0 %v1929
    %2618 = vmatpush1.bf16.msra.mxu0 %v1928
    %2619 = vmatprep.subr.bf16.mxu0 %v1923
    %2620 = vmatpush1.bf16.msra.mxu0 %v1922
    %2621 = vmatprep.subr.bf16.mxu0 %v1917
    %2622 = vmatpush1.bf16.msra.mxu0 %v1916
    %2623 = vmatprep.subr.bf16.mxu0 %v1911
    %2624 = vmatpush1.bf16.msra.mxu0 %v1910
    %2625 = vmatprep.subr.bf16.mxu0 %v1905
    %2626 = vmatpush1.bf16.msra.mxu0 %v1904
    %2627 = vmatprep.subr.bf16.mxu0 %v1899
    %2628 = vmatpush1.bf16.msra.mxu0 %v1898
    %2629 = vmatprep.subr.bf16.mxu0 %v1989
    %2630 = vmatpush2.bf16.msra.mxu0 %v1988
    %2631 = vmatprep.subr.bf16.mxu0 %v1983
    %2632 = vmatpush2.bf16.msra.mxu0 %v1982
    %2633 = vmatprep.subr.bf16.mxu0 %v1977
    %2634 = vmatpush2.bf16.msra.mxu0 %v1976
    %2635 = vmatprep.subr.bf16.mxu0 %v1971
    %2636 = vmatpush2.bf16.msra.mxu0 %v1970
    %2637 = vmatprep.subr.bf16.mxu0 %v1965
    %2638 = vmatpush2.bf16.msra.mxu0 %v1964
    %2639 = vmatprep.subr.bf16.mxu0 %v1959
    %2640 = vmatpush2.bf16.msra.mxu0 %v1958
    %2641 = vmatprep.subr.bf16.mxu0 %v1953
    %2642 = vmatpush2.bf16.msra.mxu0 %v1952
    %2643 = vmatprep.subr.bf16.mxu0 %v1947
    %2644 = vmatpush2.bf16.msra.mxu0 %v1946
    %2645 = vmatprep.mubr.bf16.mxu0 %v229
    %2646 = vmatmul.mubr.bf16.gmra.mxu0 %v228
    %v2647 = vpop.f32.mrf.mxu0
    %v2648 = vadd.f32 %v2605, %v2647
    %v2649 = vpop.f32.mrf.mxu0
    %v2650 = vadd.f32 %v2607, %v2649
    %v2651 = vpop.f32.mrf.mxu0
    %v2652 = vadd.f32 %v2609, %v2651
    %v2653 = vpop.f32.mrf.mxu0
    %v2654 = vadd.f32 %v2611, %v2653
    %2655 = vdwg.mxu0
    %2656 = vmatprep.subr.bf16.mxu0 %v2037
    %2657 = vmatpush1.bf16.msra.mxu0 %v2036
    %2658 = vmatprep.subr.bf16.mxu0 %v2031
    %2659 = vmatpush1.bf16.msra.mxu0 %v2030
    %2660 = vmatprep.subr.bf16.mxu0 %v2025
    %2661 = vmatpush1.bf16.msra.mxu0 %v2024
    %2662 = vmatprep.subr.bf16.mxu0 %v2019
    %2663 = vmatpush1.bf16.msra.mxu0 %v2018
    %2664 = vmatprep.subr.bf16.mxu0 %v2013
    %2665 = vmatpush1.bf16.msra.mxu0 %v2012
    %2666 = vmatprep.subr.bf16.mxu0 %v2007
    %2667 = vmatpush1.bf16.msra.mxu0 %v2006
    %2668 = vmatprep.subr.bf16.mxu0 %v2001
    %2669 = vmatpush1.bf16.msra.mxu0 %v2000
    %2670 = vmatprep.subr.bf16.mxu0 %v1995
    %2671 = vmatpush1.bf16.msra.mxu0 %v1994
    %2672 = vmatprep.subr.bf16.mxu0 %v2085
    %2673 = vmatpush2.bf16.msra.mxu0 %v2084
    %2674 = vmatprep.subr.bf16.mxu0 %v2079
    %2675 = vmatpush2.bf16.msra.mxu0 %v2078
    %2676 = vmatprep.subr.bf16.mxu0 %v2073
    %2677 = vmatpush2.bf16.msra.mxu0 %v2072
    %2678 = vmatprep.subr.bf16.mxu0 %v2067
    %2679 = vmatpush2.bf16.msra.mxu0 %v2066
    %2680 = vmatprep.subr.bf16.mxu0 %v2061
    %2681 = vmatpush2.bf16.msra.mxu0 %v2060
    %2682 = vmatprep.subr.bf16.mxu0 %v2055
    %2683 = vmatpush2.bf16.msra.mxu0 %v2054
    %2684 = vmatprep.subr.bf16.mxu0 %v2049
    %2685 = vmatpush2.bf16.msra.mxu0 %v2048
    %2686 = vmatprep.subr.bf16.mxu0 %v2043
    %2687 = vmatpush2.bf16.msra.mxu0 %v2042
    %2688 = vmatprep.mubr.bf16.mxu0 %v231
    %2689 = vmatmul.mubr.bf16.gmra.mxu0 %v230
    %v2690 = vpop.f32.mrf.mxu0
    %v2691 = vadd.f32 %v2648, %v2690
    %v2692 = vpop.f32.mrf.mxu0
    %v2693 = vadd.f32 %v2650, %v2692
    %v2694 = vpop.f32.mrf.mxu0
    %v2695 = vadd.f32 %v2652, %v2694
    %v2696 = vpop.f32.mrf.mxu0
    %v2697 = vadd.f32 %v2654, %v2696
    %2698 = vdwg.mxu0
    %2699 = vmatprep.subr.bf16.mxu0 %v2133
    %2700 = vmatpush1.bf16.msra.mxu0 %v2132
    %2701 = vmatprep.subr.bf16.mxu0 %v2127
    %2702 = vmatpush1.bf16.msra.mxu0 %v2126
    %2703 = vmatprep.subr.bf16.mxu0 %v2121
    %2704 = vmatpush1.bf16.msra.mxu0 %v2120
    %2705 = vmatprep.subr.bf16.mxu0 %v2115
    %2706 = vmatpush1.bf16.msra.mxu0 %v2114
    %2707 = vmatprep.subr.bf16.mxu0 %v2109
    %2708 = vmatpush1.bf16.msra.mxu0 %v2108
    %2709 = vmatprep.subr.bf16.mxu0 %v2103
    %2710 = vmatpush1.bf16.msra.mxu0 %v2102
    %2711 = vmatprep.subr.bf16.mxu0 %v2097
    %2712 = vmatpush1.bf16.msra.mxu0 %v2096
    %2713 = vmatprep.subr.bf16.mxu0 %v2091
    %2714 = vmatpush1.bf16.msra.mxu0 %v2090
    %2715 = vmatprep.subr.bf16.mxu0 %v2181
    %2716 = vmatpush2.bf16.msra.mxu0 %v2180
    %2717 = vmatprep.subr.bf16.mxu0 %v2175
    %2718 = vmatpush2.bf16.msra.mxu0 %v2174
    %2719 = vmatprep.subr.bf16.mxu0 %v2169
    %2720 = vmatpush2.bf16.msra.mxu0 %v2168
    %2721 = vmatprep.subr.bf16.mxu0 %v2163
    %2722 = vmatpush2.bf16.msra.mxu0 %v2162
    %2723 = vmatprep.subr.bf16.mxu0 %v2157
    %2724 = vmatpush2.bf16.msra.mxu0 %v2156
    %2725 = vmatprep.subr.bf16.mxu0 %v2151
    %2726 = vmatpush2.bf16.msra.mxu0 %v2150
    %2727 = vmatprep.subr.bf16.mxu0 %v2145
    %2728 = vmatpush2.bf16.msra.mxu0 %v2144
    %2729 = vmatprep.subr.bf16.mxu0 %v2139
    %2730 = vmatpush2.bf16.msra.mxu0 %v2138
    %2731 = vmatprep.mubr.bf16.mxu0 %v233
    %2732 = vmatmul.mubr.bf16.gmra.mxu0 %v232
    %v2733 = vpop.f32.mrf.mxu0
    %v2734 = vadd.f32 %v2691, %v2733
    %v2735 = vpop.f32.mrf.mxu0
    %v2736 = vadd.f32 %v2693, %v2735
    %v2737 = vpop.f32.mrf.mxu0
    %v2738 = vadd.f32 %v2695, %v2737
    %v2739 = vpop.f32.mrf.mxu0
    %v2740 = vadd.f32 %v2697, %v2739
    %2741 = vdwg.mxu0
    %2742 = vmatprep.subr.bf16.mxu0 %v1847
    %2743 = vmatpush1.bf16.msra.mxu0 %v1846
    %2744 = vmatprep.subr.bf16.mxu0 %v1841
    %2745 = vmatpush1.bf16.msra.mxu0 %v1840
    %2746 = vmatprep.subr.bf16.mxu0 %v1835
    %2747 = vmatpush1.bf16.msra.mxu0 %v1834
    %2748 = vmatprep.subr.bf16.mxu0 %v1829
    %2749 = vmatpush1.bf16.msra.mxu0 %v1828
    %2750 = vmatprep.subr.bf16.mxu0 %v1823
    %2751 = vmatpush1.bf16.msra.mxu0 %v1822
    %2752 = vmatprep.subr.bf16.mxu0 %v1817
    %2753 = vmatpush1.bf16.msra.mxu0 %v1816
    %2754 = vmatprep.subr.bf16.mxu0 %v1811
    %2755 = vmatpush1.bf16.msra.mxu0 %v1810
    %2756 = vmatprep.subr.bf16.mxu0 %v1805
    %2757 = vmatpush1.bf16.msra.mxu0 %v1804
    %2758 = vmatprep.subr.bf16.mxu0 %v1895
    %2759 = vmatpush2.bf16.msra.mxu0 %v1894
    %2760 = vmatprep.subr.bf16.mxu0 %v1889
    %2761 = vmatpush2.bf16.msra.mxu0 %v1888
    %2762 = vmatprep.subr.bf16.mxu0 %v1883
    %2763 = vmatpush2.bf16.msra.mxu0 %v1882
    %2764 = vmatprep.subr.bf16.mxu0 %v1877
    %2765 = vmatpush2.bf16.msra.mxu0 %v1876
    %2766 = vmatprep.subr.bf16.mxu0 %v1871
    %2767 = vmatpush2.bf16.msra.mxu0 %v1870
    %2768 = vmatprep.subr.bf16.mxu0 %v1865
    %2769 = vmatpush2.bf16.msra.mxu0 %v1864
    %2770 = vmatprep.subr.bf16.mxu0 %v1859
    %2771 = vmatpush2.bf16.msra.mxu0 %v1858
    %2772 = vmatprep.subr.bf16.mxu0 %v1853
    %2773 = vmatpush2.bf16.msra.mxu0 %v1852
    %2774 = vmatprep.mubr.bf16.mxu0 %v227
    %2775 = vmatmul.mubr.bf16.gmra.mxu0 %v226
    %v2776 = vpop.f32.mrf.mxu0
    %v2777 = vadd.f32 %v631, %v2776
    %v2778 = vpop.f32.mrf.mxu0
    %v2779 = vadd.f32 %v635, %v2778
    %v2780 = vpop.f32.mrf.mxu0
    %v2781 = vadd.f32 %v631, %v2780
    %v2782 = vpop.f32.mrf.mxu0
    %v2783 = vadd.f32 %v635, %v2782
    %2784 = vdwg.mxu0
    %2785 = vmatprep.subr.bf16.mxu0 %v1943
    %2786 = vmatpush1.bf16.msra.mxu0 %v1942
    %2787 = vmatprep.subr.bf16.mxu0 %v1937
    %2788 = vmatpush1.bf16.msra.mxu0 %v1936
    %2789 = vmatprep.subr.bf16.mxu0 %v1931
    %2790 = vmatpush1.bf16.msra.mxu0 %v1930
    %2791 = vmatprep.subr.bf16.mxu0 %v1925
    %2792 = vmatpush1.bf16.msra.mxu0 %v1924
    %2793 = vmatprep.subr.bf16.mxu0 %v1919
    %2794 = vmatpush1.bf16.msra.mxu0 %v1918
    %2795 = vmatprep.subr.bf16.mxu0 %v1913
    %2796 = vmatpush1.bf16.msra.mxu0 %v1912
    %2797 = vmatprep.subr.bf16.mxu0 %v1907
    %2798 = vmatpush1.bf16.msra.mxu0 %v1906
    %2799 = vmatprep.subr.bf16.mxu0 %v1901
    %2800 = vmatpush1.bf16.msra.mxu0 %v1900
    %2801 = vmatprep.subr.bf16.mxu0 %v1991
    %2802 = vmatpush2.bf16.msra.mxu0 %v1990
    %2803 = vmatprep.subr.bf16.mxu0 %v1985
    %2804 = vmatpush2.bf16.msra.mxu0 %v1984
    %2805 = vmatprep.subr.bf16.mxu0 %v1979
    %2806 = vmatpush2.bf16.msra.mxu0 %v1978
    %2807 = vmatprep.subr.bf16.mxu0 %v1973
    %2808 = vmatpush2.bf16.msra.mxu0 %v1972
    %2809 = vmatprep.subr.bf16.mxu0 %v1967
    %2810 = vmatpush2.bf16.msra.mxu0 %v1966
    %2811 = vmatprep.subr.bf16.mxu0 %v1961
    %2812 = vmatpush2.bf16.msra.mxu0 %v1960
    %2813 = vmatprep.subr.bf16.mxu0 %v1955
    %2814 = vmatpush2.bf16.msra.mxu0 %v1954
    %2815 = vmatprep.subr.bf16.mxu0 %v1949
    %2816 = vmatpush2.bf16.msra.mxu0 %v1948
    %2817 = vmatprep.mubr.bf16.mxu0 %v229
    %2818 = vmatmul.mubr.bf16.gmra.mxu0 %v228
    %v2819 = vpop.f32.mrf.mxu0
    %v2820 = vadd.f32 %v2777, %v2819
    %v2821 = vpop.f32.mrf.mxu0
    %v2822 = vadd.f32 %v2779, %v2821
    %v2823 = vpop.f32.mrf.mxu0
    %v2824 = vadd.f32 %v2781, %v2823
    %v2825 = vpop.f32.mrf.mxu0
    %v2826 = vadd.f32 %v2783, %v2825
    %2827 = vdwg.mxu0
    %2828 = vmatprep.subr.bf16.mxu0 %v2039
    %2829 = vmatpush1.bf16.msra.mxu0 %v2038
    %2830 = vmatprep.subr.bf16.mxu0 %v2033
    %2831 = vmatpush1.bf16.msra.mxu0 %v2032
    %2832 = vmatprep.subr.bf16.mxu0 %v2027
    %2833 = vmatpush1.bf16.msra.mxu0 %v2026
    %2834 = vmatprep.subr.bf16.mxu0 %v2021
    %2835 = vmatpush1.bf16.msra.mxu0 %v2020
    %2836 = vmatprep.subr.bf16.mxu0 %v2015
    %2837 = vmatpush1.bf16.msra.mxu0 %v2014
    %2838 = vmatprep.subr.bf16.mxu0 %v2009
    %2839 = vmatpush1.bf16.msra.mxu0 %v2008
    %2840 = vmatprep.subr.bf16.mxu0 %v2003
    %2841 = vmatpush1.bf16.msra.mxu0 %v2002
    %2842 = vmatprep.subr.bf16.mxu0 %v1997
    %2843 = vmatpush1.bf16.msra.mxu0 %v1996
    %2844 = vmatprep.subr.bf16.mxu0 %v2087
    %2845 = vmatpush2.bf16.msra.mxu0 %v2086
    %2846 = vmatprep.subr.bf16.mxu0 %v2081
    %2847 = vmatpush2.bf16.msra.mxu0 %v2080
    %2848 = vmatprep.subr.bf16.mxu0 %v2075
    %2849 = vmatpush2.bf16.msra.mxu0 %v2074
    %2850 = vmatprep.subr.bf16.mxu0 %v2069
    %2851 = vmatpush2.bf16.msra.mxu0 %v2068
    %2852 = vmatprep.subr.bf16.mxu0 %v2063
    %2853 = vmatpush2.bf16.msra.mxu0 %v2062
    %2854 = vmatprep.subr.bf16.mxu0 %v2057
    %2855 = vmatpush2.bf16.msra.mxu0 %v2056
    %2856 = vmatprep.subr.bf16.mxu0 %v2051
    %2857 = vmatpush2.bf16.msra.mxu0 %v2050
    %2858 = vmatprep.subr.bf16.mxu0 %v2045
    %2859 = vmatpush2.bf16.msra.mxu0 %v2044
    %2860 = vmatprep.mubr.bf16.mxu0 %v231
    %2861 = vmatmul.mubr.bf16.gmra.mxu0 %v230
    %v2862 = vpop.f32.mrf.mxu0
    %v2863 = vadd.f32 %v2820, %v2862
    %v2864 = vpop.f32.mrf.mxu0
    %v2865 = vadd.f32 %v2822, %v2864
    %v2866 = vpop.f32.mrf.mxu0
    %v2867 = vadd.f32 %v2824, %v2866
    %v2868 = vpop.f32.mrf.mxu0
    %v2869 = vadd.f32 %v2826, %v2868
    %2870 = vdwg.mxu0
    %2871 = vmatprep.subr.bf16.mxu0 %v2135
    %2872 = vmatpush1.bf16.msra.mxu0 %v2134
    %2873 = vmatprep.subr.bf16.mxu0 %v2129
    %2874 = vmatpush1.bf16.msra.mxu0 %v2128
    %2875 = vmatprep.subr.bf16.mxu0 %v2123
    %2876 = vmatpush1.bf16.msra.mxu0 %v2122
    %2877 = vmatprep.subr.bf16.mxu0 %v2117
    %2878 = vmatpush1.bf16.msra.mxu0 %v2116
    %2879 = vmatprep.subr.bf16.mxu0 %v2111
    %2880 = vmatpush1.bf16.msra.mxu0 %v2110
    %2881 = vmatprep.subr.bf16.mxu0 %v2105
    %2882 = vmatpush1.bf16.msra.mxu0 %v2104
    %2883 = vmatprep.subr.bf16.mxu0 %v2099
    %2884 = vmatpush1.bf16.msra.mxu0 %v2098
    %2885 = vmatprep.subr.bf16.mxu0 %v2093
    %2886 = vmatpush1.bf16.msra.mxu0 %v2092
    %2887 = vmatprep.subr.bf16.mxu0 %v2183
    %2888 = vmatpush2.bf16.msra.mxu0 %v2182
    %2889 = vmatprep.subr.bf16.mxu0 %v2177
    %2890 = vmatpush2.bf16.msra.mxu0 %v2176
    %2891 = vmatprep.subr.bf16.mxu0 %v2171
    %2892 = vmatpush2.bf16.msra.mxu0 %v2170
    %2893 = vmatprep.subr.bf16.mxu0 %v2165
    %2894 = vmatpush2.bf16.msra.mxu0 %v2164
    %2895 = vmatprep.subr.bf16.mxu0 %v2159
    %2896 = vmatpush2.bf16.msra.mxu0 %v2158
    %2897 = vmatprep.subr.bf16.mxu0 %v2153
    %2898 = vmatpush2.bf16.msra.mxu0 %v2152
    %2899 = vmatprep.subr.bf16.mxu0 %v2147
    %2900 = vmatpush2.bf16.msra.mxu0 %v2146
    %2901 = vmatprep.subr.bf16.mxu0 %v2141
    %2902 = vmatpush2.bf16.msra.mxu0 %v2140
    %2903 = vmatprep.mubr.bf16.mxu0 %v233
    %2904 = vmatmul.mubr.bf16.gmra.mxu0 %v232
    %v2905 = vpop.f32.mrf.mxu0
    %v2906 = vadd.f32 %v2863, %v2905
    %v2907 = vpop.f32.mrf.mxu0
    %v2908 = vadd.f32 %v2865, %v2907
    %v2909 = vpop.f32.mrf.mxu0
    %v2910 = vadd.f32 %v2867, %v2909
    %v2911 = vpop.f32.mrf.mxu0
    %v2912 = vadd.f32 %v2869, %v2911
    %2913 = vdwg.mxu0
    %2914 = vmatprep.subr.bf16.mxu0 %v1849
    %2915 = vmatpush1.bf16.msra.mxu0 %v1848
    %2916 = vmatprep.subr.bf16.mxu0 %v1843
    %2917 = vmatpush1.bf16.msra.mxu0 %v1842
    %2918 = vmatprep.subr.bf16.mxu0 %v1837
    %2919 = vmatpush1.bf16.msra.mxu0 %v1836
    %2920 = vmatprep.subr.bf16.mxu0 %v1831
    %2921 = vmatpush1.bf16.msra.mxu0 %v1830
    %2922 = vmatprep.subr.bf16.mxu0 %v1825
    %2923 = vmatpush1.bf16.msra.mxu0 %v1824
    %2924 = vmatprep.subr.bf16.mxu0 %v1819
    %2925 = vmatpush1.bf16.msra.mxu0 %v1818
    %2926 = vmatprep.subr.bf16.mxu0 %v1813
    %2927 = vmatpush1.bf16.msra.mxu0 %v1812
    %2928 = vmatprep.subr.bf16.mxu0 %v1807
    %2929 = vmatpush1.bf16.msra.mxu0 %v1806
    %2930 = vmatprep.subr.bf16.mxu0 %v1897
    %2931 = vmatpush2.bf16.msra.mxu0 %v1896
    %2932 = vmatprep.subr.bf16.mxu0 %v1891
    %2933 = vmatpush2.bf16.msra.mxu0 %v1890
    %2934 = vmatprep.subr.bf16.mxu0 %v1885
    %2935 = vmatpush2.bf16.msra.mxu0 %v1884
    %2936 = vmatprep.subr.bf16.mxu0 %v1879
    %2937 = vmatpush2.bf16.msra.mxu0 %v1878
    %2938 = vmatprep.subr.bf16.mxu0 %v1873
    %2939 = vmatpush2.bf16.msra.mxu0 %v1872
    %2940 = vmatprep.subr.bf16.mxu0 %v1867
    %2941 = vmatpush2.bf16.msra.mxu0 %v1866
    %2942 = vmatprep.subr.bf16.mxu0 %v1861
    %2943 = vmatpush2.bf16.msra.mxu0 %v1860
    %2944 = vmatprep.subr.bf16.mxu0 %v1855
    %2945 = vmatpush2.bf16.msra.mxu0 %v1854
    %2946 = vmatprep.mubr.bf16.mxu0 %v227
    %2947 = vmatmul.mubr.bf16.gmra.mxu0 %v226
    %v2948 = vpop.f32.mrf.mxu0
    %v2949 = vadd.f32 %v639, %v2948
    %v2950 = vpop.f32.mrf.mxu0
    %v2951 = vadd.f32 %v643, %v2950
    %v2952 = vpop.f32.mrf.mxu0
    %v2953 = vadd.f32 %v639, %v2952
    %v2954 = vpop.f32.mrf.mxu0
    %v2955 = vadd.f32 %v643, %v2954
    %2956 = vdwg.mxu0
    %2957 = vmatprep.subr.bf16.mxu0 %v1945
    %2958 = vmatpush1.bf16.msra.mxu0 %v1944
    %2959 = vmatprep.subr.bf16.mxu0 %v1939
    %2960 = vmatpush1.bf16.msra.mxu0 %v1938
    %2961 = vmatprep.subr.bf16.mxu0 %v1933
    %2962 = vmatpush1.bf16.msra.mxu0 %v1932
    %2963 = vmatprep.subr.bf16.mxu0 %v1927
    %2964 = vmatpush1.bf16.msra.mxu0 %v1926
    %2965 = vmatprep.subr.bf16.mxu0 %v1921
    %2966 = vmatpush1.bf16.msra.mxu0 %v1920
    %2967 = vmatprep.subr.bf16.mxu0 %v1915
    %2968 = vmatpush1.bf16.msra.mxu0 %v1914
    %2969 = vmatprep.subr.bf16.mxu0 %v1909
    %2970 = vmatpush1.bf16.msra.mxu0 %v1908
    %2971 = vmatprep.subr.bf16.mxu0 %v1903
    %2972 = vmatpush1.bf16.msra.mxu0 %v1902
    %2973 = vmatprep.subr.bf16.mxu0 %v1993
    %2974 = vmatpush2.bf16.msra.mxu0 %v1992
    %2975 = vmatprep.subr.bf16.mxu0 %v1987
    %2976 = vmatpush2.bf16.msra.mxu0 %v1986
    %2977 = vmatprep.subr.bf16.mxu0 %v1981
    %2978 = vmatpush2.bf16.msra.mxu0 %v1980
    %2979 = vmatprep.subr.bf16.mxu0 %v1975
    %2980 = vmatpush2.bf16.msra.mxu0 %v1974
    %2981 = vmatprep.subr.bf16.mxu0 %v1969
    %2982 = vmatpush2.bf16.msra.mxu0 %v1968
    %2983 = vmatprep.subr.bf16.mxu0 %v1963
    %2984 = vmatpush2.bf16.msra.mxu0 %v1962
    %2985 = vmatprep.subr.bf16.mxu0 %v1957
    %2986 = vmatpush2.bf16.msra.mxu0 %v1956
    %2987 = vmatprep.subr.bf16.mxu0 %v1951
    %2988 = vmatpush2.bf16.msra.mxu0 %v1950
    %2989 = vmatprep.mubr.bf16.mxu0 %v229
    %2990 = vmatmul.mubr.bf16.gmra.mxu0 %v228
    %v2991 = vpop.f32.mrf.mxu0
    %v2992 = vadd.f32 %v2949, %v2991
    %v2993 = vpop.f32.mrf.mxu0
    %v2994 = vadd.f32 %v2951, %v2993
    %v2995 = vpop.f32.mrf.mxu0
    %v2996 = vadd.f32 %v2953, %v2995
    %v2997 = vpop.f32.mrf.mxu0
    %v2998 = vadd.f32 %v2955, %v2997
    %2999 = vdwg.mxu0
    %3000 = vmatprep.subr.bf16.mxu0 %v2041
    %3001 = vmatpush1.bf16.msra.mxu0 %v2040
    %3002 = vmatprep.subr.bf16.mxu0 %v2035
    %3003 = vmatpush1.bf16.msra.mxu0 %v2034
    %3004 = vmatprep.subr.bf16.mxu0 %v2029
    %3005 = vmatpush1.bf16.msra.mxu0 %v2028
    %3006 = vmatprep.subr.bf16.mxu0 %v2023
    %3007 = vmatpush1.bf16.msra.mxu0 %v2022
    %3008 = vmatprep.subr.bf16.mxu0 %v2017
    %3009 = vmatpush1.bf16.msra.mxu0 %v2016
    %3010 = vmatprep.subr.bf16.mxu0 %v2011
    %3011 = vmatpush1.bf16.msra.mxu0 %v2010
    %3012 = vmatprep.subr.bf16.mxu0 %v2005
    %3013 = vmatpush1.bf16.msra.mxu0 %v2004
    %3014 = vmatprep.subr.bf16.mxu0 %v1999
    %3015 = vmatpush1.bf16.msra.mxu0 %v1998
    %3016 = vmatprep.subr.bf16.mxu0 %v2089
    %3017 = vmatpush2.bf16.msra.mxu0 %v2088
    %3018 = vmatprep.subr.bf16.mxu0 %v2083
    %3019 = vmatpush2.bf16.msra.mxu0 %v2082
    %3020 = vmatprep.subr.bf16.mxu0 %v2077
    %3021 = vmatpush2.bf16.msra.mxu0 %v2076
    %3022 = vmatprep.subr.bf16.mxu0 %v2071
    %3023 = vmatpush2.bf16.msra.mxu0 %v2070
    %3024 = vmatprep.subr.bf16.mxu0 %v2065
    %3025 = vmatpush2.bf16.msra.mxu0 %v2064
    %3026 = vmatprep.subr.bf16.mxu0 %v2059
    %3027 = vmatpush2.bf16.msra.mxu0 %v2058
    %3028 = vmatprep.subr.bf16.mxu0 %v2053
    %3029 = vmatpush2.bf16.msra.mxu0 %v2052
    %3030 = vmatprep.subr.bf16.mxu0 %v2047
    %3031 = vmatpush2.bf16.msra.mxu0 %v2046
    %3032 = vmatprep.mubr.bf16.mxu0 %v231
    %3033 = vmatmul.mubr.bf16.gmra.mxu0 %v230
    %v3034 = vpop.f32.mrf.mxu0
    %v3035 = vadd.f32 %v2992, %v3034
    %v3036 = vpop.f32.mrf.mxu0
    %v3037 = vadd.f32 %v2994, %v3036
    %v3038 = vpop.f32.mrf.mxu0
    %v3039 = vadd.f32 %v2996, %v3038
    %v3040 = vpop.f32.mrf.mxu0
    %v3041 = vadd.f32 %v2998, %v3040
    %3042 = vdwg.mxu0
    %3043 = vmatprep.subr.bf16.mxu0 %v2137
    %3044 = vmatpush1.bf16.msra.mxu0 %v2136
    %3045 = vmatprep.subr.bf16.mxu0 %v2131
    %3046 = vmatpush1.bf16.msra.mxu0 %v2130
    %3047 = vmatprep.subr.bf16.mxu0 %v2125
    %3048 = vmatpush1.bf16.msra.mxu0 %v2124
    %3049 = vmatprep.subr.bf16.mxu0 %v2119
    %3050 = vmatpush1.bf16.msra.mxu0 %v2118
    %3051 = vmatprep.subr.bf16.mxu0 %v2113
    %3052 = vmatpush1.bf16.msra.mxu0 %v2112
    %3053 = vmatprep.subr.bf16.mxu0 %v2107
    %3054 = vmatpush1.bf16.msra.mxu0 %v2106
    %3055 = vmatprep.subr.bf16.mxu0 %v2101
    %3056 = vmatpush1.bf16.msra.mxu0 %v2100
    %3057 = vmatprep.subr.bf16.mxu0 %v2095
    %3058 = vmatpush1.bf16.msra.mxu0 %v2094
    %3059 = vmatprep.subr.bf16.mxu0 %v2185
    %3060 = vmatpush2.bf16.msra.mxu0 %v2184
    %3061 = vmatprep.subr.bf16.mxu0 %v2179
    %3062 = vmatpush2.bf16.msra.mxu0 %v2178
    %3063 = vmatprep.subr.bf16.mxu0 %v2173
    %3064 = vmatpush2.bf16.msra.mxu0 %v2172
    %3065 = vmatprep.subr.bf16.mxu0 %v2167
    %3066 = vmatpush2.bf16.msra.mxu0 %v2166
    %3067 = vmatprep.subr.bf16.mxu0 %v2161
    %3068 = vmatpush2.bf16.msra.mxu0 %v2160
    %3069 = vmatprep.subr.bf16.mxu0 %v2155
    %3070 = vmatpush2.bf16.msra.mxu0 %v2154
    %3071 = vmatprep.subr.bf16.mxu0 %v2149
    %3072 = vmatpush2.bf16.msra.mxu0 %v2148
    %3073 = vmatprep.subr.bf16.mxu0 %v2143
    %3074 = vmatpush2.bf16.msra.mxu0 %v2142
    %3075 = vmatprep.mubr.bf16.mxu0 %v233
    %3076 = vmatmul.mubr.bf16.gmra.mxu0 %v232
    %v3077 = vpop.f32.mrf.mxu0
    %v3078 = vadd.f32 %v3035, %v3077
    %v3079 = vpop.f32.mrf.mxu0
    %v3080 = vadd.f32 %v3037, %v3079
    %v3081 = vpop.f32.mrf.mxu0
    %v3082 = vadd.f32 %v3039, %v3081
    %v3083 = vpop.f32.mrf.mxu0
    %v3084 = vadd.f32 %v3041, %v3083
    %3085 = vdwg.mxu0
    %v3086 = vmax.f32 %v2734, 0.0
    %v3087 = vmax.f32 %v2736, 0.0
    %v3088 = vmax.f32 %v2906, 0.0
    %v3089 = vmax.f32 %v2908, 0.0
    %v3090 = vmax.f32 %v3078, 0.0
    %v3091 = vmax.f32 %v3080, 0.0
    %v3092 = vmax.f32 %v2738, 0.0
    %v3093 = vmax.f32 %v2740, 0.0
    %v3094 = vmax.f32 %v2910, 0.0
    %v3095 = vmax.f32 %v2912, 0.0
    %v3096 = vmax.f32 %v3082, 0.0
    %v3097 = vmax.f32 %v3084, 0.0
    %v3098 = vpack.c.bf16 %v3092, %v3086
    %v3099 = vpack.c.bf16 %v3093, %v3087
    %v3100 = vpack.c.bf16 %v3094, %v3088
    %v3101 = vpack.c.bf16 %v3095, %v3089
    %v3102 = vpack.c.bf16 %v3096, %v3090
    %v3103 = vpack.c.bf16 %v3097, %v3091
    %v3104 = vld [vmem:[#allocation8] sm:$0xff]
    %v3105 = vld [vmem:[#allocation8 + $0x8] sm:$0xff]
    %v3106 = vld [vmem:[#allocation8 + $0x10] sm:$0xff]
    %v3107 = vld [vmem:[#allocation8 + $0x18] sm:$0xff]
    %v3108 = vld [vmem:[#allocation8 + $0x20] sm:$0xff]
    %v3109 = vld [vmem:[#allocation8 + $0x28] sm:$0xff]
    %v3110 = vld [vmem:[#allocation8 + $0x30] sm:$0xff]
    %v3111 = vld [vmem:[#allocation8 + $0x38] sm:$0xff]
    %v3112 = vld [vmem:[#allocation8 + $0x40] sm:$0xff]
    %v3113 = vld [vmem:[#allocation8 + $0x48] sm:$0xff]
    %v3114 = vld [vmem:[#allocation8 + $0x50] sm:$0xff]
    %v3115 = vld [vmem:[#allocation8 + $0x58] sm:$0xff]
    %v3116 = vld [vmem:[#allocation8 + $0x60] sm:$0xff]
    %v3117 = vld [vmem:[#allocation8 + $0x68] sm:$0xff]
    %v3118 = vld [vmem:[#allocation8 + $0x70] sm:$0xff]
    %v3119 = vld [vmem:[#allocation8 + $0x78] sm:$0xff]
    %v3120 = vld [vmem:[#allocation8 + $0x80] sm:$0xff]
    %v3121 = vld [vmem:[#allocation8 + $0x88] sm:$0xff]
    %v3122 = vld [vmem:[#allocation8 + $0x90] sm:$0xff]
    %v3123 = vld [vmem:[#allocation8 + $0x98] sm:$0xff]
    %v3124 = vld [vmem:[#allocation8 + $0xa0] sm:$0xff]
    %v3125 = vld [vmem:[#allocation8 + $0xa8] sm:$0xff]
    %v3126 = vld [vmem:[#allocation8 + $0xb0] sm:$0xff]
    %v3127 = vld [vmem:[#allocation8 + $0xb8] sm:$0xff]
    %v3128 = vld [vmem:[#allocation8 + $0xc0] sm:$0xff]
    %v3129 = vld [vmem:[#allocation8 + $0xc8] sm:$0xff]
    %v3130 = vld [vmem:[#allocation8 + $0xd0] sm:$0xff]
    %v3131 = vld [vmem:[#allocation8 + $0xd8] sm:$0xff]
    %v3132 = vld [vmem:[#allocation8 + $0xe0] sm:$0xff]
    %v3133 = vld [vmem:[#allocation8 + $0xe8] sm:$0xff]
    %v3134 = vld [vmem:[#allocation8 + $0xf0] sm:$0xff]
    %v3135 = vld [vmem:[#allocation8 + $0xf8] sm:$0xff]
    %v3136 = vld [vmem:[#allocation8 + $0x100] sm:$0xff]
    %v3137 = vld [vmem:[#allocation8 + $0x108] sm:$0xff]
    %v3138 = vld [vmem:[#allocation8 + $0x110] sm:$0xff]
    %v3139 = vld [vmem:[#allocation8 + $0x118] sm:$0xff]
    %v3140 = vld [vmem:[#allocation8 + $0x120] sm:$0xff]
    %v3141 = vld [vmem:[#allocation8 + $0x128] sm:$0xff]
    %v3142 = vld [vmem:[#allocation8 + $0x130] sm:$0xff]
    %v3143 = vld [vmem:[#allocation8 + $0x138] sm:$0xff]
    %v3144 = vld [vmem:[#allocation8 + $0x140] sm:$0xff]
    %v3145 = vld [vmem:[#allocation8 + $0x148] sm:$0xff]
    %v3146 = vld [vmem:[#allocation8 + $0x150] sm:$0xff]
    %v3147 = vld [vmem:[#allocation8 + $0x158] sm:$0xff]
    %v3148 = vld [vmem:[#allocation8 + $0x160] sm:$0xff]
    %v3149 = vld [vmem:[#allocation8 + $0x168] sm:$0xff]
    %v3150 = vld [vmem:[#allocation8 + $0x170] sm:$0xff]
    %v3151 = vld [vmem:[#allocation8 + $0x178] sm:$0xff]
    %v3152 = vld [vmem:[#allocation8 + $0x180] sm:$0xff]
    %v3153 = vld [vmem:[#allocation8 + $0x188] sm:$0xff]
    %v3154 = vld [vmem:[#allocation8 + $0x190] sm:$0xff]
    %v3155 = vld [vmem:[#allocation8 + $0x198] sm:$0xff]
    %v3156 = vld [vmem:[#allocation8 + $0x1a0] sm:$0xff]
    %v3157 = vld [vmem:[#allocation8 + $0x1a8] sm:$0xff]
    %v3158 = vld [vmem:[#allocation8 + $0x1b0] sm:$0xff]
    %v3159 = vld [vmem:[#allocation8 + $0x1b8] sm:$0xff]
    %v3160 = vld [vmem:[#allocation8 + $0x1c0] sm:$0xff]
    %v3161 = vld [vmem:[#allocation8 + $0x1c8] sm:$0xff]
    %v3162 = vld [vmem:[#allocation8 + $0x1d0] sm:$0xff]
    %v3163 = vld [vmem:[#allocation8 + $0x1d8] sm:$0xff]
    %v3164 = vld [vmem:[#allocation8 + $0x1e0] sm:$0xff]
    %v3165 = vld [vmem:[#allocation8 + $0x1e8] sm:$0xff]
    %v3166 = vld [vmem:[#allocation8 + $0x1f0] sm:$0xff]
    %v3167 = vld [vmem:[#allocation8 + $0x1f8] sm:$0xff]
    %v3168 = vld [vmem:[#allocation8 + $0x200] sm:$0xff]
    %v3169 = vld [vmem:[#allocation8 + $0x208] sm:$0xff]
    %v3170 = vld [vmem:[#allocation8 + $0x210] sm:$0xff]
    %v3171 = vld [vmem:[#allocation8 + $0x218] sm:$0xff]
    %v3172 = vld [vmem:[#allocation8 + $0x220] sm:$0xff]
    %v3173 = vld [vmem:[#allocation8 + $0x228] sm:$0xff]
    %v3174 = vld [vmem:[#allocation8 + $0x230] sm:$0xff]
    %v3175 = vld [vmem:[#allocation8 + $0x238] sm:$0xff]
    %v3176 = vld [vmem:[#allocation8 + $0x240] sm:$0xff]
    %v3177 = vld [vmem:[#allocation8 + $0x248] sm:$0xff]
    %v3178 = vld [vmem:[#allocation8 + $0x250] sm:$0xff]
    %v3179 = vld [vmem:[#allocation8 + $0x258] sm:$0xff]
    %v3180 = vld [vmem:[#allocation8 + $0x260] sm:$0xff]
    %v3181 = vld [vmem:[#allocation8 + $0x268] sm:$0xff]
    %v3182 = vld [vmem:[#allocation8 + $0x270] sm:$0xff]
    %v3183 = vld [vmem:[#allocation8 + $0x278] sm:$0xff]
    %v3184 = vld [vmem:[#allocation8 + $0x280] sm:$0xff]
    %v3185 = vld [vmem:[#allocation8 + $0x288] sm:$0xff]
    %v3186 = vld [vmem:[#allocation8 + $0x290] sm:$0xff]
    %v3187 = vld [vmem:[#allocation8 + $0x298] sm:$0xff]
    %v3188 = vld [vmem:[#allocation8 + $0x2a0] sm:$0xff]
    %v3189 = vld [vmem:[#allocation8 + $0x2a8] sm:$0xff]
    %v3190 = vld [vmem:[#allocation8 + $0x2b0] sm:$0xff]
    %v3191 = vld [vmem:[#allocation8 + $0x2b8] sm:$0xff]
    %v3192 = vld [vmem:[#allocation8 + $0x2c0] sm:$0xff]
    %v3193 = vld [vmem:[#allocation8 + $0x2c8] sm:$0xff]
    %v3194 = vld [vmem:[#allocation8 + $0x2d0] sm:$0xff]
    %v3195 = vld [vmem:[#allocation8 + $0x2d8] sm:$0xff]
    %v3196 = vld [vmem:[#allocation8 + $0x2e0] sm:$0xff]
    %v3197 = vld [vmem:[#allocation8 + $0x2e8] sm:$0xff]
    %v3198 = vld [vmem:[#allocation8 + $0x2f0] sm:$0xff]
    %v3199 = vld [vmem:[#allocation8 + $0x2f8] sm:$0xff]
    %v3200 = vld [vmem:[#allocation10] sm:$0x3]
    %v3202 = vlaneseq
    %v3203 = vshrl.u32 %v3202, 7
    %v3204 = vsub.s32 0, %v3203
    %v3205 = vrot.slane %v3200, %v3204
    %v3206 = vlaneseq
    %v3207 = vshrl.u32 %v3206, 7
    %v3208 = vsub.s32 1, %v3207
    %v3209 = vrot.slane %v3200, %v3208
    %v3308 = vunpack.c.l.b16 %v3104
    %v3309 = vunpack.c.h.b16 %v3104
    %v3310 = vunpack.c.l.b16 %v3105
    %v3311 = vunpack.c.h.b16 %v3105
    %v3312 = vunpack.c.l.b16 %v3106
    %v3313 = vunpack.c.h.b16 %v3106
    %v3314 = vunpack.c.l.b16 %v3107
    %v3315 = vunpack.c.h.b16 %v3107
    %v3316 = vunpack.c.l.b16 %v3108
    %v3317 = vunpack.c.h.b16 %v3108
    %v3318 = vunpack.c.l.b16 %v3109
    %v3319 = vunpack.c.h.b16 %v3109
    %v3320 = vunpack.c.l.b16 %v3110
    %v3321 = vunpack.c.h.b16 %v3110
    %v3322 = vunpack.c.l.b16 %v3111
    %v3323 = vunpack.c.h.b16 %v3111
    %v3324 = vunpack.c.l.b16 %v3112
    %v3325 = vunpack.c.h.b16 %v3112
    %v3326 = vunpack.c.l.b16 %v3113
    %v3327 = vunpack.c.h.b16 %v3113
    %v3328 = vunpack.c.l.b16 %v3114
    %v3329 = vunpack.c.h.b16 %v3114
    %v3330 = vunpack.c.l.b16 %v3115
    %v3331 = vunpack.c.h.b16 %v3115
    %v3332 = vunpack.c.l.b16 %v3116
    %v3333 = vunpack.c.h.b16 %v3116
    %v3334 = vunpack.c.l.b16 %v3117
    %v3335 = vunpack.c.h.b16 %v3117
    %v3336 = vunpack.c.l.b16 %v3118
    %v3337 = vunpack.c.h.b16 %v3118
    %v3338 = vunpack.c.l.b16 %v3119
    %v3339 = vunpack.c.h.b16 %v3119
    %v3340 = vunpack.c.l.b16 %v3120
    %v3341 = vunpack.c.h.b16 %v3120
    %v3342 = vunpack.c.l.b16 %v3121
    %v3343 = vunpack.c.h.b16 %v3121
    %v3344 = vunpack.c.l.b16 %v3122
    %v3345 = vunpack.c.h.b16 %v3122
    %v3346 = vunpack.c.l.b16 %v3123
    %v3347 = vunpack.c.h.b16 %v3123
    %v3348 = vunpack.c.l.b16 %v3124
    %v3349 = vunpack.c.h.b16 %v3124
    %v3350 = vunpack.c.l.b16 %v3125
    %v3351 = vunpack.c.h.b16 %v3125
    %v3352 = vunpack.c.l.b16 %v3126
    %v3353 = vunpack.c.h.b16 %v3126
    %v3354 = vunpack.c.l.b16 %v3127
    %v3355 = vunpack.c.h.b16 %v3127
    %v3356 = vunpack.c.l.b16 %v3128
    %v3357 = vunpack.c.h.b16 %v3128
    %v3358 = vunpack.c.l.b16 %v3129
    %v3359 = vunpack.c.h.b16 %v3129
    %v3360 = vunpack.c.l.b16 %v3130
    %v3361 = vunpack.c.h.b16 %v3130
    %v3362 = vunpack.c.l.b16 %v3131
    %v3363 = vunpack.c.h.b16 %v3131
    %v3364 = vunpack.c.l.b16 %v3132
    %v3365 = vunpack.c.h.b16 %v3132
    %v3366 = vunpack.c.l.b16 %v3133
    %v3367 = vunpack.c.h.b16 %v3133
    %v3368 = vunpack.c.l.b16 %v3134
    %v3369 = vunpack.c.h.b16 %v3134
    %v3370 = vunpack.c.l.b16 %v3135
    %v3371 = vunpack.c.h.b16 %v3135
    %v3372 = vunpack.c.l.b16 %v3136
    %v3373 = vunpack.c.h.b16 %v3136
    %v3374 = vunpack.c.l.b16 %v3137
    %v3375 = vunpack.c.h.b16 %v3137
    %v3376 = vunpack.c.l.b16 %v3138
    %v3377 = vunpack.c.h.b16 %v3138
    %v3378 = vunpack.c.l.b16 %v3139
    %v3379 = vunpack.c.h.b16 %v3139
    %v3380 = vunpack.c.l.b16 %v3140
    %v3381 = vunpack.c.h.b16 %v3140
    %v3382 = vunpack.c.l.b16 %v3141
    %v3383 = vunpack.c.h.b16 %v3141
    %v3384 = vunpack.c.l.b16 %v3142
    %v3385 = vunpack.c.h.b16 %v3142
    %v3386 = vunpack.c.l.b16 %v3143
    %v3387 = vunpack.c.h.b16 %v3143
    %v3388 = vunpack.c.l.b16 %v3144
    %v3389 = vunpack.c.h.b16 %v3144
    %v3390 = vunpack.c.l.b16 %v3145
    %v3391 = vunpack.c.h.b16 %v3145
    %v3392 = vunpack.c.l.b16 %v3146
    %v3393 = vunpack.c.h.b16 %v3146
    %v3394 = vunpack.c.l.b16 %v3147
    %v3395 = vunpack.c.h.b16 %v3147
    %v3396 = vunpack.c.l.b16 %v3148
    %v3397 = vunpack.c.h.b16 %v3148
    %v3398 = vunpack.c.l.b16 %v3149
    %v3399 = vunpack.c.h.b16 %v3149
    %v3400 = vunpack.c.l.b16 %v3150
    %v3401 = vunpack.c.h.b16 %v3150
    %v3402 = vunpack.c.l.b16 %v3151
    %v3403 = vunpack.c.h.b16 %v3151
    %v3404 = vunpack.c.l.b16 %v3152
    %v3405 = vunpack.c.h.b16 %v3152
    %v3406 = vunpack.c.l.b16 %v3153
    %v3407 = vunpack.c.h.b16 %v3153
    %v3408 = vunpack.c.l.b16 %v3154
    %v3409 = vunpack.c.h.b16 %v3154
    %v3410 = vunpack.c.l.b16 %v3155
    %v3411 = vunpack.c.h.b16 %v3155
    %v3412 = vunpack.c.l.b16 %v3156
    %v3413 = vunpack.c.h.b16 %v3156
    %v3414 = vunpack.c.l.b16 %v3157
    %v3415 = vunpack.c.h.b16 %v3157
    %v3416 = vunpack.c.l.b16 %v3158
    %v3417 = vunpack.c.h.b16 %v3158
    %v3418 = vunpack.c.l.b16 %v3159
    %v3419 = vunpack.c.h.b16 %v3159
    %v3420 = vunpack.c.l.b16 %v3160
    %v3421 = vunpack.c.h.b16 %v3160
    %v3422 = vunpack.c.l.b16 %v3161
    %v3423 = vunpack.c.h.b16 %v3161
    %v3424 = vunpack.c.l.b16 %v3162
    %v3425 = vunpack.c.h.b16 %v3162
    %v3426 = vunpack.c.l.b16 %v3163
    %v3427 = vunpack.c.h.b16 %v3163
    %v3428 = vunpack.c.l.b16 %v3164
    %v3429 = vunpack.c.h.b16 %v3164
    %v3430 = vunpack.c.l.b16 %v3165
    %v3431 = vunpack.c.h.b16 %v3165
    %v3432 = vunpack.c.l.b16 %v3166
    %v3433 = vunpack.c.h.b16 %v3166
    %v3434 = vunpack.c.l.b16 %v3167
    %v3435 = vunpack.c.h.b16 %v3167
    %v3436 = vunpack.c.l.b16 %v3168
    %v3437 = vunpack.c.h.b16 %v3168
    %v3438 = vunpack.c.l.b16 %v3169
    %v3439 = vunpack.c.h.b16 %v3169
    %v3440 = vunpack.c.l.b16 %v3170
    %v3441 = vunpack.c.h.b16 %v3170
    %v3442 = vunpack.c.l.b16 %v3171
    %v3443 = vunpack.c.h.b16 %v3171
    %v3444 = vunpack.c.l.b16 %v3172
    %v3445 = vunpack.c.h.b16 %v3172
    %v3446 = vunpack.c.l.b16 %v3173
    %v3447 = vunpack.c.h.b16 %v3173
    %v3448 = vunpack.c.l.b16 %v3174
    %v3449 = vunpack.c.h.b16 %v3174
    %v3450 = vunpack.c.l.b16 %v3175
    %v3451 = vunpack.c.h.b16 %v3175
    %v3452 = vunpack.c.l.b16 %v3176
    %v3453 = vunpack.c.h.b16 %v3176
    %v3454 = vunpack.c.l.b16 %v3177
    %v3455 = vunpack.c.h.b16 %v3177
    %v3456 = vunpack.c.l.b16 %v3178
    %v3457 = vunpack.c.h.b16 %v3178
    %v3458 = vunpack.c.l.b16 %v3179
    %v3459 = vunpack.c.h.b16 %v3179
    %v3460 = vunpack.c.l.b16 %v3180
    %v3461 = vunpack.c.h.b16 %v3180
    %v3462 = vunpack.c.l.b16 %v3181
    %v3463 = vunpack.c.h.b16 %v3181
    %v3464 = vunpack.c.l.b16 %v3182
    %v3465 = vunpack.c.h.b16 %v3182
    %v3466 = vunpack.c.l.b16 %v3183
    %v3467 = vunpack.c.h.b16 %v3183
    %v3468 = vunpack.c.l.b16 %v3184
    %v3469 = vunpack.c.h.b16 %v3184
    %v3470 = vunpack.c.l.b16 %v3185
    %v3471 = vunpack.c.h.b16 %v3185
    %v3472 = vunpack.c.l.b16 %v3186
    %v3473 = vunpack.c.h.b16 %v3186
    %v3474 = vunpack.c.l.b16 %v3187
    %v3475 = vunpack.c.h.b16 %v3187
    %v3476 = vunpack.c.l.b16 %v3188
    %v3477 = vunpack.c.h.b16 %v3188
    %v3478 = vunpack.c.l.b16 %v3189
    %v3479 = vunpack.c.h.b16 %v3189
    %v3480 = vunpack.c.l.b16 %v3190
    %v3481 = vunpack.c.h.b16 %v3190
    %v3482 = vunpack.c.l.b16 %v3191
    %v3483 = vunpack.c.h.b16 %v3191
    %v3484 = vunpack.c.l.b16 %v3192
    %v3485 = vunpack.c.h.b16 %v3192
    %v3486 = vunpack.c.l.b16 %v3193
    %v3487 = vunpack.c.h.b16 %v3193
    %v3488 = vunpack.c.l.b16 %v3194
    %v3489 = vunpack.c.h.b16 %v3194
    %v3490 = vunpack.c.l.b16 %v3195
    %v3491 = vunpack.c.h.b16 %v3195
    %v3492 = vunpack.c.l.b16 %v3196
    %v3493 = vunpack.c.h.b16 %v3196
    %v3494 = vunpack.c.l.b16 %v3197
    %v3495 = vunpack.c.h.b16 %v3197
    %v3496 = vunpack.c.l.b16 %v3198
    %v3497 = vunpack.c.h.b16 %v3198
    %v3498 = vunpack.c.l.b16 %v3199
    %v3499 = vunpack.c.h.b16 %v3199
    %v3500 = vpack.c.b16 %v3310, %v3308
    %v3501 = vpack.c.b16 %v3311, %v3309
    %v3502 = vpack.c.b16 %v3314, %v3312
    %v3503 = vpack.c.b16 %v3315, %v3313
    %v3504 = vpack.c.b16 %v3318, %v3316
    %v3505 = vpack.c.b16 %v3319, %v3317
    %v3506 = vpack.c.b16 %v3322, %v3320
    %v3507 = vpack.c.b16 %v3323, %v3321
    %v3508 = vpack.c.b16 %v3326, %v3324
    %v3509 = vpack.c.b16 %v3327, %v3325
    %v3510 = vpack.c.b16 %v3330, %v3328
    %v3511 = vpack.c.b16 %v3331, %v3329
    %v3512 = vpack.c.b16 %v3334, %v3332
    %v3513 = vpack.c.b16 %v3335, %v3333
    %v3514 = vpack.c.b16 %v3338, %v3336
    %v3515 = vpack.c.b16 %v3339, %v3337
    %v3516 = vpack.c.b16 %v3342, %v3340
    %v3517 = vpack.c.b16 %v3343, %v3341
    %v3518 = vpack.c.b16 %v3346, %v3344
    %v3519 = vpack.c.b16 %v3347, %v3345
    %v3520 = vpack.c.b16 %v3350, %v3348
    %v3521 = vpack.c.b16 %v3351, %v3349
    %v3522 = vpack.c.b16 %v3354, %v3352
    %v3523 = vpack.c.b16 %v3355, %v3353
    %v3524 = vpack.c.b16 %v3358, %v3356
    %v3525 = vpack.c.b16 %v3359, %v3357
    %v3526 = vpack.c.b16 %v3362, %v3360
    %v3527 = vpack.c.b16 %v3363, %v3361
    %v3528 = vpack.c.b16 %v3366, %v3364
    %v3529 = vpack.c.b16 %v3367, %v3365
    %v3530 = vpack.c.b16 %v3370, %v3368
    %v3531 = vpack.c.b16 %v3371, %v3369
    %v3532 = vpack.c.b16 %v3374, %v3372
    %v3533 = vpack.c.b16 %v3375, %v3373
    %v3534 = vpack.c.b16 %v3378, %v3376
    %v3535 = vpack.c.b16 %v3379, %v3377
    %v3536 = vpack.c.b16 %v3382, %v3380
    %v3537 = vpack.c.b16 %v3383, %v3381
    %v3538 = vpack.c.b16 %v3386, %v3384
    %v3539 = vpack.c.b16 %v3387, %v3385
    %v3540 = vpack.c.b16 %v3390, %v3388
    %v3541 = vpack.c.b16 %v3391, %v3389
    %v3542 = vpack.c.b16 %v3394, %v3392
    %v3543 = vpack.c.b16 %v3395, %v3393
    %v3544 = vpack.c.b16 %v3398, %v3396
    %v3545 = vpack.c.b16 %v3399, %v3397
    %v3546 = vpack.c.b16 %v3402, %v3400
    %v3547 = vpack.c.b16 %v3403, %v3401
    %v3548 = vpack.c.b16 %v3406, %v3404
    %v3549 = vpack.c.b16 %v3407, %v3405
    %v3550 = vpack.c.b16 %v3410, %v3408
    %v3551 = vpack.c.b16 %v3411, %v3409
    %v3552 = vpack.c.b16 %v3414, %v3412
    %v3553 = vpack.c.b16 %v3415, %v3413
    %v3554 = vpack.c.b16 %v3418, %v3416
    %v3555 = vpack.c.b16 %v3419, %v3417
    %v3556 = vpack.c.b16 %v3422, %v3420
    %v3557 = vpack.c.b16 %v3423, %v3421
    %v3558 = vpack.c.b16 %v3426, %v3424
    %v3559 = vpack.c.b16 %v3427, %v3425
    %v3560 = vpack.c.b16 %v3430, %v3428
    %v3561 = vpack.c.b16 %v3431, %v3429
    %v3562 = vpack.c.b16 %v3434, %v3432
    %v3563 = vpack.c.b16 %v3435, %v3433
    %v3564 = vpack.c.b16 %v3438, %v3436
    %v3565 = vpack.c.b16 %v3439, %v3437
    %v3566 = vpack.c.b16 %v3442, %v3440
    %v3567 = vpack.c.b16 %v3443, %v3441
    %v3568 = vpack.c.b16 %v3446, %v3444
    %v3569 = vpack.c.b16 %v3447, %v3445
    %v3570 = vpack.c.b16 %v3450, %v3448
    %v3571 = vpack.c.b16 %v3451, %v3449
    %v3572 = vpack.c.b16 %v3454, %v3452
    %v3573 = vpack.c.b16 %v3455, %v3453
    %v3574 = vpack.c.b16 %v3458, %v3456
    %v3575 = vpack.c.b16 %v3459, %v3457
    %v3576 = vpack.c.b16 %v3462, %v3460
    %v3577 = vpack.c.b16 %v3463, %v3461
    %v3578 = vpack.c.b16 %v3466, %v3464
    %v3579 = vpack.c.b16 %v3467, %v3465
    %v3580 = vpack.c.b16 %v3470, %v3468
    %v3581 = vpack.c.b16 %v3471, %v3469
    %v3582 = vpack.c.b16 %v3474, %v3472
    %v3583 = vpack.c.b16 %v3475, %v3473
    %v3584 = vpack.c.b16 %v3478, %v3476
    %v3585 = vpack.c.b16 %v3479, %v3477
    %v3586 = vpack.c.b16 %v3482, %v3480
    %v3587 = vpack.c.b16 %v3483, %v3481
    %v3588 = vpack.c.b16 %v3486, %v3484
    %v3589 = vpack.c.b16 %v3487, %v3485
    %v3590 = vpack.c.b16 %v3490, %v3488
    %v3591 = vpack.c.b16 %v3491, %v3489
    %v3592 = vpack.c.b16 %v3494, %v3492
    %v3593 = vpack.c.b16 %v3495, %v3493
    %v3594 = vpack.c.b16 %v3498, %v3496
    %v3595 = vpack.c.b16 %v3499, %v3497
    %3692 = vmatprep.subr.bf16.mxu0 %v3515
    %3693 = vmatpush1.bf16.msra.mxu0 %v3514
    %3694 = vmatprep.subr.bf16.mxu0 %v3513
    %3695 = vmatpush1.bf16.msra.mxu0 %v3512
    %3696 = vmatprep.subr.bf16.mxu0 %v3511
    %3697 = vmatpush1.bf16.msra.mxu0 %v3510
    %3698 = vmatprep.subr.bf16.mxu0 %v3509
    %3699 = vmatpush1.bf16.msra.mxu0 %v3508
    %3700 = vmatprep.subr.bf16.mxu0 %v3507
    %3701 = vmatpush1.bf16.msra.mxu0 %v3506
    %3702 = vmatprep.subr.bf16.mxu0 %v3505
    %3703 = vmatpush1.bf16.msra.mxu0 %v3504
    %3704 = vmatprep.subr.bf16.mxu0 %v3503
    %3705 = vmatpush1.bf16.msra.mxu0 %v3502
    %3706 = vmatprep.subr.bf16.mxu0 %v3501
    %3707 = vmatpush1.bf16.msra.mxu0 %v3500
    %3708 = vmatprep.subr.bf16.mxu0 %v3531
    %3709 = vmatpush2.bf16.msra.mxu0 %v3530
    %3710 = vmatprep.subr.bf16.mxu0 %v3529
    %3711 = vmatpush2.bf16.msra.mxu0 %v3528
    %3712 = vmatprep.subr.bf16.mxu0 %v3527
    %3713 = vmatpush2.bf16.msra.mxu0 %v3526
    %3714 = vmatprep.subr.bf16.mxu0 %v3525
    %3715 = vmatpush2.bf16.msra.mxu0 %v3524
    %3716 = vmatprep.subr.bf16.mxu0 %v3523
    %3717 = vmatpush2.bf16.msra.mxu0 %v3522
    %3718 = vmatprep.subr.bf16.mxu0 %v3521
    %3719 = vmatpush2.bf16.msra.mxu0 %v3520
    %3720 = vmatprep.subr.bf16.mxu0 %v3519
    %3721 = vmatpush2.bf16.msra.mxu0 %v3518
    %3722 = vmatprep.subr.bf16.mxu0 %v3517
    %3723 = vmatpush2.bf16.msra.mxu0 %v3516
    %3724 = vmatprep.mubr.bf16.mxu0 %v3099
    %3725 = vmatmul.mubr.bf16.gmra.mxu0 %v3098
    %v3726 = vpop.f32.mrf.mxu0
    %v3727 = vadd.f32 %v3205, %v3726
    %v3728 = vpop.f32.mrf.mxu0
    %v3729 = vadd.f32 %v3209, %v3728
    %v3730 = vpop.f32.mrf.mxu0
    %v3731 = vadd.f32 %v3205, %v3730
    %v3732 = vpop.f32.mrf.mxu0
    %v3733 = vadd.f32 %v3209, %v3732
    %3734 = vdwg.mxu0
    %3735 = vmatprep.subr.bf16.mxu0 %v3547
    %3736 = vmatpush1.bf16.msra.mxu0 %v3546
    %3737 = vmatprep.subr.bf16.mxu0 %v3545
    %3738 = vmatpush1.bf16.msra.mxu0 %v3544
    %3739 = vmatprep.subr.bf16.mxu0 %v3543
    %3740 = vmatpush1.bf16.msra.mxu0 %v3542
    %3741 = vmatprep.subr.bf16.mxu0 %v3541
    %3742 = vmatpush1.bf16.msra.mxu0 %v3540
    %3743 = vmatprep.subr.bf16.mxu0 %v3539
    %3744 = vmatpush1.bf16.msra.mxu0 %v3538
    %3745 = vmatprep.subr.bf16.mxu0 %v3537
    %3746 = vmatpush1.bf16.msra.mxu0 %v3536
    %3747 = vmatprep.subr.bf16.mxu0 %v3535
    %3748 = vmatpush1.bf16.msra.mxu0 %v3534
    %3749 = vmatprep.subr.bf16.mxu0 %v3533
    %3750 = vmatpush1.bf16.msra.mxu0 %v3532
    %3751 = vmatprep.subr.bf16.mxu0 %v3563
    %3752 = vmatpush2.bf16.msra.mxu0 %v3562
    %3753 = vmatprep.subr.bf16.mxu0 %v3561
    %3754 = vmatpush2.bf16.msra.mxu0 %v3560
    %3755 = vmatprep.subr.bf16.mxu0 %v3559
    %3756 = vmatpush2.bf16.msra.mxu0 %v3558
    %3757 = vmatprep.subr.bf16.mxu0 %v3557
    %3758 = vmatpush2.bf16.msra.mxu0 %v3556
    %3759 = vmatprep.subr.bf16.mxu0 %v3555
    %3760 = vmatpush2.bf16.msra.mxu0 %v3554
    %3761 = vmatprep.subr.bf16.mxu0 %v3553
    %3762 = vmatpush2.bf16.msra.mxu0 %v3552
    %3763 = vmatprep.subr.bf16.mxu0 %v3551
    %3764 = vmatpush2.bf16.msra.mxu0 %v3550
    %3765 = vmatprep.subr.bf16.mxu0 %v3549
    %3766 = vmatpush2.bf16.msra.mxu0 %v3548
    %3767 = vmatprep.mubr.bf16.mxu0 %v3101
    %3768 = vmatmul.mubr.bf16.gmra.mxu0 %v3100
    %v3769 = vpop.f32.mrf.mxu0
    %v3770 = vadd.f32 %v3727, %v3769
    %v3771 = vpop.f32.mrf.mxu0
    %v3772 = vadd.f32 %v3729, %v3771
    %v3773 = vpop.f32.mrf.mxu0
    %v3774 = vadd.f32 %v3731, %v3773
    %v3775 = vpop.f32.mrf.mxu0
    %v3776 = vadd.f32 %v3733, %v3775
    %3777 = vdwg.mxu0
    %3778 = vmatprep.subr.bf16.mxu0 %v3579
    %3779 = vmatpush1.bf16.msra.mxu0 %v3578
    %3780 = vmatprep.subr.bf16.mxu0 %v3577
    %3781 = vmatpush1.bf16.msra.mxu0 %v3576
    %3782 = vmatprep.subr.bf16.mxu0 %v3575
    %3783 = vmatpush1.bf16.msra.mxu0 %v3574
    %3784 = vmatprep.subr.bf16.mxu0 %v3573
    %3785 = vmatpush1.bf16.msra.mxu0 %v3572
    %3786 = vmatprep.subr.bf16.mxu0 %v3571
    %3787 = vmatpush1.bf16.msra.mxu0 %v3570
    %3788 = vmatprep.subr.bf16.mxu0 %v3569
    %3789 = vmatpush1.bf16.msra.mxu0 %v3568
    %3790 = vmatprep.subr.bf16.mxu0 %v3567
    %3791 = vmatpush1.bf16.msra.mxu0 %v3566
    %3792 = vmatprep.subr.bf16.mxu0 %v3565
    %3793 = vmatpush1.bf16.msra.mxu0 %v3564
    %3794 = vmatprep.subr.bf16.mxu0 %v3595
    %3795 = vmatpush2.bf16.msra.mxu0 %v3594
    %3796 = vmatprep.subr.bf16.mxu0 %v3593
    %3797 = vmatpush2.bf16.msra.mxu0 %v3592
    %3798 = vmatprep.subr.bf16.mxu0 %v3591
    %3799 = vmatpush2.bf16.msra.mxu0 %v3590
    %3800 = vmatprep.subr.bf16.mxu0 %v3589
    %3801 = vmatpush2.bf16.msra.mxu0 %v3588
    %3802 = vmatprep.subr.bf16.mxu0 %v3587
    %3803 = vmatpush2.bf16.msra.mxu0 %v3586
    %3804 = vmatprep.subr.bf16.mxu0 %v3585
    %3805 = vmatpush2.bf16.msra.mxu0 %v3584
    %3806 = vmatprep.subr.bf16.mxu0 %v3583
    %3807 = vmatpush2.bf16.msra.mxu0 %v3582
    %3808 = vmatprep.subr.bf16.mxu0 %v3581
    %3809 = vmatpush2.bf16.msra.mxu0 %v3580
    %3810 = vmatprep.mubr.bf16.mxu0 %v3103
    %3811 = vmatmul.mubr.bf16.gmra.mxu0 %v3102
    %v3812 = vpop.f32.mrf.mxu0
    %v3813 = vadd.f32 %v3770, %v3812
    %v3814 = vpop.f32.mrf.mxu0
    %v3815 = vadd.f32 %v3772, %v3814
    %v3816 = vpop.f32.mrf.mxu0
    %v3817 = vadd.f32 %v3774, %v3816
    %v3818 = vpop.f32.mrf.mxu0
    %v3819 = vadd.f32 %v3776, %v3818
    %3820 = vdwg.mxu0
    %v3821 = vmax.f32 %v3813, 0.0
    %v3822 = vmax.f32 %v3815, 0.0
    %v3823 = vmax.f32 %v3817, 0.0
    %v3824 = vmax.f32 %v3819, 0.0
    %v3825 = vpack.c.bf16 %v3823, %v3821
    %v3826 = vpack.c.bf16 %v3824, %v3822
    %v3827 = vld [vmem:[#allocation11] sm:$0xf]
    %v3828 = vld [vmem:[#allocation11 + $0x4] sm:$0xf]
    %v3829 = vld [vmem:[#allocation11 + $0x8] sm:$0xf]
    %v3830 = vld [vmem:[#allocation11 + $0xc] sm:$0xf]
    %v3831 = vld [vmem:[#allocation11 + $0x10] sm:$0xf]
    %v3832 = vld [vmem:[#allocation11 + $0x14] sm:$0xf]
    %v3833 = vld [vmem:[#allocation11 + $0x18] sm:$0xf]
    %v3834 = vld [vmem:[#allocation11 + $0x1c] sm:$0xf]
    %v3835 = vld [vmem:[#allocation11 + $0x20] sm:$0xf]
    %v3836 = vld [vmem:[#allocation11 + $0x24] sm:$0xf]
    %v3837 = vld [vmem:[#allocation11 + $0x28] sm:$0xf]
    %v3838 = vld [vmem:[#allocation11 + $0x2c] sm:$0xf]
    %v3839 = vld [vmem:[#allocation11 + $0x30] sm:$0xf]
    %v3840 = vld [vmem:[#allocation11 + $0x34] sm:$0xf]
    %v3841 = vld [vmem:[#allocation11 + $0x38] sm:$0xf]
    %v3842 = vld [vmem:[#allocation11 + $0x3c] sm:$0xf]
    %v3843 = vld [vmem:[#allocation11 + $0x40] sm:$0xf]
    %v3844 = vld [vmem:[#allocation11 + $0x44] sm:$0xf]
    %v3845 = vld [vmem:[#allocation11 + $0x48] sm:$0xf]
    %v3846 = vld [vmem:[#allocation11 + $0x4c] sm:$0xf]
    %v3847 = vld [vmem:[#allocation11 + $0x50] sm:$0xf]
    %v3848 = vld [vmem:[#allocation11 + $0x54] sm:$0xf]
    %v3849 = vld [vmem:[#allocation11 + $0x58] sm:$0xf]
    %v3850 = vld [vmem:[#allocation11 + $0x5c] sm:$0xf]
    %v3851 = vld [vmem:[#allocation11 + $0x60] sm:$0xf]
    %v3852 = vld [vmem:[#allocation11 + $0x64] sm:$0xf]
    %v3853 = vld [vmem:[#allocation11 + $0x68] sm:$0xf]
    %v3854 = vld [vmem:[#allocation11 + $0x6c] sm:$0xf]
    %v3855 = vld [vmem:[#allocation11 + $0x70] sm:$0xf]
    %v3856 = vld [vmem:[#allocation11 + $0x74] sm:$0xf]
    %v3857 = vld [vmem:[#allocation11 + $0x78] sm:$0xf]
    %v3858 = vld [vmem:[#allocation11 + $0x7c] sm:$0xf]
    %v3859 = vld [vmem:[#allocation13] sm:$0x1]
    %v3861 = vlaneseq
    %v3862 = vshrl.u32 %v3861, 7
    %v3863 = vsub.s32 0, %v3862
    %v3864 = vrot.slane %v3859, %v3863
    %v3898 = vunpack.c.l.b16 %v3827
    %v3899 = vunpack.c.l.b16 %v3828
    %v3900 = vunpack.c.l.b16 %v3829
    %v3901 = vunpack.c.l.b16 %v3830
    %v3902 = vunpack.c.l.b16 %v3831
    %v3903 = vunpack.c.l.b16 %v3832
    %v3904 = vunpack.c.l.b16 %v3833
    %v3905 = vunpack.c.l.b16 %v3834
    %v3906 = vunpack.c.l.b16 %v3835
    %v3907 = vunpack.c.l.b16 %v3836
    %v3908 = vunpack.c.l.b16 %v3837
    %v3909 = vunpack.c.l.b16 %v3838
    %v3910 = vunpack.c.l.b16 %v3839
    %v3911 = vunpack.c.l.b16 %v3840
    %v3912 = vunpack.c.l.b16 %v3841
    %v3913 = vunpack.c.l.b16 %v3842
    %v3914 = vunpack.c.l.b16 %v3843
    %v3915 = vunpack.c.l.b16 %v3844
    %v3916 = vunpack.c.l.b16 %v3845
    %v3917 = vunpack.c.l.b16 %v3846
    %v3918 = vunpack.c.l.b16 %v3847
    %v3919 = vunpack.c.l.b16 %v3848
    %v3920 = vunpack.c.l.b16 %v3849
    %v3921 = vunpack.c.l.b16 %v3850
    %v3922 = vunpack.c.l.b16 %v3851
    %v3923 = vunpack.c.l.b16 %v3852
    %v3924 = vunpack.c.l.b16 %v3853
    %v3925 = vunpack.c.l.b16 %v3854
    %v3926 = vunpack.c.l.b16 %v3855
    %v3927 = vunpack.c.l.b16 %v3856
    %v3928 = vunpack.c.l.b16 %v3857
    %v3929 = vunpack.c.l.b16 %v3858
    %v3930 = vpack.c.b16 %v3899, %v3898
    %v3931 = vpack.c.b16 %v3901, %v3900
    %v3932 = vpack.c.b16 %v3903, %v3902
    %v3933 = vpack.c.b16 %v3905, %v3904
    %v3934 = vpack.c.b16 %v3907, %v3906
    %v3935 = vpack.c.b16 %v3909, %v3908
    %v3936 = vpack.c.b16 %v3911, %v3910
    %v3937 = vpack.c.b16 %v3913, %v3912
    %v3938 = vpack.c.b16 %v3915, %v3914
    %v3939 = vpack.c.b16 %v3917, %v3916
    %v3940 = vpack.c.b16 %v3919, %v3918
    %v3941 = vpack.c.b16 %v3921, %v3920
    %v3942 = vpack.c.b16 %v3923, %v3922
    %v3943 = vpack.c.b16 %v3925, %v3924
    %v3944 = vpack.c.b16 %v3927, %v3926
    %v3945 = vpack.c.b16 %v3929, %v3928
    %3962 = vmatprep.subr.bf16.mxu0 0
    %3963 = vmatpush1.bf16.msra.mxu0 %v3937
    %3964 = vmatprep.subr.bf16.mxu0 0
    %3965 = vmatpush1.bf16.msra.mxu0 %v3936
    %3966 = vmatprep.subr.bf16.mxu0 0
    %3967 = vmatpush1.bf16.msra.mxu0 %v3935
    %3968 = vmatprep.subr.bf16.mxu0 0
    %3969 = vmatpush1.bf16.msra.mxu0 %v3934
    %3970 = vmatprep.subr.bf16.mxu0 0
    %3971 = vmatpush1.bf16.msra.mxu0 %v3933
    %3972 = vmatprep.subr.bf16.mxu0 0
    %3973 = vmatpush1.bf16.msra.mxu0 %v3932
    %3974 = vmatprep.subr.bf16.mxu0 0
    %3975 = vmatpush1.bf16.msra.mxu0 %v3931
    %3976 = vmatprep.subr.bf16.mxu0 0
    %3977 = vmatpush1.bf16.msra.mxu0 %v3930
    %3978 = vmatprep.subr.bf16.mxu0 0
    %3979 = vmatpush2.bf16.msra.mxu0 %v3945
    %3980 = vmatprep.subr.bf16.mxu0 0
    %3981 = vmatpush2.bf16.msra.mxu0 %v3944
    %3982 = vmatprep.subr.bf16.mxu0 0
    %3983 = vmatpush2.bf16.msra.mxu0 %v3943
    %3984 = vmatprep.subr.bf16.mxu0 0
    %3985 = vmatpush2.bf16.msra.mxu0 %v3942
    %3986 = vmatprep.subr.bf16.mxu0 0
    %3987 = vmatpush2.bf16.msra.mxu0 %v3941
    %3988 = vmatprep.subr.bf16.mxu0 0
    %3989 = vmatpush2.bf16.msra.mxu0 %v3940
    %3990 = vmatprep.subr.bf16.mxu0 0
    %3991 = vmatpush2.bf16.msra.mxu0 %v3939
    %3992 = vmatprep.subr.bf16.mxu0 0
    %3993 = vmatpush2.bf16.msra.mxu0 %v3938
    %3994 = vmatprep.mubr.bf16.mxu0 %v3826
    %3995 = vmatmul.mubr.bf16.gmra.mxu0 %v3825
    %v3996 = vpop.f32.mrf.mxu0
    %v3997 = vadd.f32 %v3864, %v3996
    %v3998 = vpop.f32.mrf.mxu0
    %v3999 = vpop.f32.mrf.mxu0
    %v4000 = vadd.f32 %v3864, %v3999
    %v4001 = vpop.f32.mrf.mxu0
    %4002 = vdwg.mxu0
    %v4003 = vmax.f32 %v3997, 0.0
    %v4004 = vmax.f32 %v4000, 0.0
    %v4005 = vpack.c.bf16 %v4004, %v4003
    %v4006 = vld [vmem:[#allocation14] sm:$0xff]
    %v4007 = vld [vmem:[#allocation14 + $0x8] sm:$0xff]
    %v4008 = vld [vmem:[#allocation14 + $0x10] sm:$0xff]
    %v4009 = vld [vmem:[#allocation14 + $0x18] sm:$0xff]
    %v4010 = vld [vmem:[#allocation14 + $0x20] sm:$0xff]
    %v4011 = vld [vmem:[#allocation14 + $0x28] sm:$0xff]
    %v4012 = vld [vmem:[#allocation14 + $0x30] sm:$0xff]
    %v4013 = vld [vmem:[#allocation14 + $0x38] sm:$0xff]
    %v4014 = vld [vmem:[#allocation14 + $0x40] sm:$0xff]
    %v4015 = vld [vmem:[#allocation14 + $0x48] sm:$0xff]
    %v4016 = vld [vmem:[#allocation14 + $0x50] sm:$0xff]
    %v4017 = vld [vmem:[#allocation14 + $0x58] sm:$0xff]
    %v4018 = vld [vmem:[#allocation14 + $0x60] sm:$0xff]
    %v4019 = vld [vmem:[#allocation14 + $0x68] sm:$0xff]
    %v4020 = vld [vmem:[#allocation14 + $0x70] sm:$0xff]
    %v4021 = vld [vmem:[#allocation14 + $0x78] sm:$0xff]
    %v4022 = vld [vmem:[#allocation16] sm:$0x3]
    %v4024 = vlaneseq
    %v4025 = vshrl.u32 %v4024, 7
    %v4026 = vsub.s32 0, %v4025
    %v4027 = vrot.slane %v4022, %v4026
    %v4028 = vlaneseq
    %v4029 = vshrl.u32 %v4028, 7
    %v4030 = vsub.s32 1, %v4029
    %v4031 = vrot.slane %v4022, %v4030
    %v4050 = vunpack.c.l.b16 %v4006
    %v4051 = vunpack.c.h.b16 %v4006
    %v4052 = vunpack.c.l.b16 %v4007
    %v4053 = vunpack.c.h.b16 %v4007
    %v4054 = vunpack.c.l.b16 %v4008
    %v4055 = vunpack.c.h.b16 %v4008
    %v4056 = vunpack.c.l.b16 %v4009
    %v4057 = vunpack.c.h.b16 %v4009
    %v4058 = vunpack.c.l.b16 %v4010
    %v4059 = vunpack.c.h.b16 %v4010
    %v4060 = vunpack.c.l.b16 %v4011
    %v4061 = vunpack.c.h.b16 %v4011
    %v4062 = vunpack.c.l.b16 %v4012
    %v4063 = vunpack.c.h.b16 %v4012
    %v4064 = vunpack.c.l.b16 %v4013
    %v4065 = vunpack.c.h.b16 %v4013
    %v4066 = vunpack.c.l.b16 %v4014
    %v4067 = vunpack.c.h.b16 %v4014
    %v4068 = vunpack.c.l.b16 %v4015
    %v4069 = vunpack.c.h.b16 %v4015
    %v4070 = vunpack.c.l.b16 %v4016
    %v4071 = vunpack.c.h.b16 %v4016
    %v4072 = vunpack.c.l.b16 %v4017
    %v4073 = vunpack.c.h.b16 %v4017
    %v4074 = vunpack.c.l.b16 %v4018
    %v4075 = vunpack.c.h.b16 %v4018
    %v4076 = vunpack.c.l.b16 %v4019
    %v4077 = vunpack.c.h.b16 %v4019
    %v4078 = vunpack.c.l.b16 %v4020
    %v4079 = vunpack.c.h.b16 %v4020
    %v4080 = vunpack.c.l.b16 %v4021
    %v4081 = vunpack.c.h.b16 %v4021
    %v4082 = vpack.c.b16 %v4052, %v4050
    %v4083 = vpack.c.b16 %v4053, %v4051
    %v4084 = vpack.c.b16 %v4056, %v4054
    %v4085 = vpack.c.b16 %v4057, %v4055
    %v4086 = vpack.c.b16 %v4060, %v4058
    %v4087 = vpack.c.b16 %v4061, %v4059
    %v4088 = vpack.c.b16 %v4064, %v4062
    %v4089 = vpack.c.b16 %v4065, %v4063
    %v4090 = vpack.c.b16 %v4068, %v4066
    %v4091 = vpack.c.b16 %v4069, %v4067
    %v4092 = vpack.c.b16 %v4072, %v4070
    %v4093 = vpack.c.b16 %v4073, %v4071
    %v4094 = vpack.c.b16 %v4076, %v4074
    %v4095 = vpack.c.b16 %v4077, %v4075
    %v4096 = vpack.c.b16 %v4080, %v4078
    %v4097 = vpack.c.b16 %v4081, %v4079
    %4114 = vmatprep.subr.bf16.mxu0 %v4097
    %4115 = vmatpush1.bf16.msra.mxu0 %v4096
    %4116 = vmatprep.subr.bf16.mxu0 %v4095
    %4117 = vmatpush1.bf16.msra.mxu0 %v4094
    %4118 = vmatprep.subr.bf16.mxu0 %v4093
    %4119 = vmatpush1.bf16.msra.mxu0 %v4092
    %4120 = vmatprep.subr.bf16.mxu0 %v4091
    %4121 = vmatpush1.bf16.msra.mxu0 %v4090
    %4122 = vmatprep.subr.bf16.mxu0 %v4089
    %4123 = vmatpush1.bf16.msra.mxu0 %v4088
    %4124 = vmatprep.subr.bf16.mxu0 %v4087
    %4125 = vmatpush1.bf16.msra.mxu0 %v4086
    %4126 = vmatprep.subr.bf16.mxu0 %v4085
    %4127 = vmatpush1.bf16.msra.mxu0 %v4084
    %4128 = vmatprep.subr.bf16.mxu0 %v4083
    %4129 = vmatpush1.bf16.msra.mxu0 %v4082
    %4130 = vmatprep.subr.bf16.mxu0 0
    %4131 = vmatpush2.bf16.msra.mxu0 0
    %4132 = vmatprep.subr.bf16.mxu0 0
    %4133 = vmatpush2.bf16.msra.mxu0 0
    %4134 = vmatprep.subr.bf16.mxu0 0
    %4135 = vmatpush2.bf16.msra.mxu0 0
    %4136 = vmatprep.subr.bf16.mxu0 0
    %4137 = vmatpush2.bf16.msra.mxu0 0
    %4138 = vmatprep.subr.bf16.mxu0 0
    %4139 = vmatpush2.bf16.msra.mxu0 0
    %4140 = vmatprep.subr.bf16.mxu0 0
    %4141 = vmatpush2.bf16.msra.mxu0 0
    %4142 = vmatprep.subr.bf16.mxu0 0
    %4143 = vmatpush2.bf16.msra.mxu0 0
    %4144 = vmatprep.subr.bf16.mxu0 0
    %4145 = vmatpush2.bf16.msra.mxu0 0
    %4146 = vmatprep.mubr.bf16.mxu0 0
    %4147 = vmatmul.mubr.bf16.gmra.mxu0 %v4005
    %v4148 = vpop.f32.mrf.mxu0
    %v4149 = vadd.f32 %v4027, %v4148
    %v4150 = vpop.f32.mrf.mxu0
    %v4151 = vadd.f32 %v4031, %v4150
    %v4152 = vpop.f32.mrf.mxu0
    %v4153 = vadd.f32 %v4027, %v4152
    %v4154 = vpop.f32.mrf.mxu0
    %v4155 = vadd.f32 %v4031, %v4154
    %4156 = vdwg.mxu0
    %v4157 = vmax.f32 %v4149, 0.0
    %v4158 = vmax.f32 %v4151, 0.0
    %v4159 = vmax.f32 %v4153, 0.0
    %v4160 = vmax.f32 %v4155, 0.0
    %v4161 = vpack.c.bf16 %v4159, %v4157
    %v4162 = vpack.c.bf16 %v4160, %v4158
    %v4163 = vld [vmem:[#allocation17] sm:$0xff]
    %v4164 = vld [vmem:[#allocation17 + $0x8] sm:$0xff]
    %v4165 = vld [vmem:[#allocation17 + $0x10] sm:$0xff]
    %v4166 = vld [vmem:[#allocation17 + $0x18] sm:$0xff]
    %v4167 = vld [vmem:[#allocation17 + $0x20] sm:$0xff]
    %v4168 = vld [vmem:[#allocation17 + $0x28] sm:$0xff]
    %v4169 = vld [vmem:[#allocation17 + $0x30] sm:$0xff]
    %v4170 = vld [vmem:[#allocation17 + $0x38] sm:$0xff]
    %v4171 = vld [vmem:[#allocation17 + $0x40] sm:$0xff]
    %v4172 = vld [vmem:[#allocation17 + $0x48] sm:$0xff]
    %v4173 = vld [vmem:[#allocation17 + $0x50] sm:$0xff]
    %v4174 = vld [vmem:[#allocation17 + $0x58] sm:$0xff]
    %v4175 = vld [vmem:[#allocation17 + $0x60] sm:$0xff]
    %v4176 = vld [vmem:[#allocation17 + $0x68] sm:$0xff]
    %v4177 = vld [vmem:[#allocation17 + $0x70] sm:$0xff]
    %v4178 = vld [vmem:[#allocation17 + $0x78] sm:$0xff]
    %v4179 = vld [vmem:[#allocation17 + $0x80] sm:$0xff]
    %v4180 = vld [vmem:[#allocation17 + $0x88] sm:$0xff]
    %v4181 = vld [vmem:[#allocation17 + $0x90] sm:$0xff]
    %v4182 = vld [vmem:[#allocation17 + $0x98] sm:$0xff]
    %v4183 = vld [vmem:[#allocation17 + $0xa0] sm:$0xff]
    %v4184 = vld [vmem:[#allocation17 + $0xa8] sm:$0xff]
    %v4185 = vld [vmem:[#allocation17 + $0xb0] sm:$0xff]
    %v4186 = vld [vmem:[#allocation17 + $0xb8] sm:$0xff]
    %v4187 = vld [vmem:[#allocation17 + $0xc0] sm:$0xff]
    %v4188 = vld [vmem:[#allocation17 + $0xc8] sm:$0xff]
    %v4189 = vld [vmem:[#allocation17 + $0xd0] sm:$0xff]
    %v4190 = vld [vmem:[#allocation17 + $0xd8] sm:$0xff]
    %v4191 = vld [vmem:[#allocation17 + $0xe0] sm:$0xff]
    %v4192 = vld [vmem:[#allocation17 + $0xe8] sm:$0xff]
    %v4193 = vld [vmem:[#allocation17 + $0xf0] sm:$0xff]
    %v4194 = vld [vmem:[#allocation17 + $0xf8] sm:$0xff]
    %v4195 = vld [vmem:[#allocation17 + $0x100] sm:$0xff]
    %v4196 = vld [vmem:[#allocation17 + $0x108] sm:$0xff]
    %v4197 = vld [vmem:[#allocation17 + $0x110] sm:$0xff]
    %v4198 = vld [vmem:[#allocation17 + $0x118] sm:$0xff]
    %v4199 = vld [vmem:[#allocation17 + $0x120] sm:$0xff]
    %v4200 = vld [vmem:[#allocation17 + $0x128] sm:$0xff]
    %v4201 = vld [vmem:[#allocation17 + $0x130] sm:$0xff]
    %v4202 = vld [vmem:[#allocation17 + $0x138] sm:$0xff]
    %v4203 = vld [vmem:[#allocation17 + $0x140] sm:$0xff]
    %v4204 = vld [vmem:[#allocation17 + $0x148] sm:$0xff]
    %v4205 = vld [vmem:[#allocation17 + $0x150] sm:$0xff]
    %v4206 = vld [vmem:[#allocation17 + $0x158] sm:$0xff]
    %v4207 = vld [vmem:[#allocation17 + $0x160] sm:$0xff]
    %v4208 = vld [vmem:[#allocation17 + $0x168] sm:$0xff]
    %v4209 = vld [vmem:[#allocation17 + $0x170] sm:$0xff]
    %v4210 = vld [vmem:[#allocation17 + $0x178] sm:$0xff]
    %v4211 = vld [vmem:[#allocation17 + $0x180] sm:$0xff]
    %v4212 = vld [vmem:[#allocation17 + $0x188] sm:$0xff]
    %v4213 = vld [vmem:[#allocation17 + $0x190] sm:$0xff]
    %v4214 = vld [vmem:[#allocation17 + $0x198] sm:$0xff]
    %v4215 = vld [vmem:[#allocation17 + $0x1a0] sm:$0xff]
    %v4216 = vld [vmem:[#allocation17 + $0x1a8] sm:$0xff]
    %v4217 = vld [vmem:[#allocation17 + $0x1b0] sm:$0xff]
    %v4218 = vld [vmem:[#allocation17 + $0x1b8] sm:$0xff]
    %v4219 = vld [vmem:[#allocation17 + $0x1c0] sm:$0xff]
    %v4220 = vld [vmem:[#allocation17 + $0x1c8] sm:$0xff]
    %v4221 = vld [vmem:[#allocation17 + $0x1d0] sm:$0xff]
    %v4222 = vld [vmem:[#allocation17 + $0x1d8] sm:$0xff]
    %v4223 = vld [vmem:[#allocation17 + $0x1e0] sm:$0xff]
    %v4224 = vld [vmem:[#allocation17 + $0x1e8] sm:$0xff]
    %v4225 = vld [vmem:[#allocation17 + $0x1f0] sm:$0xff]
    %v4226 = vld [vmem:[#allocation17 + $0x1f8] sm:$0xff]
    %v4227 = vld [vmem:[#allocation17 + $0x200] sm:$0xff]
    %v4228 = vld [vmem:[#allocation17 + $0x208] sm:$0xff]
    %v4229 = vld [vmem:[#allocation17 + $0x210] sm:$0xff]
    %v4230 = vld [vmem:[#allocation17 + $0x218] sm:$0xff]
    %v4231 = vld [vmem:[#allocation17 + $0x220] sm:$0xff]
    %v4232 = vld [vmem:[#allocation17 + $0x228] sm:$0xff]
    %v4233 = vld [vmem:[#allocation17 + $0x230] sm:$0xff]
    %v4234 = vld [vmem:[#allocation17 + $0x238] sm:$0xff]
    %v4235 = vld [vmem:[#allocation17 + $0x240] sm:$0xff]
    %v4236 = vld [vmem:[#allocation17 + $0x248] sm:$0xff]
    %v4237 = vld [vmem:[#allocation17 + $0x250] sm:$0xff]
    %v4238 = vld [vmem:[#allocation17 + $0x258] sm:$0xff]
    %v4239 = vld [vmem:[#allocation17 + $0x260] sm:$0xff]
    %v4240 = vld [vmem:[#allocation17 + $0x268] sm:$0xff]
    %v4241 = vld [vmem:[#allocation17 + $0x270] sm:$0xff]
    %v4242 = vld [vmem:[#allocation17 + $0x278] sm:$0xff]
    %v4243 = vld [vmem:[#allocation17 + $0x280] sm:$0xff]
    %v4244 = vld [vmem:[#allocation17 + $0x288] sm:$0xff]
    %v4245 = vld [vmem:[#allocation17 + $0x290] sm:$0xff]
    %v4246 = vld [vmem:[#allocation17 + $0x298] sm:$0xff]
    %v4247 = vld [vmem:[#allocation17 + $0x2a0] sm:$0xff]
    %v4248 = vld [vmem:[#allocation17 + $0x2a8] sm:$0xff]
    %v4249 = vld [vmem:[#allocation17 + $0x2b0] sm:$0xff]
    %v4250 = vld [vmem:[#allocation17 + $0x2b8] sm:$0xff]
    %v4251 = vld [vmem:[#allocation17 + $0x2c0] sm:$0xff]
    %v4252 = vld [vmem:[#allocation17 + $0x2c8] sm:$0xff]
    %v4253 = vld [vmem:[#allocation17 + $0x2d0] sm:$0xff]
    %v4254 = vld [vmem:[#allocation17 + $0x2d8] sm:$0xff]
    %v4255 = vld [vmem:[#allocation17 + $0x2e0] sm:$0xff]
    %v4256 = vld [vmem:[#allocation17 + $0x2e8] sm:$0xff]
    %v4257 = vld [vmem:[#allocation17 + $0x2f0] sm:$0xff]
    %v4258 = vld [vmem:[#allocation17 + $0x2f8] sm:$0xff]
    %v4259 = vld [vmem:[#allocation19] sm:$0x3f]
    %v4261 = vlaneseq
    %v4262 = vshrl.u32 %v4261, 7
    %v4263 = vsub.s32 0, %v4262
    %v4264 = vrot.slane %v4259, %v4263
    %v4265 = vlaneseq
    %v4266 = vshrl.u32 %v4265, 7
    %v4267 = vsub.s32 1, %v4266
    %v4268 = vrot.slane %v4259, %v4267
    %v4269 = vlaneseq
    %v4270 = vshrl.u32 %v4269, 7
    %v4271 = vsub.s32 2, %v4270
    %v4272 = vrot.slane %v4259, %v4271
    %v4273 = vlaneseq
    %v4274 = vshrl.u32 %v4273, 7
    %v4275 = vsub.s32 3, %v4274
    %v4276 = vrot.slane %v4259, %v4275
    %v4277 = vlaneseq
    %v4278 = vshrl.u32 %v4277, 7
    %v4279 = vsub.s32 4, %v4278
    %v4280 = vrot.slane %v4259, %v4279
    %v4281 = vlaneseq
    %v4282 = vshrl.u32 %v4281, 7
    %v4283 = vsub.s32 5, %v4282
    %v4284 = vrot.slane %v4259, %v4283
    %v4387 = vunpack.c.l.b16 %v4163
    %v4388 = vunpack.c.h.b16 %v4163
    %v4389 = vunpack.c.l.b16 %v4164
    %v4390 = vunpack.c.h.b16 %v4164
    %v4391 = vunpack.c.l.b16 %v4165
    %v4392 = vunpack.c.h.b16 %v4165
    %v4393 = vunpack.c.l.b16 %v4166
    %v4394 = vunpack.c.h.b16 %v4166
    %v4395 = vunpack.c.l.b16 %v4167
    %v4396 = vunpack.c.h.b16 %v4167
    %v4397 = vunpack.c.l.b16 %v4168
    %v4398 = vunpack.c.h.b16 %v4168
    %v4399 = vunpack.c.l.b16 %v4169
    %v4400 = vunpack.c.h.b16 %v4169
    %v4401 = vunpack.c.l.b16 %v4170
    %v4402 = vunpack.c.h.b16 %v4170
    %v4403 = vunpack.c.l.b16 %v4171
    %v4404 = vunpack.c.h.b16 %v4171
    %v4405 = vunpack.c.l.b16 %v4172
    %v4406 = vunpack.c.h.b16 %v4172
    %v4407 = vunpack.c.l.b16 %v4173
    %v4408 = vunpack.c.h.b16 %v4173
    %v4409 = vunpack.c.l.b16 %v4174
    %v4410 = vunpack.c.h.b16 %v4174
    %v4411 = vunpack.c.l.b16 %v4175
    %v4412 = vunpack.c.h.b16 %v4175
    %v4413 = vunpack.c.l.b16 %v4176
    %v4414 = vunpack.c.h.b16 %v4176
    %v4415 = vunpack.c.l.b16 %v4177
    %v4416 = vunpack.c.h.b16 %v4177
    %v4417 = vunpack.c.l.b16 %v4178
    %v4418 = vunpack.c.h.b16 %v4178
    %v4419 = vunpack.c.l.b16 %v4179
    %v4420 = vunpack.c.h.b16 %v4179
    %v4421 = vunpack.c.l.b16 %v4180
    %v4422 = vunpack.c.h.b16 %v4180
    %v4423 = vunpack.c.l.b16 %v4181
    %v4424 = vunpack.c.h.b16 %v4181
    %v4425 = vunpack.c.l.b16 %v4182
    %v4426 = vunpack.c.h.b16 %v4182
    %v4427 = vunpack.c.l.b16 %v4183
    %v4428 = vunpack.c.h.b16 %v4183
    %v4429 = vunpack.c.l.b16 %v4184
    %v4430 = vunpack.c.h.b16 %v4184
    %v4431 = vunpack.c.l.b16 %v4185
    %v4432 = vunpack.c.h.b16 %v4185
    %v4433 = vunpack.c.l.b16 %v4186
    %v4434 = vunpack.c.h.b16 %v4186
    %v4435 = vunpack.c.l.b16 %v4187
    %v4436 = vunpack.c.h.b16 %v4187
    %v4437 = vunpack.c.l.b16 %v4188
    %v4438 = vunpack.c.h.b16 %v4188
    %v4439 = vunpack.c.l.b16 %v4189
    %v4440 = vunpack.c.h.b16 %v4189
    %v4441 = vunpack.c.l.b16 %v4190
    %v4442 = vunpack.c.h.b16 %v4190
    %v4443 = vunpack.c.l.b16 %v4191
    %v4444 = vunpack.c.h.b16 %v4191
    %v4445 = vunpack.c.l.b16 %v4192
    %v4446 = vunpack.c.h.b16 %v4192
    %v4447 = vunpack.c.l.b16 %v4193
    %v4448 = vunpack.c.h.b16 %v4193
    %v4449 = vunpack.c.l.b16 %v4194
    %v4450 = vunpack.c.h.b16 %v4194
    %v4451 = vunpack.c.l.b16 %v4195
    %v4452 = vunpack.c.h.b16 %v4195
    %v4453 = vunpack.c.l.b16 %v4196
    %v4454 = vunpack.c.h.b16 %v4196
    %v4455 = vunpack.c.l.b16 %v4197
    %v4456 = vunpack.c.h.b16 %v4197
    %v4457 = vunpack.c.l.b16 %v4198
    %v4458 = vunpack.c.h.b16 %v4198
    %v4459 = vunpack.c.l.b16 %v4199
    %v4460 = vunpack.c.h.b16 %v4199
    %v4461 = vunpack.c.l.b16 %v4200
    %v4462 = vunpack.c.h.b16 %v4200
    %v4463 = vunpack.c.l.b16 %v4201
    %v4464 = vunpack.c.h.b16 %v4201
    %v4465 = vunpack.c.l.b16 %v4202
    %v4466 = vunpack.c.h.b16 %v4202
    %v4467 = vunpack.c.l.b16 %v4203
    %v4468 = vunpack.c.h.b16 %v4203
    %v4469 = vunpack.c.l.b16 %v4204
    %v4470 = vunpack.c.h.b16 %v4204
    %v4471 = vunpack.c.l.b16 %v4205
    %v4472 = vunpack.c.h.b16 %v4205
    %v4473 = vunpack.c.l.b16 %v4206
    %v4474 = vunpack.c.h.b16 %v4206
    %v4475 = vunpack.c.l.b16 %v4207
    %v4476 = vunpack.c.h.b16 %v4207
    %v4477 = vunpack.c.l.b16 %v4208
    %v4478 = vunpack.c.h.b16 %v4208
    %v4479 = vunpack.c.l.b16 %v4209
    %v4480 = vunpack.c.h.b16 %v4209
    %v4481 = vunpack.c.l.b16 %v4210
    %v4482 = vunpack.c.h.b16 %v4210
    %v4483 = vunpack.c.l.b16 %v4211
    %v4484 = vunpack.c.h.b16 %v4211
    %v4485 = vunpack.c.l.b16 %v4212
    %v4486 = vunpack.c.h.b16 %v4212
    %v4487 = vunpack.c.l.b16 %v4213
    %v4488 = vunpack.c.h.b16 %v4213
    %v4489 = vunpack.c.l.b16 %v4214
    %v4490 = vunpack.c.h.b16 %v4214
    %v4491 = vunpack.c.l.b16 %v4215
    %v4492 = vunpack.c.h.b16 %v4215
    %v4493 = vunpack.c.l.b16 %v4216
    %v4494 = vunpack.c.h.b16 %v4216
    %v4495 = vunpack.c.l.b16 %v4217
    %v4496 = vunpack.c.h.b16 %v4217
    %v4497 = vunpack.c.l.b16 %v4218
    %v4498 = vunpack.c.h.b16 %v4218
    %v4499 = vunpack.c.l.b16 %v4219
    %v4500 = vunpack.c.h.b16 %v4219
    %v4501 = vunpack.c.l.b16 %v4220
    %v4502 = vunpack.c.h.b16 %v4220
    %v4503 = vunpack.c.l.b16 %v4221
    %v4504 = vunpack.c.h.b16 %v4221
    %v4505 = vunpack.c.l.b16 %v4222
    %v4506 = vunpack.c.h.b16 %v4222
    %v4507 = vunpack.c.l.b16 %v4223
    %v4508 = vunpack.c.h.b16 %v4223
    %v4509 = vunpack.c.l.b16 %v4224
    %v4510 = vunpack.c.h.b16 %v4224
    %v4511 = vunpack.c.l.b16 %v4225
    %v4512 = vunpack.c.h.b16 %v4225
    %v4513 = vunpack.c.l.b16 %v4226
    %v4514 = vunpack.c.h.b16 %v4226
    %v4515 = vunpack.c.l.b16 %v4227
    %v4516 = vunpack.c.h.b16 %v4227
    %v4517 = vunpack.c.l.b16 %v4228
    %v4518 = vunpack.c.h.b16 %v4228
    %v4519 = vunpack.c.l.b16 %v4229
    %v4520 = vunpack.c.h.b16 %v4229
    %v4521 = vunpack.c.l.b16 %v4230
    %v4522 = vunpack.c.h.b16 %v4230
    %v4523 = vunpack.c.l.b16 %v4231
    %v4524 = vunpack.c.h.b16 %v4231
    %v4525 = vunpack.c.l.b16 %v4232
    %v4526 = vunpack.c.h.b16 %v4232
    %v4527 = vunpack.c.l.b16 %v4233
    %v4528 = vunpack.c.h.b16 %v4233
    %v4529 = vunpack.c.l.b16 %v4234
    %v4530 = vunpack.c.h.b16 %v4234
    %v4531 = vunpack.c.l.b16 %v4235
    %v4532 = vunpack.c.h.b16 %v4235
    %v4533 = vunpack.c.l.b16 %v4236
    %v4534 = vunpack.c.h.b16 %v4236
    %v4535 = vunpack.c.l.b16 %v4237
    %v4536 = vunpack.c.h.b16 %v4237
    %v4537 = vunpack.c.l.b16 %v4238
    %v4538 = vunpack.c.h.b16 %v4238
    %v4539 = vunpack.c.l.b16 %v4239
    %v4540 = vunpack.c.h.b16 %v4239
    %v4541 = vunpack.c.l.b16 %v4240
    %v4542 = vunpack.c.h.b16 %v4240
    %v4543 = vunpack.c.l.b16 %v4241
    %v4544 = vunpack.c.h.b16 %v4241
    %v4545 = vunpack.c.l.b16 %v4242
    %v4546 = vunpack.c.h.b16 %v4242
    %v4547 = vunpack.c.l.b16 %v4243
    %v4548 = vunpack.c.h.b16 %v4243
    %v4549 = vunpack.c.l.b16 %v4244
    %v4550 = vunpack.c.h.b16 %v4244
    %v4551 = vunpack.c.l.b16 %v4245
    %v4552 = vunpack.c.h.b16 %v4245
    %v4553 = vunpack.c.l.b16 %v4246
    %v4554 = vunpack.c.h.b16 %v4246
    %v4555 = vunpack.c.l.b16 %v4247
    %v4556 = vunpack.c.h.b16 %v4247
    %v4557 = vunpack.c.l.b16 %v4248
    %v4558 = vunpack.c.h.b16 %v4248
    %v4559 = vunpack.c.l.b16 %v4249
    %v4560 = vunpack.c.h.b16 %v4249
    %v4561 = vunpack.c.l.b16 %v4250
    %v4562 = vunpack.c.h.b16 %v4250
    %v4563 = vunpack.c.l.b16 %v4251
    %v4564 = vunpack.c.h.b16 %v4251
    %v4565 = vunpack.c.l.b16 %v4252
    %v4566 = vunpack.c.h.b16 %v4252
    %v4567 = vunpack.c.l.b16 %v4253
    %v4568 = vunpack.c.h.b16 %v4253
    %v4569 = vunpack.c.l.b16 %v4254
    %v4570 = vunpack.c.h.b16 %v4254
    %v4571 = vunpack.c.l.b16 %v4255
    %v4572 = vunpack.c.h.b16 %v4255
    %v4573 = vunpack.c.l.b16 %v4256
    %v4574 = vunpack.c.h.b16 %v4256
    %v4575 = vunpack.c.l.b16 %v4257
    %v4576 = vunpack.c.h.b16 %v4257
    %v4577 = vunpack.c.l.b16 %v4258
    %v4578 = vunpack.c.h.b16 %v4258
    %v4579 = vpack.c.b16 %v4393, %v4387
    %v4580 = vpack.c.b16 %v4394, %v4388
    %v4581 = vpack.c.b16 %v4395, %v4389
    %v4582 = vpack.c.b16 %v4396, %v4390
    %v4583 = vpack.c.b16 %v4397, %v4391
    %v4584 = vpack.c.b16 %v4398, %v4392
    %v4585 = vpack.c.b16 %v4405, %v4399
    %v4586 = vpack.c.b16 %v4406, %v4400
    %v4587 = vpack.c.b16 %v4407, %v4401
    %v4588 = vpack.c.b16 %v4408, %v4402
    %v4589 = vpack.c.b16 %v4409, %v4403
    %v4590 = vpack.c.b16 %v4410, %v4404
    %v4591 = vpack.c.b16 %v4417, %v4411
    %v4592 = vpack.c.b16 %v4418, %v4412
    %v4593 = vpack.c.b16 %v4419, %v4413
    %v4594 = vpack.c.b16 %v4420, %v4414
    %v4595 = vpack.c.b16 %v4421, %v4415
    %v4596 = vpack.c.b16 %v4422, %v4416
    %v4597 = vpack.c.b16 %v4429, %v4423
    %v4598 = vpack.c.b16 %v4430, %v4424
    %v4599 = vpack.c.b16 %v4431, %v4425
    %v4600 = vpack.c.b16 %v4432, %v4426
    %v4601 = vpack.c.b16 %v4433, %v4427
    %v4602 = vpack.c.b16 %v4434, %v4428
    %v4603 = vpack.c.b16 %v4441, %v4435
    %v4604 = vpack.c.b16 %v4442, %v4436
    %v4605 = vpack.c.b16 %v4443, %v4437
    %v4606 = vpack.c.b16 %v4444, %v4438
    %v4607 = vpack.c.b16 %v4445, %v4439
    %v4608 = vpack.c.b16 %v4446, %v4440
    %v4609 = vpack.c.b16 %v4453, %v4447
    %v4610 = vpack.c.b16 %v4454, %v4448
    %v4611 = vpack.c.b16 %v4455, %v4449
    %v4612 = vpack.c.b16 %v4456, %v4450
    %v4613 = vpack.c.b16 %v4457, %v4451
    %v4614 = vpack.c.b16 %v4458, %v4452
    %v4615 = vpack.c.b16 %v4465, %v4459
    %v4616 = vpack.c.b16 %v4466, %v4460
    %v4617 = vpack.c.b16 %v4467, %v4461
    %v4618 = vpack.c.b16 %v4468, %v4462
    %v4619 = vpack.c.b16 %v4469, %v4463
    %v4620 = vpack.c.b16 %v4470, %v4464
    %v4621 = vpack.c.b16 %v4477, %v4471
    %v4622 = vpack.c.b16 %v4478, %v4472
    %v4623 = vpack.c.b16 %v4479, %v4473
    %v4624 = vpack.c.b16 %v4480, %v4474
    %v4625 = vpack.c.b16 %v4481, %v4475
    %v4626 = vpack.c.b16 %v4482, %v4476
    %v4627 = vpack.c.b16 %v4489, %v4483
    %v4628 = vpack.c.b16 %v4490, %v4484
    %v4629 = vpack.c.b16 %v4491, %v4485
    %v4630 = vpack.c.b16 %v4492, %v4486
    %v4631 = vpack.c.b16 %v4493, %v4487
    %v4632 = vpack.c.b16 %v4494, %v4488
    %v4633 = vpack.c.b16 %v4501, %v4495
    %v4634 = vpack.c.b16 %v4502, %v4496
    %v4635 = vpack.c.b16 %v4503, %v4497
    %v4636 = vpack.c.b16 %v4504, %v4498
    %v4637 = vpack.c.b16 %v4505, %v4499
    %v4638 = vpack.c.b16 %v4506, %v4500
    %v4639 = vpack.c.b16 %v4513, %v4507
    %v4640 = vpack.c.b16 %v4514, %v4508
    %v4641 = vpack.c.b16 %v4515, %v4509
    %v4642 = vpack.c.b16 %v4516, %v4510
    %v4643 = vpack.c.b16 %v4517, %v4511
    %v4644 = vpack.c.b16 %v4518, %v4512
    %v4645 = vpack.c.b16 %v4525, %v4519
    %v4646 = vpack.c.b16 %v4526, %v4520
    %v4647 = vpack.c.b16 %v4527, %v4521
    %v4648 = vpack.c.b16 %v4528, %v4522
    %v4649 = vpack.c.b16 %v4529, %v4523
    %v4650 = vpack.c.b16 %v4530, %v4524
    %v4651 = vpack.c.b16 %v4537, %v4531
    %v4652 = vpack.c.b16 %v4538, %v4532
    %v4653 = vpack.c.b16 %v4539, %v4533
    %v4654 = vpack.c.b16 %v4540, %v4534
    %v4655 = vpack.c.b16 %v4541, %v4535
    %v4656 = vpack.c.b16 %v4542, %v4536
    %v4657 = vpack.c.b16 %v4549, %v4543
    %v4658 = vpack.c.b16 %v4550, %v4544
    %v4659 = vpack.c.b16 %v4551, %v4545
    %v4660 = vpack.c.b16 %v4552, %v4546
    %v4661 = vpack.c.b16 %v4553, %v4547
    %v4662 = vpack.c.b16 %v4554, %v4548
    %v4663 = vpack.c.b16 %v4561, %v4555
    %v4664 = vpack.c.b16 %v4562, %v4556
    %v4665 = vpack.c.b16 %v4563, %v4557
    %v4666 = vpack.c.b16 %v4564, %v4558
    %v4667 = vpack.c.b16 %v4565, %v4559
    %v4668 = vpack.c.b16 %v4566, %v4560
    %v4669 = vpack.c.b16 %v4573, %v4567
    %v4670 = vpack.c.b16 %v4574, %v4568
    %v4671 = vpack.c.b16 %v4575, %v4569
    %v4672 = vpack.c.b16 %v4576, %v4570
    %v4673 = vpack.c.b16 %v4577, %v4571
    %v4674 = vpack.c.b16 %v4578, %v4572
    %4771 = vmatprep.subr.bf16.mxu0 %v4622
    %4772 = vmatpush1.bf16.msra.mxu0 %v4621
    %4773 = vmatprep.subr.bf16.mxu0 %v4616
    %4774 = vmatpush1.bf16.msra.mxu0 %v4615
    %4775 = vmatprep.subr.bf16.mxu0 %v4610
    %4776 = vmatpush1.bf16.msra.mxu0 %v4609
    %4777 = vmatprep.subr.bf16.mxu0 %v4604
    %4778 = vmatpush1.bf16.msra.mxu0 %v4603
    %4779 = vmatprep.subr.bf16.mxu0 %v4598
    %4780 = vmatpush1.bf16.msra.mxu0 %v4597
    %4781 = vmatprep.subr.bf16.mxu0 %v4592
    %4782 = vmatpush1.bf16.msra.mxu0 %v4591
    %4783 = vmatprep.subr.bf16.mxu0 %v4586
    %4784 = vmatpush1.bf16.msra.mxu0 %v4585
    %4785 = vmatprep.subr.bf16.mxu0 %v4580
    %4786 = vmatpush1.bf16.msra.mxu0 %v4579
    %4787 = vmatprep.subr.bf16.mxu0 %v4670
    %4788 = vmatpush2.bf16.msra.mxu0 %v4669
    %4789 = vmatprep.subr.bf16.mxu0 %v4664
    %4790 = vmatpush2.bf16.msra.mxu0 %v4663
    %4791 = vmatprep.subr.bf16.mxu0 %v4658
    %4792 = vmatpush2.bf16.msra.mxu0 %v4657
    %4793 = vmatprep.subr.bf16.mxu0 %v4652
    %4794 = vmatpush2.bf16.msra.mxu0 %v4651
    %4795 = vmatprep.subr.bf16.mxu0 %v4646
    %4796 = vmatpush2.bf16.msra.mxu0 %v4645
    %4797 = vmatprep.subr.bf16.mxu0 %v4640
    %4798 = vmatpush2.bf16.msra.mxu0 %v4639
    %4799 = vmatprep.subr.bf16.mxu0 %v4634
    %4800 = vmatpush2.bf16.msra.mxu0 %v4633
    %4801 = vmatprep.subr.bf16.mxu0 %v4628
    %4802 = vmatpush2.bf16.msra.mxu0 %v4627
    %4803 = vmatprep.mubr.bf16.mxu0 %v4162
    %4804 = vmatmul.mubr.bf16.gmra.mxu0 %v4161
    %v4805 = vpop.f32.mrf.mxu0
    %v4806 = vadd.f32 %v4264, %v4805
    %v4807 = vpop.f32.mrf.mxu0
    %v4808 = vadd.f32 %v4268, %v4807
    %v4809 = vpop.f32.mrf.mxu0
    %v4810 = vadd.f32 %v4264, %v4809
    %v4811 = vpop.f32.mrf.mxu0
    %v4812 = vadd.f32 %v4268, %v4811
    %4813 = vdwg.mxu0
    %4814 = vmatprep.subr.bf16.mxu0 %v4624
    %4815 = vmatpush1.bf16.msra.mxu0 %v4623
    %4816 = vmatprep.subr.bf16.mxu0 %v4618
    %4817 = vmatpush1.bf16.msra.mxu0 %v4617
    %4818 = vmatprep.subr.bf16.mxu0 %v4612
    %4819 = vmatpush1.bf16.msra.mxu0 %v4611
    %4820 = vmatprep.subr.bf16.mxu0 %v4606
    %4821 = vmatpush1.bf16.msra.mxu0 %v4605
    %4822 = vmatprep.subr.bf16.mxu0 %v4600
    %4823 = vmatpush1.bf16.msra.mxu0 %v4599
    %4824 = vmatprep.subr.bf16.mxu0 %v4594
    %4825 = vmatpush1.bf16.msra.mxu0 %v4593
    %4826 = vmatprep.subr.bf16.mxu0 %v4588
    %4827 = vmatpush1.bf16.msra.mxu0 %v4587
    %4828 = vmatprep.subr.bf16.mxu0 %v4582
    %4829 = vmatpush1.bf16.msra.mxu0 %v4581
    %4830 = vmatprep.subr.bf16.mxu0 %v4672
    %4831 = vmatpush2.bf16.msra.mxu0 %v4671
    %4832 = vmatprep.subr.bf16.mxu0 %v4666
    %4833 = vmatpush2.bf16.msra.mxu0 %v4665
    %4834 = vmatprep.subr.bf16.mxu0 %v4660
    %4835 = vmatpush2.bf16.msra.mxu0 %v4659
    %4836 = vmatprep.subr.bf16.mxu0 %v4654
    %4837 = vmatpush2.bf16.msra.mxu0 %v4653
    %4838 = vmatprep.subr.bf16.mxu0 %v4648
    %4839 = vmatpush2.bf16.msra.mxu0 %v4647
    %4840 = vmatprep.subr.bf16.mxu0 %v4642
    %4841 = vmatpush2.bf16.msra.mxu0 %v4641
    %4842 = vmatprep.subr.bf16.mxu0 %v4636
    %4843 = vmatpush2.bf16.msra.mxu0 %v4635
    %4844 = vmatprep.subr.bf16.mxu0 %v4630
    %4845 = vmatpush2.bf16.msra.mxu0 %v4629
    %4846 = vmatprep.mubr.bf16.mxu0 %v4162
    %4847 = vmatmul.mubr.bf16.gmra.mxu0 %v4161
    %v4848 = vpop.f32.mrf.mxu0
    %v4849 = vadd.f32 %v4272, %v4848
    %v4850 = vpop.f32.mrf.mxu0
    %v4851 = vadd.f32 %v4276, %v4850
    %v4852 = vpop.f32.mrf.mxu0
    %v4853 = vadd.f32 %v4272, %v4852
    %v4854 = vpop.f32.mrf.mxu0
    %v4855 = vadd.f32 %v4276, %v4854
    %4856 = vdwg.mxu0
    %4857 = vmatprep.subr.bf16.mxu0 %v4626
    %4858 = vmatpush1.bf16.msra.mxu0 %v4625
    %4859 = vmatprep.subr.bf16.mxu0 %v4620
    %4860 = vmatpush1.bf16.msra.mxu0 %v4619
    %4861 = vmatprep.subr.bf16.mxu0 %v4614
    %4862 = vmatpush1.bf16.msra.mxu0 %v4613
    %4863 = vmatprep.subr.bf16.mxu0 %v4608
    %4864 = vmatpush1.bf16.msra.mxu0 %v4607
    %4865 = vmatprep.subr.bf16.mxu0 %v4602
    %4866 = vmatpush1.bf16.msra.mxu0 %v4601
    %4867 = vmatprep.subr.bf16.mxu0 %v4596
    %4868 = vmatpush1.bf16.msra.mxu0 %v4595
    %4869 = vmatprep.subr.bf16.mxu0 %v4590
    %4870 = vmatpush1.bf16.msra.mxu0 %v4589
    %4871 = vmatprep.subr.bf16.mxu0 %v4584
    %4872 = vmatpush1.bf16.msra.mxu0 %v4583
    %4873 = vmatprep.subr.bf16.mxu0 %v4674
    %4874 = vmatpush2.bf16.msra.mxu0 %v4673
    %4875 = vmatprep.subr.bf16.mxu0 %v4668
    %4876 = vmatpush2.bf16.msra.mxu0 %v4667
    %4877 = vmatprep.subr.bf16.mxu0 %v4662
    %4878 = vmatpush2.bf16.msra.mxu0 %v4661
    %4879 = vmatprep.subr.bf16.mxu0 %v4656
    %4880 = vmatpush2.bf16.msra.mxu0 %v4655
    %4881 = vmatprep.subr.bf16.mxu0 %v4650
    %4882 = vmatpush2.bf16.msra.mxu0 %v4649
    %4883 = vmatprep.subr.bf16.mxu0 %v4644
    %4884 = vmatpush2.bf16.msra.mxu0 %v4643
    %4885 = vmatprep.subr.bf16.mxu0 %v4638
    %4886 = vmatpush2.bf16.msra.mxu0 %v4637
    %4887 = vmatprep.subr.bf16.mxu0 %v4632
    %4888 = vmatpush2.bf16.msra.mxu0 %v4631
    %4889 = vmatprep.mubr.bf16.mxu0 %v4162
    %4890 = vmatmul.mubr.bf16.gmra.mxu0 %v4161
    %v4891 = vpop.f32.mrf.mxu0
    %v4892 = vadd.f32 %v4280, %v4891
    %v4893 = vpop.f32.mrf.mxu0
    %v4894 = vadd.f32 %v4284, %v4893
    %v4895 = vpop.f32.mrf.mxu0
    %v4896 = vadd.f32 %v4280, %v4895
    %v4897 = vpop.f32.mrf.mxu0
    %v4898 = vadd.f32 %v4284, %v4897
    %4899 = vdwg.mxu0
    %v4900 = vmax.f32 %v4806, 0.0
    %v4901 = vmax.f32 %v4808, 0.0
    %v4902 = vmax.f32 %v4849, 0.0
    %v4903 = vmax.f32 %v4851, 0.0
    %v4904 = vmax.f32 %v4892, 0.0
    %v4905 = vmax.f32 %v4894, 0.0
    %v4906 = vmax.f32 %v4810, 0.0
    %v4907 = vmax.f32 %v4812, 0.0
    %v4908 = vmax.f32 %v4853, 0.0
    %v4909 = vmax.f32 %v4855, 0.0
    %v4910 = vmax.f32 %v4896, 0.0
    %v4911 = vmax.f32 %v4898, 0.0
    %v4912 = vpack.c.bf16 %v4906, %v4900
    %v4913 = vpack.c.bf16 %v4907, %v4901
    %v4914 = vpack.c.bf16 %v4908, %v4902
    %v4915 = vpack.c.bf16 %v4909, %v4903
    %v4916 = vpack.c.bf16 %v4910, %v4904
    %v4917 = vpack.c.bf16 %v4911, %v4905
    %v4918 = vld [vmem:[#allocation20] sm:$0xff]
    %v4919 = vld [vmem:[#allocation20 + $0x8] sm:$0xff]
    %v4920 = vld [vmem:[#allocation20 + $0x10] sm:$0xff]
    %v4921 = vld [vmem:[#allocation20 + $0x18] sm:$0xff]
    %v4922 = vld [vmem:[#allocation20 + $0x20] sm:$0xff]
    %v4923 = vld [vmem:[#allocation20 + $0x28] sm:$0xff]
    %v4924 = vld [vmem:[#allocation20 + $0x30] sm:$0xff]
    %v4925 = vld [vmem:[#allocation20 + $0x38] sm:$0xff]
    %v4926 = vld [vmem:[#allocation20 + $0x40] sm:$0xff]
    %v4927 = vld [vmem:[#allocation20 + $0x48] sm:$0xff]
    %v4928 = vld [vmem:[#allocation20 + $0x50] sm:$0xff]
    %v4929 = vld [vmem:[#allocation20 + $0x58] sm:$0xff]
    %v4930 = vld [vmem:[#allocation20 + $0x60] sm:$0xff]
    %v4931 = vld [vmem:[#allocation20 + $0x68] sm:$0xff]
    %v4932 = vld [vmem:[#allocation20 + $0x70] sm:$0xff]
    %v4933 = vld [vmem:[#allocation20 + $0x78] sm:$0xff]
    %v4934 = vld [vmem:[#allocation20 + $0x80] sm:$0xff]
    %v4935 = vld [vmem:[#allocation20 + $0x88] sm:$0xff]
    %v4936 = vld [vmem:[#allocation20 + $0x90] sm:$0xff]
    %v4937 = vld [vmem:[#allocation20 + $0x98] sm:$0xff]
    %v4938 = vld [vmem:[#allocation20 + $0xa0] sm:$0xff]
    %v4939 = vld [vmem:[#allocation20 + $0xa8] sm:$0xff]
    %v4940 = vld [vmem:[#allocation20 + $0xb0] sm:$0xff]
    %v4941 = vld [vmem:[#allocation20 + $0xb8] sm:$0xff]
    %v4942 = vld [vmem:[#allocation20 + $0xc0] sm:$0xff]
    %v4943 = vld [vmem:[#allocation20 + $0xc8] sm:$0xff]
    %v4944 = vld [vmem:[#allocation20 + $0xd0] sm:$0xff]
    %v4945 = vld [vmem:[#allocation20 + $0xd8] sm:$0xff]
    %v4946 = vld [vmem:[#allocation20 + $0xe0] sm:$0xff]
    %v4947 = vld [vmem:[#allocation20 + $0xe8] sm:$0xff]
    %v4948 = vld [vmem:[#allocation20 + $0xf0] sm:$0xff]
    %v4949 = vld [vmem:[#allocation20 + $0xf8] sm:$0xff]
    %v4950 = vld [vmem:[#allocation20 + $0x100] sm:$0xff]
    %v4951 = vld [vmem:[#allocation20 + $0x108] sm:$0xff]
    %v4952 = vld [vmem:[#allocation20 + $0x110] sm:$0xff]
    %v4953 = vld [vmem:[#allocation20 + $0x118] sm:$0xff]
    %v4954 = vld [vmem:[#allocation20 + $0x120] sm:$0xff]
    %v4955 = vld [vmem:[#allocation20 + $0x128] sm:$0xff]
    %v4956 = vld [vmem:[#allocation20 + $0x130] sm:$0xff]
    %v4957 = vld [vmem:[#allocation20 + $0x138] sm:$0xff]
    %v4958 = vld [vmem:[#allocation20 + $0x140] sm:$0xff]
    %v4959 = vld [vmem:[#allocation20 + $0x148] sm:$0xff]
    %v4960 = vld [vmem:[#allocation20 + $0x150] sm:$0xff]
    %v4961 = vld [vmem:[#allocation20 + $0x158] sm:$0xff]
    %v4962 = vld [vmem:[#allocation20 + $0x160] sm:$0xff]
    %v4963 = vld [vmem:[#allocation20 + $0x168] sm:$0xff]
    %v4964 = vld [vmem:[#allocation20 + $0x170] sm:$0xff]
    %v4965 = vld [vmem:[#allocation20 + $0x178] sm:$0xff]
    %v4966 = vld [vmem:[#allocation20 + $0x180] sm:$0xff]
    %v4967 = vld [vmem:[#allocation20 + $0x188] sm:$0xff]
    %v4968 = vld [vmem:[#allocation20 + $0x190] sm:$0xff]
    %v4969 = vld [vmem:[#allocation20 + $0x198] sm:$0xff]
    %v4970 = vld [vmem:[#allocation20 + $0x1a0] sm:$0xff]
    %v4971 = vld [vmem:[#allocation20 + $0x1a8] sm:$0xff]
    %v4972 = vld [vmem:[#allocation20 + $0x1b0] sm:$0xff]
    %v4973 = vld [vmem:[#allocation20 + $0x1b8] sm:$0xff]
    %v4974 = vld [vmem:[#allocation20 + $0x1c0] sm:$0xff]
    %v4975 = vld [vmem:[#allocation20 + $0x1c8] sm:$0xff]
    %v4976 = vld [vmem:[#allocation20 + $0x1d0] sm:$0xff]
    %v4977 = vld [vmem:[#allocation20 + $0x1d8] sm:$0xff]
    %v4978 = vld [vmem:[#allocation20 + $0x1e0] sm:$0xff]
    %v4979 = vld [vmem:[#allocation20 + $0x1e8] sm:$0xff]
    %v4980 = vld [vmem:[#allocation20 + $0x1f0] sm:$0xff]
    %v4981 = vld [vmem:[#allocation20 + $0x1f8] sm:$0xff]
    %v4982 = vld [vmem:[#allocation20 + $0x200] sm:$0xff]
    %v4983 = vld [vmem:[#allocation20 + $0x208] sm:$0xff]
    %v4984 = vld [vmem:[#allocation20 + $0x210] sm:$0xff]
    %v4985 = vld [vmem:[#allocation20 + $0x218] sm:$0xff]
    %v4986 = vld [vmem:[#allocation20 + $0x220] sm:$0xff]
    %v4987 = vld [vmem:[#allocation20 + $0x228] sm:$0xff]
    %v4988 = vld [vmem:[#allocation20 + $0x230] sm:$0xff]
    %v4989 = vld [vmem:[#allocation20 + $0x238] sm:$0xff]
    %v4990 = vld [vmem:[#allocation20 + $0x240] sm:$0xff]
    %v4991 = vld [vmem:[#allocation20 + $0x248] sm:$0xff]
    %v4992 = vld [vmem:[#allocation20 + $0x250] sm:$0xff]
    %v4993 = vld [vmem:[#allocation20 + $0x258] sm:$0xff]
    %v4994 = vld [vmem:[#allocation20 + $0x260] sm:$0xff]
    %v4995 = vld [vmem:[#allocation20 + $0x268] sm:$0xff]
    %v4996 = vld [vmem:[#allocation20 + $0x270] sm:$0xff]
    %v4997 = vld [vmem:[#allocation20 + $0x278] sm:$0xff]
    %v4998 = vld [vmem:[#allocation20 + $0x280] sm:$0xff]
    %v4999 = vld [vmem:[#allocation20 + $0x288] sm:$0xff]
    %v5000 = vld [vmem:[#allocation20 + $0x290] sm:$0xff]
    %v5001 = vld [vmem:[#allocation20 + $0x298] sm:$0xff]
    %v5002 = vld [vmem:[#allocation20 + $0x2a0] sm:$0xff]
    %v5003 = vld [vmem:[#allocation20 + $0x2a8] sm:$0xff]
    %v5004 = vld [vmem:[#allocation20 + $0x2b0] sm:$0xff]
    %v5005 = vld [vmem:[#allocation20 + $0x2b8] sm:$0xff]
    %v5006 = vld [vmem:[#allocation20 + $0x2c0] sm:$0xff]
    %v5007 = vld [vmem:[#allocation20 + $0x2c8] sm:$0xff]
    %v5008 = vld [vmem:[#allocation20 + $0x2d0] sm:$0xff]
    %v5009 = vld [vmem:[#allocation20 + $0x2d8] sm:$0xff]
    %v5010 = vld [vmem:[#allocation20 + $0x2e0] sm:$0xff]
    %v5011 = vld [vmem:[#allocation20 + $0x2e8] sm:$0xff]
    %v5012 = vld [vmem:[#allocation20 + $0x2f0] sm:$0xff]
    %v5013 = vld [vmem:[#allocation20 + $0x2f8] sm:$0xff]
    %v5014 = vld [vmem:[#allocation20 + $0x300] sm:$0xff]
    %v5015 = vld [vmem:[#allocation20 + $0x308] sm:$0xff]
    %v5016 = vld [vmem:[#allocation20 + $0x310] sm:$0xff]
    %v5017 = vld [vmem:[#allocation20 + $0x318] sm:$0xff]
    %v5018 = vld [vmem:[#allocation20 + $0x320] sm:$0xff]
    %v5019 = vld [vmem:[#allocation20 + $0x328] sm:$0xff]
    %v5020 = vld [vmem:[#allocation20 + $0x330] sm:$0xff]
    %v5021 = vld [vmem:[#allocation20 + $0x338] sm:$0xff]
    %v5022 = vld [vmem:[#allocation20 + $0x340] sm:$0xff]
    %v5023 = vld [vmem:[#allocation20 + $0x348] sm:$0xff]
    %v5024 = vld [vmem:[#allocation20 + $0x350] sm:$0xff]
    %v5025 = vld [vmem:[#allocation20 + $0x358] sm:$0xff]
    %v5026 = vld [vmem:[#allocation20 + $0x360] sm:$0xff]
    %v5027 = vld [vmem:[#allocation20 + $0x368] sm:$0xff]
    %v5028 = vld [vmem:[#allocation20 + $0x370] sm:$0xff]
    %v5029 = vld [vmem:[#allocation20 + $0x378] sm:$0xff]
    %v5030 = vld [vmem:[#allocation20 + $0x380] sm:$0xff]
    %v5031 = vld [vmem:[#allocation20 + $0x388] sm:$0xff]
    %v5032 = vld [vmem:[#allocation20 + $0x390] sm:$0xff]
    %v5033 = vld [vmem:[#allocation20 + $0x398] sm:$0xff]
    %v5034 = vld [vmem:[#allocation20 + $0x3a0] sm:$0xff]
    %v5035 = vld [vmem:[#allocation20 + $0x3a8] sm:$0xff]
    %v5036 = vld [vmem:[#allocation20 + $0x3b0] sm:$0xff]
    %v5037 = vld [vmem:[#allocation20 + $0x3b8] sm:$0xff]
    %v5038 = vld [vmem:[#allocation20 + $0x3c0] sm:$0xff]
    %v5039 = vld [vmem:[#allocation20 + $0x3c8] sm:$0xff]
    %v5040 = vld [vmem:[#allocation20 + $0x3d0] sm:$0xff]
    %v5041 = vld [vmem:[#allocation20 + $0x3d8] sm:$0xff]
    %v5042 = vld [vmem:[#allocation20 + $0x3e0] sm:$0xff]
    %v5043 = vld [vmem:[#allocation20 + $0x3e8] sm:$0xff]
    %v5044 = vld [vmem:[#allocation20 + $0x3f0] sm:$0xff]
    %v5045 = vld [vmem:[#allocation20 + $0x3f8] sm:$0xff]
    %v5046 = vld [vmem:[#allocation20 + $0x400] sm:$0xff]
    %v5047 = vld [vmem:[#allocation20 + $0x408] sm:$0xff]
    %v5048 = vld [vmem:[#allocation20 + $0x410] sm:$0xff]
    %v5049 = vld [vmem:[#allocation20 + $0x418] sm:$0xff]
    %v5050 = vld [vmem:[#allocation20 + $0x420] sm:$0xff]
    %v5051 = vld [vmem:[#allocation20 + $0x428] sm:$0xff]
    %v5052 = vld [vmem:[#allocation20 + $0x430] sm:$0xff]
    %v5053 = vld [vmem:[#allocation20 + $0x438] sm:$0xff]
    %v5054 = vld [vmem:[#allocation20 + $0x440] sm:$0xff]
    %v5055 = vld [vmem:[#allocation20 + $0x448] sm:$0xff]
    %v5056 = vld [vmem:[#allocation20 + $0x450] sm:$0xff]
    %v5057 = vld [vmem:[#allocation20 + $0x458] sm:$0xff]
    %v5058 = vld [vmem:[#allocation20 + $0x460] sm:$0xff]
    %v5059 = vld [vmem:[#allocation20 + $0x468] sm:$0xff]
    %v5060 = vld [vmem:[#allocation20 + $0x470] sm:$0xff]
    %v5061 = vld [vmem:[#allocation20 + $0x478] sm:$0xff]
    %v5062 = vld [vmem:[#allocation20 + $0x480] sm:$0xff]
    %v5063 = vld [vmem:[#allocation20 + $0x488] sm:$0xff]
    %v5064 = vld [vmem:[#allocation20 + $0x490] sm:$0xff]
    %v5065 = vld [vmem:[#allocation20 + $0x498] sm:$0xff]
    %v5066 = vld [vmem:[#allocation20 + $0x4a0] sm:$0xff]
    %v5067 = vld [vmem:[#allocation20 + $0x4a8] sm:$0xff]
    %v5068 = vld [vmem:[#allocation20 + $0x4b0] sm:$0xff]
    %v5069 = vld [vmem:[#allocation20 + $0x4b8] sm:$0xff]
    %v5070 = vld [vmem:[#allocation20 + $0x4c0] sm:$0xff]
    %v5071 = vld [vmem:[#allocation20 + $0x4c8] sm:$0xff]
    %v5072 = vld [vmem:[#allocation20 + $0x4d0] sm:$0xff]
    %v5073 = vld [vmem:[#allocation20 + $0x4d8] sm:$0xff]
    %v5074 = vld [vmem:[#allocation20 + $0x4e0] sm:$0xff]
    %v5075 = vld [vmem:[#allocation20 + $0x4e8] sm:$0xff]
    %v5076 = vld [vmem:[#allocation20 + $0x4f0] sm:$0xff]
    %v5077 = vld [vmem:[#allocation20 + $0x4f8] sm:$0xff]
    %v5078 = vld [vmem:[#allocation20 + $0x500] sm:$0xff]
    %v5079 = vld [vmem:[#allocation20 + $0x508] sm:$0xff]
    %v5080 = vld [vmem:[#allocation20 + $0x510] sm:$0xff]
    %v5081 = vld [vmem:[#allocation20 + $0x518] sm:$0xff]
    %v5082 = vld [vmem:[#allocation20 + $0x520] sm:$0xff]
    %v5083 = vld [vmem:[#allocation20 + $0x528] sm:$0xff]
    %v5084 = vld [vmem:[#allocation20 + $0x530] sm:$0xff]
    %v5085 = vld [vmem:[#allocation20 + $0x538] sm:$0xff]
    %v5086 = vld [vmem:[#allocation20 + $0x540] sm:$0xff]
    %v5087 = vld [vmem:[#allocation20 + $0x548] sm:$0xff]
    %v5088 = vld [vmem:[#allocation20 + $0x550] sm:$0xff]
    %v5089 = vld [vmem:[#allocation20 + $0x558] sm:$0xff]
    %v5090 = vld [vmem:[#allocation20 + $0x560] sm:$0xff]
    %v5091 = vld [vmem:[#allocation20 + $0x568] sm:$0xff]
    %v5092 = vld [vmem:[#allocation20 + $0x570] sm:$0xff]
    %v5093 = vld [vmem:[#allocation20 + $0x578] sm:$0xff]
    %v5094 = vld [vmem:[#allocation20 + $0x580] sm:$0xff]
    %v5095 = vld [vmem:[#allocation20 + $0x588] sm:$0xff]
    %v5096 = vld [vmem:[#allocation20 + $0x590] sm:$0xff]
    %v5097 = vld [vmem:[#allocation20 + $0x598] sm:$0xff]
    %v5098 = vld [vmem:[#allocation20 + $0x5a0] sm:$0xff]
    %v5099 = vld [vmem:[#allocation20 + $0x5a8] sm:$0xff]
    %v5100 = vld [vmem:[#allocation20 + $0x5b0] sm:$0xff]
    %v5101 = vld [vmem:[#allocation20 + $0x5b8] sm:$0xff]
    %v5102 = vld [vmem:[#allocation20 + $0x5c0] sm:$0xff]
    %v5103 = vld [vmem:[#allocation20 + $0x5c8] sm:$0xff]
    %v5104 = vld [vmem:[#allocation20 + $0x5d0] sm:$0xff]
    %v5105 = vld [vmem:[#allocation20 + $0x5d8] sm:$0xff]
    %v5106 = vld [vmem:[#allocation20 + $0x5e0] sm:$0xff]
    %v5107 = vld [vmem:[#allocation20 + $0x5e8] sm:$0xff]
    %v5108 = vld [vmem:[#allocation20 + $0x5f0] sm:$0xff]
    %v5109 = vld [vmem:[#allocation20 + $0x5f8] sm:$0xff]
    %v5110 = vld [vmem:[#allocation20 + $0x600] sm:$0xff]
    %v5111 = vld [vmem:[#allocation20 + $0x608] sm:$0xff]
    %v5112 = vld [vmem:[#allocation20 + $0x610] sm:$0xff]
    %v5113 = vld [vmem:[#allocation20 + $0x618] sm:$0xff]
    %v5114 = vld [vmem:[#allocation20 + $0x620] sm:$0xff]
    %v5115 = vld [vmem:[#allocation20 + $0x628] sm:$0xff]
    %v5116 = vld [vmem:[#allocation20 + $0x630] sm:$0xff]
    %v5117 = vld [vmem:[#allocation20 + $0x638] sm:$0xff]
    %v5118 = vld [vmem:[#allocation20 + $0x640] sm:$0xff]
    %v5119 = vld [vmem:[#allocation20 + $0x648] sm:$0xff]
    %v5120 = vld [vmem:[#allocation20 + $0x650] sm:$0xff]
    %v5121 = vld [vmem:[#allocation20 + $0x658] sm:$0xff]
    %v5122 = vld [vmem:[#allocation20 + $0x660] sm:$0xff]
    %v5123 = vld [vmem:[#allocation20 + $0x668] sm:$0xff]
    %v5124 = vld [vmem:[#allocation20 + $0x670] sm:$0xff]
    %v5125 = vld [vmem:[#allocation20 + $0x678] sm:$0xff]
    %v5126 = vld [vmem:[#allocation20 + $0x680] sm:$0xff]
    %v5127 = vld [vmem:[#allocation20 + $0x688] sm:$0xff]
    %v5128 = vld [vmem:[#allocation20 + $0x690] sm:$0xff]
    %v5129 = vld [vmem:[#allocation20 + $0x698] sm:$0xff]
    %v5130 = vld [vmem:[#allocation20 + $0x6a0] sm:$0xff]
    %v5131 = vld [vmem:[#allocation20 + $0x6a8] sm:$0xff]
    %v5132 = vld [vmem:[#allocation20 + $0x6b0] sm:$0xff]
    %v5133 = vld [vmem:[#allocation20 + $0x6b8] sm:$0xff]
    %v5134 = vld [vmem:[#allocation20 + $0x6c0] sm:$0xff]
    %v5135 = vld [vmem:[#allocation20 + $0x6c8] sm:$0xff]
    %v5136 = vld [vmem:[#allocation20 + $0x6d0] sm:$0xff]
    %v5137 = vld [vmem:[#allocation20 + $0x6d8] sm:$0xff]
    %v5138 = vld [vmem:[#allocation20 + $0x6e0] sm:$0xff]
    %v5139 = vld [vmem:[#allocation20 + $0x6e8] sm:$0xff]
    %v5140 = vld [vmem:[#allocation20 + $0x6f0] sm:$0xff]
    %v5141 = vld [vmem:[#allocation20 + $0x6f8] sm:$0xff]
    %v5142 = vld [vmem:[#allocation20 + $0x700] sm:$0xff]
    %v5143 = vld [vmem:[#allocation20 + $0x708] sm:$0xff]
    %v5144 = vld [vmem:[#allocation20 + $0x710] sm:$0xff]
    %v5145 = vld [vmem:[#allocation20 + $0x718] sm:$0xff]
    %v5146 = vld [vmem:[#allocation20 + $0x720] sm:$0xff]
    %v5147 = vld [vmem:[#allocation20 + $0x728] sm:$0xff]
    %v5148 = vld [vmem:[#allocation20 + $0x730] sm:$0xff]
    %v5149 = vld [vmem:[#allocation20 + $0x738] sm:$0xff]
    %v5150 = vld [vmem:[#allocation20 + $0x740] sm:$0xff]
    %v5151 = vld [vmem:[#allocation20 + $0x748] sm:$0xff]
    %v5152 = vld [vmem:[#allocation20 + $0x750] sm:$0xff]
    %v5153 = vld [vmem:[#allocation20 + $0x758] sm:$0xff]
    %v5154 = vld [vmem:[#allocation20 + $0x760] sm:$0xff]
    %v5155 = vld [vmem:[#allocation20 + $0x768] sm:$0xff]
    %v5156 = vld [vmem:[#allocation20 + $0x770] sm:$0xff]
    %v5157 = vld [vmem:[#allocation20 + $0x778] sm:$0xff]
    %v5158 = vld [vmem:[#allocation20 + $0x780] sm:$0xff]
    %v5159 = vld [vmem:[#allocation20 + $0x788] sm:$0xff]
    %v5160 = vld [vmem:[#allocation20 + $0x790] sm:$0xff]
    %v5161 = vld [vmem:[#allocation20 + $0x798] sm:$0xff]
    %v5162 = vld [vmem:[#allocation20 + $0x7a0] sm:$0xff]
    %v5163 = vld [vmem:[#allocation20 + $0x7a8] sm:$0xff]
    %v5164 = vld [vmem:[#allocation20 + $0x7b0] sm:$0xff]
    %v5165 = vld [vmem:[#allocation20 + $0x7b8] sm:$0xff]
    %v5166 = vld [vmem:[#allocation20 + $0x7c0] sm:$0xff]
    %v5167 = vld [vmem:[#allocation20 + $0x7c8] sm:$0xff]
    %v5168 = vld [vmem:[#allocation20 + $0x7d0] sm:$0xff]
    %v5169 = vld [vmem:[#allocation20 + $0x7d8] sm:$0xff]
    %v5170 = vld [vmem:[#allocation20 + $0x7e0] sm:$0xff]
    %v5171 = vld [vmem:[#allocation20 + $0x7e8] sm:$0xff]
    %v5172 = vld [vmem:[#allocation20 + $0x7f0] sm:$0xff]
    %v5173 = vld [vmem:[#allocation20 + $0x7f8] sm:$0xff]
    %v5174 = vld [vmem:[#allocation20 + $0x800] sm:$0xff]
    %v5175 = vld [vmem:[#allocation20 + $0x808] sm:$0xff]
    %v5176 = vld [vmem:[#allocation20 + $0x810] sm:$0xff]
    %v5177 = vld [vmem:[#allocation20 + $0x818] sm:$0xff]
    %v5178 = vld [vmem:[#allocation20 + $0x820] sm:$0xff]
    %v5179 = vld [vmem:[#allocation20 + $0x828] sm:$0xff]
    %v5180 = vld [vmem:[#allocation20 + $0x830] sm:$0xff]
    %v5181 = vld [vmem:[#allocation20 + $0x838] sm:$0xff]
    %v5182 = vld [vmem:[#allocation20 + $0x840] sm:$0xff]
    %v5183 = vld [vmem:[#allocation20 + $0x848] sm:$0xff]
    %v5184 = vld [vmem:[#allocation20 + $0x850] sm:$0xff]
    %v5185 = vld [vmem:[#allocation20 + $0x858] sm:$0xff]
    %v5186 = vld [vmem:[#allocation20 + $0x860] sm:$0xff]
    %v5187 = vld [vmem:[#allocation20 + $0x868] sm:$0xff]
    %v5188 = vld [vmem:[#allocation20 + $0x870] sm:$0xff]
    %v5189 = vld [vmem:[#allocation20 + $0x878] sm:$0xff]
    %v5190 = vld [vmem:[#allocation20 + $0x880] sm:$0xff]
    %v5191 = vld [vmem:[#allocation20 + $0x888] sm:$0xff]
    %v5192 = vld [vmem:[#allocation20 + $0x890] sm:$0xff]
    %v5193 = vld [vmem:[#allocation20 + $0x898] sm:$0xff]
    %v5194 = vld [vmem:[#allocation20 + $0x8a0] sm:$0xff]
    %v5195 = vld [vmem:[#allocation20 + $0x8a8] sm:$0xff]
    %v5196 = vld [vmem:[#allocation20 + $0x8b0] sm:$0xff]
    %v5197 = vld [vmem:[#allocation20 + $0x8b8] sm:$0xff]
    %v5198 = vld [vmem:[#allocation20 + $0x8c0] sm:$0xff]
    %v5199 = vld [vmem:[#allocation20 + $0x8c8] sm:$0xff]
    %v5200 = vld [vmem:[#allocation20 + $0x8d0] sm:$0xff]
    %v5201 = vld [vmem:[#allocation20 + $0x8d8] sm:$0xff]
    %v5202 = vld [vmem:[#allocation20 + $0x8e0] sm:$0xff]
    %v5203 = vld [vmem:[#allocation20 + $0x8e8] sm:$0xff]
    %v5204 = vld [vmem:[#allocation20 + $0x8f0] sm:$0xff]
    %v5205 = vld [vmem:[#allocation20 + $0x8f8] sm:$0xff]
    %v5206 = vld [vmem:[#allocation20 + $0x900] sm:$0xff]
    %v5207 = vld [vmem:[#allocation20 + $0x908] sm:$0xff]
    %v5208 = vld [vmem:[#allocation20 + $0x910] sm:$0xff]
    %v5209 = vld [vmem:[#allocation20 + $0x918] sm:$0xff]
    %v5210 = vld [vmem:[#allocation20 + $0x920] sm:$0xff]
    %v5211 = vld [vmem:[#allocation20 + $0x928] sm:$0xff]
    %v5212 = vld [vmem:[#allocation20 + $0x930] sm:$0xff]
    %v5213 = vld [vmem:[#allocation20 + $0x938] sm:$0xff]
    %v5214 = vld [vmem:[#allocation20 + $0x940] sm:$0xff]
    %v5215 = vld [vmem:[#allocation20 + $0x948] sm:$0xff]
    %v5216 = vld [vmem:[#allocation20 + $0x950] sm:$0xff]
    %v5217 = vld [vmem:[#allocation20 + $0x958] sm:$0xff]
    %v5218 = vld [vmem:[#allocation20 + $0x960] sm:$0xff]
    %v5219 = vld [vmem:[#allocation20 + $0x968] sm:$0xff]
    %v5220 = vld [vmem:[#allocation20 + $0x970] sm:$0xff]
    %v5221 = vld [vmem:[#allocation20 + $0x978] sm:$0xff]
    %v5222 = vld [vmem:[#allocation20 + $0x980] sm:$0xff]
    %v5223 = vld [vmem:[#allocation20 + $0x988] sm:$0xff]
    %v5224 = vld [vmem:[#allocation20 + $0x990] sm:$0xff]
    %v5225 = vld [vmem:[#allocation20 + $0x998] sm:$0xff]
    %v5226 = vld [vmem:[#allocation20 + $0x9a0] sm:$0xff]
    %v5227 = vld [vmem:[#allocation20 + $0x9a8] sm:$0xff]
    %v5228 = vld [vmem:[#allocation20 + $0x9b0] sm:$0xff]
    %v5229 = vld [vmem:[#allocation20 + $0x9b8] sm:$0xff]
    %v5230 = vld [vmem:[#allocation20 + $0x9c0] sm:$0xff]
    %v5231 = vld [vmem:[#allocation20 + $0x9c8] sm:$0xff]
    %v5232 = vld [vmem:[#allocation20 + $0x9d0] sm:$0xff]
    %v5233 = vld [vmem:[#allocation20 + $0x9d8] sm:$0xff]
    %v5234 = vld [vmem:[#allocation20 + $0x9e0] sm:$0xff]
    %v5235 = vld [vmem:[#allocation20 + $0x9e8] sm:$0xff]
    %v5236 = vld [vmem:[#allocation20 + $0x9f0] sm:$0xff]
    %v5237 = vld [vmem:[#allocation20 + $0x9f8] sm:$0xff]
    %v5238 = vld [vmem:[#allocation20 + $0xa00] sm:$0xff]
    %v5239 = vld [vmem:[#allocation20 + $0xa08] sm:$0xff]
    %v5240 = vld [vmem:[#allocation20 + $0xa10] sm:$0xff]
    %v5241 = vld [vmem:[#allocation20 + $0xa18] sm:$0xff]
    %v5242 = vld [vmem:[#allocation20 + $0xa20] sm:$0xff]
    %v5243 = vld [vmem:[#allocation20 + $0xa28] sm:$0xff]
    %v5244 = vld [vmem:[#allocation20 + $0xa30] sm:$0xff]
    %v5245 = vld [vmem:[#allocation20 + $0xa38] sm:$0xff]
    %v5246 = vld [vmem:[#allocation20 + $0xa40] sm:$0xff]
    %v5247 = vld [vmem:[#allocation20 + $0xa48] sm:$0xff]
    %v5248 = vld [vmem:[#allocation20 + $0xa50] sm:$0xff]
    %v5249 = vld [vmem:[#allocation20 + $0xa58] sm:$0xff]
    %v5250 = vld [vmem:[#allocation20 + $0xa60] sm:$0xff]
    %v5251 = vld [vmem:[#allocation20 + $0xa68] sm:$0xff]
    %v5252 = vld [vmem:[#allocation20 + $0xa70] sm:$0xff]
    %v5253 = vld [vmem:[#allocation20 + $0xa78] sm:$0xff]
    %v5254 = vld [vmem:[#allocation20 + $0xa80] sm:$0xff]
    %v5255 = vld [vmem:[#allocation20 + $0xa88] sm:$0xff]
    %v5256 = vld [vmem:[#allocation20 + $0xa90] sm:$0xff]
    %v5257 = vld [vmem:[#allocation20 + $0xa98] sm:$0xff]
    %v5258 = vld [vmem:[#allocation20 + $0xaa0] sm:$0xff]
    %v5259 = vld [vmem:[#allocation20 + $0xaa8] sm:$0xff]
    %v5260 = vld [vmem:[#allocation20 + $0xab0] sm:$0xff]
    %v5261 = vld [vmem:[#allocation20 + $0xab8] sm:$0xff]
    %v5262 = vld [vmem:[#allocation20 + $0xac0] sm:$0xff]
    %v5263 = vld [vmem:[#allocation20 + $0xac8] sm:$0xff]
    %v5264 = vld [vmem:[#allocation20 + $0xad0] sm:$0xff]
    %v5265 = vld [vmem:[#allocation20 + $0xad8] sm:$0xff]
    %v5266 = vld [vmem:[#allocation20 + $0xae0] sm:$0xff]
    %v5267 = vld [vmem:[#allocation20 + $0xae8] sm:$0xff]
    %v5268 = vld [vmem:[#allocation20 + $0xaf0] sm:$0xff]
    %v5269 = vld [vmem:[#allocation20 + $0xaf8] sm:$0xff]
    %v5270 = vld [vmem:[#allocation20 + $0xb00] sm:$0xff]
    %v5271 = vld [vmem:[#allocation20 + $0xb08] sm:$0xff]
    %v5272 = vld [vmem:[#allocation20 + $0xb10] sm:$0xff]
    %v5273 = vld [vmem:[#allocation20 + $0xb18] sm:$0xff]
    %v5274 = vld [vmem:[#allocation20 + $0xb20] sm:$0xff]
    %v5275 = vld [vmem:[#allocation20 + $0xb28] sm:$0xff]
    %v5276 = vld [vmem:[#allocation20 + $0xb30] sm:$0xff]
    %v5277 = vld [vmem:[#allocation20 + $0xb38] sm:$0xff]
    %v5278 = vld [vmem:[#allocation20 + $0xb40] sm:$0xff]
    %v5279 = vld [vmem:[#allocation20 + $0xb48] sm:$0xff]
    %v5280 = vld [vmem:[#allocation20 + $0xb50] sm:$0xff]
    %v5281 = vld [vmem:[#allocation20 + $0xb58] sm:$0xff]
    %v5282 = vld [vmem:[#allocation20 + $0xb60] sm:$0xff]
    %v5283 = vld [vmem:[#allocation20 + $0xb68] sm:$0xff]
    %v5284 = vld [vmem:[#allocation20 + $0xb70] sm:$0xff]
    %v5285 = vld [vmem:[#allocation20 + $0xb78] sm:$0xff]
    %v5286 = vld [vmem:[#allocation20 + $0xb80] sm:$0xff]
    %v5287 = vld [vmem:[#allocation20 + $0xb88] sm:$0xff]
    %v5288 = vld [vmem:[#allocation20 + $0xb90] sm:$0xff]
    %v5289 = vld [vmem:[#allocation20 + $0xb98] sm:$0xff]
    %v5290 = vld [vmem:[#allocation20 + $0xba0] sm:$0xff]
    %v5291 = vld [vmem:[#allocation20 + $0xba8] sm:$0xff]
    %v5292 = vld [vmem:[#allocation20 + $0xbb0] sm:$0xff]
    %v5293 = vld [vmem:[#allocation20 + $0xbb8] sm:$0xff]
    %v5294 = vld [vmem:[#allocation20 + $0xbc0] sm:$0xff]
    %v5295 = vld [vmem:[#allocation20 + $0xbc8] sm:$0xff]
    %v5296 = vld [vmem:[#allocation20 + $0xbd0] sm:$0xff]
    %v5297 = vld [vmem:[#allocation20 + $0xbd8] sm:$0xff]
    %v5298 = vld [vmem:[#allocation20 + $0xbe0] sm:$0xff]
    %v5299 = vld [vmem:[#allocation20 + $0xbe8] sm:$0xff]
    %v5300 = vld [vmem:[#allocation20 + $0xbf0] sm:$0xff]
    %v5301 = vld [vmem:[#allocation20 + $0xbf8] sm:$0xff]
    %v5302 = vld [vmem:[#allocation22] sm:$0xff]
    %v5304 = vlaneseq
    %v5305 = vshrl.u32 %v5304, 7
    %v5306 = vsub.s32 0, %v5305
    %v5307 = vrot.slane %v5302, %v5306
    %v5308 = vlaneseq
    %v5309 = vshrl.u32 %v5308, 7
    %v5310 = vsub.s32 1, %v5309
    %v5311 = vrot.slane %v5302, %v5310
    %v5312 = vlaneseq
    %v5313 = vshrl.u32 %v5312, 7
    %v5314 = vsub.s32 2, %v5313
    %v5315 = vrot.slane %v5302, %v5314
    %v5316 = vlaneseq
    %v5317 = vshrl.u32 %v5316, 7
    %v5318 = vsub.s32 3, %v5317
    %v5319 = vrot.slane %v5302, %v5318
    %v5320 = vlaneseq
    %v5321 = vshrl.u32 %v5320, 7
    %v5322 = vsub.s32 4, %v5321
    %v5323 = vrot.slane %v5302, %v5322
    %v5324 = vlaneseq
    %v5325 = vshrl.u32 %v5324, 7
    %v5326 = vsub.s32 5, %v5325
    %v5327 = vrot.slane %v5302, %v5326
    %v5328 = vlaneseq
    %v5329 = vshrl.u32 %v5328, 7
    %v5330 = vsub.s32 6, %v5329
    %v5331 = vrot.slane %v5302, %v5330
    %v5332 = vlaneseq
    %v5333 = vshrl.u32 %v5332, 7
    %v5334 = vsub.s32 7, %v5333
    %v5335 = vrot.slane %v5302, %v5334
    %v5728 = vunpack.c.l.b16 %v4918
    %v5729 = vunpack.c.h.b16 %v4918
    %v5730 = vunpack.c.l.b16 %v4919
    %v5731 = vunpack.c.h.b16 %v4919
    %v5732 = vunpack.c.l.b16 %v4920
    %v5733 = vunpack.c.h.b16 %v4920
    %v5734 = vunpack.c.l.b16 %v4921
    %v5735 = vunpack.c.h.b16 %v4921
    %v5736 = vunpack.c.l.b16 %v4922
    %v5737 = vunpack.c.h.b16 %v4922
    %v5738 = vunpack.c.l.b16 %v4923
    %v5739 = vunpack.c.h.b16 %v4923
    %v5740 = vunpack.c.l.b16 %v4924
    %v5741 = vunpack.c.h.b16 %v4924
    %v5742 = vunpack.c.l.b16 %v4925
    %v5743 = vunpack.c.h.b16 %v4925
    %v5744 = vunpack.c.l.b16 %v4926
    %v5745 = vunpack.c.h.b16 %v4926
    %v5746 = vunpack.c.l.b16 %v4927
    %v5747 = vunpack.c.h.b16 %v4927
    %v5748 = vunpack.c.l.b16 %v4928
    %v5749 = vunpack.c.h.b16 %v4928
    %v5750 = vunpack.c.l.b16 %v4929
    %v5751 = vunpack.c.h.b16 %v4929
    %v5752 = vunpack.c.l.b16 %v4930
    %v5753 = vunpack.c.h.b16 %v4930
    %v5754 = vunpack.c.l.b16 %v4931
    %v5755 = vunpack.c.h.b16 %v4931
    %v5756 = vunpack.c.l.b16 %v4932
    %v5757 = vunpack.c.h.b16 %v4932
    %v5758 = vunpack.c.l.b16 %v4933
    %v5759 = vunpack.c.h.b16 %v4933
    %v5760 = vunpack.c.l.b16 %v4934
    %v5761 = vunpack.c.h.b16 %v4934
    %v5762 = vunpack.c.l.b16 %v4935
    %v5763 = vunpack.c.h.b16 %v4935
    %v5764 = vunpack.c.l.b16 %v4936
    %v5765 = vunpack.c.h.b16 %v4936
    %v5766 = vunpack.c.l.b16 %v4937
    %v5767 = vunpack.c.h.b16 %v4937
    %v5768 = vunpack.c.l.b16 %v4938
    %v5769 = vunpack.c.h.b16 %v4938
    %v5770 = vunpack.c.l.b16 %v4939
    %v5771 = vunpack.c.h.b16 %v4939
    %v5772 = vunpack.c.l.b16 %v4940
    %v5773 = vunpack.c.h.b16 %v4940
    %v5774 = vunpack.c.l.b16 %v4941
    %v5775 = vunpack.c.h.b16 %v4941
    %v5776 = vunpack.c.l.b16 %v4942
    %v5777 = vunpack.c.h.b16 %v4942
    %v5778 = vunpack.c.l.b16 %v4943
    %v5779 = vunpack.c.h.b16 %v4943
    %v5780 = vunpack.c.l.b16 %v4944
    %v5781 = vunpack.c.h.b16 %v4944
    %v5782 = vunpack.c.l.b16 %v4945
    %v5783 = vunpack.c.h.b16 %v4945
    %v5784 = vunpack.c.l.b16 %v4946
    %v5785 = vunpack.c.h.b16 %v4946
    %v5786 = vunpack.c.l.b16 %v4947
    %v5787 = vunpack.c.h.b16 %v4947
    %v5788 = vunpack.c.l.b16 %v4948
    %v5789 = vunpack.c.h.b16 %v4948
    %v5790 = vunpack.c.l.b16 %v4949
    %v5791 = vunpack.c.h.b16 %v4949
    %v5792 = vunpack.c.l.b16 %v4950
    %v5793 = vunpack.c.h.b16 %v4950
    %v5794 = vunpack.c.l.b16 %v4951
    %v5795 = vunpack.c.h.b16 %v4951
    %v5796 = vunpack.c.l.b16 %v4952
    %v5797 = vunpack.c.h.b16 %v4952
    %v5798 = vunpack.c.l.b16 %v4953
    %v5799 = vunpack.c.h.b16 %v4953
    %v5800 = vunpack.c.l.b16 %v4954
    %v5801 = vunpack.c.h.b16 %v4954
    %v5802 = vunpack.c.l.b16 %v4955
    %v5803 = vunpack.c.h.b16 %v4955
    %v5804 = vunpack.c.l.b16 %v4956
    %v5805 = vunpack.c.h.b16 %v4956
    %v5806 = vunpack.c.l.b16 %v4957
    %v5807 = vunpack.c.h.b16 %v4957
    %v5808 = vunpack.c.l.b16 %v4958
    %v5809 = vunpack.c.h.b16 %v4958
    %v5810 = vunpack.c.l.b16 %v4959
    %v5811 = vunpack.c.h.b16 %v4959
    %v5812 = vunpack.c.l.b16 %v4960
    %v5813 = vunpack.c.h.b16 %v4960
    %v5814 = vunpack.c.l.b16 %v4961
    %v5815 = vunpack.c.h.b16 %v4961
    %v5816 = vunpack.c.l.b16 %v4962
    %v5817 = vunpack.c.h.b16 %v4962
    %v5818 = vunpack.c.l.b16 %v4963
    %v5819 = vunpack.c.h.b16 %v4963
    %v5820 = vunpack.c.l.b16 %v4964
    %v5821 = vunpack.c.h.b16 %v4964
    %v5822 = vunpack.c.l.b16 %v4965
    %v5823 = vunpack.c.h.b16 %v4965
    %v5824 = vunpack.c.l.b16 %v4966
    %v5825 = vunpack.c.h.b16 %v4966
    %v5826 = vunpack.c.l.b16 %v4967
    %v5827 = vunpack.c.h.b16 %v4967
    %v5828 = vunpack.c.l.b16 %v4968
    %v5829 = vunpack.c.h.b16 %v4968
    %v5830 = vunpack.c.l.b16 %v4969
    %v5831 = vunpack.c.h.b16 %v4969
    %v5832 = vunpack.c.l.b16 %v4970
    %v5833 = vunpack.c.h.b16 %v4970
    %v5834 = vunpack.c.l.b16 %v4971
    %v5835 = vunpack.c.h.b16 %v4971
    %v5836 = vunpack.c.l.b16 %v4972
    %v5837 = vunpack.c.h.b16 %v4972
    %v5838 = vunpack.c.l.b16 %v4973
    %v5839 = vunpack.c.h.b16 %v4973
    %v5840 = vunpack.c.l.b16 %v4974
    %v5841 = vunpack.c.h.b16 %v4974
    %v5842 = vunpack.c.l.b16 %v4975
    %v5843 = vunpack.c.h.b16 %v4975
    %v5844 = vunpack.c.l.b16 %v4976
    %v5845 = vunpack.c.h.b16 %v4976
    %v5846 = vunpack.c.l.b16 %v4977
    %v5847 = vunpack.c.h.b16 %v4977
    %v5848 = vunpack.c.l.b16 %v4978
    %v5849 = vunpack.c.h.b16 %v4978
    %v5850 = vunpack.c.l.b16 %v4979
    %v5851 = vunpack.c.h.b16 %v4979
    %v5852 = vunpack.c.l.b16 %v4980
    %v5853 = vunpack.c.h.b16 %v4980
    %v5854 = vunpack.c.l.b16 %v4981
    %v5855 = vunpack.c.h.b16 %v4981
    %v5856 = vunpack.c.l.b16 %v4982
    %v5857 = vunpack.c.h.b16 %v4982
    %v5858 = vunpack.c.l.b16 %v4983
    %v5859 = vunpack.c.h.b16 %v4983
    %v5860 = vunpack.c.l.b16 %v4984
    %v5861 = vunpack.c.h.b16 %v4984
    %v5862 = vunpack.c.l.b16 %v4985
    %v5863 = vunpack.c.h.b16 %v4985
    %v5864 = vunpack.c.l.b16 %v4986
    %v5865 = vunpack.c.h.b16 %v4986
    %v5866 = vunpack.c.l.b16 %v4987
    %v5867 = vunpack.c.h.b16 %v4987
    %v5868 = vunpack.c.l.b16 %v4988
    %v5869 = vunpack.c.h.b16 %v4988
    %v5870 = vunpack.c.l.b16 %v4989
    %v5871 = vunpack.c.h.b16 %v4989
    %v5872 = vunpack.c.l.b16 %v4990
    %v5873 = vunpack.c.h.b16 %v4990
    %v5874 = vunpack.c.l.b16 %v4991
    %v5875 = vunpack.c.h.b16 %v4991
    %v5876 = vunpack.c.l.b16 %v4992
    %v5877 = vunpack.c.h.b16 %v4992
    %v5878 = vunpack.c.l.b16 %v4993
    %v5879 = vunpack.c.h.b16 %v4993
    %v5880 = vunpack.c.l.b16 %v4994
    %v5881 = vunpack.c.h.b16 %v4994
    %v5882 = vunpack.c.l.b16 %v4995
    %v5883 = vunpack.c.h.b16 %v4995
    %v5884 = vunpack.c.l.b16 %v4996
    %v5885 = vunpack.c.h.b16 %v4996
    %v5886 = vunpack.c.l.b16 %v4997
    %v5887 = vunpack.c.h.b16 %v4997
    %v5888 = vunpack.c.l.b16 %v4998
    %v5889 = vunpack.c.h.b16 %v4998
    %v5890 = vunpack.c.l.b16 %v4999
    %v5891 = vunpack.c.h.b16 %v4999
    %v5892 = vunpack.c.l.b16 %v5000
    %v5893 = vunpack.c.h.b16 %v5000
    %v5894 = vunpack.c.l.b16 %v5001
    %v5895 = vunpack.c.h.b16 %v5001
    %v5896 = vunpack.c.l.b16 %v5002
    %v5897 = vunpack.c.h.b16 %v5002
    %v5898 = vunpack.c.l.b16 %v5003
    %v5899 = vunpack.c.h.b16 %v5003
    %v5900 = vunpack.c.l.b16 %v5004
    %v5901 = vunpack.c.h.b16 %v5004
    %v5902 = vunpack.c.l.b16 %v5005
    %v5903 = vunpack.c.h.b16 %v5005
    %v5904 = vunpack.c.l.b16 %v5006
    %v5905 = vunpack.c.h.b16 %v5006
    %v5906 = vunpack.c.l.b16 %v5007
    %v5907 = vunpack.c.h.b16 %v5007
    %v5908 = vunpack.c.l.b16 %v5008
    %v5909 = vunpack.c.h.b16 %v5008
    %v5910 = vunpack.c.l.b16 %v5009
    %v5911 = vunpack.c.h.b16 %v5009
    %v5912 = vunpack.c.l.b16 %v5010
    %v5913 = vunpack.c.h.b16 %v5010
    %v5914 = vunpack.c.l.b16 %v5011
    %v5915 = vunpack.c.h.b16 %v5011
    %v5916 = vunpack.c.l.b16 %v5012
    %v5917 = vunpack.c.h.b16 %v5012
    %v5918 = vunpack.c.l.b16 %v5013
    %v5919 = vunpack.c.h.b16 %v5013
    %v5920 = vunpack.c.l.b16 %v5014
    %v5921 = vunpack.c.h.b16 %v5014
    %v5922 = vunpack.c.l.b16 %v5015
    %v5923 = vunpack.c.h.b16 %v5015
    %v5924 = vunpack.c.l.b16 %v5016
    %v5925 = vunpack.c.h.b16 %v5016
    %v5926 = vunpack.c.l.b16 %v5017
    %v5927 = vunpack.c.h.b16 %v5017
    %v5928 = vunpack.c.l.b16 %v5018
    %v5929 = vunpack.c.h.b16 %v5018
    %v5930 = vunpack.c.l.b16 %v5019
    %v5931 = vunpack.c.h.b16 %v5019
    %v5932 = vunpack.c.l.b16 %v5020
    %v5933 = vunpack.c.h.b16 %v5020
    %v5934 = vunpack.c.l.b16 %v5021
    %v5935 = vunpack.c.h.b16 %v5021
    %v5936 = vunpack.c.l.b16 %v5022
    %v5937 = vunpack.c.h.b16 %v5022
    %v5938 = vunpack.c.l.b16 %v5023
    %v5939 = vunpack.c.h.b16 %v5023
    %v5940 = vunpack.c.l.b16 %v5024
    %v5941 = vunpack.c.h.b16 %v5024
    %v5942 = vunpack.c.l.b16 %v5025
    %v5943 = vunpack.c.h.b16 %v5025
    %v5944 = vunpack.c.l.b16 %v5026
    %v5945 = vunpack.c.h.b16 %v5026
    %v5946 = vunpack.c.l.b16 %v5027
    %v5947 = vunpack.c.h.b16 %v5027
    %v5948 = vunpack.c.l.b16 %v5028
    %v5949 = vunpack.c.h.b16 %v5028
    %v5950 = vunpack.c.l.b16 %v5029
    %v5951 = vunpack.c.h.b16 %v5029
    %v5952 = vunpack.c.l.b16 %v5030
    %v5953 = vunpack.c.h.b16 %v5030
    %v5954 = vunpack.c.l.b16 %v5031
    %v5955 = vunpack.c.h.b16 %v5031
    %v5956 = vunpack.c.l.b16 %v5032
    %v5957 = vunpack.c.h.b16 %v5032
    %v5958 = vunpack.c.l.b16 %v5033
    %v5959 = vunpack.c.h.b16 %v5033
    %v5960 = vunpack.c.l.b16 %v5034
    %v5961 = vunpack.c.h.b16 %v5034
    %v5962 = vunpack.c.l.b16 %v5035
    %v5963 = vunpack.c.h.b16 %v5035
    %v5964 = vunpack.c.l.b16 %v5036
    %v5965 = vunpack.c.h.b16 %v5036
    %v5966 = vunpack.c.l.b16 %v5037
    %v5967 = vunpack.c.h.b16 %v5037
    %v5968 = vunpack.c.l.b16 %v5038
    %v5969 = vunpack.c.h.b16 %v5038
    %v5970 = vunpack.c.l.b16 %v5039
    %v5971 = vunpack.c.h.b16 %v5039
    %v5972 = vunpack.c.l.b16 %v5040
    %v5973 = vunpack.c.h.b16 %v5040
    %v5974 = vunpack.c.l.b16 %v5041
    %v5975 = vunpack.c.h.b16 %v5041
    %v5976 = vunpack.c.l.b16 %v5042
    %v5977 = vunpack.c.h.b16 %v5042
    %v5978 = vunpack.c.l.b16 %v5043
    %v5979 = vunpack.c.h.b16 %v5043
    %v5980 = vunpack.c.l.b16 %v5044
    %v5981 = vunpack.c.h.b16 %v5044
    %v5982 = vunpack.c.l.b16 %v5045
    %v5983 = vunpack.c.h.b16 %v5045
    %v5984 = vunpack.c.l.b16 %v5046
    %v5985 = vunpack.c.h.b16 %v5046
    %v5986 = vunpack.c.l.b16 %v5047
    %v5987 = vunpack.c.h.b16 %v5047
    %v5988 = vunpack.c.l.b16 %v5048
    %v5989 = vunpack.c.h.b16 %v5048
    %v5990 = vunpack.c.l.b16 %v5049
    %v5991 = vunpack.c.h.b16 %v5049
    %v5992 = vunpack.c.l.b16 %v5050
    %v5993 = vunpack.c.h.b16 %v5050
    %v5994 = vunpack.c.l.b16 %v5051
    %v5995 = vunpack.c.h.b16 %v5051
    %v5996 = vunpack.c.l.b16 %v5052
    %v5997 = vunpack.c.h.b16 %v5052
    %v5998 = vunpack.c.l.b16 %v5053
    %v5999 = vunpack.c.h.b16 %v5053
    %v6000 = vunpack.c.l.b16 %v5054
    %v6001 = vunpack.c.h.b16 %v5054
    %v6002 = vunpack.c.l.b16 %v5055
    %v6003 = vunpack.c.h.b16 %v5055
    %v6004 = vunpack.c.l.b16 %v5056
    %v6005 = vunpack.c.h.b16 %v5056
    %v6006 = vunpack.c.l.b16 %v5057
    %v6007 = vunpack.c.h.b16 %v5057
    %v6008 = vunpack.c.l.b16 %v5058
    %v6009 = vunpack.c.h.b16 %v5058
    %v6010 = vunpack.c.l.b16 %v5059
    %v6011 = vunpack.c.h.b16 %v5059
    %v6012 = vunpack.c.l.b16 %v5060
    %v6013 = vunpack.c.h.b16 %v5060
    %v6014 = vunpack.c.l.b16 %v5061
    %v6015 = vunpack.c.h.b16 %v5061
    %v6016 = vunpack.c.l.b16 %v5062
    %v6017 = vunpack.c.h.b16 %v5062
    %v6018 = vunpack.c.l.b16 %v5063
    %v6019 = vunpack.c.h.b16 %v5063
    %v6020 = vunpack.c.l.b16 %v5064
    %v6021 = vunpack.c.h.b16 %v5064
    %v6022 = vunpack.c.l.b16 %v5065
    %v6023 = vunpack.c.h.b16 %v5065
    %v6024 = vunpack.c.l.b16 %v5066
    %v6025 = vunpack.c.h.b16 %v5066
    %v6026 = vunpack.c.l.b16 %v5067
    %v6027 = vunpack.c.h.b16 %v5067
    %v6028 = vunpack.c.l.b16 %v5068
    %v6029 = vunpack.c.h.b16 %v5068
    %v6030 = vunpack.c.l.b16 %v5069
    %v6031 = vunpack.c.h.b16 %v5069
    %v6032 = vunpack.c.l.b16 %v5070
    %v6033 = vunpack.c.h.b16 %v5070
    %v6034 = vunpack.c.l.b16 %v5071
    %v6035 = vunpack.c.h.b16 %v5071
    %v6036 = vunpack.c.l.b16 %v5072
    %v6037 = vunpack.c.h.b16 %v5072
    %v6038 = vunpack.c.l.b16 %v5073
    %v6039 = vunpack.c.h.b16 %v5073
    %v6040 = vunpack.c.l.b16 %v5074
    %v6041 = vunpack.c.h.b16 %v5074
    %v6042 = vunpack.c.l.b16 %v5075
    %v6043 = vunpack.c.h.b16 %v5075
    %v6044 = vunpack.c.l.b16 %v5076
    %v6045 = vunpack.c.h.b16 %v5076
    %v6046 = vunpack.c.l.b16 %v5077
    %v6047 = vunpack.c.h.b16 %v5077
    %v6048 = vunpack.c.l.b16 %v5078
    %v6049 = vunpack.c.h.b16 %v5078
    %v6050 = vunpack.c.l.b16 %v5079
    %v6051 = vunpack.c.h.b16 %v5079
    %v6052 = vunpack.c.l.b16 %v5080
    %v6053 = vunpack.c.h.b16 %v5080
    %v6054 = vunpack.c.l.b16 %v5081
    %v6055 = vunpack.c.h.b16 %v5081
    %v6056 = vunpack.c.l.b16 %v5082
    %v6057 = vunpack.c.h.b16 %v5082
    %v6058 = vunpack.c.l.b16 %v5083
    %v6059 = vunpack.c.h.b16 %v5083
    %v6060 = vunpack.c.l.b16 %v5084
    %v6061 = vunpack.c.h.b16 %v5084
    %v6062 = vunpack.c.l.b16 %v5085
    %v6063 = vunpack.c.h.b16 %v5085
    %v6064 = vunpack.c.l.b16 %v5086
    %v6065 = vunpack.c.h.b16 %v5086
    %v6066 = vunpack.c.l.b16 %v5087
    %v6067 = vunpack.c.h.b16 %v5087
    %v6068 = vunpack.c.l.b16 %v5088
    %v6069 = vunpack.c.h.b16 %v5088
    %v6070 = vunpack.c.l.b16 %v5089
    %v6071 = vunpack.c.h.b16 %v5089
    %v6072 = vunpack.c.l.b16 %v5090
    %v6073 = vunpack.c.h.b16 %v5090
    %v6074 = vunpack.c.l.b16 %v5091
    %v6075 = vunpack.c.h.b16 %v5091
    %v6076 = vunpack.c.l.b16 %v5092
    %v6077 = vunpack.c.h.b16 %v5092
    %v6078 = vunpack.c.l.b16 %v5093
    %v6079 = vunpack.c.h.b16 %v5093
    %v6080 = vunpack.c.l.b16 %v5094
    %v6081 = vunpack.c.h.b16 %v5094
    %v6082 = vunpack.c.l.b16 %v5095
    %v6083 = vunpack.c.h.b16 %v5095
    %v6084 = vunpack.c.l.b16 %v5096
    %v6085 = vunpack.c.h.b16 %v5096
    %v6086 = vunpack.c.l.b16 %v5097
    %v6087 = vunpack.c.h.b16 %v5097
    %v6088 = vunpack.c.l.b16 %v5098
    %v6089 = vunpack.c.h.b16 %v5098
    %v6090 = vunpack.c.l.b16 %v5099
    %v6091 = vunpack.c.h.b16 %v5099
    %v6092 = vunpack.c.l.b16 %v5100
    %v6093 = vunpack.c.h.b16 %v5100
    %v6094 = vunpack.c.l.b16 %v5101
    %v6095 = vunpack.c.h.b16 %v5101
    %v6096 = vunpack.c.l.b16 %v5102
    %v6097 = vunpack.c.h.b16 %v5102
    %v6098 = vunpack.c.l.b16 %v5103
    %v6099 = vunpack.c.h.b16 %v5103
    %v6100 = vunpack.c.l.b16 %v5104
    %v6101 = vunpack.c.h.b16 %v5104
    %v6102 = vunpack.c.l.b16 %v5105
    %v6103 = vunpack.c.h.b16 %v5105
    %v6104 = vunpack.c.l.b16 %v5106
    %v6105 = vunpack.c.h.b16 %v5106
    %v6106 = vunpack.c.l.b16 %v5107
    %v6107 = vunpack.c.h.b16 %v5107
    %v6108 = vunpack.c.l.b16 %v5108
    %v6109 = vunpack.c.h.b16 %v5108
    %v6110 = vunpack.c.l.b16 %v5109
    %v6111 = vunpack.c.h.b16 %v5109
    %v6112 = vunpack.c.l.b16 %v5110
    %v6113 = vunpack.c.h.b16 %v5110
    %v6114 = vunpack.c.l.b16 %v5111
    %v6115 = vunpack.c.h.b16 %v5111
    %v6116 = vunpack.c.l.b16 %v5112
    %v6117 = vunpack.c.h.b16 %v5112
    %v6118 = vunpack.c.l.b16 %v5113
    %v6119 = vunpack.c.h.b16 %v5113
    %v6120 = vunpack.c.l.b16 %v5114
    %v6121 = vunpack.c.h.b16 %v5114
    %v6122 = vunpack.c.l.b16 %v5115
    %v6123 = vunpack.c.h.b16 %v5115
    %v6124 = vunpack.c.l.b16 %v5116
    %v6125 = vunpack.c.h.b16 %v5116
    %v6126 = vunpack.c.l.b16 %v5117
    %v6127 = vunpack.c.h.b16 %v5117
    %v6128 = vunpack.c.l.b16 %v5118
    %v6129 = vunpack.c.h.b16 %v5118
    %v6130 = vunpack.c.l.b16 %v5119
    %v6131 = vunpack.c.h.b16 %v5119
    %v6132 = vunpack.c.l.b16 %v5120
    %v6133 = vunpack.c.h.b16 %v5120
    %v6134 = vunpack.c.l.b16 %v5121
    %v6135 = vunpack.c.h.b16 %v5121
    %v6136 = vunpack.c.l.b16 %v5122
    %v6137 = vunpack.c.h.b16 %v5122
    %v6138 = vunpack.c.l.b16 %v5123
    %v6139 = vunpack.c.h.b16 %v5123
    %v6140 = vunpack.c.l.b16 %v5124
    %v6141 = vunpack.c.h.b16 %v5124
    %v6142 = vunpack.c.l.b16 %v5125
    %v6143 = vunpack.c.h.b16 %v5125
    %v6144 = vunpack.c.l.b16 %v5126
    %v6145 = vunpack.c.h.b16 %v5126
    %v6146 = vunpack.c.l.b16 %v5127
    %v6147 = vunpack.c.h.b16 %v5127
    %v6148 = vunpack.c.l.b16 %v5128
    %v6149 = vunpack.c.h.b16 %v5128
    %v6150 = vunpack.c.l.b16 %v5129
    %v6151 = vunpack.c.h.b16 %v5129
    %v6152 = vunpack.c.l.b16 %v5130
    %v6153 = vunpack.c.h.b16 %v5130
    %v6154 = vunpack.c.l.b16 %v5131
    %v6155 = vunpack.c.h.b16 %v5131
    %v6156 = vunpack.c.l.b16 %v5132
    %v6157 = vunpack.c.h.b16 %v5132
    %v6158 = vunpack.c.l.b16 %v5133
    %v6159 = vunpack.c.h.b16 %v5133
    %v6160 = vunpack.c.l.b16 %v5134
    %v6161 = vunpack.c.h.b16 %v5134
    %v6162 = vunpack.c.l.b16 %v5135
    %v6163 = vunpack.c.h.b16 %v5135
    %v6164 = vunpack.c.l.b16 %v5136
    %v6165 = vunpack.c.h.b16 %v5136
    %v6166 = vunpack.c.l.b16 %v5137
    %v6167 = vunpack.c.h.b16 %v5137
    %v6168 = vunpack.c.l.b16 %v5138
    %v6169 = vunpack.c.h.b16 %v5138
    %v6170 = vunpack.c.l.b16 %v5139
    %v6171 = vunpack.c.h.b16 %v5139
    %v6172 = vunpack.c.l.b16 %v5140
    %v6173 = vunpack.c.h.b16 %v5140
    %v6174 = vunpack.c.l.b16 %v5141
    %v6175 = vunpack.c.h.b16 %v5141
    %v6176 = vunpack.c.l.b16 %v5142
    %v6177 = vunpack.c.h.b16 %v5142
    %v6178 = vunpack.c.l.b16 %v5143
    %v6179 = vunpack.c.h.b16 %v5143
    %v6180 = vunpack.c.l.b16 %v5144
    %v6181 = vunpack.c.h.b16 %v5144
    %v6182 = vunpack.c.l.b16 %v5145
    %v6183 = vunpack.c.h.b16 %v5145
    %v6184 = vunpack.c.l.b16 %v5146
    %v6185 = vunpack.c.h.b16 %v5146
    %v6186 = vunpack.c.l.b16 %v5147
    %v6187 = vunpack.c.h.b16 %v5147
    %v6188 = vunpack.c.l.b16 %v5148
    %v6189 = vunpack.c.h.b16 %v5148
    %v6190 = vunpack.c.l.b16 %v5149
    %v6191 = vunpack.c.h.b16 %v5149
    %v6192 = vunpack.c.l.b16 %v5150
    %v6193 = vunpack.c.h.b16 %v5150
    %v6194 = vunpack.c.l.b16 %v5151
    %v6195 = vunpack.c.h.b16 %v5151
    %v6196 = vunpack.c.l.b16 %v5152
    %v6197 = vunpack.c.h.b16 %v5152
    %v6198 = vunpack.c.l.b16 %v5153
    %v6199 = vunpack.c.h.b16 %v5153
    %v6200 = vunpack.c.l.b16 %v5154
    %v6201 = vunpack.c.h.b16 %v5154
    %v6202 = vunpack.c.l.b16 %v5155
    %v6203 = vunpack.c.h.b16 %v5155
    %v6204 = vunpack.c.l.b16 %v5156
    %v6205 = vunpack.c.h.b16 %v5156
    %v6206 = vunpack.c.l.b16 %v5157
    %v6207 = vunpack.c.h.b16 %v5157
    %v6208 = vunpack.c.l.b16 %v5158
    %v6209 = vunpack.c.h.b16 %v5158
    %v6210 = vunpack.c.l.b16 %v5159
    %v6211 = vunpack.c.h.b16 %v5159
    %v6212 = vunpack.c.l.b16 %v5160
    %v6213 = vunpack.c.h.b16 %v5160
    %v6214 = vunpack.c.l.b16 %v5161
    %v6215 = vunpack.c.h.b16 %v5161
    %v6216 = vunpack.c.l.b16 %v5162
    %v6217 = vunpack.c.h.b16 %v5162
    %v6218 = vunpack.c.l.b16 %v5163
    %v6219 = vunpack.c.h.b16 %v5163
    %v6220 = vunpack.c.l.b16 %v5164
    %v6221 = vunpack.c.h.b16 %v5164
    %v6222 = vunpack.c.l.b16 %v5165
    %v6223 = vunpack.c.h.b16 %v5165
    %v6224 = vunpack.c.l.b16 %v5166
    %v6225 = vunpack.c.h.b16 %v5166
    %v6226 = vunpack.c.l.b16 %v5167
    %v6227 = vunpack.c.h.b16 %v5167
    %v6228 = vunpack.c.l.b16 %v5168
    %v6229 = vunpack.c.h.b16 %v5168
    %v6230 = vunpack.c.l.b16 %v5169
    %v6231 = vunpack.c.h.b16 %v5169
    %v6232 = vunpack.c.l.b16 %v5170
    %v6233 = vunpack.c.h.b16 %v5170
    %v6234 = vunpack.c.l.b16 %v5171
    %v6235 = vunpack.c.h.b16 %v5171
    %v6236 = vunpack.c.l.b16 %v5172
    %v6237 = vunpack.c.h.b16 %v5172
    %v6238 = vunpack.c.l.b16 %v5173
    %v6239 = vunpack.c.h.b16 %v5173
    %v6240 = vunpack.c.l.b16 %v5174
    %v6241 = vunpack.c.h.b16 %v5174
    %v6242 = vunpack.c.l.b16 %v5175
    %v6243 = vunpack.c.h.b16 %v5175
    %v6244 = vunpack.c.l.b16 %v5176
    %v6245 = vunpack.c.h.b16 %v5176
    %v6246 = vunpack.c.l.b16 %v5177
    %v6247 = vunpack.c.h.b16 %v5177
    %v6248 = vunpack.c.l.b16 %v5178
    %v6249 = vunpack.c.h.b16 %v5178
    %v6250 = vunpack.c.l.b16 %v5179
    %v6251 = vunpack.c.h.b16 %v5179
    %v6252 = vunpack.c.l.b16 %v5180
    %v6253 = vunpack.c.h.b16 %v5180
    %v6254 = vunpack.c.l.b16 %v5181
    %v6255 = vunpack.c.h.b16 %v5181
    %v6256 = vunpack.c.l.b16 %v5182
    %v6257 = vunpack.c.h.b16 %v5182
    %v6258 = vunpack.c.l.b16 %v5183
    %v6259 = vunpack.c.h.b16 %v5183
    %v6260 = vunpack.c.l.b16 %v5184
    %v6261 = vunpack.c.h.b16 %v5184
    %v6262 = vunpack.c.l.b16 %v5185
    %v6263 = vunpack.c.h.b16 %v5185
    %v6264 = vunpack.c.l.b16 %v5186
    %v6265 = vunpack.c.h.b16 %v5186
    %v6266 = vunpack.c.l.b16 %v5187
    %v6267 = vunpack.c.h.b16 %v5187
    %v6268 = vunpack.c.l.b16 %v5188
    %v6269 = vunpack.c.h.b16 %v5188
    %v6270 = vunpack.c.l.b16 %v5189
    %v6271 = vunpack.c.h.b16 %v5189
    %v6272 = vunpack.c.l.b16 %v5190
    %v6273 = vunpack.c.h.b16 %v5190
    %v6274 = vunpack.c.l.b16 %v5191
    %v6275 = vunpack.c.h.b16 %v5191
    %v6276 = vunpack.c.l.b16 %v5192
    %v6277 = vunpack.c.h.b16 %v5192
    %v6278 = vunpack.c.l.b16 %v5193
    %v6279 = vunpack.c.h.b16 %v5193
    %v6280 = vunpack.c.l.b16 %v5194
    %v6281 = vunpack.c.h.b16 %v5194
    %v6282 = vunpack.c.l.b16 %v5195
    %v6283 = vunpack.c.h.b16 %v5195
    %v6284 = vunpack.c.l.b16 %v5196
    %v6285 = vunpack.c.h.b16 %v5196
    %v6286 = vunpack.c.l.b16 %v5197
    %v6287 = vunpack.c.h.b16 %v5197
    %v6288 = vunpack.c.l.b16 %v5198
    %v6289 = vunpack.c.h.b16 %v5198
    %v6290 = vunpack.c.l.b16 %v5199
    %v6291 = vunpack.c.h.b16 %v5199
    %v6292 = vunpack.c.l.b16 %v5200
    %v6293 = vunpack.c.h.b16 %v5200
    %v6294 = vunpack.c.l.b16 %v5201
    %v6295 = vunpack.c.h.b16 %v5201
    %v6296 = vunpack.c.l.b16 %v5202
    %v6297 = vunpack.c.h.b16 %v5202
    %v6298 = vunpack.c.l.b16 %v5203
    %v6299 = vunpack.c.h.b16 %v5203
    %v6300 = vunpack.c.l.b16 %v5204
    %v6301 = vunpack.c.h.b16 %v5204
    %v6302 = vunpack.c.l.b16 %v5205
    %v6303 = vunpack.c.h.b16 %v5205
    %v6304 = vunpack.c.l.b16 %v5206
    %v6305 = vunpack.c.h.b16 %v5206
    %v6306 = vunpack.c.l.b16 %v5207
    %v6307 = vunpack.c.h.b16 %v5207
    %v6308 = vunpack.c.l.b16 %v5208
    %v6309 = vunpack.c.h.b16 %v5208
    %v6310 = vunpack.c.l.b16 %v5209
    %v6311 = vunpack.c.h.b16 %v5209
    %v6312 = vunpack.c.l.b16 %v5210
    %v6313 = vunpack.c.h.b16 %v5210
    %v6314 = vunpack.c.l.b16 %v5211
    %v6315 = vunpack.c.h.b16 %v5211
    %v6316 = vunpack.c.l.b16 %v5212
    %v6317 = vunpack.c.h.b16 %v5212
    %v6318 = vunpack.c.l.b16 %v5213
    %v6319 = vunpack.c.h.b16 %v5213
    %v6320 = vunpack.c.l.b16 %v5214
    %v6321 = vunpack.c.h.b16 %v5214
    %v6322 = vunpack.c.l.b16 %v5215
    %v6323 = vunpack.c.h.b16 %v5215
    %v6324 = vunpack.c.l.b16 %v5216
    %v6325 = vunpack.c.h.b16 %v5216
    %v6326 = vunpack.c.l.b16 %v5217
    %v6327 = vunpack.c.h.b16 %v5217
    %v6328 = vunpack.c.l.b16 %v5218
    %v6329 = vunpack.c.h.b16 %v5218
    %v6330 = vunpack.c.l.b16 %v5219
    %v6331 = vunpack.c.h.b16 %v5219
    %v6332 = vunpack.c.l.b16 %v5220
    %v6333 = vunpack.c.h.b16 %v5220
    %v6334 = vunpack.c.l.b16 %v5221
    %v6335 = vunpack.c.h.b16 %v5221
    %v6336 = vunpack.c.l.b16 %v5222
    %v6337 = vunpack.c.h.b16 %v5222
    %v6338 = vunpack.c.l.b16 %v5223
    %v6339 = vunpack.c.h.b16 %v5223
    %v6340 = vunpack.c.l.b16 %v5224
    %v6341 = vunpack.c.h.b16 %v5224
    %v6342 = vunpack.c.l.b16 %v5225
    %v6343 = vunpack.c.h.b16 %v5225
    %v6344 = vunpack.c.l.b16 %v5226
    %v6345 = vunpack.c.h.b16 %v5226
    %v6346 = vunpack.c.l.b16 %v5227
    %v6347 = vunpack.c.h.b16 %v5227
    %v6348 = vunpack.c.l.b16 %v5228
    %v6349 = vunpack.c.h.b16 %v5228
    %v6350 = vunpack.c.l.b16 %v5229
    %v6351 = vunpack.c.h.b16 %v5229
    %v6352 = vunpack.c.l.b16 %v5230
    %v6353 = vunpack.c.h.b16 %v5230
    %v6354 = vunpack.c.l.b16 %v5231
    %v6355 = vunpack.c.h.b16 %v5231
    %v6356 = vunpack.c.l.b16 %v5232
    %v6357 = vunpack.c.h.b16 %v5232
    %v6358 = vunpack.c.l.b16 %v5233
    %v6359 = vunpack.c.h.b16 %v5233
    %v6360 = vunpack.c.l.b16 %v5234
    %v6361 = vunpack.c.h.b16 %v5234
    %v6362 = vunpack.c.l.b16 %v5235
    %v6363 = vunpack.c.h.b16 %v5235
    %v6364 = vunpack.c.l.b16 %v5236
    %v6365 = vunpack.c.h.b16 %v5236
    %v6366 = vunpack.c.l.b16 %v5237
    %v6367 = vunpack.c.h.b16 %v5237
    %v6368 = vunpack.c.l.b16 %v5238
    %v6369 = vunpack.c.h.b16 %v5238
    %v6370 = vunpack.c.l.b16 %v5239
    %v6371 = vunpack.c.h.b16 %v5239
    %v6372 = vunpack.c.l.b16 %v5240
    %v6373 = vunpack.c.h.b16 %v5240
    %v6374 = vunpack.c.l.b16 %v5241
    %v6375 = vunpack.c.h.b16 %v5241
    %v6376 = vunpack.c.l.b16 %v5242
    %v6377 = vunpack.c.h.b16 %v5242
    %v6378 = vunpack.c.l.b16 %v5243
    %v6379 = vunpack.c.h.b16 %v5243
    %v6380 = vunpack.c.l.b16 %v5244
    %v6381 = vunpack.c.h.b16 %v5244
    %v6382 = vunpack.c.l.b16 %v5245
    %v6383 = vunpack.c.h.b16 %v5245
    %v6384 = vunpack.c.l.b16 %v5246
    %v6385 = vunpack.c.h.b16 %v5246
    %v6386 = vunpack.c.l.b16 %v5247
    %v6387 = vunpack.c.h.b16 %v5247
    %v6388 = vunpack.c.l.b16 %v5248
    %v6389 = vunpack.c.h.b16 %v5248
    %v6390 = vunpack.c.l.b16 %v5249
    %v6391 = vunpack.c.h.b16 %v5249
    %v6392 = vunpack.c.l.b16 %v5250
    %v6393 = vunpack.c.h.b16 %v5250
    %v6394 = vunpack.c.l.b16 %v5251
    %v6395 = vunpack.c.h.b16 %v5251
    %v6396 = vunpack.c.l.b16 %v5252
    %v6397 = vunpack.c.h.b16 %v5252
    %v6398 = vunpack.c.l.b16 %v5253
    %v6399 = vunpack.c.h.b16 %v5253
    %v6400 = vunpack.c.l.b16 %v5254
    %v6401 = vunpack.c.h.b16 %v5254
    %v6402 = vunpack.c.l.b16 %v5255
    %v6403 = vunpack.c.h.b16 %v5255
    %v6404 = vunpack.c.l.b16 %v5256
    %v6405 = vunpack.c.h.b16 %v5256
    %v6406 = vunpack.c.l.b16 %v5257
    %v6407 = vunpack.c.h.b16 %v5257
    %v6408 = vunpack.c.l.b16 %v5258
    %v6409 = vunpack.c.h.b16 %v5258
    %v6410 = vunpack.c.l.b16 %v5259
    %v6411 = vunpack.c.h.b16 %v5259
    %v6412 = vunpack.c.l.b16 %v5260
    %v6413 = vunpack.c.h.b16 %v5260
    %v6414 = vunpack.c.l.b16 %v5261
    %v6415 = vunpack.c.h.b16 %v5261
    %v6416 = vunpack.c.l.b16 %v5262
    %v6417 = vunpack.c.h.b16 %v5262
    %v6418 = vunpack.c.l.b16 %v5263
    %v6419 = vunpack.c.h.b16 %v5263
    %v6420 = vunpack.c.l.b16 %v5264
    %v6421 = vunpack.c.h.b16 %v5264
    %v6422 = vunpack.c.l.b16 %v5265
    %v6423 = vunpack.c.h.b16 %v5265
    %v6424 = vunpack.c.l.b16 %v5266
    %v6425 = vunpack.c.h.b16 %v5266
    %v6426 = vunpack.c.l.b16 %v5267
    %v6427 = vunpack.c.h.b16 %v5267
    %v6428 = vunpack.c.l.b16 %v5268
    %v6429 = vunpack.c.h.b16 %v5268
    %v6430 = vunpack.c.l.b16 %v5269
    %v6431 = vunpack.c.h.b16 %v5269
    %v6432 = vunpack.c.l.b16 %v5270
    %v6433 = vunpack.c.h.b16 %v5270
    %v6434 = vunpack.c.l.b16 %v5271
    %v6435 = vunpack.c.h.b16 %v5271
    %v6436 = vunpack.c.l.b16 %v5272
    %v6437 = vunpack.c.h.b16 %v5272
    %v6438 = vunpack.c.l.b16 %v5273
    %v6439 = vunpack.c.h.b16 %v5273
    %v6440 = vunpack.c.l.b16 %v5274
    %v6441 = vunpack.c.h.b16 %v5274
    %v6442 = vunpack.c.l.b16 %v5275
    %v6443 = vunpack.c.h.b16 %v5275
    %v6444 = vunpack.c.l.b16 %v5276
    %v6445 = vunpack.c.h.b16 %v5276
    %v6446 = vunpack.c.l.b16 %v5277
    %v6447 = vunpack.c.h.b16 %v5277
    %v6448 = vunpack.c.l.b16 %v5278
    %v6449 = vunpack.c.h.b16 %v5278
    %v6450 = vunpack.c.l.b16 %v5279
    %v6451 = vunpack.c.h.b16 %v5279
    %v6452 = vunpack.c.l.b16 %v5280
    %v6453 = vunpack.c.h.b16 %v5280
    %v6454 = vunpack.c.l.b16 %v5281
    %v6455 = vunpack.c.h.b16 %v5281
    %v6456 = vunpack.c.l.b16 %v5282
    %v6457 = vunpack.c.h.b16 %v5282
    %v6458 = vunpack.c.l.b16 %v5283
    %v6459 = vunpack.c.h.b16 %v5283
    %v6460 = vunpack.c.l.b16 %v5284
    %v6461 = vunpack.c.h.b16 %v5284
    %v6462 = vunpack.c.l.b16 %v5285
    %v6463 = vunpack.c.h.b16 %v5285
    %v6464 = vunpack.c.l.b16 %v5286
    %v6465 = vunpack.c.h.b16 %v5286
    %v6466 = vunpack.c.l.b16 %v5287
    %v6467 = vunpack.c.h.b16 %v5287
    %v6468 = vunpack.c.l.b16 %v5288
    %v6469 = vunpack.c.h.b16 %v5288
    %v6470 = vunpack.c.l.b16 %v5289
    %v6471 = vunpack.c.h.b16 %v5289
    %v6472 = vunpack.c.l.b16 %v5290
    %v6473 = vunpack.c.h.b16 %v5290
    %v6474 = vunpack.c.l.b16 %v5291
    %v6475 = vunpack.c.h.b16 %v5291
    %v6476 = vunpack.c.l.b16 %v5292
    %v6477 = vunpack.c.h.b16 %v5292
    %v6478 = vunpack.c.l.b16 %v5293
    %v6479 = vunpack.c.h.b16 %v5293
    %v6480 = vunpack.c.l.b16 %v5294
    %v6481 = vunpack.c.h.b16 %v5294
    %v6482 = vunpack.c.l.b16 %v5295
    %v6483 = vunpack.c.h.b16 %v5295
    %v6484 = vunpack.c.l.b16 %v5296
    %v6485 = vunpack.c.h.b16 %v5296
    %v6486 = vunpack.c.l.b16 %v5297
    %v6487 = vunpack.c.h.b16 %v5297
    %v6488 = vunpack.c.l.b16 %v5298
    %v6489 = vunpack.c.h.b16 %v5298
    %v6490 = vunpack.c.l.b16 %v5299
    %v6491 = vunpack.c.h.b16 %v5299
    %v6492 = vunpack.c.l.b16 %v5300
    %v6493 = vunpack.c.h.b16 %v5300
    %v6494 = vunpack.c.l.b16 %v5301
    %v6495 = vunpack.c.h.b16 %v5301
    %v6496 = vpack.c.b16 %v5736, %v5728
    %v6497 = vpack.c.b16 %v5737, %v5729
    %v6498 = vpack.c.b16 %v5738, %v5730
    %v6499 = vpack.c.b16 %v5739, %v5731
    %v6500 = vpack.c.b16 %v5740, %v5732
    %v6501 = vpack.c.b16 %v5741, %v5733
    %v6502 = vpack.c.b16 %v5742, %v5734
    %v6503 = vpack.c.b16 %v5743, %v5735
    %v6504 = vpack.c.b16 %v5752, %v5744
    %v6505 = vpack.c.b16 %v5753, %v5745
    %v6506 = vpack.c.b16 %v5754, %v5746
    %v6507 = vpack.c.b16 %v5755, %v5747
    %v6508 = vpack.c.b16 %v5756, %v5748
    %v6509 = vpack.c.b16 %v5757, %v5749
    %v6510 = vpack.c.b16 %v5758, %v5750
    %v6511 = vpack.c.b16 %v5759, %v5751
    %v6512 = vpack.c.b16 %v5768, %v5760
    %v6513 = vpack.c.b16 %v5769, %v5761
    %v6514 = vpack.c.b16 %v5770, %v5762
    %v6515 = vpack.c.b16 %v5771, %v5763
    %v6516 = vpack.c.b16 %v5772, %v5764
    %v6517 = vpack.c.b16 %v5773, %v5765
    %v6518 = vpack.c.b16 %v5774, %v5766
    %v6519 = vpack.c.b16 %v5775, %v5767
    %v6520 = vpack.c.b16 %v5784, %v5776
    %v6521 = vpack.c.b16 %v5785, %v5777
    %v6522 = vpack.c.b16 %v5786, %v5778
    %v6523 = vpack.c.b16 %v5787, %v5779
    %v6524 = vpack.c.b16 %v5788, %v5780
    %v6525 = vpack.c.b16 %v5789, %v5781
    %v6526 = vpack.c.b16 %v5790, %v5782
    %v6527 = vpack.c.b16 %v5791, %v5783
    %v6528 = vpack.c.b16 %v5800, %v5792
    %v6529 = vpack.c.b16 %v5801, %v5793
    %v6530 = vpack.c.b16 %v5802, %v5794
    %v6531 = vpack.c.b16 %v5803, %v5795
    %v6532 = vpack.c.b16 %v5804, %v5796
    %v6533 = vpack.c.b16 %v5805, %v5797
    %v6534 = vpack.c.b16 %v5806, %v5798
    %v6535 = vpack.c.b16 %v5807, %v5799
    %v6536 = vpack.c.b16 %v5816, %v5808
    %v6537 = vpack.c.b16 %v5817, %v5809
    %v6538 = vpack.c.b16 %v5818, %v5810
    %v6539 = vpack.c.b16 %v5819, %v5811
    %v6540 = vpack.c.b16 %v5820, %v5812
    %v6541 = vpack.c.b16 %v5821, %v5813
    %v6542 = vpack.c.b16 %v5822, %v5814
    %v6543 = vpack.c.b16 %v5823, %v5815
    %v6544 = vpack.c.b16 %v5832, %v5824
    %v6545 = vpack.c.b16 %v5833, %v5825
    %v6546 = vpack.c.b16 %v5834, %v5826
    %v6547 = vpack.c.b16 %v5835, %v5827
    %v6548 = vpack.c.b16 %v5836, %v5828
    %v6549 = vpack.c.b16 %v5837, %v5829
    %v6550 = vpack.c.b16 %v5838, %v5830
    %v6551 = vpack.c.b16 %v5839, %v5831
    %v6552 = vpack.c.b16 %v5848, %v5840
    %v6553 = vpack.c.b16 %v5849, %v5841
    %v6554 = vpack.c.b16 %v5850, %v5842
    %v6555 = vpack.c.b16 %v5851, %v5843
    %v6556 = vpack.c.b16 %v5852, %v5844
    %v6557 = vpack.c.b16 %v5853, %v5845
    %v6558 = vpack.c.b16 %v5854, %v5846
    %v6559 = vpack.c.b16 %v5855, %v5847
    %v6560 = vpack.c.b16 %v5864, %v5856
    %v6561 = vpack.c.b16 %v5865, %v5857
    %v6562 = vpack.c.b16 %v5866, %v5858
    %v6563 = vpack.c.b16 %v5867, %v5859
    %v6564 = vpack.c.b16 %v5868, %v5860
    %v6565 = vpack.c.b16 %v5869, %v5861
    %v6566 = vpack.c.b16 %v5870, %v5862
    %v6567 = vpack.c.b16 %v5871, %v5863
    %v6568 = vpack.c.b16 %v5880, %v5872
    %v6569 = vpack.c.b16 %v5881, %v5873
    %v6570 = vpack.c.b16 %v5882, %v5874
    %v6571 = vpack.c.b16 %v5883, %v5875
    %v6572 = vpack.c.b16 %v5884, %v5876
    %v6573 = vpack.c.b16 %v5885, %v5877
    %v6574 = vpack.c.b16 %v5886, %v5878
    %v6575 = vpack.c.b16 %v5887, %v5879
    %v6576 = vpack.c.b16 %v5896, %v5888
    %v6577 = vpack.c.b16 %v5897, %v5889
    %v6578 = vpack.c.b16 %v5898, %v5890
    %v6579 = vpack.c.b16 %v5899, %v5891
    %v6580 = vpack.c.b16 %v5900, %v5892
    %v6581 = vpack.c.b16 %v5901, %v5893
    %v6582 = vpack.c.b16 %v5902, %v5894
    %v6583 = vpack.c.b16 %v5903, %v5895
    %v6584 = vpack.c.b16 %v5912, %v5904
    %v6585 = vpack.c.b16 %v5913, %v5905
    %v6586 = vpack.c.b16 %v5914, %v5906
    %v6587 = vpack.c.b16 %v5915, %v5907
    %v6588 = vpack.c.b16 %v5916, %v5908
    %v6589 = vpack.c.b16 %v5917, %v5909
    %v6590 = vpack.c.b16 %v5918, %v5910
    %v6591 = vpack.c.b16 %v5919, %v5911
    %v6592 = vpack.c.b16 %v5928, %v5920
    %v6593 = vpack.c.b16 %v5929, %v5921
    %v6594 = vpack.c.b16 %v5930, %v5922
    %v6595 = vpack.c.b16 %v5931, %v5923
    %v6596 = vpack.c.b16 %v5932, %v5924
    %v6597 = vpack.c.b16 %v5933, %v5925
    %v6598 = vpack.c.b16 %v5934, %v5926
    %v6599 = vpack.c.b16 %v5935, %v5927
    %v6600 = vpack.c.b16 %v5944, %v5936
    %v6601 = vpack.c.b16 %v5945, %v5937
    %v6602 = vpack.c.b16 %v5946, %v5938
    %v6603 = vpack.c.b16 %v5947, %v5939
    %v6604 = vpack.c.b16 %v5948, %v5940
    %v6605 = vpack.c.b16 %v5949, %v5941
    %v6606 = vpack.c.b16 %v5950, %v5942
    %v6607 = vpack.c.b16 %v5951, %v5943
    %v6608 = vpack.c.b16 %v5960, %v5952
    %v6609 = vpack.c.b16 %v5961, %v5953
    %v6610 = vpack.c.b16 %v5962, %v5954
    %v6611 = vpack.c.b16 %v5963, %v5955
    %v6612 = vpack.c.b16 %v5964, %v5956
    %v6613 = vpack.c.b16 %v5965, %v5957
    %v6614 = vpack.c.b16 %v5966, %v5958
    %v6615 = vpack.c.b16 %v5967, %v5959
    %v6616 = vpack.c.b16 %v5976, %v5968
    %v6617 = vpack.c.b16 %v5977, %v5969
    %v6618 = vpack.c.b16 %v5978, %v5970
    %v6619 = vpack.c.b16 %v5979, %v5971
    %v6620 = vpack.c.b16 %v5980, %v5972
    %v6621 = vpack.c.b16 %v5981, %v5973
    %v6622 = vpack.c.b16 %v5982, %v5974
    %v6623 = vpack.c.b16 %v5983, %v5975
    %v6624 = vpack.c.b16 %v5992, %v5984
    %v6625 = vpack.c.b16 %v5993, %v5985
    %v6626 = vpack.c.b16 %v5994, %v5986
    %v6627 = vpack.c.b16 %v5995, %v5987
    %v6628 = vpack.c.b16 %v5996, %v5988
    %v6629 = vpack.c.b16 %v5997, %v5989
    %v6630 = vpack.c.b16 %v5998, %v5990
    %v6631 = vpack.c.b16 %v5999, %v5991
    %v6632 = vpack.c.b16 %v6008, %v6000
    %v6633 = vpack.c.b16 %v6009, %v6001
    %v6634 = vpack.c.b16 %v6010, %v6002
    %v6635 = vpack.c.b16 %v6011, %v6003
    %v6636 = vpack.c.b16 %v6012, %v6004
    %v6637 = vpack.c.b16 %v6013, %v6005
    %v6638 = vpack.c.b16 %v6014, %v6006
    %v6639 = vpack.c.b16 %v6015, %v6007
    %v6640 = vpack.c.b16 %v6024, %v6016
    %v6641 = vpack.c.b16 %v6025, %v6017
    %v6642 = vpack.c.b16 %v6026, %v6018
    %v6643 = vpack.c.b16 %v6027, %v6019
    %v6644 = vpack.c.b16 %v6028, %v6020
    %v6645 = vpack.c.b16 %v6029, %v6021
    %v6646 = vpack.c.b16 %v6030, %v6022
    %v6647 = vpack.c.b16 %v6031, %v6023
    %v6648 = vpack.c.b16 %v6040, %v6032
    %v6649 = vpack.c.b16 %v6041, %v6033
    %v6650 = vpack.c.b16 %v6042, %v6034
    %v6651 = vpack.c.b16 %v6043, %v6035
    %v6652 = vpack.c.b16 %v6044, %v6036
    %v6653 = vpack.c.b16 %v6045, %v6037
    %v6654 = vpack.c.b16 %v6046, %v6038
    %v6655 = vpack.c.b16 %v6047, %v6039
    %v6656 = vpack.c.b16 %v6056, %v6048
    %v6657 = vpack.c.b16 %v6057, %v6049
    %v6658 = vpack.c.b16 %v6058, %v6050
    %v6659 = vpack.c.b16 %v6059, %v6051
    %v6660 = vpack.c.b16 %v6060, %v6052
    %v6661 = vpack.c.b16 %v6061, %v6053
    %v6662 = vpack.c.b16 %v6062, %v6054
    %v6663 = vpack.c.b16 %v6063, %v6055
    %v6664 = vpack.c.b16 %v6072, %v6064
    %v6665 = vpack.c.b16 %v6073, %v6065
    %v6666 = vpack.c.b16 %v6074, %v6066
    %v6667 = vpack.c.b16 %v6075, %v6067
    %v6668 = vpack.c.b16 %v6076, %v6068
    %v6669 = vpack.c.b16 %v6077, %v6069
    %v6670 = vpack.c.b16 %v6078, %v6070
    %v6671 = vpack.c.b16 %v6079, %v6071
    %v6672 = vpack.c.b16 %v6088, %v6080
    %v6673 = vpack.c.b16 %v6089, %v6081
    %v6674 = vpack.c.b16 %v6090, %v6082
    %v6675 = vpack.c.b16 %v6091, %v6083
    %v6676 = vpack.c.b16 %v6092, %v6084
    %v6677 = vpack.c.b16 %v6093, %v6085
    %v6678 = vpack.c.b16 %v6094, %v6086
    %v6679 = vpack.c.b16 %v6095, %v6087
    %v6680 = vpack.c.b16 %v6104, %v6096
    %v6681 = vpack.c.b16 %v6105, %v6097
    %v6682 = vpack.c.b16 %v6106, %v6098
    %v6683 = vpack.c.b16 %v6107, %v6099
    %v6684 = vpack.c.b16 %v6108, %v6100
    %v6685 = vpack.c.b16 %v6109, %v6101
    %v6686 = vpack.c.b16 %v6110, %v6102
    %v6687 = vpack.c.b16 %v6111, %v6103
    %v6688 = vpack.c.b16 %v6120, %v6112
    %v6689 = vpack.c.b16 %v6121, %v6113
    %v6690 = vpack.c.b16 %v6122, %v6114
    %v6691 = vpack.c.b16 %v6123, %v6115
    %v6692 = vpack.c.b16 %v6124, %v6116
    %v6693 = vpack.c.b16 %v6125, %v6117
    %v6694 = vpack.c.b16 %v6126, %v6118
    %v6695 = vpack.c.b16 %v6127, %v6119
    %v6696 = vpack.c.b16 %v6136, %v6128
    %v6697 = vpack.c.b16 %v6137, %v6129
    %v6698 = vpack.c.b16 %v6138, %v6130
    %v6699 = vpack.c.b16 %v6139, %v6131
    %v6700 = vpack.c.b16 %v6140, %v6132
    %v6701 = vpack.c.b16 %v6141, %v6133
    %v6702 = vpack.c.b16 %v6142, %v6134
    %v6703 = vpack.c.b16 %v6143, %v6135
    %v6704 = vpack.c.b16 %v6152, %v6144
    %v6705 = vpack.c.b16 %v6153, %v6145
    %v6706 = vpack.c.b16 %v6154, %v6146
    %v6707 = vpack.c.b16 %v6155, %v6147
    %v6708 = vpack.c.b16 %v6156, %v6148
    %v6709 = vpack.c.b16 %v6157, %v6149
    %v6710 = vpack.c.b16 %v6158, %v6150
    %v6711 = vpack.c.b16 %v6159, %v6151
    %v6712 = vpack.c.b16 %v6168, %v6160
    %v6713 = vpack.c.b16 %v6169, %v6161
    %v6714 = vpack.c.b16 %v6170, %v6162
    %v6715 = vpack.c.b16 %v6171, %v6163
    %v6716 = vpack.c.b16 %v6172, %v6164
    %v6717 = vpack.c.b16 %v6173, %v6165
    %v6718 = vpack.c.b16 %v6174, %v6166
    %v6719 = vpack.c.b16 %v6175, %v6167
    %v6720 = vpack.c.b16 %v6184, %v6176
    %v6721 = vpack.c.b16 %v6185, %v6177
    %v6722 = vpack.c.b16 %v6186, %v6178
    %v6723 = vpack.c.b16 %v6187, %v6179
    %v6724 = vpack.c.b16 %v6188, %v6180
    %v6725 = vpack.c.b16 %v6189, %v6181
    %v6726 = vpack.c.b16 %v6190, %v6182
    %v6727 = vpack.c.b16 %v6191, %v6183
    %v6728 = vpack.c.b16 %v6200, %v6192
    %v6729 = vpack.c.b16 %v6201, %v6193
    %v6730 = vpack.c.b16 %v6202, %v6194
    %v6731 = vpack.c.b16 %v6203, %v6195
    %v6732 = vpack.c.b16 %v6204, %v6196
    %v6733 = vpack.c.b16 %v6205, %v6197
    %v6734 = vpack.c.b16 %v6206, %v6198
    %v6735 = vpack.c.b16 %v6207, %v6199
    %v6736 = vpack.c.b16 %v6216, %v6208
    %v6737 = vpack.c.b16 %v6217, %v6209
    %v6738 = vpack.c.b16 %v6218, %v6210
    %v6739 = vpack.c.b16 %v6219, %v6211
    %v6740 = vpack.c.b16 %v6220, %v6212
    %v6741 = vpack.c.b16 %v6221, %v6213
    %v6742 = vpack.c.b16 %v6222, %v6214
    %v6743 = vpack.c.b16 %v6223, %v6215
    %v6744 = vpack.c.b16 %v6232, %v6224
    %v6745 = vpack.c.b16 %v6233, %v6225
    %v6746 = vpack.c.b16 %v6234, %v6226
    %v6747 = vpack.c.b16 %v6235, %v6227
    %v6748 = vpack.c.b16 %v6236, %v6228
    %v6749 = vpack.c.b16 %v6237, %v6229
    %v6750 = vpack.c.b16 %v6238, %v6230
    %v6751 = vpack.c.b16 %v6239, %v6231
    %v6752 = vpack.c.b16 %v6248, %v6240
    %v6753 = vpack.c.b16 %v6249, %v6241
    %v6754 = vpack.c.b16 %v6250, %v6242
    %v6755 = vpack.c.b16 %v6251, %v6243
    %v6756 = vpack.c.b16 %v6252, %v6244
    %v6757 = vpack.c.b16 %v6253, %v6245
    %v6758 = vpack.c.b16 %v6254, %v6246
    %v6759 = vpack.c.b16 %v6255, %v6247
    %v6760 = vpack.c.b16 %v6264, %v6256
    %v6761 = vpack.c.b16 %v6265, %v6257
    %v6762 = vpack.c.b16 %v6266, %v6258
    %v6763 = vpack.c.b16 %v6267, %v6259
    %v6764 = vpack.c.b16 %v6268, %v6260
    %v6765 = vpack.c.b16 %v6269, %v6261
    %v6766 = vpack.c.b16 %v6270, %v6262
    %v6767 = vpack.c.b16 %v6271, %v6263
    %v6768 = vpack.c.b16 %v6280, %v6272
    %v6769 = vpack.c.b16 %v6281, %v6273
    %v6770 = vpack.c.b16 %v6282, %v6274
    %v6771 = vpack.c.b16 %v6283, %v6275
    %v6772 = vpack.c.b16 %v6284, %v6276
    %v6773 = vpack.c.b16 %v6285, %v6277
    %v6774 = vpack.c.b16 %v6286, %v6278
    %v6775 = vpack.c.b16 %v6287, %v6279
    %v6776 = vpack.c.b16 %v6296, %v6288
    %v6777 = vpack.c.b16 %v6297, %v6289
    %v6778 = vpack.c.b16 %v6298, %v6290
    %v6779 = vpack.c.b16 %v6299, %v6291
    %v6780 = vpack.c.b16 %v6300, %v6292
    %v6781 = vpack.c.b16 %v6301, %v6293
    %v6782 = vpack.c.b16 %v6302, %v6294
    %v6783 = vpack.c.b16 %v6303, %v6295
    %v6784 = vpack.c.b16 %v6312, %v6304
    %v6785 = vpack.c.b16 %v6313, %v6305
    %v6786 = vpack.c.b16 %v6314, %v6306
    %v6787 = vpack.c.b16 %v6315, %v6307
    %v6788 = vpack.c.b16 %v6316, %v6308
    %v6789 = vpack.c.b16 %v6317, %v6309
    %v6790 = vpack.c.b16 %v6318, %v6310
    %v6791 = vpack.c.b16 %v6319, %v6311
    %v6792 = vpack.c.b16 %v6328, %v6320
    %v6793 = vpack.c.b16 %v6329, %v6321
    %v6794 = vpack.c.b16 %v6330, %v6322
    %v6795 = vpack.c.b16 %v6331, %v6323
    %v6796 = vpack.c.b16 %v6332, %v6324
    %v6797 = vpack.c.b16 %v6333, %v6325
    %v6798 = vpack.c.b16 %v6334, %v6326
    %v6799 = vpack.c.b16 %v6335, %v6327
    %v6800 = vpack.c.b16 %v6344, %v6336
    %v6801 = vpack.c.b16 %v6345, %v6337
    %v6802 = vpack.c.b16 %v6346, %v6338
    %v6803 = vpack.c.b16 %v6347, %v6339
    %v6804 = vpack.c.b16 %v6348, %v6340
    %v6805 = vpack.c.b16 %v6349, %v6341
    %v6806 = vpack.c.b16 %v6350, %v6342
    %v6807 = vpack.c.b16 %v6351, %v6343
    %v6808 = vpack.c.b16 %v6360, %v6352
    %v6809 = vpack.c.b16 %v6361, %v6353
    %v6810 = vpack.c.b16 %v6362, %v6354
    %v6811 = vpack.c.b16 %v6363, %v6355
    %v6812 = vpack.c.b16 %v6364, %v6356
    %v6813 = vpack.c.b16 %v6365, %v6357
    %v6814 = vpack.c.b16 %v6366, %v6358
    %v6815 = vpack.c.b16 %v6367, %v6359
    %v6816 = vpack.c.b16 %v6376, %v6368
    %v6817 = vpack.c.b16 %v6377, %v6369
    %v6818 = vpack.c.b16 %v6378, %v6370
    %v6819 = vpack.c.b16 %v6379, %v6371
    %v6820 = vpack.c.b16 %v6380, %v6372
    %v6821 = vpack.c.b16 %v6381, %v6373
    %v6822 = vpack.c.b16 %v6382, %v6374
    %v6823 = vpack.c.b16 %v6383, %v6375
    %v6824 = vpack.c.b16 %v6392, %v6384
    %v6825 = vpack.c.b16 %v6393, %v6385
    %v6826 = vpack.c.b16 %v6394, %v6386
    %v6827 = vpack.c.b16 %v6395, %v6387
    %v6828 = vpack.c.b16 %v6396, %v6388
    %v6829 = vpack.c.b16 %v6397, %v6389
    %v6830 = vpack.c.b16 %v6398, %v6390
    %v6831 = vpack.c.b16 %v6399, %v6391
    %v6832 = vpack.c.b16 %v6408, %v6400
    %v6833 = vpack.c.b16 %v6409, %v6401
    %v6834 = vpack.c.b16 %v6410, %v6402
    %v6835 = vpack.c.b16 %v6411, %v6403
    %v6836 = vpack.c.b16 %v6412, %v6404
    %v6837 = vpack.c.b16 %v6413, %v6405
    %v6838 = vpack.c.b16 %v6414, %v6406
    %v6839 = vpack.c.b16 %v6415, %v6407
    %v6840 = vpack.c.b16 %v6424, %v6416
    %v6841 = vpack.c.b16 %v6425, %v6417
    %v6842 = vpack.c.b16 %v6426, %v6418
    %v6843 = vpack.c.b16 %v6427, %v6419
    %v6844 = vpack.c.b16 %v6428, %v6420
    %v6845 = vpack.c.b16 %v6429, %v6421
    %v6846 = vpack.c.b16 %v6430, %v6422
    %v6847 = vpack.c.b16 %v6431, %v6423
    %v6848 = vpack.c.b16 %v6440, %v6432
    %v6849 = vpack.c.b16 %v6441, %v6433
    %v6850 = vpack.c.b16 %v6442, %v6434
    %v6851 = vpack.c.b16 %v6443, %v6435
    %v6852 = vpack.c.b16 %v6444, %v6436
    %v6853 = vpack.c.b16 %v6445, %v6437
    %v6854 = vpack.c.b16 %v6446, %v6438
    %v6855 = vpack.c.b16 %v6447, %v6439
    %v6856 = vpack.c.b16 %v6456, %v6448
    %v6857 = vpack.c.b16 %v6457, %v6449
    %v6858 = vpack.c.b16 %v6458, %v6450
    %v6859 = vpack.c.b16 %v6459, %v6451
    %v6860 = vpack.c.b16 %v6460, %v6452
    %v6861 = vpack.c.b16 %v6461, %v6453
    %v6862 = vpack.c.b16 %v6462, %v6454
    %v6863 = vpack.c.b16 %v6463, %v6455
    %v6864 = vpack.c.b16 %v6472, %v6464
    %v6865 = vpack.c.b16 %v6473, %v6465
    %v6866 = vpack.c.b16 %v6474, %v6466
    %v6867 = vpack.c.b16 %v6475, %v6467
    %v6868 = vpack.c.b16 %v6476, %v6468
    %v6869 = vpack.c.b16 %v6477, %v6469
    %v6870 = vpack.c.b16 %v6478, %v6470
    %v6871 = vpack.c.b16 %v6479, %v6471
    %v6872 = vpack.c.b16 %v6488, %v6480
    %v6873 = vpack.c.b16 %v6489, %v6481
    %v6874 = vpack.c.b16 %v6490, %v6482
    %v6875 = vpack.c.b16 %v6491, %v6483
    %v6876 = vpack.c.b16 %v6492, %v6484
    %v6877 = vpack.c.b16 %v6493, %v6485
    %v6878 = vpack.c.b16 %v6494, %v6486
    %v6879 = vpack.c.b16 %v6495, %v6487
    %7264 = vmatprep.subr.bf16.mxu0 %v6553
    %7265 = vmatpush1.bf16.msra.mxu0 %v6552
    %7266 = vmatprep.subr.bf16.mxu0 %v6545
    %7267 = vmatpush1.bf16.msra.mxu0 %v6544
    %7268 = vmatprep.subr.bf16.mxu0 %v6537
    %7269 = vmatpush1.bf16.msra.mxu0 %v6536
    %7270 = vmatprep.subr.bf16.mxu0 %v6529
    %7271 = vmatpush1.bf16.msra.mxu0 %v6528
    %7272 = vmatprep.subr.bf16.mxu0 %v6521
    %7273 = vmatpush1.bf16.msra.mxu0 %v6520
    %7274 = vmatprep.subr.bf16.mxu0 %v6513
    %7275 = vmatpush1.bf16.msra.mxu0 %v6512
    %7276 = vmatprep.subr.bf16.mxu0 %v6505
    %7277 = vmatpush1.bf16.msra.mxu0 %v6504
    %7278 = vmatprep.subr.bf16.mxu0 %v6497
    %7279 = vmatpush1.bf16.msra.mxu0 %v6496
    %7280 = vmatprep.subr.bf16.mxu0 %v6617
    %7281 = vmatpush2.bf16.msra.mxu0 %v6616
    %7282 = vmatprep.subr.bf16.mxu0 %v6609
    %7283 = vmatpush2.bf16.msra.mxu0 %v6608
    %7284 = vmatprep.subr.bf16.mxu0 %v6601
    %7285 = vmatpush2.bf16.msra.mxu0 %v6600
    %7286 = vmatprep.subr.bf16.mxu0 %v6593
    %7287 = vmatpush2.bf16.msra.mxu0 %v6592
    %7288 = vmatprep.subr.bf16.mxu0 %v6585
    %7289 = vmatpush2.bf16.msra.mxu0 %v6584
    %7290 = vmatprep.subr.bf16.mxu0 %v6577
    %7291 = vmatpush2.bf16.msra.mxu0 %v6576
    %7292 = vmatprep.subr.bf16.mxu0 %v6569
    %7293 = vmatpush2.bf16.msra.mxu0 %v6568
    %7294 = vmatprep.subr.bf16.mxu0 %v6561
    %7295 = vmatpush2.bf16.msra.mxu0 %v6560
    %7296 = vmatprep.mubr.bf16.mxu0 %v4913
    %7297 = vmatmul.mubr.bf16.gmra.mxu0 %v4912
    %v7298 = vpop.f32.mrf.mxu0
    %v7299 = vadd.f32 %v5307, %v7298
    %v7300 = vpop.f32.mrf.mxu0
    %v7301 = vadd.f32 %v5311, %v7300
    %v7302 = vpop.f32.mrf.mxu0
    %v7303 = vadd.f32 %v5307, %v7302
    %v7304 = vpop.f32.mrf.mxu0
    %v7305 = vadd.f32 %v5311, %v7304
    %7306 = vdwg.mxu0
    %7307 = vmatprep.subr.bf16.mxu0 %v6681
    %7308 = vmatpush1.bf16.msra.mxu0 %v6680
    %7309 = vmatprep.subr.bf16.mxu0 %v6673
    %7310 = vmatpush1.bf16.msra.mxu0 %v6672
    %7311 = vmatprep.subr.bf16.mxu0 %v6665
    %7312 = vmatpush1.bf16.msra.mxu0 %v6664
    %7313 = vmatprep.subr.bf16.mxu0 %v6657
    %7314 = vmatpush1.bf16.msra.mxu0 %v6656
    %7315 = vmatprep.subr.bf16.mxu0 %v6649
    %7316 = vmatpush1.bf16.msra.mxu0 %v6648
    %7317 = vmatprep.subr.bf16.mxu0 %v6641
    %7318 = vmatpush1.bf16.msra.mxu0 %v6640
    %7319 = vmatprep.subr.bf16.mxu0 %v6633
    %7320 = vmatpush1.bf16.msra.mxu0 %v6632
    %7321 = vmatprep.subr.bf16.mxu0 %v6625
    %7322 = vmatpush1.bf16.msra.mxu0 %v6624
    %7323 = vmatprep.subr.bf16.mxu0 %v6745
    %7324 = vmatpush2.bf16.msra.mxu0 %v6744
    %7325 = vmatprep.subr.bf16.mxu0 %v6737
    %7326 = vmatpush2.bf16.msra.mxu0 %v6736
    %7327 = vmatprep.subr.bf16.mxu0 %v6729
    %7328 = vmatpush2.bf16.msra.mxu0 %v6728
    %7329 = vmatprep.subr.bf16.mxu0 %v6721
    %7330 = vmatpush2.bf16.msra.mxu0 %v6720
    %7331 = vmatprep.subr.bf16.mxu0 %v6713
    %7332 = vmatpush2.bf16.msra.mxu0 %v6712
    %7333 = vmatprep.subr.bf16.mxu0 %v6705
    %7334 = vmatpush2.bf16.msra.mxu0 %v6704
    %7335 = vmatprep.subr.bf16.mxu0 %v6697
    %7336 = vmatpush2.bf16.msra.mxu0 %v6696
    %7337 = vmatprep.subr.bf16.mxu0 %v6689
    %7338 = vmatpush2.bf16.msra.mxu0 %v6688
    %7339 = vmatprep.mubr.bf16.mxu0 %v4915
    %7340 = vmatmul.mubr.bf16.gmra.mxu0 %v4914
    %v7341 = vpop.f32.mrf.mxu0
    %v7342 = vadd.f32 %v7299, %v7341
    %v7343 = vpop.f32.mrf.mxu0
    %v7344 = vadd.f32 %v7301, %v7343
    %v7345 = vpop.f32.mrf.mxu0
    %v7346 = vadd.f32 %v7303, %v7345
    %v7347 = vpop.f32.mrf.mxu0
    %v7348 = vadd.f32 %v7305, %v7347
    %7349 = vdwg.mxu0
    %7350 = vmatprep.subr.bf16.mxu0 %v6809
    %7351 = vmatpush1.bf16.msra.mxu0 %v6808
    %7352 = vmatprep.subr.bf16.mxu0 %v6801
    %7353 = vmatpush1.bf16.msra.mxu0 %v6800
    %7354 = vmatprep.subr.bf16.mxu0 %v6793
    %7355 = vmatpush1.bf16.msra.mxu0 %v6792
    %7356 = vmatprep.subr.bf16.mxu0 %v6785
    %7357 = vmatpush1.bf16.msra.mxu0 %v6784
    %7358 = vmatprep.subr.bf16.mxu0 %v6777
    %7359 = vmatpush1.bf16.msra.mxu0 %v6776
    %7360 = vmatprep.subr.bf16.mxu0 %v6769
    %7361 = vmatpush1.bf16.msra.mxu0 %v6768
    %7362 = vmatprep.subr.bf16.mxu0 %v6761
    %7363 = vmatpush1.bf16.msra.mxu0 %v6760
    %7364 = vmatprep.subr.bf16.mxu0 %v6753
    %7365 = vmatpush1.bf16.msra.mxu0 %v6752
    %7366 = vmatprep.subr.bf16.mxu0 %v6873
    %7367 = vmatpush2.bf16.msra.mxu0 %v6872
    %7368 = vmatprep.subr.bf16.mxu0 %v6865
    %7369 = vmatpush2.bf16.msra.mxu0 %v6864
    %7370 = vmatprep.subr.bf16.mxu0 %v6857
    %7371 = vmatpush2.bf16.msra.mxu0 %v6856
    %7372 = vmatprep.subr.bf16.mxu0 %v6849
    %7373 = vmatpush2.bf16.msra.mxu0 %v6848
    %7374 = vmatprep.subr.bf16.mxu0 %v6841
    %7375 = vmatpush2.bf16.msra.mxu0 %v6840
    %7376 = vmatprep.subr.bf16.mxu0 %v6833
    %7377 = vmatpush2.bf16.msra.mxu0 %v6832
    %7378 = vmatprep.subr.bf16.mxu0 %v6825
    %7379 = vmatpush2.bf16.msra.mxu0 %v6824
    %7380 = vmatprep.subr.bf16.mxu0 %v6817
    %7381 = vmatpush2.bf16.msra.mxu0 %v6816
    %7382 = vmatprep.mubr.bf16.mxu0 %v4917
    %7383 = vmatmul.mubr.bf16.gmra.mxu0 %v4916
    %v7384 = vpop.f32.mrf.mxu0
    %v7385 = vadd.f32 %v7342, %v7384
    %v7386 = vpop.f32.mrf.mxu0
    %v7387 = vadd.f32 %v7344, %v7386
    %v7388 = vpop.f32.mrf.mxu0
    %v7389 = vadd.f32 %v7346, %v7388
    %v7390 = vpop.f32.mrf.mxu0
    %v7391 = vadd.f32 %v7348, %v7390
    %7392 = vdwg.mxu0
    %7393 = vmatprep.subr.bf16.mxu0 %v6555
    %7394 = vmatpush1.bf16.msra.mxu0 %v6554
    %7395 = vmatprep.subr.bf16.mxu0 %v6547
    %7396 = vmatpush1.bf16.msra.mxu0 %v6546
    %7397 = vmatprep.subr.bf16.mxu0 %v6539
    %7398 = vmatpush1.bf16.msra.mxu0 %v6538
    %7399 = vmatprep.subr.bf16.mxu0 %v6531
    %7400 = vmatpush1.bf16.msra.mxu0 %v6530
    %7401 = vmatprep.subr.bf16.mxu0 %v6523
    %7402 = vmatpush1.bf16.msra.mxu0 %v6522
    %7403 = vmatprep.subr.bf16.mxu0 %v6515
    %7404 = vmatpush1.bf16.msra.mxu0 %v6514
    %7405 = vmatprep.subr.bf16.mxu0 %v6507
    %7406 = vmatpush1.bf16.msra.mxu0 %v6506
    %7407 = vmatprep.subr.bf16.mxu0 %v6499
    %7408 = vmatpush1.bf16.msra.mxu0 %v6498
    %7409 = vmatprep.subr.bf16.mxu0 %v6619
    %7410 = vmatpush2.bf16.msra.mxu0 %v6618
    %7411 = vmatprep.subr.bf16.mxu0 %v6611
    %7412 = vmatpush2.bf16.msra.mxu0 %v6610
    %7413 = vmatprep.subr.bf16.mxu0 %v6603
    %7414 = vmatpush2.bf16.msra.mxu0 %v6602
    %7415 = vmatprep.subr.bf16.mxu0 %v6595
    %7416 = vmatpush2.bf16.msra.mxu0 %v6594
    %7417 = vmatprep.subr.bf16.mxu0 %v6587
    %7418 = vmatpush2.bf16.msra.mxu0 %v6586
    %7419 = vmatprep.subr.bf16.mxu0 %v6579
    %7420 = vmatpush2.bf16.msra.mxu0 %v6578
    %7421 = vmatprep.subr.bf16.mxu0 %v6571
    %7422 = vmatpush2.bf16.msra.mxu0 %v6570
    %7423 = vmatprep.subr.bf16.mxu0 %v6563
    %7424 = vmatpush2.bf16.msra.mxu0 %v6562
    %7425 = vmatprep.mubr.bf16.mxu0 %v4913
    %7426 = vmatmul.mubr.bf16.gmra.mxu0 %v4912
    %v7427 = vpop.f32.mrf.mxu0
    %v7428 = vadd.f32 %v5315, %v7427
    %v7429 = vpop.f32.mrf.mxu0
    %v7430 = vadd.f32 %v5319, %v7429
    %v7431 = vpop.f32.mrf.mxu0
    %v7432 = vadd.f32 %v5315, %v7431
    %v7433 = vpop.f32.mrf.mxu0
    %v7434 = vadd.f32 %v5319, %v7433
    %7435 = vdwg.mxu0
    %7436 = vmatprep.subr.bf16.mxu0 %v6683
    %7437 = vmatpush1.bf16.msra.mxu0 %v6682
    %7438 = vmatprep.subr.bf16.mxu0 %v6675
    %7439 = vmatpush1.bf16.msra.mxu0 %v6674
    %7440 = vmatprep.subr.bf16.mxu0 %v6667
    %7441 = vmatpush1.bf16.msra.mxu0 %v6666
    %7442 = vmatprep.subr.bf16.mxu0 %v6659
    %7443 = vmatpush1.bf16.msra.mxu0 %v6658
    %7444 = vmatprep.subr.bf16.mxu0 %v6651
    %7445 = vmatpush1.bf16.msra.mxu0 %v6650
    %7446 = vmatprep.subr.bf16.mxu0 %v6643
    %7447 = vmatpush1.bf16.msra.mxu0 %v6642
    %7448 = vmatprep.subr.bf16.mxu0 %v6635
    %7449 = vmatpush1.bf16.msra.mxu0 %v6634
    %7450 = vmatprep.subr.bf16.mxu0 %v6627
    %7451 = vmatpush1.bf16.msra.mxu0 %v6626
    %7452 = vmatprep.subr.bf16.mxu0 %v6747
    %7453 = vmatpush2.bf16.msra.mxu0 %v6746
    %7454 = vmatprep.subr.bf16.mxu0 %v6739
    %7455 = vmatpush2.bf16.msra.mxu0 %v6738
    %7456 = vmatprep.subr.bf16.mxu0 %v6731
    %7457 = vmatpush2.bf16.msra.mxu0 %v6730
    %7458 = vmatprep.subr.bf16.mxu0 %v6723
    %7459 = vmatpush2.bf16.msra.mxu0 %v6722
    %7460 = vmatprep.subr.bf16.mxu0 %v6715
    %7461 = vmatpush2.bf16.msra.mxu0 %v6714
    %7462 = vmatprep.subr.bf16.mxu0 %v6707
    %7463 = vmatpush2.bf16.msra.mxu0 %v6706
    %7464 = vmatprep.subr.bf16.mxu0 %v6699
    %7465 = vmatpush2.bf16.msra.mxu0 %v6698
    %7466 = vmatprep.subr.bf16.mxu0 %v6691
    %7467 = vmatpush2.bf16.msra.mxu0 %v6690
    %7468 = vmatprep.mubr.bf16.mxu0 %v4915
    %7469 = vmatmul.mubr.bf16.gmra.mxu0 %v4914
    %v7470 = vpop.f32.mrf.mxu0
    %v7471 = vadd.f32 %v7428, %v7470
    %v7472 = vpop.f32.mrf.mxu0
    %v7473 = vadd.f32 %v7430, %v7472
    %v7474 = vpop.f32.mrf.mxu0
    %v7475 = vadd.f32 %v7432, %v7474
    %v7476 = vpop.f32.mrf.mxu0
    %v7477 = vadd.f32 %v7434, %v7476
    %7478 = vdwg.mxu0
    %7479 = vmatprep.subr.bf16.mxu0 %v6811
    %7480 = vmatpush1.bf16.msra.mxu0 %v6810
    %7481 = vmatprep.subr.bf16.mxu0 %v6803
    %7482 = vmatpush1.bf16.msra.mxu0 %v6802
    %7483 = vmatprep.subr.bf16.mxu0 %v6795
    %7484 = vmatpush1.bf16.msra.mxu0 %v6794
    %7485 = vmatprep.subr.bf16.mxu0 %v6787
    %7486 = vmatpush1.bf16.msra.mxu0 %v6786
    %7487 = vmatprep.subr.bf16.mxu0 %v6779
    %7488 = vmatpush1.bf16.msra.mxu0 %v6778
    %7489 = vmatprep.subr.bf16.mxu0 %v6771
    %7490 = vmatpush1.bf16.msra.mxu0 %v6770
    %7491 = vmatprep.subr.bf16.mxu0 %v6763
    %7492 = vmatpush1.bf16.msra.mxu0 %v6762
    %7493 = vmatprep.subr.bf16.mxu0 %v6755
    %7494 = vmatpush1.bf16.msra.mxu0 %v6754
    %7495 = vmatprep.subr.bf16.mxu0 %v6875
    %7496 = vmatpush2.bf16.msra.mxu0 %v6874
    %7497 = vmatprep.subr.bf16.mxu0 %v6867
    %7498 = vmatpush2.bf16.msra.mxu0 %v6866
    %7499 = vmatprep.subr.bf16.mxu0 %v6859
    %7500 = vmatpush2.bf16.msra.mxu0 %v6858
    %7501 = vmatprep.subr.bf16.mxu0 %v6851
    %7502 = vmatpush2.bf16.msra.mxu0 %v6850
    %7503 = vmatprep.subr.bf16.mxu0 %v6843
    %7504 = vmatpush2.bf16.msra.mxu0 %v6842
    %7505 = vmatprep.subr.bf16.mxu0 %v6835
    %7506 = vmatpush2.bf16.msra.mxu0 %v6834
    %7507 = vmatprep.subr.bf16.mxu0 %v6827
    %7508 = vmatpush2.bf16.msra.mxu0 %v6826
    %7509 = vmatprep.subr.bf16.mxu0 %v6819
    %7510 = vmatpush2.bf16.msra.mxu0 %v6818
    %7511 = vmatprep.mubr.bf16.mxu0 %v4917
    %7512 = vmatmul.mubr.bf16.gmra.mxu0 %v4916
    %v7513 = vpop.f32.mrf.mxu0
    %v7514 = vadd.f32 %v7471, %v7513
    %v7515 = vpop.f32.mrf.mxu0
    %v7516 = vadd.f32 %v7473, %v7515
    %v7517 = vpop.f32.mrf.mxu0
    %v7518 = vadd.f32 %v7475, %v7517
    %v7519 = vpop.f32.mrf.mxu0
    %v7520 = vadd.f32 %v7477, %v7519
    %7521 = vdwg.mxu0
    %7522 = vmatprep.subr.bf16.mxu0 %v6557
    %7523 = vmatpush1.bf16.msra.mxu0 %v6556
    %7524 = vmatprep.subr.bf16.mxu0 %v6549
    %7525 = vmatpush1.bf16.msra.mxu0 %v6548
    %7526 = vmatprep.subr.bf16.mxu0 %v6541
    %7527 = vmatpush1.bf16.msra.mxu0 %v6540
    %7528 = vmatprep.subr.bf16.mxu0 %v6533
    %7529 = vmatpush1.bf16.msra.mxu0 %v6532
    %7530 = vmatprep.subr.bf16.mxu0 %v6525
    %7531 = vmatpush1.bf16.msra.mxu0 %v6524
    %7532 = vmatprep.subr.bf16.mxu0 %v6517
    %7533 = vmatpush1.bf16.msra.mxu0 %v6516
    %7534 = vmatprep.subr.bf16.mxu0 %v6509
    %7535 = vmatpush1.bf16.msra.mxu0 %v6508
    %7536 = vmatprep.subr.bf16.mxu0 %v6501
    %7537 = vmatpush1.bf16.msra.mxu0 %v6500
    %7538 = vmatprep.subr.bf16.mxu0 %v6621
    %7539 = vmatpush2.bf16.msra.mxu0 %v6620
    %7540 = vmatprep.subr.bf16.mxu0 %v6613
    %7541 = vmatpush2.bf16.msra.mxu0 %v6612
    %7542 = vmatprep.subr.bf16.mxu0 %v6605
    %7543 = vmatpush2.bf16.msra.mxu0 %v6604
    %7544 = vmatprep.subr.bf16.mxu0 %v6597
    %7545 = vmatpush2.bf16.msra.mxu0 %v6596
    %7546 = vmatprep.subr.bf16.mxu0 %v6589
    %7547 = vmatpush2.bf16.msra.mxu0 %v6588
    %7548 = vmatprep.subr.bf16.mxu0 %v6581
    %7549 = vmatpush2.bf16.msra.mxu0 %v6580
    %7550 = vmatprep.subr.bf16.mxu0 %v6573
    %7551 = vmatpush2.bf16.msra.mxu0 %v6572
    %7552 = vmatprep.subr.bf16.mxu0 %v6565
    %7553 = vmatpush2.bf16.msra.mxu0 %v6564
    %7554 = vmatprep.mubr.bf16.mxu0 %v4913
    %7555 = vmatmul.mubr.bf16.gmra.mxu0 %v4912
    %v7556 = vpop.f32.mrf.mxu0
    %v7557 = vadd.f32 %v5323, %v7556
    %v7558 = vpop.f32.mrf.mxu0
    %v7559 = vadd.f32 %v5327, %v7558
    %v7560 = vpop.f32.mrf.mxu0
    %v7561 = vadd.f32 %v5323, %v7560
    %v7562 = vpop.f32.mrf.mxu0
    %v7563 = vadd.f32 %v5327, %v7562
    %7564 = vdwg.mxu0
    %7565 = vmatprep.subr.bf16.mxu0 %v6685
    %7566 = vmatpush1.bf16.msra.mxu0 %v6684
    %7567 = vmatprep.subr.bf16.mxu0 %v6677
    %7568 = vmatpush1.bf16.msra.mxu0 %v6676
    %7569 = vmatprep.subr.bf16.mxu0 %v6669
    %7570 = vmatpush1.bf16.msra.mxu0 %v6668
    %7571 = vmatprep.subr.bf16.mxu0 %v6661
    %7572 = vmatpush1.bf16.msra.mxu0 %v6660
    %7573 = vmatprep.subr.bf16.mxu0 %v6653
    %7574 = vmatpush1.bf16.msra.mxu0 %v6652
    %7575 = vmatprep.subr.bf16.mxu0 %v6645
    %7576 = vmatpush1.bf16.msra.mxu0 %v6644
    %7577 = vmatprep.subr.bf16.mxu0 %v6637
    %7578 = vmatpush1.bf16.msra.mxu0 %v6636
    %7579 = vmatprep.subr.bf16.mxu0 %v6629
    %7580 = vmatpush1.bf16.msra.mxu0 %v6628
    %7581 = vmatprep.subr.bf16.mxu0 %v6749
    %7582 = vmatpush2.bf16.msra.mxu0 %v6748
    %7583 = vmatprep.subr.bf16.mxu0 %v6741
    %7584 = vmatpush2.bf16.msra.mxu0 %v6740
    %7585 = vmatprep.subr.bf16.mxu0 %v6733
    %7586 = vmatpush2.bf16.msra.mxu0 %v6732
    %7587 = vmatprep.subr.bf16.mxu0 %v6725
    %7588 = vmatpush2.bf16.msra.mxu0 %v6724
    %7589 = vmatprep.subr.bf16.mxu0 %v6717
    %7590 = vmatpush2.bf16.msra.mxu0 %v6716
    %7591 = vmatprep.subr.bf16.mxu0 %v6709
    %7592 = vmatpush2.bf16.msra.mxu0 %v6708
    %7593 = vmatprep.subr.bf16.mxu0 %v6701
    %7594 = vmatpush2.bf16.msra.mxu0 %v6700
    %7595 = vmatprep.subr.bf16.mxu0 %v6693
    %7596 = vmatpush2.bf16.msra.mxu0 %v6692
    %7597 = vmatprep.mubr.bf16.mxu0 %v4915
    %7598 = vmatmul.mubr.bf16.gmra.mxu0 %v4914
    %v7599 = vpop.f32.mrf.mxu0
    %v7600 = vadd.f32 %v7557, %v7599
    %v7601 = vpop.f32.mrf.mxu0
    %v7602 = vadd.f32 %v7559, %v7601
    %v7603 = vpop.f32.mrf.mxu0
    %v7604 = vadd.f32 %v7561, %v7603
    %v7605 = vpop.f32.mrf.mxu0
    %v7606 = vadd.f32 %v7563, %v7605
    %7607 = vdwg.mxu0
    %7608 = vmatprep.subr.bf16.mxu0 %v6813
    %7609 = vmatpush1.bf16.msra.mxu0 %v6812
    %7610 = vmatprep.subr.bf16.mxu0 %v6805
    %7611 = vmatpush1.bf16.msra.mxu0 %v6804
    %7612 = vmatprep.subr.bf16.mxu0 %v6797
    %7613 = vmatpush1.bf16.msra.mxu0 %v6796
    %7614 = vmatprep.subr.bf16.mxu0 %v6789
    %7615 = vmatpush1.bf16.msra.mxu0 %v6788
    %7616 = vmatprep.subr.bf16.mxu0 %v6781
    %7617 = vmatpush1.bf16.msra.mxu0 %v6780
    %7618 = vmatprep.subr.bf16.mxu0 %v6773
    %7619 = vmatpush1.bf16.msra.mxu0 %v6772
    %7620 = vmatprep.subr.bf16.mxu0 %v6765
    %7621 = vmatpush1.bf16.msra.mxu0 %v6764
    %7622 = vmatprep.subr.bf16.mxu0 %v6757
    %7623 = vmatpush1.bf16.msra.mxu0 %v6756
    %7624 = vmatprep.subr.bf16.mxu0 %v6877
    %7625 = vmatpush2.bf16.msra.mxu0 %v6876
    %7626 = vmatprep.subr.bf16.mxu0 %v6869
    %7627 = vmatpush2.bf16.msra.mxu0 %v6868
    %7628 = vmatprep.subr.bf16.mxu0 %v6861
    %7629 = vmatpush2.bf16.msra.mxu0 %v6860
    %7630 = vmatprep.subr.bf16.mxu0 %v6853
    %7631 = vmatpush2.bf16.msra.mxu0 %v6852
    %7632 = vmatprep.subr.bf16.mxu0 %v6845
    %7633 = vmatpush2.bf16.msra.mxu0 %v6844
    %7634 = vmatprep.subr.bf16.mxu0 %v6837
    %7635 = vmatpush2.bf16.msra.mxu0 %v6836
    %7636 = vmatprep.subr.bf16.mxu0 %v6829
    %7637 = vmatpush2.bf16.msra.mxu0 %v6828
    %7638 = vmatprep.subr.bf16.mxu0 %v6821
    %7639 = vmatpush2.bf16.msra.mxu0 %v6820
    %7640 = vmatprep.mubr.bf16.mxu0 %v4917
    %7641 = vmatmul.mubr.bf16.gmra.mxu0 %v4916
    %v7642 = vpop.f32.mrf.mxu0
    %v7643 = vadd.f32 %v7600, %v7642
    %v7644 = vpop.f32.mrf.mxu0
    %v7645 = vadd.f32 %v7602, %v7644
    %v7646 = vpop.f32.mrf.mxu0
    %v7647 = vadd.f32 %v7604, %v7646
    %v7648 = vpop.f32.mrf.mxu0
    %v7649 = vadd.f32 %v7606, %v7648
    %7650 = vdwg.mxu0
    %7651 = vmatprep.subr.bf16.mxu0 %v6559
    %7652 = vmatpush1.bf16.msra.mxu0 %v6558
    %7653 = vmatprep.subr.bf16.mxu0 %v6551
    %7654 = vmatpush1.bf16.msra.mxu0 %v6550
    %7655 = vmatprep.subr.bf16.mxu0 %v6543
    %7656 = vmatpush1.bf16.msra.mxu0 %v6542
    %7657 = vmatprep.subr.bf16.mxu0 %v6535
    %7658 = vmatpush1.bf16.msra.mxu0 %v6534
    %7659 = vmatprep.subr.bf16.mxu0 %v6527
    %7660 = vmatpush1.bf16.msra.mxu0 %v6526
    %7661 = vmatprep.subr.bf16.mxu0 %v6519
    %7662 = vmatpush1.bf16.msra.mxu0 %v6518
    %7663 = vmatprep.subr.bf16.mxu0 %v6511
    %7664 = vmatpush1.bf16.msra.mxu0 %v6510
    %7665 = vmatprep.subr.bf16.mxu0 %v6503
    %7666 = vmatpush1.bf16.msra.mxu0 %v6502
    %7667 = vmatprep.subr.bf16.mxu0 %v6623
    %7668 = vmatpush2.bf16.msra.mxu0 %v6622
    %7669 = vmatprep.subr.bf16.mxu0 %v6615
    %7670 = vmatpush2.bf16.msra.mxu0 %v6614
    %7671 = vmatprep.subr.bf16.mxu0 %v6607
    %7672 = vmatpush2.bf16.msra.mxu0 %v6606
    %7673 = vmatprep.subr.bf16.mxu0 %v6599
    %7674 = vmatpush2.bf16.msra.mxu0 %v6598
    %7675 = vmatprep.subr.bf16.mxu0 %v6591
    %7676 = vmatpush2.bf16.msra.mxu0 %v6590
    %7677 = vmatprep.subr.bf16.mxu0 %v6583
    %7678 = vmatpush2.bf16.msra.mxu0 %v6582
    %7679 = vmatprep.subr.bf16.mxu0 %v6575
    %7680 = vmatpush2.bf16.msra.mxu0 %v6574
    %7681 = vmatprep.subr.bf16.mxu0 %v6567
    %7682 = vmatpush2.bf16.msra.mxu0 %v6566
    %7683 = vmatprep.mubr.bf16.mxu0 %v4913
    %7684 = vmatmul.mubr.bf16.gmra.mxu0 %v4912
    %v7685 = vpop.f32.mrf.mxu0
    %v7686 = vadd.f32 %v5331, %v7685
    %v7687 = vpop.f32.mrf.mxu0
    %v7688 = vadd.f32 %v5335, %v7687
    %v7689 = vpop.f32.mrf.mxu0
    %v7690 = vadd.f32 %v5331, %v7689
    %v7691 = vpop.f32.mrf.mxu0
    %v7692 = vadd.f32 %v5335, %v7691
    %7693 = vdwg.mxu0
    %7694 = vmatprep.subr.bf16.mxu0 %v6687
    %7695 = vmatpush1.bf16.msra.mxu0 %v6686
    %7696 = vmatprep.subr.bf16.mxu0 %v6679
    %7697 = vmatpush1.bf16.msra.mxu0 %v6678
    %7698 = vmatprep.subr.bf16.mxu0 %v6671
    %7699 = vmatpush1.bf16.msra.mxu0 %v6670
    %7700 = vmatprep.subr.bf16.mxu0 %v6663
    %7701 = vmatpush1.bf16.msra.mxu0 %v6662
    %7702 = vmatprep.subr.bf16.mxu0 %v6655
    %7703 = vmatpush1.bf16.msra.mxu0 %v6654
    %7704 = vmatprep.subr.bf16.mxu0 %v6647
    %7705 = vmatpush1.bf16.msra.mxu0 %v6646
    %7706 = vmatprep.subr.bf16.mxu0 %v6639
    %7707 = vmatpush1.bf16.msra.mxu0 %v6638
    %7708 = vmatprep.subr.bf16.mxu0 %v6631
    %7709 = vmatpush1.bf16.msra.mxu0 %v6630
    %7710 = vmatprep.subr.bf16.mxu0 %v6751
    %7711 = vmatpush2.bf16.msra.mxu0 %v6750
    %7712 = vmatprep.subr.bf16.mxu0 %v6743
    %7713 = vmatpush2.bf16.msra.mxu0 %v6742
    %7714 = vmatprep.subr.bf16.mxu0 %v6735
    %7715 = vmatpush2.bf16.msra.mxu0 %v6734
    %7716 = vmatprep.subr.bf16.mxu0 %v6727
    %7717 = vmatpush2.bf16.msra.mxu0 %v6726
    %7718 = vmatprep.subr.bf16.mxu0 %v6719
    %7719 = vmatpush2.bf16.msra.mxu0 %v6718
    %7720 = vmatprep.subr.bf16.mxu0 %v6711
    %7721 = vmatpush2.bf16.msra.mxu0 %v6710
    %7722 = vmatprep.subr.bf16.mxu0 %v6703
    %7723 = vmatpush2.bf16.msra.mxu0 %v6702
    %7724 = vmatprep.subr.bf16.mxu0 %v6695
    %7725 = vmatpush2.bf16.msra.mxu0 %v6694
    %7726 = vmatprep.mubr.bf16.mxu0 %v4915
    %7727 = vmatmul.mubr.bf16.gmra.mxu0 %v4914
    %v7728 = vpop.f32.mrf.mxu0
    %v7729 = vadd.f32 %v7686, %v7728
    %v7730 = vpop.f32.mrf.mxu0
    %v7731 = vadd.f32 %v7688, %v7730
    %v7732 = vpop.f32.mrf.mxu0
    %v7733 = vadd.f32 %v7690, %v7732
    %v7734 = vpop.f32.mrf.mxu0
    %v7735 = vadd.f32 %v7692, %v7734
    %7736 = vdwg.mxu0
    %7737 = vmatprep.subr.bf16.mxu0 %v6815
    %7738 = vmatpush1.bf16.msra.mxu0 %v6814
    %7739 = vmatprep.subr.bf16.mxu0 %v6807
    %7740 = vmatpush1.bf16.msra.mxu0 %v6806
    %7741 = vmatprep.subr.bf16.mxu0 %v6799
    %7742 = vmatpush1.bf16.msra.mxu0 %v6798
    %7743 = vmatprep.subr.bf16.mxu0 %v6791
    %7744 = vmatpush1.bf16.msra.mxu0 %v6790
    %7745 = vmatprep.subr.bf16.mxu0 %v6783
    %7746 = vmatpush1.bf16.msra.mxu0 %v6782
    %7747 = vmatprep.subr.bf16.mxu0 %v6775
    %7748 = vmatpush1.bf16.msra.mxu0 %v6774
    %7749 = vmatprep.subr.bf16.mxu0 %v6767
    %7750 = vmatpush1.bf16.msra.mxu0 %v6766
    %7751 = vmatprep.subr.bf16.mxu0 %v6759
    %7752 = vmatpush1.bf16.msra.mxu0 %v6758
    %7753 = vmatprep.subr.bf16.mxu0 %v6879
    %7754 = vmatpush2.bf16.msra.mxu0 %v6878
    %7755 = vmatprep.subr.bf16.mxu0 %v6871
    %7756 = vmatpush2.bf16.msra.mxu0 %v6870
    %7757 = vmatprep.subr.bf16.mxu0 %v6863
    %7758 = vmatpush2.bf16.msra.mxu0 %v6862
    %7759 = vmatprep.subr.bf16.mxu0 %v6855
    %7760 = vmatpush2.bf16.msra.mxu0 %v6854
    %7761 = vmatprep.subr.bf16.mxu0 %v6847
    %7762 = vmatpush2.bf16.msra.mxu0 %v6846
    %7763 = vmatprep.subr.bf16.mxu0 %v6839
    %7764 = vmatpush2.bf16.msra.mxu0 %v6838
    %7765 = vmatprep.subr.bf16.mxu0 %v6831
    %7766 = vmatpush2.bf16.msra.mxu0 %v6830
    %7767 = vmatprep.subr.bf16.mxu0 %v6823
    %7768 = vmatpush2.bf16.msra.mxu0 %v6822
    %7769 = vmatprep.mubr.bf16.mxu0 %v4917
    %7770 = vmatmul.mubr.bf16.gmra.mxu0 %v4916
    %v7771 = vpop.f32.mrf.mxu0
    %v7772 = vadd.f32 %v7729, %v7771
    %v7773 = vpop.f32.mrf.mxu0
    %v7774 = vadd.f32 %v7731, %v7773
    %v7775 = vpop.f32.mrf.mxu0
    %v7776 = vadd.f32 %v7733, %v7775
    %v7777 = vpop.f32.mrf.mxu0
    %v7778 = vadd.f32 %v7735, %v7777
    %7779 = vdwg.mxu0
    %7780 = vst [vmem:[#allocation23] sm:$0xff] %v7385
    %7781 = vst [vmem:[#allocation23 + $0x8] sm:$0xff] %v7387
    %7782 = vst [vmem:[#allocation23 + $0x10] sm:$0xff] %v7514
    %7783 = vst [vmem:[#allocation23 + $0x18] sm:$0xff] %v7516
    %7784 = vst [vmem:[#allocation23 + $0x20] sm:$0xff] %v7643
    %7785 = vst [vmem:[#allocation23 + $0x28] sm:$0xff] %v7645
    %7786 = vst [vmem:[#allocation23 + $0x30] sm:$0xff] %v7772
    %7787 = vst [vmem:[#allocation23 + $0x38] sm:$0xff] %v7774
    %7788 = vst [vmem:[#allocation23 + $0x40] sm:$0xff] %v7389
    %7789 = vst [vmem:[#allocation23 + $0x48] sm:$0xff] %v7391
    %7790 = vst [vmem:[#allocation23 + $0x50] sm:$0xff] %v7518
    %7791 = vst [vmem:[#allocation23 + $0x58] sm:$0xff] %v7520
    %7792 = vst [vmem:[#allocation23 + $0x60] sm:$0xff] %v7647
    %7793 = vst [vmem:[#allocation23 + $0x68] sm:$0xff] %v7649
    %7794 = vst [vmem:[#allocation23 + $0x70] sm:$0xff] %v7776
    %7795 = vst [vmem:[#allocation23 + $0x78] sm:$0xff] %v7778
    // Predicated region
    $region106: #{tpu_custom_call.1} parent=1 // pred_check
      _
    $region107: #{tpu_custom_call.1} parent=1 // pred_check_branch
      %7797 = sbr.rel (0) target = $region109
    $region108: #{tpu_custom_call.1} parent=1 // pred_region
      %s7799 = ssub.s32 2048, 2048
      %7800 = vsyncadd [#allocation4], %s7799
      %s7801 = sshll.u32 [#allocation23], 4
      %s7802 = int_to_ptr.vmem [resolvable:$true] %s7801
      %7807 = dma.vmem_to_hbm [thread:$0]  %s7802, 2048, %s13, [#allocation4], 1024, 1024, 64
    $region109: #{tpu_custom_call.1} parent=1 // pred_fallthru
      _
    // Predicated region
    $region110: #{tpu_custom_call.1} parent=1 // pred_check
      _
    $region111: #{tpu_custom_call.1} parent=1 // pred_check_branch
      %7809 = sbr.rel (0) target = $region113
    $region112: #{tpu_custom_call.1} parent=1 // pred_region
      %7810 = dma.done [#allocation4], 2048
    $region113: #{tpu_custom_call.1} parent=1 // pred_fallthru
      _
    %7811 = vsyncpa [#allocation3], 1
    %7812 = vsyncpa [#allocation6], 1
    %7813 = vsyncpa [#allocation9], 1
    %7814 = vsyncpa [#allocation12], 1
    %7815 = vsyncpa [#allocation15], 1
    %7816 = vsyncpa [#allocation18], 1
    %7817 = vsyncpa [#allocation21], 1
    %7818 = vsyncpa [#allocation4], 1

</llo_original>
